<compile_context>
chip_gen: v7x
topology: tpu7x:2x2x1
jax: 0.10.0
libtpu: 0.0.40
codegen_flags: <defaults>
</compile_context>

<pallas_src>
import functools

import jax
import jax.numpy as jnp
from jax.experimental import pallas as pl
from jax.experimental.pallas import tpu as pltpu


# --------------------------- in-kernel GRU helpers --------------------------- #

def _gru_cell(gi, gh, h):
    """PyTorch nn.GRU cell update from precomputed projections.

    gi, gh: (B, 3H) input/hidden projections (gates stacked r|z|n, biases
    already added — bhh stays inside gh so the n-gate gets r * (Whn h + bhn)).
    """
    H = h.shape[-1]
    r = jax.nn.sigmoid(gi[:, 0:H] + gh[:, 0:H])
    z = jax.nn.sigmoid(gi[:, H:2 * H] + gh[:, H:2 * H])
    n = jnp.tanh(gi[:, 2 * H:3 * H] + r * gh[:, 2 * H:3 * H])
    return (1.0 - z) * n + z * h


def _run_direction(gi_all, whh, bhh, T, B, reverse):
    """Fully-unrolled GRU recurrence for one direction.

    gi_all: (T*B, 3H) hoisted input projections, rows grouped per timestep.
    Returns (per-timestep hiddens indexed by ORIGINAL time, final hidden).
    """
    H = whh.shape[0]
    h = jnp.zeros((B, H), jnp.float32)
    outs = [None] * T
    for s in range(T):
        t = (T - 1 - s) if reverse else s
        gi = gi_all[t * B:(t + 1) * B, :]
        gh = jnp.dot(h, whh, preferred_element_type=jnp.float32) + bhh
        h = _gru_cell(gi, gh, h)
        outs[t] = h
    return outs, h


def _bidir_gru_layer(x2d, wih, whh, bih, bhh, T, B):
    """One bidirectional GRU layer.

    x2d: (T*B, in); wih/bih stack [fwd gates || bwd gates] along lanes so the
    hoisted input projection of BOTH directions is one wide matmul.
    whh/bhh: (2, H, 3H) / (2, 1, 3H), per direction.
    Returns (y2d (T*B, 2H) per-step [fwd||bwd] outputs, final fwd h, final bwd h).
    """
    H = whh.shape[-2]
    G = 3 * H
    gi_both = jnp.dot(x2d, wih, preferred_element_type=jnp.float32) + bih   # (T*B, 6H)
    outs_f, hf = _run_direction(gi_both[:, 0:G], whh[0], bhh[0], T, B, reverse=False)
    outs_b, hb = _run_direction(gi_both[:, G:2 * G], whh[1], bhh[1], T, B, reverse=True)
    y2d = jnp.concatenate(
        [jnp.concatenate([outs_f[t], outs_b[t]], axis=-1) for t in range(T)], axis=0)
    return y2d, hf, hb


# ------------------------------ the fused kernel ----------------------------- #

def seq2seq_kernel(x_ref, dec0_ref, tgt_ref,
                   e0_wih_ref, e0_whh_ref, e0_bih_ref, e0_bhh_ref,
                   e1_wih_ref, e1_whh_ref, e1_bih_ref, e1_bhh_ref,
                   d0_wih_ref, d0_whh_ref, d0_bih_ref, d0_bhh_ref,
                   d1_wih_ref, d1_whh_ref, d1_bih_ref, d1_bhh_ref,
                   w1a_ref, b1a_ref, w1b_ref, b1b_ref,
                   w2a_ref, b2a_ref, w2b_ref, b2b_ref,
                   w3a_ref, b3a_ref, w3b_ref, b3b_ref,
                   out_ref, stop_ref,
                   *, T_enc, T_dec, B):
    f32 = jnp.float32

    # ------------------- Encoder: 2-layer bidirectional GRU ------------------ #
    x2d = x_ref[...]                                           # (T_enc*B, I)
    y0, h0f, h0b = _bidir_gru_layer(
        x2d, e0_wih_ref[...], e0_whh_ref[...], e0_bih_ref[...], e0_bhh_ref[...],
        T_enc, B)
    # Inter-layer GRU dropout (p=0.2) is training-only -> identity in eval.
    _, h1f, h1b = _bidir_gru_layer(
        y0, e1_wih_ref[...], e1_whh_ref[...], e1_bih_ref[...], e1_bhh_ref[...],
        T_enc, B)

    # Decoder initial hidden: per-encoder-layer [fwd || bwd] concatenation,
    # matching infer_encoder's view(n_layer,2,B,H) / split(dim=1) / cat(dim=2).
    h0 = jnp.concatenate([h0f, h0b], axis=-1)                  # (B, 2H) -> dec layer 0
    h1 = jnp.concatenate([h1f, h1b], axis=-1)                  # (B, 2H) -> dec layer 1

    # ------------------ Decoder: 2-layer GRU, teacher forcing ---------------- #
    d0_wih, d0_whh = d0_wih_ref[...], d0_whh_ref[...]
    d0_bih, d0_bhh = d0_bih_ref[...], d0_bhh_ref[...]
    d1_wih, d1_whh = d1_wih_ref[...], d1_whh_ref[...]
    d1_bih, d1_bhh = d1_bih_ref[...], d1_bhh_ref[...]

    # Layer-0 input projections hoisted out of the recurrence (all teacher-forced
    # step inputs are known up front). Last B rows of gi0_tf are unused.
    gi0_init = jnp.dot(dec0_ref[...], d0_wih, preferred_element_type=f32) + d0_bih  # (B, 3Hd)
    gi0_tf = jnp.dot(tgt_ref[...], d0_wih, preferred_element_type=f32) + d0_bih     # (T_dec*B, 3Hd)

    # LockedDropout on the step input is training-only -> identity in eval.
    h0_steps, h1_steps = [], []
    for t in range(T_dec):
        gi0 = gi0_init if t == 0 else gi0_tf[(t - 1) * B:t * B, :]
        gh0 = jnp.dot(h0, d0_whh, preferred_element_type=f32) + d0_bhh
        h0 = _gru_cell(gi0, gh0, h0)
        # decoder inter-layer GRU dropout (p=0.2) is training-only -> identity.
        gi1 = jnp.dot(h0, d1_wih, preferred_element_type=f32) + d1_bih
        gh1 = jnp.dot(h1, d1_whh, preferred_element_type=f32) + d1_bhh
        h1 = _gru_cell(gi1, gh1, h1)
        h0_steps.append(h0)
        h1_steps.append(h1)

    # ------------- MLP heads, batched over all T_dec*B decoder rows ---------- #
    h0_all = jnp.concatenate(h0_steps, axis=0)                 # (T_dec*B, 2H)
    h1_all = jnp.concatenate(h1_steps, axis=0)                 # (T_dec*B, 2H)

    # linear1: Linear -> LeakyReLU(True) -> Linear
    # TODO(synk): nn.LeakyReLU(True) sets negative_slope=True==1.0 (identity);
    # reproduced faithfully (almost certainly an inplace=True bug upstream).
    t1 = jnp.dot(h0_all, w1a_ref[...], preferred_element_type=f32) + b1a_ref[...]
    code = jnp.dot(t1, w1b_ref[...], preferred_element_type=f32) + b1b_ref[...]

    # linear2: Linear -> ReLU -> Dropout(eval: id) -> Linear
    t2 = jnp.maximum(
        jnp.dot(h1_all, w2a_ref[...], preferred_element_type=f32) + b2a_ref[...], 0.0)
    param = jnp.dot(t2, w2b_ref[...], preferred_element_type=f32) + b2b_ref[...]

    # linear3: Linear -> ReLU -> Dropout(eval: id) -> Linear
    t3 = jnp.maximum(
        jnp.dot(h0_all, w3a_ref[...], preferred_element_type=f32) + b3a_ref[...], 0.0)
    stop = jnp.dot(t3, w3b_ref[...], preferred_element_type=f32) + b3b_ref[...]

    out_ref[...] = jnp.concatenate([code, param], axis=-1)     # (T_dec*B, D) [code|param]
    stop_ref[...] = stop                                       # (T_dec*B, 1)


# --------------------------------- wrapper ----------------------------------- #

def seq2seq_forward(params, input_seq, target_seq):
    """input_seq: (T_enc, B, I), target_seq: (T_dec, B, D).

    Returns (decoder_outputs (T_dec, B, D), stop_signs (T_dec, B, 1)).
    """
    T_enc, B, I = input_seq.shape
    T_dec, _, D = target_seq.shape

    # decoder.init_input: zeros for the code part, [0.5,0.5,0.5,1,1,1] for params.
    # TODO(synk): reference draws `random.random() < teacher_forcing_ratio`; teacher
    # forcing is fixed to True here for a deterministic forward pass.
    init_x = jnp.concatenate(
        [jnp.zeros((B, D - 6), jnp.float32),
         jnp.tile(jnp.array([[0.5, 0.5, 0.5, 1.0, 1.0, 1.0]], jnp.float32), (B, 1))],
        axis=1)                                                # (B, D)

    enc0, enc1 = params["enc"]
    dec = params["dec"]
    operands = [
        input_seq.reshape(T_enc * B, I),      # leading-dim merge: layout no-op
        init_x,
        target_seq.reshape(T_dec * B, D),
        enc0["wih"], enc0["whh"], enc0["bih"], enc0["bhh"],
        enc1["wih"], enc1["whh"], enc1["bih"], enc1["bhh"],
        dec["wih0"], dec["whh0"], dec["bih0"], dec["bhh0"],
        dec["wih1"], dec["whh1"], dec["bih1"], dec["bhh1"],
        dec["w1a"], dec["b1a"], dec["w1b"], dec["b1b"],
        dec["w2a"], dec["b2a"], dec["w2b"], dec["b2b"],
        dec["w3a"], dec["b3a"], dec["w3b"], dec["b3b"],
    ]

    kernel = functools.partial(seq2seq_kernel, T_enc=T_enc, T_dec=T_dec, B=B)
    vmem = pl.BlockSpec(memory_space=pltpu.MemorySpace.VMEM)   # whole array resident in VMEM
    out2d, stop2d = pl.pallas_call(
        kernel,
        out_shape=(jax.ShapeDtypeStruct((T_dec * B, D), jnp.float32),
                   jax.ShapeDtypeStruct((T_dec * B, 1), jnp.float32)),
        in_specs=[vmem] * len(operands),
        out_specs=(vmem, vmem),
    )(*operands)

    return out2d.reshape(T_dec, B, D), stop2d.reshape(T_dec, B, 1)


# ------------------------------ parameter setup ------------------------------ #

def _uniform(key, shape, k):
    return jax.random.uniform(key, shape, jnp.float32, minval=-k, maxval=k)


def make_gru_dir_params(key, in_dim, hidden):
    k = 1.0 / (hidden ** 0.5)
    ks = jax.random.split(key, 4)
    return dict(
        wih=_uniform(ks[0], (in_dim, 3 * hidden), k),   # gates r|z|n stacked along lanes
        whh=_uniform(ks[1], (hidden, 3 * hidden), k),
        bih=_uniform(ks[2], (1, 3 * hidden), k),
        bhh=_uniform(ks[3], (1, 3 * hidden), k),
    )


def make_bidir_gru_params(key, in_dim, hidden):
    kf, kb = jax.random.split(key)
    pf = make_gru_dir_params(kf, in_dim, hidden)
    pb = make_gru_dir_params(kb, in_dim, hidden)
    return dict(
        # wih/bih: [fwd gate block || bwd gate block] stacked along lanes so the
        # hoisted input projection for both directions is one wide matmul.
        wih=jnp.concatenate([pf["wih"], pb["wih"]], axis=-1),   # (in, 6H)
        bih=jnp.concatenate([pf["bih"], pb["bih"]], axis=-1),   # (1, 6H)
        whh=jnp.stack([pf["whh"], pb["whh"]], axis=0),          # (2, H, 3H)
        bhh=jnp.stack([pf["bhh"], pb["bhh"]], axis=0),          # (2, 1, 3H)
    )


def make_linear(key, in_dim, out_dim):
    k = 1.0 / (in_dim ** 0.5)
    k1, k2 = jax.random.split(key)
    return _uniform(k1, (in_dim, out_dim), k), _uniform(k2, (1, out_dim), k)


def make_params(key, en_input_size, de_input_size, hidden_size):
    dec_hidden = 2 * hidden_size
    ks = iter(jax.random.split(key, 16))
    enc = [
        make_bidir_gru_params(next(ks), en_input_size, hidden_size),
        make_bidir_gru_params(next(ks), 2 * hidden_size, hidden_size),
    ]
    w1a, b1a = make_linear(next(ks), dec_hidden, 256)
    w1b, b1b = make_linear(next(ks), 256, de_input_size - 6)
    w2a, b2a = make_linear(next(ks), dec_hidden, 128)
    w2b, b2b = make_linear(next(ks), 128, 6)
    w3a, b3a = make_linear(next(ks), dec_hidden, 128)
    w3b, b3b = make_linear(next(ks), 128, 1)
    l0 = make_gru_dir_params(next(ks), de_input_size, dec_hidden)
    l1 = make_gru_dir_params(next(ks), dec_hidden, dec_hidden)
    dec = dict(
        wih0=l0["wih"], whh0=l0["whh"], bih0=l0["bih"], bhh0=l0["bhh"],
        wih1=l1["wih"], whh1=l1["whh"], bih1=l1["bih"], bhh1=l1["bhh"],
        w1a=w1a, b1a=b1a, w1b=w1b, b1b=b1b,
        w2a=w2a, b2a=b2a, w2b=w2b, b2b=b2b,
        w3a=w3a, b3a=b3a, w3b=w3b, b3b=b3b,
    )
    return {"enc": enc, "dec": dec}


# ----------------------------------- main ------------------------------------ #

if __name__ == "__main__":
    en_input_size = 16
    de_input_size = 14          # output_code dim = 8, output_param dim = 6
    hidden_size = 32            # decoder hidden = 64
    enc_seq_len, dec_seq_len, batch = 8, 5, 2

    root = jax.random.PRNGKey(0)
    k_params, k_in, k_tgt = jax.random.split(root, 3)
    params = make_params(k_params, en_input_size, de_input_size, hidden_size)

    input_seq = jax.random.normal(k_in, (enc_seq_len, batch, en_input_size), jnp.float32)
    target_seq = jax.random.normal(k_tgt, (dec_seq_len, batch, de_input_size), jnp.float32)

    forward = jax.jit(seq2seq_forward)
    decoder_outputs, stop_signs = forward(params, input_seq, target_seq)
    jax.block_until_ready((decoder_outputs, stop_signs))

    assert decoder_outputs.shape == (dec_seq_len, batch, de_input_size)
    assert stop_signs.shape == (dec_seq_len, batch, 1)
    assert bool(jnp.all(jnp.isfinite(decoder_outputs)))
    assert bool(jnp.all(jnp.isfinite(stop_signs)))
    print("KERNEL_OK")
</pallas_src>

<mosaic_0001>
module attributes {stable_mosaic.version = 11 : i64} {
  func.func @seq2seq_kernel(%arg0: memref<16x16xf32, #tpu.memory_space<vmem>>, %arg1: memref<2x14xf32, #tpu.memory_space<vmem>>, %arg2: memref<10x14xf32, #tpu.memory_space<vmem>>, %arg3: memref<16x192xf32, #tpu.memory_space<vmem>>, %arg4: memref<2x32x96xf32, #tpu.memory_space<vmem>>, %arg5: memref<1x192xf32, #tpu.memory_space<vmem>>, %arg6: memref<2x1x96xf32, #tpu.memory_space<vmem>>, %arg7: memref<64x192xf32, #tpu.memory_space<vmem>>, %arg8: memref<2x32x96xf32, #tpu.memory_space<vmem>>, %arg9: memref<1x192xf32, #tpu.memory_space<vmem>>, %arg10: memref<2x1x96xf32, #tpu.memory_space<vmem>>, %arg11: memref<14x192xf32, #tpu.memory_space<vmem>>, %arg12: memref<64x192xf32, #tpu.memory_space<vmem>>, %arg13: memref<1x192xf32, #tpu.memory_space<vmem>>, %arg14: memref<1x192xf32, #tpu.memory_space<vmem>>, %arg15: memref<64x192xf32, #tpu.memory_space<vmem>>, %arg16: memref<64x192xf32, #tpu.memory_space<vmem>>, %arg17: memref<1x192xf32, #tpu.memory_space<vmem>>, %arg18: memref<1x192xf32, #tpu.memory_space<vmem>>, %arg19: memref<64x256xf32, #tpu.memory_space<vmem>>, %arg20: memref<1x256xf32, #tpu.memory_space<vmem>>, %arg21: memref<256x8xf32, #tpu.memory_space<vmem>>, %arg22: memref<1x8xf32, #tpu.memory_space<vmem>>, %arg23: memref<64x128xf32, #tpu.memory_space<vmem>>, %arg24: memref<1x128xf32, #tpu.memory_space<vmem>>, %arg25: memref<128x6xf32, #tpu.memory_space<vmem>>, %arg26: memref<1x6xf32, #tpu.memory_space<vmem>>, %arg27: memref<64x128xf32, #tpu.memory_space<vmem>>, %arg28: memref<1x128xf32, #tpu.memory_space<vmem>>, %arg29: memref<128x1xf32, #tpu.memory_space<vmem>>, %arg30: memref<1x1xf32, #tpu.memory_space<vmem>>, %arg31: memref<10x14xf32, #tpu.memory_space<vmem>>, %arg32: memref<10x1xf32, #tpu.memory_space<vmem>>) attributes {dimension_semantics = [], scalar_prefetch = 0 : i64, scratch_operands = 0 : i64, tpu.core_type = #tpu.core_type<tc>} {
    %c0 = arith.constant 0 : index
    %c0_0 = arith.constant 0 : index
    %0 = vector.load %arg0[%c0, %c0_0] : memref<16x16xf32, #tpu.memory_space<vmem>>, vector<16x16xf32>
    %c0_1 = arith.constant 0 : index
    %c0_2 = arith.constant 0 : index
    %1 = vector.load %arg3[%c0_1, %c0_2] : memref<16x192xf32, #tpu.memory_space<vmem>>, vector<16x192xf32>
    %c0_3 = arith.constant 0 : index
    %c0_4 = arith.constant 0 : index
    %c0_5 = arith.constant 0 : index
    %2 = vector.load %arg4[%c0_3, %c0_4, %c0_5] : memref<2x32x96xf32, #tpu.memory_space<vmem>>, vector<2x32x96xf32>
    %c0_6 = arith.constant 0 : index
    %c0_7 = arith.constant 0 : index
    %3 = vector.load %arg5[%c0_6, %c0_7] : memref<1x192xf32, #tpu.memory_space<vmem>>, vector<1x192xf32>
    %c0_8 = arith.constant 0 : index
    %c0_9 = arith.constant 0 : index
    %c0_10 = arith.constant 0 : index
    %4 = vector.load %arg6[%c0_8, %c0_9, %c0_10] : memref<2x1x96xf32, #tpu.memory_space<vmem>>, vector<2x1x96xf32>
    %cst = arith.constant dense<0.000000e+00> : vector<16x192xf32>
    %5 = tpu.matmul %0, %1, %cst {dimension_numbers = #tpu.dot_dimension_numbers<[1], [0], [0], [1], [0, 0, 1, 1], [], []>} : vector<16x16xf32>, vector<16x192xf32>, vector<16x192xf32> -> vector<16x192xf32>
    %6 = vector.broadcast %3 : vector<1x192xf32> to vector<16x192xf32>
    %7 = arith.addf %5, %6 : vector<16x192xf32>
    %8 = vector.extract_strided_slice %7 {offsets = [0, 0], sizes = [16, 96], strides = [1, 1]} : vector<16x192xf32> to vector<16x96xf32>
    %9 = vector.extract_strided_slice %2 {offsets = [0, 0, 0], sizes = [1, 32, 96], strides = [1, 1, 1]} : vector<2x32x96xf32> to vector<1x32x96xf32>
    %10 = vector.shape_cast %9 : vector<1x32x96xf32> to vector<32x96xf32>
    %11 = vector.extract_strided_slice %4 {offsets = [0, 0, 0], sizes = [1, 1, 96], strides = [1, 1, 1]} : vector<2x1x96xf32> to vector<1x1x96xf32>
    %12 = vector.shape_cast %11 : vector<1x1x96xf32> to vector<1x96xf32>
    %cst_11 = arith.constant 0.000000e+00 : f32
    %13 = vector.broadcast %cst_11 : f32 to vector<2x32xf32>
    %14 = vector.extract_strided_slice %8 {offsets = [0, 0], sizes = [2, 96], strides = [1, 1]} : vector<16x96xf32> to vector<2x96xf32>
    %cst_12 = arith.constant dense<0.000000e+00> : vector<2x96xf32>
    %15 = tpu.matmul %13, %10, %cst_12 {dimension_numbers = #tpu.dot_dimension_numbers<[1], [0], [0], [1], [0, 0, 1, 1], [], []>} : vector<2x32xf32>, vector<32x96xf32>, vector<2x96xf32> -> vector<2x96xf32>
    %16 = vector.broadcast %12 : vector<1x96xf32> to vector<2x96xf32>
    %17 = arith.addf %15, %16 : vector<2x96xf32>
    %18 = vector.extract_strided_slice %14 {offsets = [0, 0], sizes = [2, 32], strides = [1, 1]} : vector<2x96xf32> to vector<2x32xf32>
    %19 = vector.extract_strided_slice %17 {offsets = [0, 0], sizes = [2, 32], strides = [1, 1]} : vector<2x96xf32> to vector<2x32xf32>
    %20 = arith.addf %18, %19 : vector<2x32xf32>
    %21 = arith.negf %20 : vector<2x32xf32>
    %22 = math.exp %21 : vector<2x32xf32>
    %cst_13 = arith.constant 1.000000e+00 : f32
    %23 = vector.broadcast %cst_13 : f32 to vector<2x32xf32>
    %24 = arith.addf %23, %22 : vector<2x32xf32>
    %25 = arith.divf %23, %24 : vector<2x32xf32>
    %26 = vector.extract_strided_slice %14 {offsets = [0, 32], sizes = [2, 32], strides = [1, 1]} : vector<2x96xf32> to vector<2x32xf32>
    %27 = vector.extract_strided_slice %17 {offsets = [0, 32], sizes = [2, 32], strides = [1, 1]} : vector<2x96xf32> to vector<2x32xf32>
    %28 = arith.addf %26, %27 : vector<2x32xf32>
    %29 = arith.negf %28 : vector<2x32xf32>
    %30 = math.exp %29 : vector<2x32xf32>
    %cst_14 = arith.constant 1.000000e+00 : f32
    %31 = vector.broadcast %cst_14 : f32 to vector<2x32xf32>
    %32 = arith.addf %31, %30 : vector<2x32xf32>
    %33 = arith.divf %31, %32 : vector<2x32xf32>
    %34 = vector.extract_strided_slice %14 {offsets = [0, 64], sizes = [2, 32], strides = [1, 1]} : vector<2x96xf32> to vector<2x32xf32>
    %35 = vector.extract_strided_slice %17 {offsets = [0, 64], sizes = [2, 32], strides = [1, 1]} : vector<2x96xf32> to vector<2x32xf32>
    %36 = arith.mulf %25, %35 : vector<2x32xf32>
    %37 = arith.addf %34, %36 : vector<2x32xf32>
    %38 = math.tanh %37 : vector<2x32xf32>
    %cst_15 = arith.constant 1.000000e+00 : f32
    %39 = vector.broadcast %cst_15 : f32 to vector<2x32xf32>
    %40 = arith.subf %39, %33 : vector<2x32xf32>
    %41 = arith.mulf %40, %38 : vector<2x32xf32>
    %42 = arith.mulf %33, %13 : vector<2x32xf32>
    %43 = arith.addf %41, %42 : vector<2x32xf32>
    %44 = vector.extract_strided_slice %8 {offsets = [2, 0], sizes = [2, 96], strides = [1, 1]} : vector<16x96xf32> to vector<2x96xf32>
    %cst_16 = arith.constant dense<0.000000e+00> : vector<2x96xf32>
    %45 = tpu.matmul %43, %10, %cst_16 {dimension_numbers = #tpu.dot_dimension_numbers<[1], [0], [0], [1], [0, 0, 1, 1], [], []>} : vector<2x32xf32>, vector<32x96xf32>, vector<2x96xf32> -> vector<2x96xf32>
    %46 = vector.broadcast %12 : vector<1x96xf32> to vector<2x96xf32>
    %47 = arith.addf %45, %46 : vector<2x96xf32>
    %48 = vector.extract_strided_slice %44 {offsets = [0, 0], sizes = [2, 32], strides = [1, 1]} : vector<2x96xf32> to vector<2x32xf32>
    %49 = vector.extract_strided_slice %47 {offsets = [0, 0], sizes = [2, 32], strides = [1, 1]} : vector<2x96xf32> to vector<2x32xf32>
    %50 = arith.addf %48, %49 : vector<2x32xf32>
    %51 = arith.negf %50 : vector<2x32xf32>
    %52 = math.exp %51 : vector<2x32xf32>
    %cst_17 = arith.constant 1.000000e+00 : f32
    %53 = vector.broadcast %cst_17 : f32 to vector<2x32xf32>
    %54 = arith.addf %53, %52 : vector<2x32xf32>
    %55 = arith.divf %53, %54 : vector<2x32xf32>
    %56 = vector.extract_strided_slice %44 {offsets = [0, 32], sizes = [2, 32], strides = [1, 1]} : vector<2x96xf32> to vector<2x32xf32>
    %57 = vector.extract_strided_slice %47 {offsets = [0, 32], sizes = [2, 32], strides = [1, 1]} : vector<2x96xf32> to vector<2x32xf32>
    %58 = arith.addf %56, %57 : vector<2x32xf32>
    %59 = arith.negf %58 : vector<2x32xf32>
    %60 = math.exp %59 : vector<2x32xf32>
    %cst_18 = arith.constant 1.000000e+00 : f32
    %61 = vector.broadcast %cst_18 : f32 to vector<2x32xf32>
    %62 = arith.addf %61, %60 : vector<2x32xf32>
    %63 = arith.divf %61, %62 : vector<2x32xf32>
    %64 = vector.extract_strided_slice %44 {offsets = [0, 64], sizes = [2, 32], strides = [1, 1]} : vector<2x96xf32> to vector<2x32xf32>
    %65 = vector.extract_strided_slice %47 {offsets = [0, 64], sizes = [2, 32], strides = [1, 1]} : vector<2x96xf32> to vector<2x32xf32>
    %66 = arith.mulf %55, %65 : vector<2x32xf32>
    %67 = arith.addf %64, %66 : vector<2x32xf32>
    %68 = math.tanh %67 : vector<2x32xf32>
    %cst_19 = arith.constant 1.000000e+00 : f32
    %69 = vector.broadcast %cst_19 : f32 to vector<2x32xf32>
    %70 = arith.subf %69, %63 : vector<2x32xf32>
    %71 = arith.mulf %70, %68 : vector<2x32xf32>
    %72 = arith.mulf %63, %43 : vector<2x32xf32>
    %73 = arith.addf %71, %72 : vector<2x32xf32>
    %74 = vector.extract_strided_slice %8 {offsets = [4, 0], sizes = [2, 96], strides = [1, 1]} : vector<16x96xf32> to vector<2x96xf32>
    %cst_20 = arith.constant dense<0.000000e+00> : vector<2x96xf32>
    %75 = tpu.matmul %73, %10, %cst_20 {dimension_numbers = #tpu.dot_dimension_numbers<[1], [0], [0], [1], [0, 0, 1, 1], [], []>} : vector<2x32xf32>, vector<32x96xf32>, vector<2x96xf32> -> vector<2x96xf32>
    %76 = vector.broadcast %12 : vector<1x96xf32> to vector<2x96xf32>
    %77 = arith.addf %75, %76 : vector<2x96xf32>
    %78 = vector.extract_strided_slice %74 {offsets = [0, 0], sizes = [2, 32], strides = [1, 1]} : vector<2x96xf32> to vector<2x32xf32>
    %79 = vector.extract_strided_slice %77 {offsets = [0, 0], sizes = [2, 32], strides = [1, 1]} : vector<2x96xf32> to vector<2x32xf32>
    %80 = arith.addf %78, %79 : vector<2x32xf32>
    %81 = arith.negf %80 : vector<2x32xf32>
    %82 = math.exp %81 : vector<2x32xf32>
    %cst_21 = arith.constant 1.000000e+00 : f32
    %83 = vector.broadcast %cst_21 : f32 to vector<2x32xf32>
    %84 = arith.addf %83, %82 : vector<2x32xf32>
    %85 = arith.divf %83, %84 : vector<2x32xf32>
    %86 = vector.extract_strided_slice %74 {offsets = [0, 32], sizes = [2, 32], strides = [1, 1]} : vector<2x96xf32> to vector<2x32xf32>
    %87 = vector.extract_strided_slice %77 {offsets = [0, 32], sizes = [2, 32], strides = [1, 1]} : vector<2x96xf32> to vector<2x32xf32>
    %88 = arith.addf %86, %87 : vector<2x32xf32>
    %89 = arith.negf %88 : vector<2x32xf32>
    %90 = math.exp %89 : vector<2x32xf32>
    %cst_22 = arith.constant 1.000000e+00 : f32
    %91 = vector.broadcast %cst_22 : f32 to vector<2x32xf32>
    %92 = arith.addf %91, %90 : vector<2x32xf32>
    %93 = arith.divf %91, %92 : vector<2x32xf32>
    %94 = vector.extract_strided_slice %74 {offsets = [0, 64], sizes = [2, 32], strides = [1, 1]} : vector<2x96xf32> to vector<2x32xf32>
    %95 = vector.extract_strided_slice %77 {offsets = [0, 64], sizes = [2, 32], strides = [1, 1]} : vector<2x96xf32> to vector<2x32xf32>
    %96 = arith.mulf %85, %95 : vector<2x32xf32>
    %97 = arith.addf %94, %96 : vector<2x32xf32>
    %98 = math.tanh %97 : vector<2x32xf32>
    %cst_23 = arith.constant 1.000000e+00 : f32
    %99 = vector.broadcast %cst_23 : f32 to vector<2x32xf32>
    %100 = arith.subf %99, %93 : vector<2x32xf32>
    %101 = arith.mulf %100, %98 : vector<2x32xf32>
    %102 = arith.mulf %93, %73 : vector<2x32xf32>
    %103 = arith.addf %101, %102 : vector<2x32xf32>
    %104 = vector.extract_strided_slice %8 {offsets = [6, 0], sizes = [2, 96], strides = [1, 1]} : vector<16x96xf32> to vector<2x96xf32>
    %cst_24 = arith.constant dense<0.000000e+00> : vector<2x96xf32>
    %105 = tpu.matmul %103, %10, %cst_24 {dimension_numbers = #tpu.dot_dimension_numbers<[1], [0], [0], [1], [0, 0, 1, 1], [], []>} : vector<2x32xf32>, vector<32x96xf32>, vector<2x96xf32> -> vector<2x96xf32>
    %106 = vector.broadcast %12 : vector<1x96xf32> to vector<2x96xf32>
    %107 = arith.addf %105, %106 : vector<2x96xf32>
    %108 = vector.extract_strided_slice %104 {offsets = [0, 0], sizes = [2, 32], strides = [1, 1]} : vector<2x96xf32> to vector<2x32xf32>
    %109 = vector.extract_strided_slice %107 {offsets = [0, 0], sizes = [2, 32], strides = [1, 1]} : vector<2x96xf32> to vector<2x32xf32>
    %110 = arith.addf %108, %109 : vector<2x32xf32>
    %111 = arith.negf %110 : vector<2x32xf32>
    %112 = math.exp %111 : vector<2x32xf32>
    %cst_25 = arith.constant 1.000000e+00 : f32
    %113 = vector.broadcast %cst_25 : f32 to vector<2x32xf32>
    %114 = arith.addf %113, %112 : vector<2x32xf32>
    %115 = arith.divf %113, %114 : vector<2x32xf32>
    %116 = vector.extract_strided_slice %104 {offsets = [0, 32], sizes = [2, 32], strides = [1, 1]} : vector<2x96xf32> to vector<2x32xf32>
    %117 = vector.extract_strided_slice %107 {offsets = [0, 32], sizes = [2, 32], strides = [1, 1]} : vector<2x96xf32> to vector<2x32xf32>
    %118 = arith.addf %116, %117 : vector<2x32xf32>
    %119 = arith.negf %118 : vector<2x32xf32>
    %120 = math.exp %119 : vector<2x32xf32>
    %cst_26 = arith.constant 1.000000e+00 : f32
    %121 = vector.broadcast %cst_26 : f32 to vector<2x32xf32>
    %122 = arith.addf %121, %120 : vector<2x32xf32>
    %123 = arith.divf %121, %122 : vector<2x32xf32>
    %124 = vector.extract_strided_slice %104 {offsets = [0, 64], sizes = [2, 32], strides = [1, 1]} : vector<2x96xf32> to vector<2x32xf32>
    %125 = vector.extract_strided_slice %107 {offsets = [0, 64], sizes = [2, 32], strides = [1, 1]} : vector<2x96xf32> to vector<2x32xf32>
    %126 = arith.mulf %115, %125 : vector<2x32xf32>
    %127 = arith.addf %124, %126 : vector<2x32xf32>
    %128 = math.tanh %127 : vector<2x32xf32>
    %cst_27 = arith.constant 1.000000e+00 : f32
    %129 = vector.broadcast %cst_27 : f32 to vector<2x32xf32>
    %130 = arith.subf %129, %123 : vector<2x32xf32>
    %131 = arith.mulf %130, %128 : vector<2x32xf32>
    %132 = arith.mulf %123, %103 : vector<2x32xf32>
    %133 = arith.addf %131, %132 : vector<2x32xf32>
    %134 = vector.extract_strided_slice %8 {offsets = [8, 0], sizes = [2, 96], strides = [1, 1]} : vector<16x96xf32> to vector<2x96xf32>
    %cst_28 = arith.constant dense<0.000000e+00> : vector<2x96xf32>
    %135 = tpu.matmul %133, %10, %cst_28 {dimension_numbers = #tpu.dot_dimension_numbers<[1], [0], [0], [1], [0, 0, 1, 1], [], []>} : vector<2x32xf32>, vector<32x96xf32>, vector<2x96xf32> -> vector<2x96xf32>
    %136 = vector.broadcast %12 : vector<1x96xf32> to vector<2x96xf32>
    %137 = arith.addf %135, %136 : vector<2x96xf32>
    %138 = vector.extract_strided_slice %134 {offsets = [0, 0], sizes = [2, 32], strides = [1, 1]} : vector<2x96xf32> to vector<2x32xf32>
    %139 = vector.extract_strided_slice %137 {offsets = [0, 0], sizes = [2, 32], strides = [1, 1]} : vector<2x96xf32> to vector<2x32xf32>
    %140 = arith.addf %138, %139 : vector<2x32xf32>
    %141 = arith.negf %140 : vector<2x32xf32>
    %142 = math.exp %141 : vector<2x32xf32>
    %cst_29 = arith.constant 1.000000e+00 : f32
    %143 = vector.broadcast %cst_29 : f32 to vector<2x32xf32>
    %144 = arith.addf %143, %142 : vector<2x32xf32>
    %145 = arith.divf %143, %144 : vector<2x32xf32>
    %146 = vector.extract_strided_slice %134 {offsets = [0, 32], sizes = [2, 32], strides = [1, 1]} : vector<2x96xf32> to vector<2x32xf32>
    %147 = vector.extract_strided_slice %137 {offsets = [0, 32], sizes = [2, 32], strides = [1, 1]} : vector<2x96xf32> to vector<2x32xf32>
    %148 = arith.addf %146, %147 : vector<2x32xf32>
    %149 = arith.negf %148 : vector<2x32xf32>
    %150 = math.exp %149 : vector<2x32xf32>
    %cst_30 = arith.constant 1.000000e+00 : f32
    %151 = vector.broadcast %cst_30 : f32 to vector<2x32xf32>
    %152 = arith.addf %151, %150 : vector<2x32xf32>
    %153 = arith.divf %151, %152 : vector<2x32xf32>
    %154 = vector.extract_strided_slice %134 {offsets = [0, 64], sizes = [2, 32], strides = [1, 1]} : vector<2x96xf32> to vector<2x32xf32>
    %155 = vector.extract_strided_slice %137 {offsets = [0, 64], sizes = [2, 32], strides = [1, 1]} : vector<2x96xf32> to vector<2x32xf32>
    %156 = arith.mulf %145, %155 : vector<2x32xf32>
    %157 = arith.addf %154, %156 : vector<2x32xf32>
    %158 = math.tanh %157 : vector<2x32xf32>
    %cst_31 = arith.constant 1.000000e+00 : f32
    %159 = vector.broadcast %cst_31 : f32 to vector<2x32xf32>
    %160 = arith.subf %159, %153 : vector<2x32xf32>
    %161 = arith.mulf %160, %158 : vector<2x32xf32>
    %162 = arith.mulf %153, %133 : vector<2x32xf32>
    %163 = arith.addf %161, %162 : vector<2x32xf32>
    %164 = vector.extract_strided_slice %8 {offsets = [10, 0], sizes = [2, 96], strides = [1, 1]} : vector<16x96xf32> to vector<2x96xf32>
    %cst_32 = arith.constant dense<0.000000e+00> : vector<2x96xf32>
    %165 = tpu.matmul %163, %10, %cst_32 {dimension_numbers = #tpu.dot_dimension_numbers<[1], [0], [0], [1], [0, 0, 1, 1], [], []>} : vector<2x32xf32>, vector<32x96xf32>, vector<2x96xf32> -> vector<2x96xf32>
    %166 = vector.broadcast %12 : vector<1x96xf32> to vector<2x96xf32>
    %167 = arith.addf %165, %166 : vector<2x96xf32>
    %168 = vector.extract_strided_slice %164 {offsets = [0, 0], sizes = [2, 32], strides = [1, 1]} : vector<2x96xf32> to vector<2x32xf32>
    %169 = vector.extract_strided_slice %167 {offsets = [0, 0], sizes = [2, 32], strides = [1, 1]} : vector<2x96xf32> to vector<2x32xf32>
    %170 = arith.addf %168, %169 : vector<2x32xf32>
    %171 = arith.negf %170 : vector<2x32xf32>
    %172 = math.exp %171 : vector<2x32xf32>
    %cst_33 = arith.constant 1.000000e+00 : f32
    %173 = vector.broadcast %cst_33 : f32 to vector<2x32xf32>
    %174 = arith.addf %173, %172 : vector<2x32xf32>
    %175 = arith.divf %173, %174 : vector<2x32xf32>
    %176 = vector.extract_strided_slice %164 {offsets = [0, 32], sizes = [2, 32], strides = [1, 1]} : vector<2x96xf32> to vector<2x32xf32>
    %177 = vector.extract_strided_slice %167 {offsets = [0, 32], sizes = [2, 32], strides = [1, 1]} : vector<2x96xf32> to vector<2x32xf32>
    %178 = arith.addf %176, %177 : vector<2x32xf32>
    %179 = arith.negf %178 : vector<2x32xf32>
    %180 = math.exp %179 : vector<2x32xf32>
    %cst_34 = arith.constant 1.000000e+00 : f32
    %181 = vector.broadcast %cst_34 : f32 to vector<2x32xf32>
    %182 = arith.addf %181, %180 : vector<2x32xf32>
    %183 = arith.divf %181, %182 : vector<2x32xf32>
    %184 = vector.extract_strided_slice %164 {offsets = [0, 64], sizes = [2, 32], strides = [1, 1]} : vector<2x96xf32> to vector<2x32xf32>
    %185 = vector.extract_strided_slice %167 {offsets = [0, 64], sizes = [2, 32], strides = [1, 1]} : vector<2x96xf32> to vector<2x32xf32>
    %186 = arith.mulf %175, %185 : vector<2x32xf32>
    %187 = arith.addf %184, %186 : vector<2x32xf32>
    %188 = math.tanh %187 : vector<2x32xf32>
    %cst_35 = arith.constant 1.000000e+00 : f32
    %189 = vector.broadcast %cst_35 : f32 to vector<2x32xf32>
    %190 = arith.subf %189, %183 : vector<2x32xf32>
    %191 = arith.mulf %190, %188 : vector<2x32xf32>
    %192 = arith.mulf %183, %163 : vector<2x32xf32>
    %193 = arith.addf %191, %192 : vector<2x32xf32>
    %194 = vector.extract_strided_slice %8 {offsets = [12, 0], sizes = [2, 96], strides = [1, 1]} : vector<16x96xf32> to vector<2x96xf32>
    %cst_36 = arith.constant dense<0.000000e+00> : vector<2x96xf32>
    %195 = tpu.matmul %193, %10, %cst_36 {dimension_numbers = #tpu.dot_dimension_numbers<[1], [0], [0], [1], [0, 0, 1, 1], [], []>} : vector<2x32xf32>, vector<32x96xf32>, vector<2x96xf32> -> vector<2x96xf32>
    %196 = vector.broadcast %12 : vector<1x96xf32> to vector<2x96xf32>
    %197 = arith.addf %195, %196 : vector<2x96xf32>
    %198 = vector.extract_strided_slice %194 {offsets = [0, 0], sizes = [2, 32], strides = [1, 1]} : vector<2x96xf32> to vector<2x32xf32>
    %199 = vector.extract_strided_slice %197 {offsets = [0, 0], sizes = [2, 32], strides = [1, 1]} : vector<2x96xf32> to vector<2x32xf32>
    %200 = arith.addf %198, %199 : vector<2x32xf32>
    %201 = arith.negf %200 : vector<2x32xf32>
    %202 = math.exp %201 : vector<2x32xf32>
    %cst_37 = arith.constant 1.000000e+00 : f32
    %203 = vector.broadcast %cst_37 : f32 to vector<2x32xf32>
    %204 = arith.addf %203, %202 : vector<2x32xf32>
    %205 = arith.divf %203, %204 : vector<2x32xf32>
    %206 = vector.extract_strided_slice %194 {offsets = [0, 32], sizes = [2, 32], strides = [1, 1]} : vector<2x96xf32> to vector<2x32xf32>
    %207 = vector.extract_strided_slice %197 {offsets = [0, 32], sizes = [2, 32], strides = [1, 1]} : vector<2x96xf32> to vector<2x32xf32>
    %208 = arith.addf %206, %207 : vector<2x32xf32>
    %209 = arith.negf %208 : vector<2x32xf32>
    %210 = math.exp %209 : vector<2x32xf32>
    %cst_38 = arith.constant 1.000000e+00 : f32
    %211 = vector.broadcast %cst_38 : f32 to vector<2x32xf32>
    %212 = arith.addf %211, %210 : vector<2x32xf32>
    %213 = arith.divf %211, %212 : vector<2x32xf32>
    %214 = vector.extract_strided_slice %194 {offsets = [0, 64], sizes = [2, 32], strides = [1, 1]} : vector<2x96xf32> to vector<2x32xf32>
    %215 = vector.extract_strided_slice %197 {offsets = [0, 64], sizes = [2, 32], strides = [1, 1]} : vector<2x96xf32> to vector<2x32xf32>
    %216 = arith.mulf %205, %215 : vector<2x32xf32>
    %217 = arith.addf %214, %216 : vector<2x32xf32>
    %218 = math.tanh %217 : vector<2x32xf32>
    %cst_39 = arith.constant 1.000000e+00 : f32
    %219 = vector.broadcast %cst_39 : f32 to vector<2x32xf32>
    %220 = arith.subf %219, %213 : vector<2x32xf32>
    %221 = arith.mulf %220, %218 : vector<2x32xf32>
    %222 = arith.mulf %213, %193 : vector<2x32xf32>
    %223 = arith.addf %221, %222 : vector<2x32xf32>
    %224 = vector.extract_strided_slice %8 {offsets = [14, 0], sizes = [2, 96], strides = [1, 1]} : vector<16x96xf32> to vector<2x96xf32>
    %cst_40 = arith.constant dense<0.000000e+00> : vector<2x96xf32>
    %225 = tpu.matmul %223, %10, %cst_40 {dimension_numbers = #tpu.dot_dimension_numbers<[1], [0], [0], [1], [0, 0, 1, 1], [], []>} : vector<2x32xf32>, vector<32x96xf32>, vector<2x96xf32> -> vector<2x96xf32>
    %226 = vector.broadcast %12 : vector<1x96xf32> to vector<2x96xf32>
    %227 = arith.addf %225, %226 : vector<2x96xf32>
    %228 = vector.extract_strided_slice %224 {offsets = [0, 0], sizes = [2, 32], strides = [1, 1]} : vector<2x96xf32> to vector<2x32xf32>
    %229 = vector.extract_strided_slice %227 {offsets = [0, 0], sizes = [2, 32], strides = [1, 1]} : vector<2x96xf32> to vector<2x32xf32>
    %230 = arith.addf %228, %229 : vector<2x32xf32>
    %231 = arith.negf %230 : vector<2x32xf32>
    %232 = math.exp %231 : vector<2x32xf32>
    %cst_41 = arith.constant 1.000000e+00 : f32
    %233 = vector.broadcast %cst_41 : f32 to vector<2x32xf32>
    %234 = arith.addf %233, %232 : vector<2x32xf32>
    %235 = arith.divf %233, %234 : vector<2x32xf32>
    %236 = vector.extract_strided_slice %224 {offsets = [0, 32], sizes = [2, 32], strides = [1, 1]} : vector<2x96xf32> to vector<2x32xf32>
    %237 = vector.extract_strided_slice %227 {offsets = [0, 32], sizes = [2, 32], strides = [1, 1]} : vector<2x96xf32> to vector<2x32xf32>
    %238 = arith.addf %236, %237 : vector<2x32xf32>
    %239 = arith.negf %238 : vector<2x32xf32>
    %240 = math.exp %239 : vector<2x32xf32>
    %cst_42 = arith.constant 1.000000e+00 : f32
    %241 = vector.broadcast %cst_42 : f32 to vector<2x32xf32>
    %242 = arith.addf %241, %240 : vector<2x32xf32>
    %243 = arith.divf %241, %242 : vector<2x32xf32>
    %244 = vector.extract_strided_slice %224 {offsets = [0, 64], sizes = [2, 32], strides = [1, 1]} : vector<2x96xf32> to vector<2x32xf32>
    %245 = vector.extract_strided_slice %227 {offsets = [0, 64], sizes = [2, 32], strides = [1, 1]} : vector<2x96xf32> to vector<2x32xf32>
    %246 = arith.mulf %235, %245 : vector<2x32xf32>
    %247 = arith.addf %244, %246 : vector<2x32xf32>
    %248 = math.tanh %247 : vector<2x32xf32>
    %cst_43 = arith.constant 1.000000e+00 : f32
    %249 = vector.broadcast %cst_43 : f32 to vector<2x32xf32>
    %250 = arith.subf %249, %243 : vector<2x32xf32>
    %251 = arith.mulf %250, %248 : vector<2x32xf32>
    %252 = arith.mulf %243, %223 : vector<2x32xf32>
    %253 = arith.addf %251, %252 : vector<2x32xf32>
    %254 = vector.extract_strided_slice %7 {offsets = [0, 96], sizes = [16, 96], strides = [1, 1]} : vector<16x192xf32> to vector<16x96xf32>
    %255 = vector.extract_strided_slice %2 {offsets = [1, 0, 0], sizes = [1, 32, 96], strides = [1, 1, 1]} : vector<2x32x96xf32> to vector<1x32x96xf32>
    %256 = vector.shape_cast %255 : vector<1x32x96xf32> to vector<32x96xf32>
    %257 = vector.extract_strided_slice %4 {offsets = [1, 0, 0], sizes = [1, 1, 96], strides = [1, 1, 1]} : vector<2x1x96xf32> to vector<1x1x96xf32>
    %258 = vector.shape_cast %257 : vector<1x1x96xf32> to vector<1x96xf32>
    %cst_44 = arith.constant 0.000000e+00 : f32
    %259 = vector.broadcast %cst_44 : f32 to vector<2x32xf32>
    %260 = vector.extract_strided_slice %254 {offsets = [14, 0], sizes = [2, 96], strides = [1, 1]} : vector<16x96xf32> to vector<2x96xf32>
    %cst_45 = arith.constant dense<0.000000e+00> : vector<2x96xf32>
    %261 = tpu.matmul %259, %256, %cst_45 {dimension_numbers = #tpu.dot_dimension_numbers<[1], [0], [0], [1], [0, 0, 1, 1], [], []>} : vector<2x32xf32>, vector<32x96xf32>, vector<2x96xf32> -> vector<2x96xf32>
    %262 = vector.broadcast %258 : vector<1x96xf32> to vector<2x96xf32>
    %263 = arith.addf %261, %262 : vector<2x96xf32>
    %264 = vector.extract_strided_slice %260 {offsets = [0, 0], sizes = [2, 32], strides = [1, 1]} : vector<2x96xf32> to vector<2x32xf32>
    %265 = vector.extract_strided_slice %263 {offsets = [0, 0], sizes = [2, 32], strides = [1, 1]} : vector<2x96xf32> to vector<2x32xf32>
    %266 = arith.addf %264, %265 : vector<2x32xf32>
    %267 = arith.negf %266 : vector<2x32xf32>
    %268 = math.exp %267 : vector<2x32xf32>
    %cst_46 = arith.constant 1.000000e+00 : f32
    %269 = vector.broadcast %cst_46 : f32 to vector<2x32xf32>
    %270 = arith.addf %269, %268 : vector<2x32xf32>
    %271 = arith.divf %269, %270 : vector<2x32xf32>
    %272 = vector.extract_strided_slice %260 {offsets = [0, 32], sizes = [2, 32], strides = [1, 1]} : vector<2x96xf32> to vector<2x32xf32>
    %273 = vector.extract_strided_slice %263 {offsets = [0, 32], sizes = [2, 32], strides = [1, 1]} : vector<2x96xf32> to vector<2x32xf32>
    %274 = arith.addf %272, %273 : vector<2x32xf32>
    %275 = arith.negf %274 : vector<2x32xf32>
    %276 = math.exp %275 : vector<2x32xf32>
    %cst_47 = arith.constant 1.000000e+00 : f32
    %277 = vector.broadcast %cst_47 : f32 to vector<2x32xf32>
    %278 = arith.addf %277, %276 : vector<2x32xf32>
    %279 = arith.divf %277, %278 : vector<2x32xf32>
    %280 = vector.extract_strided_slice %260 {offsets = [0, 64], sizes = [2, 32], strides = [1, 1]} : vector<2x96xf32> to vector<2x32xf32>
    %281 = vector.extract_strided_slice %263 {offsets = [0, 64], sizes = [2, 32], strides = [1, 1]} : vector<2x96xf32> to vector<2x32xf32>
    %282 = arith.mulf %271, %281 : vector<2x32xf32>
    %283 = arith.addf %280, %282 : vector<2x32xf32>
    %284 = math.tanh %283 : vector<2x32xf32>
    %cst_48 = arith.constant 1.000000e+00 : f32
    %285 = vector.broadcast %cst_48 : f32 to vector<2x32xf32>
    %286 = arith.subf %285, %279 : vector<2x32xf32>
    %287 = arith.mulf %286, %284 : vector<2x32xf32>
    %288 = arith.mulf %279, %259 : vector<2x32xf32>
    %289 = arith.addf %287, %288 : vector<2x32xf32>
    %290 = vector.extract_strided_slice %254 {offsets = [12, 0], sizes = [2, 96], strides = [1, 1]} : vector<16x96xf32> to vector<2x96xf32>
    %cst_49 = arith.constant dense<0.000000e+00> : vector<2x96xf32>
    %291 = tpu.matmul %289, %256, %cst_49 {dimension_numbers = #tpu.dot_dimension_numbers<[1], [0], [0], [1], [0, 0, 1, 1], [], []>} : vector<2x32xf32>, vector<32x96xf32>, vector<2x96xf32> -> vector<2x96xf32>
    %292 = vector.broadcast %258 : vector<1x96xf32> to vector<2x96xf32>
    %293 = arith.addf %291, %292 : vector<2x96xf32>
    %294 = vector.extract_strided_slice %290 {offsets = [0, 0], sizes = [2, 32], strides = [1, 1]} : vector<2x96xf32> to vector<2x32xf32>
    %295 = vector.extract_strided_slice %293 {offsets = [0, 0], sizes = [2, 32], strides = [1, 1]} : vector<2x96xf32> to vector<2x32xf32>
    %296 = arith.addf %294, %295 : vector<2x32xf32>
    %297 = arith.negf %296 : vector<2x32xf32>
    %298 = math.exp %297 : vector<2x32xf32>
    %cst_50 = arith.constant 1.000000e+00 : f32
    %299 = vector.broadcast %cst_50 : f32 to vector<2x32xf32>
    %300 = arith.addf %299, %298 : vector<2x32xf32>
    %301 = arith.divf %299, %300 : vector<2x32xf32>
    %302 = vector.extract_strided_slice %290 {offsets = [0, 32], sizes = [2, 32], strides = [1, 1]} : vector<2x96xf32> to vector<2x32xf32>
    %303 = vector.extract_strided_slice %293 {offsets = [0, 32], sizes = [2, 32], strides = [1, 1]} : vector<2x96xf32> to vector<2x32xf32>
    %304 = arith.addf %302, %303 : vector<2x32xf32>
    %305 = arith.negf %304 : vector<2x32xf32>
    %306 = math.exp %305 : vector<2x32xf32>
    %cst_51 = arith.constant 1.000000e+00 : f32
    %307 = vector.broadcast %cst_51 : f32 to vector<2x32xf32>
    %308 = arith.addf %307, %306 : vector<2x32xf32>
    %309 = arith.divf %307, %308 : vector<2x32xf32>
    %310 = vector.extract_strided_slice %290 {offsets = [0, 64], sizes = [2, 32], strides = [1, 1]} : vector<2x96xf32> to vector<2x32xf32>
    %311 = vector.extract_strided_slice %293 {offsets = [0, 64], sizes = [2, 32], strides = [1, 1]} : vector<2x96xf32> to vector<2x32xf32>
    %312 = arith.mulf %301, %311 : vector<2x32xf32>
    %313 = arith.addf %310, %312 : vector<2x32xf32>
    %314 = math.tanh %313 : vector<2x32xf32>
    %cst_52 = arith.constant 1.000000e+00 : f32
    %315 = vector.broadcast %cst_52 : f32 to vector<2x32xf32>
    %316 = arith.subf %315, %309 : vector<2x32xf32>
    %317 = arith.mulf %316, %314 : vector<2x32xf32>
    %318 = arith.mulf %309, %289 : vector<2x32xf32>
    %319 = arith.addf %317, %318 : vector<2x32xf32>
    %320 = vector.extract_strided_slice %254 {offsets = [10, 0], sizes = [2, 96], strides = [1, 1]} : vector<16x96xf32> to vector<2x96xf32>
    %cst_53 = arith.constant dense<0.000000e+00> : vector<2x96xf32>
    %321 = tpu.matmul %319, %256, %cst_53 {dimension_numbers = #tpu.dot_dimension_numbers<[1], [0], [0], [1], [0, 0, 1, 1], [], []>} : vector<2x32xf32>, vector<32x96xf32>, vector<2x96xf32> -> vector<2x96xf32>
    %322 = vector.broadcast %258 : vector<1x96xf32> to vector<2x96xf32>
    %323 = arith.addf %321, %322 : vector<2x96xf32>
    %324 = vector.extract_strided_slice %320 {offsets = [0, 0], sizes = [2, 32], strides = [1, 1]} : vector<2x96xf32> to vector<2x32xf32>
    %325 = vector.extract_strided_slice %323 {offsets = [0, 0], sizes = [2, 32], strides = [1, 1]} : vector<2x96xf32> to vector<2x32xf32>
    %326 = arith.addf %324, %325 : vector<2x32xf32>
    %327 = arith.negf %326 : vector<2x32xf32>
    %328 = math.exp %327 : vector<2x32xf32>
    %cst_54 = arith.constant 1.000000e+00 : f32
    %329 = vector.broadcast %cst_54 : f32 to vector<2x32xf32>
    %330 = arith.addf %329, %328 : vector<2x32xf32>
    %331 = arith.divf %329, %330 : vector<2x32xf32>
    %332 = vector.extract_strided_slice %320 {offsets = [0, 32], sizes = [2, 32], strides = [1, 1]} : vector<2x96xf32> to vector<2x32xf32>
    %333 = vector.extract_strided_slice %323 {offsets = [0, 32], sizes = [2, 32], strides = [1, 1]} : vector<2x96xf32> to vector<2x32xf32>
    %334 = arith.addf %332, %333 : vector<2x32xf32>
    %335 = arith.negf %334 : vector<2x32xf32>
    %336 = math.exp %335 : vector<2x32xf32>
    %cst_55 = arith.constant 1.000000e+00 : f32
    %337 = vector.broadcast %cst_55 : f32 to vector<2x32xf32>
    %338 = arith.addf %337, %336 : vector<2x32xf32>
    %339 = arith.divf %337, %338 : vector<2x32xf32>
    %340 = vector.extract_strided_slice %320 {offsets = [0, 64], sizes = [2, 32], strides = [1, 1]} : vector<2x96xf32> to vector<2x32xf32>
    %341 = vector.extract_strided_slice %323 {offsets = [0, 64], sizes = [2, 32], strides = [1, 1]} : vector<2x96xf32> to vector<2x32xf32>
    %342 = arith.mulf %331, %341 : vector<2x32xf32>
    %343 = arith.addf %340, %342 : vector<2x32xf32>
    %344 = math.tanh %343 : vector<2x32xf32>
    %cst_56 = arith.constant 1.000000e+00 : f32
    %345 = vector.broadcast %cst_56 : f32 to vector<2x32xf32>
    %346 = arith.subf %345, %339 : vector<2x32xf32>
    %347 = arith.mulf %346, %344 : vector<2x32xf32>
    %348 = arith.mulf %339, %319 : vector<2x32xf32>
    %349 = arith.addf %347, %348 : vector<2x32xf32>
    %350 = vector.extract_strided_slice %254 {offsets = [8, 0], sizes = [2, 96], strides = [1, 1]} : vector<16x96xf32> to vector<2x96xf32>
    %cst_57 = arith.constant dense<0.000000e+00> : vector<2x96xf32>
    %351 = tpu.matmul %349, %256, %cst_57 {dimension_numbers = #tpu.dot_dimension_numbers<[1], [0], [0], [1], [0, 0, 1, 1], [], []>} : vector<2x32xf32>, vector<32x96xf32>, vector<2x96xf32> -> vector<2x96xf32>
    %352 = vector.broadcast %258 : vector<1x96xf32> to vector<2x96xf32>
    %353 = arith.addf %351, %352 : vector<2x96xf32>
    %354 = vector.extract_strided_slice %350 {offsets = [0, 0], sizes = [2, 32], strides = [1, 1]} : vector<2x96xf32> to vector<2x32xf32>
    %355 = vector.extract_strided_slice %353 {offsets = [0, 0], sizes = [2, 32], strides = [1, 1]} : vector<2x96xf32> to vector<2x32xf32>
    %356 = arith.addf %354, %355 : vector<2x32xf32>
    %357 = arith.negf %356 : vector<2x32xf32>
    %358 = math.exp %357 : vector<2x32xf32>
    %cst_58 = arith.constant 1.000000e+00 : f32
    %359 = vector.broadcast %cst_58 : f32 to vector<2x32xf32>
    %360 = arith.addf %359, %358 : vector<2x32xf32>
    %361 = arith.divf %359, %360 : vector<2x32xf32>
    %362 = vector.extract_strided_slice %350 {offsets = [0, 32], sizes = [2, 32], strides = [1, 1]} : vector<2x96xf32> to vector<2x32xf32>
    %363 = vector.extract_strided_slice %353 {offsets = [0, 32], sizes = [2, 32], strides = [1, 1]} : vector<2x96xf32> to vector<2x32xf32>
    %364 = arith.addf %362, %363 : vector<2x32xf32>
    %365 = arith.negf %364 : vector<2x32xf32>
    %366 = math.exp %365 : vector<2x32xf32>
    %cst_59 = arith.constant 1.000000e+00 : f32
    %367 = vector.broadcast %cst_59 : f32 to vector<2x32xf32>
    %368 = arith.addf %367, %366 : vector<2x32xf32>
    %369 = arith.divf %367, %368 : vector<2x32xf32>
    %370 = vector.extract_strided_slice %350 {offsets = [0, 64], sizes = [2, 32], strides = [1, 1]} : vector<2x96xf32> to vector<2x32xf32>
    %371 = vector.extract_strided_slice %353 {offsets = [0, 64], sizes = [2, 32], strides = [1, 1]} : vector<2x96xf32> to vector<2x32xf32>
    %372 = arith.mulf %361, %371 : vector<2x32xf32>
    %373 = arith.addf %370, %372 : vector<2x32xf32>
    %374 = math.tanh %373 : vector<2x32xf32>
    %cst_60 = arith.constant 1.000000e+00 : f32
    %375 = vector.broadcast %cst_60 : f32 to vector<2x32xf32>
    %376 = arith.subf %375, %369 : vector<2x32xf32>
    %377 = arith.mulf %376, %374 : vector<2x32xf32>
    %378 = arith.mulf %369, %349 : vector<2x32xf32>
    %379 = arith.addf %377, %378 : vector<2x32xf32>
    %380 = vector.extract_strided_slice %254 {offsets = [6, 0], sizes = [2, 96], strides = [1, 1]} : vector<16x96xf32> to vector<2x96xf32>
    %cst_61 = arith.constant dense<0.000000e+00> : vector<2x96xf32>
    %381 = tpu.matmul %379, %256, %cst_61 {dimension_numbers = #tpu.dot_dimension_numbers<[1], [0], [0], [1], [0, 0, 1, 1], [], []>} : vector<2x32xf32>, vector<32x96xf32>, vector<2x96xf32> -> vector<2x96xf32>
    %382 = vector.broadcast %258 : vector<1x96xf32> to vector<2x96xf32>
    %383 = arith.addf %381, %382 : vector<2x96xf32>
    %384 = vector.extract_strided_slice %380 {offsets = [0, 0], sizes = [2, 32], strides = [1, 1]} : vector<2x96xf32> to vector<2x32xf32>
    %385 = vector.extract_strided_slice %383 {offsets = [0, 0], sizes = [2, 32], strides = [1, 1]} : vector<2x96xf32> to vector<2x32xf32>
    %386 = arith.addf %384, %385 : vector<2x32xf32>
    %387 = arith.negf %386 : vector<2x32xf32>
    %388 = math.exp %387 : vector<2x32xf32>
    %cst_62 = arith.constant 1.000000e+00 : f32
    %389 = vector.broadcast %cst_62 : f32 to vector<2x32xf32>
    %390 = arith.addf %389, %388 : vector<2x32xf32>
    %391 = arith.divf %389, %390 : vector<2x32xf32>
    %392 = vector.extract_strided_slice %380 {offsets = [0, 32], sizes = [2, 32], strides = [1, 1]} : vector<2x96xf32> to vector<2x32xf32>
    %393 = vector.extract_strided_slice %383 {offsets = [0, 32], sizes = [2, 32], strides = [1, 1]} : vector<2x96xf32> to vector<2x32xf32>
    %394 = arith.addf %392, %393 : vector<2x32xf32>
    %395 = arith.negf %394 : vector<2x32xf32>
    %396 = math.exp %395 : vector<2x32xf32>
    %cst_63 = arith.constant 1.000000e+00 : f32
    %397 = vector.broadcast %cst_63 : f32 to vector<2x32xf32>
    %398 = arith.addf %397, %396 : vector<2x32xf32>
    %399 = arith.divf %397, %398 : vector<2x32xf32>
    %400 = vector.extract_strided_slice %380 {offsets = [0, 64], sizes = [2, 32], strides = [1, 1]} : vector<2x96xf32> to vector<2x32xf32>
    %401 = vector.extract_strided_slice %383 {offsets = [0, 64], sizes = [2, 32], strides = [1, 1]} : vector<2x96xf32> to vector<2x32xf32>
    %402 = arith.mulf %391, %401 : vector<2x32xf32>
    %403 = arith.addf %400, %402 : vector<2x32xf32>
    %404 = math.tanh %403 : vector<2x32xf32>
    %cst_64 = arith.constant 1.000000e+00 : f32
    %405 = vector.broadcast %cst_64 : f32 to vector<2x32xf32>
    %406 = arith.subf %405, %399 : vector<2x32xf32>
    %407 = arith.mulf %406, %404 : vector<2x32xf32>
    %408 = arith.mulf %399, %379 : vector<2x32xf32>
    %409 = arith.addf %407, %408 : vector<2x32xf32>
    %410 = vector.extract_strided_slice %254 {offsets = [4, 0], sizes = [2, 96], strides = [1, 1]} : vector<16x96xf32> to vector<2x96xf32>
    %cst_65 = arith.constant dense<0.000000e+00> : vector<2x96xf32>
    %411 = tpu.matmul %409, %256, %cst_65 {dimension_numbers = #tpu.dot_dimension_numbers<[1], [0], [0], [1], [0, 0, 1, 1], [], []>} : vector<2x32xf32>, vector<32x96xf32>, vector<2x96xf32> -> vector<2x96xf32>
    %412 = vector.broadcast %258 : vector<1x96xf32> to vector<2x96xf32>
    %413 = arith.addf %411, %412 : vector<2x96xf32>
    %414 = vector.extract_strided_slice %410 {offsets = [0, 0], sizes = [2, 32], strides = [1, 1]} : vector<2x96xf32> to vector<2x32xf32>
    %415 = vector.extract_strided_slice %413 {offsets = [0, 0], sizes = [2, 32], strides = [1, 1]} : vector<2x96xf32> to vector<2x32xf32>
    %416 = arith.addf %414, %415 : vector<2x32xf32>
    %417 = arith.negf %416 : vector<2x32xf32>
    %418 = math.exp %417 : vector<2x32xf32>
    %cst_66 = arith.constant 1.000000e+00 : f32
    %419 = vector.broadcast %cst_66 : f32 to vector<2x32xf32>
    %420 = arith.addf %419, %418 : vector<2x32xf32>
    %421 = arith.divf %419, %420 : vector<2x32xf32>
    %422 = vector.extract_strided_slice %410 {offsets = [0, 32], sizes = [2, 32], strides = [1, 1]} : vector<2x96xf32> to vector<2x32xf32>
    %423 = vector.extract_strided_slice %413 {offsets = [0, 32], sizes = [2, 32], strides = [1, 1]} : vector<2x96xf32> to vector<2x32xf32>
    %424 = arith.addf %422, %423 : vector<2x32xf32>
    %425 = arith.negf %424 : vector<2x32xf32>
    %426 = math.exp %425 : vector<2x32xf32>
    %cst_67 = arith.constant 1.000000e+00 : f32
    %427 = vector.broadcast %cst_67 : f32 to vector<2x32xf32>
    %428 = arith.addf %427, %426 : vector<2x32xf32>
    %429 = arith.divf %427, %428 : vector<2x32xf32>
    %430 = vector.extract_strided_slice %410 {offsets = [0, 64], sizes = [2, 32], strides = [1, 1]} : vector<2x96xf32> to vector<2x32xf32>
    %431 = vector.extract_strided_slice %413 {offsets = [0, 64], sizes = [2, 32], strides = [1, 1]} : vector<2x96xf32> to vector<2x32xf32>
    %432 = arith.mulf %421, %431 : vector<2x32xf32>
    %433 = arith.addf %430, %432 : vector<2x32xf32>
    %434 = math.tanh %433 : vector<2x32xf32>
    %cst_68 = arith.constant 1.000000e+00 : f32
    %435 = vector.broadcast %cst_68 : f32 to vector<2x32xf32>
    %436 = arith.subf %435, %429 : vector<2x32xf32>
    %437 = arith.mulf %436, %434 : vector<2x32xf32>
    %438 = arith.mulf %429, %409 : vector<2x32xf32>
    %439 = arith.addf %437, %438 : vector<2x32xf32>
    %440 = vector.extract_strided_slice %254 {offsets = [2, 0], sizes = [2, 96], strides = [1, 1]} : vector<16x96xf32> to vector<2x96xf32>
    %cst_69 = arith.constant dense<0.000000e+00> : vector<2x96xf32>
    %441 = tpu.matmul %439, %256, %cst_69 {dimension_numbers = #tpu.dot_dimension_numbers<[1], [0], [0], [1], [0, 0, 1, 1], [], []>} : vector<2x32xf32>, vector<32x96xf32>, vector<2x96xf32> -> vector<2x96xf32>
    %442 = vector.broadcast %258 : vector<1x96xf32> to vector<2x96xf32>
    %443 = arith.addf %441, %442 : vector<2x96xf32>
    %444 = vector.extract_strided_slice %440 {offsets = [0, 0], sizes = [2, 32], strides = [1, 1]} : vector<2x96xf32> to vector<2x32xf32>
    %445 = vector.extract_strided_slice %443 {offsets = [0, 0], sizes = [2, 32], strides = [1, 1]} : vector<2x96xf32> to vector<2x32xf32>
    %446 = arith.addf %444, %445 : vector<2x32xf32>
    %447 = arith.negf %446 : vector<2x32xf32>
    %448 = math.exp %447 : vector<2x32xf32>
    %cst_70 = arith.constant 1.000000e+00 : f32
    %449 = vector.broadcast %cst_70 : f32 to vector<2x32xf32>
    %450 = arith.addf %449, %448 : vector<2x32xf32>
    %451 = arith.divf %449, %450 : vector<2x32xf32>
    %452 = vector.extract_strided_slice %440 {offsets = [0, 32], sizes = [2, 32], strides = [1, 1]} : vector<2x96xf32> to vector<2x32xf32>
    %453 = vector.extract_strided_slice %443 {offsets = [0, 32], sizes = [2, 32], strides = [1, 1]} : vector<2x96xf32> to vector<2x32xf32>
    %454 = arith.addf %452, %453 : vector<2x32xf32>
    %455 = arith.negf %454 : vector<2x32xf32>
    %456 = math.exp %455 : vector<2x32xf32>
    %cst_71 = arith.constant 1.000000e+00 : f32
    %457 = vector.broadcast %cst_71 : f32 to vector<2x32xf32>
    %458 = arith.addf %457, %456 : vector<2x32xf32>
    %459 = arith.divf %457, %458 : vector<2x32xf32>
    %460 = vector.extract_strided_slice %440 {offsets = [0, 64], sizes = [2, 32], strides = [1, 1]} : vector<2x96xf32> to vector<2x32xf32>
    %461 = vector.extract_strided_slice %443 {offsets = [0, 64], sizes = [2, 32], strides = [1, 1]} : vector<2x96xf32> to vector<2x32xf32>
    %462 = arith.mulf %451, %461 : vector<2x32xf32>
    %463 = arith.addf %460, %462 : vector<2x32xf32>
    %464 = math.tanh %463 : vector<2x32xf32>
    %cst_72 = arith.constant 1.000000e+00 : f32
    %465 = vector.broadcast %cst_72 : f32 to vector<2x32xf32>
    %466 = arith.subf %465, %459 : vector<2x32xf32>
    %467 = arith.mulf %466, %464 : vector<2x32xf32>
    %468 = arith.mulf %459, %439 : vector<2x32xf32>
    %469 = arith.addf %467, %468 : vector<2x32xf32>
    %470 = vector.extract_strided_slice %254 {offsets = [0, 0], sizes = [2, 96], strides = [1, 1]} : vector<16x96xf32> to vector<2x96xf32>
    %cst_73 = arith.constant dense<0.000000e+00> : vector<2x96xf32>
    %471 = tpu.matmul %469, %256, %cst_73 {dimension_numbers = #tpu.dot_dimension_numbers<[1], [0], [0], [1], [0, 0, 1, 1], [], []>} : vector<2x32xf32>, vector<32x96xf32>, vector<2x96xf32> -> vector<2x96xf32>
    %472 = vector.broadcast %258 : vector<1x96xf32> to vector<2x96xf32>
    %473 = arith.addf %471, %472 : vector<2x96xf32>
    %474 = vector.extract_strided_slice %470 {offsets = [0, 0], sizes = [2, 32], strides = [1, 1]} : vector<2x96xf32> to vector<2x32xf32>
    %475 = vector.extract_strided_slice %473 {offsets = [0, 0], sizes = [2, 32], strides = [1, 1]} : vector<2x96xf32> to vector<2x32xf32>
    %476 = arith.addf %474, %475 : vector<2x32xf32>
    %477 = arith.negf %476 : vector<2x32xf32>
    %478 = math.exp %477 : vector<2x32xf32>
    %cst_74 = arith.constant 1.000000e+00 : f32
    %479 = vector.broadcast %cst_74 : f32 to vector<2x32xf32>
    %480 = arith.addf %479, %478 : vector<2x32xf32>
    %481 = arith.divf %479, %480 : vector<2x32xf32>
    %482 = vector.extract_strided_slice %470 {offsets = [0, 32], sizes = [2, 32], strides = [1, 1]} : vector<2x96xf32> to vector<2x32xf32>
    %483 = vector.extract_strided_slice %473 {offsets = [0, 32], sizes = [2, 32], strides = [1, 1]} : vector<2x96xf32> to vector<2x32xf32>
    %484 = arith.addf %482, %483 : vector<2x32xf32>
    %485 = arith.negf %484 : vector<2x32xf32>
    %486 = math.exp %485 : vector<2x32xf32>
    %cst_75 = arith.constant 1.000000e+00 : f32
    %487 = vector.broadcast %cst_75 : f32 to vector<2x32xf32>
    %488 = arith.addf %487, %486 : vector<2x32xf32>
    %489 = arith.divf %487, %488 : vector<2x32xf32>
    %490 = vector.extract_strided_slice %470 {offsets = [0, 64], sizes = [2, 32], strides = [1, 1]} : vector<2x96xf32> to vector<2x32xf32>
    %491 = vector.extract_strided_slice %473 {offsets = [0, 64], sizes = [2, 32], strides = [1, 1]} : vector<2x96xf32> to vector<2x32xf32>
    %492 = arith.mulf %481, %491 : vector<2x32xf32>
    %493 = arith.addf %490, %492 : vector<2x32xf32>
    %494 = math.tanh %493 : vector<2x32xf32>
    %cst_76 = arith.constant 1.000000e+00 : f32
    %495 = vector.broadcast %cst_76 : f32 to vector<2x32xf32>
    %496 = arith.subf %495, %489 : vector<2x32xf32>
    %497 = arith.mulf %496, %494 : vector<2x32xf32>
    %498 = arith.mulf %489, %469 : vector<2x32xf32>
    %499 = arith.addf %497, %498 : vector<2x32xf32>
    %500 = tpu.concatenate %43, %499 in 1 : vector<2x32xf32>, vector<2x32xf32> -> vector<2x64xf32>
    %501 = tpu.concatenate %73, %469 in 1 : vector<2x32xf32>, vector<2x32xf32> -> vector<2x64xf32>
    %502 = tpu.concatenate %103, %439 in 1 : vector<2x32xf32>, vector<2x32xf32> -> vector<2x64xf32>
    %503 = tpu.concatenate %133, %409 in 1 : vector<2x32xf32>, vector<2x32xf32> -> vector<2x64xf32>
    %504 = tpu.concatenate %163, %379 in 1 : vector<2x32xf32>, vector<2x32xf32> -> vector<2x64xf32>
    %505 = tpu.concatenate %193, %349 in 1 : vector<2x32xf32>, vector<2x32xf32> -> vector<2x64xf32>
    %506 = tpu.concatenate %223, %319 in 1 : vector<2x32xf32>, vector<2x32xf32> -> vector<2x64xf32>
    %507 = tpu.concatenate %253, %289 in 1 : vector<2x32xf32>, vector<2x32xf32> -> vector<2x64xf32>
    %508 = tpu.concatenate %500, %501, %502, %503, %504, %505, %506, %507 in 0 : vector<2x64xf32>, vector<2x64xf32>, vector<2x64xf32>, vector<2x64xf32>, vector<2x64xf32>, vector<2x64xf32>, vector<2x64xf32>, vector<2x64xf32> -> vector<16x64xf32>
    %c0_77 = arith.constant 0 : index
    %c0_78 = arith.constant 0 : index
    %509 = vector.load %arg7[%c0_77, %c0_78] : memref<64x192xf32, #tpu.memory_space<vmem>>, vector<64x192xf32>
    %c0_79 = arith.constant 0 : index
    %c0_80 = arith.constant 0 : index
    %c0_81 = arith.constant 0 : index
    %510 = vector.load %arg8[%c0_79, %c0_80, %c0_81] : memref<2x32x96xf32, #tpu.memory_space<vmem>>, vector<2x32x96xf32>
    %c0_82 = arith.constant 0 : index
    %c0_83 = arith.constant 0 : index
    %511 = vector.load %arg9[%c0_82, %c0_83] : memref<1x192xf32, #tpu.memory_space<vmem>>, vector<1x192xf32>
    %c0_84 = arith.constant 0 : index
    %c0_85 = arith.constant 0 : index
    %c0_86 = arith.constant 0 : index
    %512 = vector.load %arg10[%c0_84, %c0_85, %c0_86] : memref<2x1x96xf32, #tpu.memory_space<vmem>>, vector<2x1x96xf32>
    %cst_87 = arith.constant dense<0.000000e+00> : vector<16x192xf32>
    %513 = tpu.matmul %508, %509, %cst_87 {dimension_numbers = #tpu.dot_dimension_numbers<[1], [0], [0], [1], [0, 0, 1, 1], [], []>} : vector<16x64xf32>, vector<64x192xf32>, vector<16x192xf32> -> vector<16x192xf32>
    %514 = vector.broadcast %511 : vector<1x192xf32> to vector<16x192xf32>
    %515 = arith.addf %513, %514 : vector<16x192xf32>
    %516 = vector.extract_strided_slice %515 {offsets = [0, 0], sizes = [16, 96], strides = [1, 1]} : vector<16x192xf32> to vector<16x96xf32>
    %517 = vector.extract_strided_slice %510 {offsets = [0, 0, 0], sizes = [1, 32, 96], strides = [1, 1, 1]} : vector<2x32x96xf32> to vector<1x32x96xf32>
    %518 = vector.shape_cast %517 : vector<1x32x96xf32> to vector<32x96xf32>
    %519 = vector.extract_strided_slice %512 {offsets = [0, 0, 0], sizes = [1, 1, 96], strides = [1, 1, 1]} : vector<2x1x96xf32> to vector<1x1x96xf32>
    %520 = vector.shape_cast %519 : vector<1x1x96xf32> to vector<1x96xf32>
    %cst_88 = arith.constant 0.000000e+00 : f32
    %521 = vector.broadcast %cst_88 : f32 to vector<2x32xf32>
    %522 = vector.extract_strided_slice %516 {offsets = [0, 0], sizes = [2, 96], strides = [1, 1]} : vector<16x96xf32> to vector<2x96xf32>
    %cst_89 = arith.constant dense<0.000000e+00> : vector<2x96xf32>
    %523 = tpu.matmul %521, %518, %cst_89 {dimension_numbers = #tpu.dot_dimension_numbers<[1], [0], [0], [1], [0, 0, 1, 1], [], []>} : vector<2x32xf32>, vector<32x96xf32>, vector<2x96xf32> -> vector<2x96xf32>
    %524 = vector.broadcast %520 : vector<1x96xf32> to vector<2x96xf32>
    %525 = arith.addf %523, %524 : vector<2x96xf32>
    %526 = vector.extract_strided_slice %522 {offsets = [0, 0], sizes = [2, 32], strides = [1, 1]} : vector<2x96xf32> to vector<2x32xf32>
    %527 = vector.extract_strided_slice %525 {offsets = [0, 0], sizes = [2, 32], strides = [1, 1]} : vector<2x96xf32> to vector<2x32xf32>
    %528 = arith.addf %526, %527 : vector<2x32xf32>
    %529 = arith.negf %528 : vector<2x32xf32>
    %530 = math.exp %529 : vector<2x32xf32>
    %cst_90 = arith.constant 1.000000e+00 : f32
    %531 = vector.broadcast %cst_90 : f32 to vector<2x32xf32>
    %532 = arith.addf %531, %530 : vector<2x32xf32>
    %533 = arith.divf %531, %532 : vector<2x32xf32>
    %534 = vector.extract_strided_slice %522 {offsets = [0, 32], sizes = [2, 32], strides = [1, 1]} : vector<2x96xf32> to vector<2x32xf32>
    %535 = vector.extract_strided_slice %525 {offsets = [0, 32], sizes = [2, 32], strides = [1, 1]} : vector<2x96xf32> to vector<2x32xf32>
    %536 = arith.addf %534, %535 : vector<2x32xf32>
    %537 = arith.negf %536 : vector<2x32xf32>
    %538 = math.exp %537 : vector<2x32xf32>
    %cst_91 = arith.constant 1.000000e+00 : f32
    %539 = vector.broadcast %cst_91 : f32 to vector<2x32xf32>
    %540 = arith.addf %539, %538 : vector<2x32xf32>
    %541 = arith.divf %539, %540 : vector<2x32xf32>
    %542 = vector.extract_strided_slice %522 {offsets = [0, 64], sizes = [2, 32], strides = [1, 1]} : vector<2x96xf32> to vector<2x32xf32>
    %543 = vector.extract_strided_slice %525 {offsets = [0, 64], sizes = [2, 32], strides = [1, 1]} : vector<2x96xf32> to vector<2x32xf32>
    %544 = arith.mulf %533, %543 : vector<2x32xf32>
    %545 = arith.addf %542, %544 : vector<2x32xf32>
    %546 = math.tanh %545 : vector<2x32xf32>
    %cst_92 = arith.constant 1.000000e+00 : f32
    %547 = vector.broadcast %cst_92 : f32 to vector<2x32xf32>
    %548 = arith.subf %547, %541 : vector<2x32xf32>
    %549 = arith.mulf %548, %546 : vector<2x32xf32>
    %550 = arith.mulf %541, %521 : vector<2x32xf32>
    %551 = arith.addf %549, %550 : vector<2x32xf32>
    %552 = vector.extract_strided_slice %516 {offsets = [2, 0], sizes = [2, 96], strides = [1, 1]} : vector<16x96xf32> to vector<2x96xf32>
    %cst_93 = arith.constant dense<0.000000e+00> : vector<2x96xf32>
    %553 = tpu.matmul %551, %518, %cst_93 {dimension_numbers = #tpu.dot_dimension_numbers<[1], [0], [0], [1], [0, 0, 1, 1], [], []>} : vector<2x32xf32>, vector<32x96xf32>, vector<2x96xf32> -> vector<2x96xf32>
    %554 = vector.broadcast %520 : vector<1x96xf32> to vector<2x96xf32>
    %555 = arith.addf %553, %554 : vector<2x96xf32>
    %556 = vector.extract_strided_slice %552 {offsets = [0, 0], sizes = [2, 32], strides = [1, 1]} : vector<2x96xf32> to vector<2x32xf32>
    %557 = vector.extract_strided_slice %555 {offsets = [0, 0], sizes = [2, 32], strides = [1, 1]} : vector<2x96xf32> to vector<2x32xf32>
    %558 = arith.addf %556, %557 : vector<2x32xf32>
    %559 = arith.negf %558 : vector<2x32xf32>
    %560 = math.exp %559 : vector<2x32xf32>
    %cst_94 = arith.constant 1.000000e+00 : f32
    %561 = vector.broadcast %cst_94 : f32 to vector<2x32xf32>
    %562 = arith.addf %561, %560 : vector<2x32xf32>
    %563 = arith.divf %561, %562 : vector<2x32xf32>
    %564 = vector.extract_strided_slice %552 {offsets = [0, 32], sizes = [2, 32], strides = [1, 1]} : vector<2x96xf32> to vector<2x32xf32>
    %565 = vector.extract_strided_slice %555 {offsets = [0, 32], sizes = [2, 32], strides = [1, 1]} : vector<2x96xf32> to vector<2x32xf32>
    %566 = arith.addf %564, %565 : vector<2x32xf32>
    %567 = arith.negf %566 : vector<2x32xf32>
    %568 = math.exp %567 : vector<2x32xf32>
    %cst_95 = arith.constant 1.000000e+00 : f32
    %569 = vector.broadcast %cst_95 : f32 to vector<2x32xf32>
    %570 = arith.addf %569, %568 : vector<2x32xf32>
    %571 = arith.divf %569, %570 : vector<2x32xf32>
    %572 = vector.extract_strided_slice %552 {offsets = [0, 64], sizes = [2, 32], strides = [1, 1]} : vector<2x96xf32> to vector<2x32xf32>
    %573 = vector.extract_strided_slice %555 {offsets = [0, 64], sizes = [2, 32], strides = [1, 1]} : vector<2x96xf32> to vector<2x32xf32>
    %574 = arith.mulf %563, %573 : vector<2x32xf32>
    %575 = arith.addf %572, %574 : vector<2x32xf32>
    %576 = math.tanh %575 : vector<2x32xf32>
    %cst_96 = arith.constant 1.000000e+00 : f32
    %577 = vector.broadcast %cst_96 : f32 to vector<2x32xf32>
    %578 = arith.subf %577, %571 : vector<2x32xf32>
    %579 = arith.mulf %578, %576 : vector<2x32xf32>
    %580 = arith.mulf %571, %551 : vector<2x32xf32>
    %581 = arith.addf %579, %580 : vector<2x32xf32>
    %582 = vector.extract_strided_slice %516 {offsets = [4, 0], sizes = [2, 96], strides = [1, 1]} : vector<16x96xf32> to vector<2x96xf32>
    %cst_97 = arith.constant dense<0.000000e+00> : vector<2x96xf32>
    %583 = tpu.matmul %581, %518, %cst_97 {dimension_numbers = #tpu.dot_dimension_numbers<[1], [0], [0], [1], [0, 0, 1, 1], [], []>} : vector<2x32xf32>, vector<32x96xf32>, vector<2x96xf32> -> vector<2x96xf32>
    %584 = vector.broadcast %520 : vector<1x96xf32> to vector<2x96xf32>
    %585 = arith.addf %583, %584 : vector<2x96xf32>
    %586 = vector.extract_strided_slice %582 {offsets = [0, 0], sizes = [2, 32], strides = [1, 1]} : vector<2x96xf32> to vector<2x32xf32>
    %587 = vector.extract_strided_slice %585 {offsets = [0, 0], sizes = [2, 32], strides = [1, 1]} : vector<2x96xf32> to vector<2x32xf32>
    %588 = arith.addf %586, %587 : vector<2x32xf32>
    %589 = arith.negf %588 : vector<2x32xf32>
    %590 = math.exp %589 : vector<2x32xf32>
    %cst_98 = arith.constant 1.000000e+00 : f32
    %591 = vector.broadcast %cst_98 : f32 to vector<2x32xf32>
    %592 = arith.addf %591, %590 : vector<2x32xf32>
    %593 = arith.divf %591, %592 : vector<2x32xf32>
    %594 = vector.extract_strided_slice %582 {offsets = [0, 32], sizes = [2, 32], strides = [1, 1]} : vector<2x96xf32> to vector<2x32xf32>
    %595 = vector.extract_strided_slice %585 {offsets = [0, 32], sizes = [2, 32], strides = [1, 1]} : vector<2x96xf32> to vector<2x32xf32>
    %596 = arith.addf %594, %595 : vector<2x32xf32>
    %597 = arith.negf %596 : vector<2x32xf32>
    %598 = math.exp %597 : vector<2x32xf32>
    %cst_99 = arith.constant 1.000000e+00 : f32
    %599 = vector.broadcast %cst_99 : f32 to vector<2x32xf32>
    %600 = arith.addf %599, %598 : vector<2x32xf32>
    %601 = arith.divf %599, %600 : vector<2x32xf32>
    %602 = vector.extract_strided_slice %582 {offsets = [0, 64], sizes = [2, 32], strides = [1, 1]} : vector<2x96xf32> to vector<2x32xf32>
    %603 = vector.extract_strided_slice %585 {offsets = [0, 64], sizes = [2, 32], strides = [1, 1]} : vector<2x96xf32> to vector<2x32xf32>
    %604 = arith.mulf %593, %603 : vector<2x32xf32>
    %605 = arith.addf %602, %604 : vector<2x32xf32>
    %606 = math.tanh %605 : vector<2x32xf32>
    %cst_100 = arith.constant 1.000000e+00 : f32
    %607 = vector.broadcast %cst_100 : f32 to vector<2x32xf32>
    %608 = arith.subf %607, %601 : vector<2x32xf32>
    %609 = arith.mulf %608, %606 : vector<2x32xf32>
    %610 = arith.mulf %601, %581 : vector<2x32xf32>
    %611 = arith.addf %609, %610 : vector<2x32xf32>
    %612 = vector.extract_strided_slice %516 {offsets = [6, 0], sizes = [2, 96], strides = [1, 1]} : vector<16x96xf32> to vector<2x96xf32>
    %cst_101 = arith.constant dense<0.000000e+00> : vector<2x96xf32>
    %613 = tpu.matmul %611, %518, %cst_101 {dimension_numbers = #tpu.dot_dimension_numbers<[1], [0], [0], [1], [0, 0, 1, 1], [], []>} : vector<2x32xf32>, vector<32x96xf32>, vector<2x96xf32> -> vector<2x96xf32>
    %614 = vector.broadcast %520 : vector<1x96xf32> to vector<2x96xf32>
    %615 = arith.addf %613, %614 : vector<2x96xf32>
    %616 = vector.extract_strided_slice %612 {offsets = [0, 0], sizes = [2, 32], strides = [1, 1]} : vector<2x96xf32> to vector<2x32xf32>
    %617 = vector.extract_strided_slice %615 {offsets = [0, 0], sizes = [2, 32], strides = [1, 1]} : vector<2x96xf32> to vector<2x32xf32>
    %618 = arith.addf %616, %617 : vector<2x32xf32>
    %619 = arith.negf %618 : vector<2x32xf32>
    %620 = math.exp %619 : vector<2x32xf32>
    %cst_102 = arith.constant 1.000000e+00 : f32
    %621 = vector.broadcast %cst_102 : f32 to vector<2x32xf32>
    %622 = arith.addf %621, %620 : vector<2x32xf32>
    %623 = arith.divf %621, %622 : vector<2x32xf32>
    %624 = vector.extract_strided_slice %612 {offsets = [0, 32], sizes = [2, 32], strides = [1, 1]} : vector<2x96xf32> to vector<2x32xf32>
    %625 = vector.extract_strided_slice %615 {offsets = [0, 32], sizes = [2, 32], strides = [1, 1]} : vector<2x96xf32> to vector<2x32xf32>
    %626 = arith.addf %624, %625 : vector<2x32xf32>
    %627 = arith.negf %626 : vector<2x32xf32>
    %628 = math.exp %627 : vector<2x32xf32>
    %cst_103 = arith.constant 1.000000e+00 : f32
    %629 = vector.broadcast %cst_103 : f32 to vector<2x32xf32>
    %630 = arith.addf %629, %628 : vector<2x32xf32>
    %631 = arith.divf %629, %630 : vector<2x32xf32>
    %632 = vector.extract_strided_slice %612 {offsets = [0, 64], sizes = [2, 32], strides = [1, 1]} : vector<2x96xf32> to vector<2x32xf32>
    %633 = vector.extract_strided_slice %615 {offsets = [0, 64], sizes = [2, 32], strides = [1, 1]} : vector<2x96xf32> to vector<2x32xf32>
    %634 = arith.mulf %623, %633 : vector<2x32xf32>
    %635 = arith.addf %632, %634 : vector<2x32xf32>
    %636 = math.tanh %635 : vector<2x32xf32>
    %cst_104 = arith.constant 1.000000e+00 : f32
    %637 = vector.broadcast %cst_104 : f32 to vector<2x32xf32>
    %638 = arith.subf %637, %631 : vector<2x32xf32>
    %639 = arith.mulf %638, %636 : vector<2x32xf32>
    %640 = arith.mulf %631, %611 : vector<2x32xf32>
    %641 = arith.addf %639, %640 : vector<2x32xf32>
    %642 = vector.extract_strided_slice %516 {offsets = [8, 0], sizes = [2, 96], strides = [1, 1]} : vector<16x96xf32> to vector<2x96xf32>
    %cst_105 = arith.constant dense<0.000000e+00> : vector<2x96xf32>
    %643 = tpu.matmul %641, %518, %cst_105 {dimension_numbers = #tpu.dot_dimension_numbers<[1], [0], [0], [1], [0, 0, 1, 1], [], []>} : vector<2x32xf32>, vector<32x96xf32>, vector<2x96xf32> -> vector<2x96xf32>
    %644 = vector.broadcast %520 : vector<1x96xf32> to vector<2x96xf32>
    %645 = arith.addf %643, %644 : vector<2x96xf32>
    %646 = vector.extract_strided_slice %642 {offsets = [0, 0], sizes = [2, 32], strides = [1, 1]} : vector<2x96xf32> to vector<2x32xf32>
    %647 = vector.extract_strided_slice %645 {offsets = [0, 0], sizes = [2, 32], strides = [1, 1]} : vector<2x96xf32> to vector<2x32xf32>
    %648 = arith.addf %646, %647 : vector<2x32xf32>
    %649 = arith.negf %648 : vector<2x32xf32>
    %650 = math.exp %649 : vector<2x32xf32>
    %cst_106 = arith.constant 1.000000e+00 : f32
    %651 = vector.broadcast %cst_106 : f32 to vector<2x32xf32>
    %652 = arith.addf %651, %650 : vector<2x32xf32>
    %653 = arith.divf %651, %652 : vector<2x32xf32>
    %654 = vector.extract_strided_slice %642 {offsets = [0, 32], sizes = [2, 32], strides = [1, 1]} : vector<2x96xf32> to vector<2x32xf32>
    %655 = vector.extract_strided_slice %645 {offsets = [0, 32], sizes = [2, 32], strides = [1, 1]} : vector<2x96xf32> to vector<2x32xf32>
    %656 = arith.addf %654, %655 : vector<2x32xf32>
    %657 = arith.negf %656 : vector<2x32xf32>
    %658 = math.exp %657 : vector<2x32xf32>
    %cst_107 = arith.constant 1.000000e+00 : f32
    %659 = vector.broadcast %cst_107 : f32 to vector<2x32xf32>
    %660 = arith.addf %659, %658 : vector<2x32xf32>
    %661 = arith.divf %659, %660 : vector<2x32xf32>
    %662 = vector.extract_strided_slice %642 {offsets = [0, 64], sizes = [2, 32], strides = [1, 1]} : vector<2x96xf32> to vector<2x32xf32>
    %663 = vector.extract_strided_slice %645 {offsets = [0, 64], sizes = [2, 32], strides = [1, 1]} : vector<2x96xf32> to vector<2x32xf32>
    %664 = arith.mulf %653, %663 : vector<2x32xf32>
    %665 = arith.addf %662, %664 : vector<2x32xf32>
    %666 = math.tanh %665 : vector<2x32xf32>
    %cst_108 = arith.constant 1.000000e+00 : f32
    %667 = vector.broadcast %cst_108 : f32 to vector<2x32xf32>
    %668 = arith.subf %667, %661 : vector<2x32xf32>
    %669 = arith.mulf %668, %666 : vector<2x32xf32>
    %670 = arith.mulf %661, %641 : vector<2x32xf32>
    %671 = arith.addf %669, %670 : vector<2x32xf32>
    %672 = vector.extract_strided_slice %516 {offsets = [10, 0], sizes = [2, 96], strides = [1, 1]} : vector<16x96xf32> to vector<2x96xf32>
    %cst_109 = arith.constant dense<0.000000e+00> : vector<2x96xf32>
    %673 = tpu.matmul %671, %518, %cst_109 {dimension_numbers = #tpu.dot_dimension_numbers<[1], [0], [0], [1], [0, 0, 1, 1], [], []>} : vector<2x32xf32>, vector<32x96xf32>, vector<2x96xf32> -> vector<2x96xf32>
    %674 = vector.broadcast %520 : vector<1x96xf32> to vector<2x96xf32>
    %675 = arith.addf %673, %674 : vector<2x96xf32>
    %676 = vector.extract_strided_slice %672 {offsets = [0, 0], sizes = [2, 32], strides = [1, 1]} : vector<2x96xf32> to vector<2x32xf32>
    %677 = vector.extract_strided_slice %675 {offsets = [0, 0], sizes = [2, 32], strides = [1, 1]} : vector<2x96xf32> to vector<2x32xf32>
    %678 = arith.addf %676, %677 : vector<2x32xf32>
    %679 = arith.negf %678 : vector<2x32xf32>
    %680 = math.exp %679 : vector<2x32xf32>
    %cst_110 = arith.constant 1.000000e+00 : f32
    %681 = vector.broadcast %cst_110 : f32 to vector<2x32xf32>
    %682 = arith.addf %681, %680 : vector<2x32xf32>
    %683 = arith.divf %681, %682 : vector<2x32xf32>
    %684 = vector.extract_strided_slice %672 {offsets = [0, 32], sizes = [2, 32], strides = [1, 1]} : vector<2x96xf32> to vector<2x32xf32>
    %685 = vector.extract_strided_slice %675 {offsets = [0, 32], sizes = [2, 32], strides = [1, 1]} : vector<2x96xf32> to vector<2x32xf32>
    %686 = arith.addf %684, %685 : vector<2x32xf32>
    %687 = arith.negf %686 : vector<2x32xf32>
    %688 = math.exp %687 : vector<2x32xf32>
    %cst_111 = arith.constant 1.000000e+00 : f32
    %689 = vector.broadcast %cst_111 : f32 to vector<2x32xf32>
    %690 = arith.addf %689, %688 : vector<2x32xf32>
    %691 = arith.divf %689, %690 : vector<2x32xf32>
    %692 = vector.extract_strided_slice %672 {offsets = [0, 64], sizes = [2, 32], strides = [1, 1]} : vector<2x96xf32> to vector<2x32xf32>
    %693 = vector.extract_strided_slice %675 {offsets = [0, 64], sizes = [2, 32], strides = [1, 1]} : vector<2x96xf32> to vector<2x32xf32>
    %694 = arith.mulf %683, %693 : vector<2x32xf32>
    %695 = arith.addf %692, %694 : vector<2x32xf32>
    %696 = math.tanh %695 : vector<2x32xf32>
    %cst_112 = arith.constant 1.000000e+00 : f32
    %697 = vector.broadcast %cst_112 : f32 to vector<2x32xf32>
    %698 = arith.subf %697, %691 : vector<2x32xf32>
    %699 = arith.mulf %698, %696 : vector<2x32xf32>
    %700 = arith.mulf %691, %671 : vector<2x32xf32>
    %701 = arith.addf %699, %700 : vector<2x32xf32>
    %702 = vector.extract_strided_slice %516 {offsets = [12, 0], sizes = [2, 96], strides = [1, 1]} : vector<16x96xf32> to vector<2x96xf32>
    %cst_113 = arith.constant dense<0.000000e+00> : vector<2x96xf32>
    %703 = tpu.matmul %701, %518, %cst_113 {dimension_numbers = #tpu.dot_dimension_numbers<[1], [0], [0], [1], [0, 0, 1, 1], [], []>} : vector<2x32xf32>, vector<32x96xf32>, vector<2x96xf32> -> vector<2x96xf32>
    %704 = vector.broadcast %520 : vector<1x96xf32> to vector<2x96xf32>
    %705 = arith.addf %703, %704 : vector<2x96xf32>
    %706 = vector.extract_strided_slice %702 {offsets = [0, 0], sizes = [2, 32], strides = [1, 1]} : vector<2x96xf32> to vector<2x32xf32>
    %707 = vector.extract_strided_slice %705 {offsets = [0, 0], sizes = [2, 32], strides = [1, 1]} : vector<2x96xf32> to vector<2x32xf32>
    %708 = arith.addf %706, %707 : vector<2x32xf32>
    %709 = arith.negf %708 : vector<2x32xf32>
    %710 = math.exp %709 : vector<2x32xf32>
    %cst_114 = arith.constant 1.000000e+00 : f32
    %711 = vector.broadcast %cst_114 : f32 to vector<2x32xf32>
    %712 = arith.addf %711, %710 : vector<2x32xf32>
    %713 = arith.divf %711, %712 : vector<2x32xf32>
    %714 = vector.extract_strided_slice %702 {offsets = [0, 32], sizes = [2, 32], strides = [1, 1]} : vector<2x96xf32> to vector<2x32xf32>
    %715 = vector.extract_strided_slice %705 {offsets = [0, 32], sizes = [2, 32], strides = [1, 1]} : vector<2x96xf32> to vector<2x32xf32>
    %716 = arith.addf %714, %715 : vector<2x32xf32>
    %717 = arith.negf %716 : vector<2x32xf32>
    %718 = math.exp %717 : vector<2x32xf32>
    %cst_115 = arith.constant 1.000000e+00 : f32
    %719 = vector.broadcast %cst_115 : f32 to vector<2x32xf32>
    %720 = arith.addf %719, %718 : vector<2x32xf32>
    %721 = arith.divf %719, %720 : vector<2x32xf32>
    %722 = vector.extract_strided_slice %702 {offsets = [0, 64], sizes = [2, 32], strides = [1, 1]} : vector<2x96xf32> to vector<2x32xf32>
    %723 = vector.extract_strided_slice %705 {offsets = [0, 64], sizes = [2, 32], strides = [1, 1]} : vector<2x96xf32> to vector<2x32xf32>
    %724 = arith.mulf %713, %723 : vector<2x32xf32>
    %725 = arith.addf %722, %724 : vector<2x32xf32>
    %726 = math.tanh %725 : vector<2x32xf32>
    %cst_116 = arith.constant 1.000000e+00 : f32
    %727 = vector.broadcast %cst_116 : f32 to vector<2x32xf32>
    %728 = arith.subf %727, %721 : vector<2x32xf32>
    %729 = arith.mulf %728, %726 : vector<2x32xf32>
    %730 = arith.mulf %721, %701 : vector<2x32xf32>
    %731 = arith.addf %729, %730 : vector<2x32xf32>
    %732 = vector.extract_strided_slice %516 {offsets = [14, 0], sizes = [2, 96], strides = [1, 1]} : vector<16x96xf32> to vector<2x96xf32>
    %cst_117 = arith.constant dense<0.000000e+00> : vector<2x96xf32>
    %733 = tpu.matmul %731, %518, %cst_117 {dimension_numbers = #tpu.dot_dimension_numbers<[1], [0], [0], [1], [0, 0, 1, 1], [], []>} : vector<2x32xf32>, vector<32x96xf32>, vector<2x96xf32> -> vector<2x96xf32>
    %734 = vector.broadcast %520 : vector<1x96xf32> to vector<2x96xf32>
    %735 = arith.addf %733, %734 : vector<2x96xf32>
    %736 = vector.extract_strided_slice %732 {offsets = [0, 0], sizes = [2, 32], strides = [1, 1]} : vector<2x96xf32> to vector<2x32xf32>
    %737 = vector.extract_strided_slice %735 {offsets = [0, 0], sizes = [2, 32], strides = [1, 1]} : vector<2x96xf32> to vector<2x32xf32>
    %738 = arith.addf %736, %737 : vector<2x32xf32>
    %739 = arith.negf %738 : vector<2x32xf32>
    %740 = math.exp %739 : vector<2x32xf32>
    %cst_118 = arith.constant 1.000000e+00 : f32
    %741 = vector.broadcast %cst_118 : f32 to vector<2x32xf32>
    %742 = arith.addf %741, %740 : vector<2x32xf32>
    %743 = arith.divf %741, %742 : vector<2x32xf32>
    %744 = vector.extract_strided_slice %732 {offsets = [0, 32], sizes = [2, 32], strides = [1, 1]} : vector<2x96xf32> to vector<2x32xf32>
    %745 = vector.extract_strided_slice %735 {offsets = [0, 32], sizes = [2, 32], strides = [1, 1]} : vector<2x96xf32> to vector<2x32xf32>
    %746 = arith.addf %744, %745 : vector<2x32xf32>
    %747 = arith.negf %746 : vector<2x32xf32>
    %748 = math.exp %747 : vector<2x32xf32>
    %cst_119 = arith.constant 1.000000e+00 : f32
    %749 = vector.broadcast %cst_119 : f32 to vector<2x32xf32>
    %750 = arith.addf %749, %748 : vector<2x32xf32>
    %751 = arith.divf %749, %750 : vector<2x32xf32>
    %752 = vector.extract_strided_slice %732 {offsets = [0, 64], sizes = [2, 32], strides = [1, 1]} : vector<2x96xf32> to vector<2x32xf32>
    %753 = vector.extract_strided_slice %735 {offsets = [0, 64], sizes = [2, 32], strides = [1, 1]} : vector<2x96xf32> to vector<2x32xf32>
    %754 = arith.mulf %743, %753 : vector<2x32xf32>
    %755 = arith.addf %752, %754 : vector<2x32xf32>
    %756 = math.tanh %755 : vector<2x32xf32>
    %cst_120 = arith.constant 1.000000e+00 : f32
    %757 = vector.broadcast %cst_120 : f32 to vector<2x32xf32>
    %758 = arith.subf %757, %751 : vector<2x32xf32>
    %759 = arith.mulf %758, %756 : vector<2x32xf32>
    %760 = arith.mulf %751, %731 : vector<2x32xf32>
    %761 = arith.addf %759, %760 : vector<2x32xf32>
    %762 = vector.extract_strided_slice %515 {offsets = [0, 96], sizes = [16, 96], strides = [1, 1]} : vector<16x192xf32> to vector<16x96xf32>
    %763 = vector.extract_strided_slice %510 {offsets = [1, 0, 0], sizes = [1, 32, 96], strides = [1, 1, 1]} : vector<2x32x96xf32> to vector<1x32x96xf32>
    %764 = vector.shape_cast %763 : vector<1x32x96xf32> to vector<32x96xf32>
    %765 = vector.extract_strided_slice %512 {offsets = [1, 0, 0], sizes = [1, 1, 96], strides = [1, 1, 1]} : vector<2x1x96xf32> to vector<1x1x96xf32>
    %766 = vector.shape_cast %765 : vector<1x1x96xf32> to vector<1x96xf32>
    %cst_121 = arith.constant 0.000000e+00 : f32
    %767 = vector.broadcast %cst_121 : f32 to vector<2x32xf32>
    %768 = vector.extract_strided_slice %762 {offsets = [14, 0], sizes = [2, 96], strides = [1, 1]} : vector<16x96xf32> to vector<2x96xf32>
    %cst_122 = arith.constant dense<0.000000e+00> : vector<2x96xf32>
    %769 = tpu.matmul %767, %764, %cst_122 {dimension_numbers = #tpu.dot_dimension_numbers<[1], [0], [0], [1], [0, 0, 1, 1], [], []>} : vector<2x32xf32>, vector<32x96xf32>, vector<2x96xf32> -> vector<2x96xf32>
    %770 = vector.broadcast %766 : vector<1x96xf32> to vector<2x96xf32>
    %771 = arith.addf %769, %770 : vector<2x96xf32>
    %772 = vector.extract_strided_slice %768 {offsets = [0, 0], sizes = [2, 32], strides = [1, 1]} : vector<2x96xf32> to vector<2x32xf32>
    %773 = vector.extract_strided_slice %771 {offsets = [0, 0], sizes = [2, 32], strides = [1, 1]} : vector<2x96xf32> to vector<2x32xf32>
    %774 = arith.addf %772, %773 : vector<2x32xf32>
    %775 = arith.negf %774 : vector<2x32xf32>
    %776 = math.exp %775 : vector<2x32xf32>
    %cst_123 = arith.constant 1.000000e+00 : f32
    %777 = vector.broadcast %cst_123 : f32 to vector<2x32xf32>
    %778 = arith.addf %777, %776 : vector<2x32xf32>
    %779 = arith.divf %777, %778 : vector<2x32xf32>
    %780 = vector.extract_strided_slice %768 {offsets = [0, 32], sizes = [2, 32], strides = [1, 1]} : vector<2x96xf32> to vector<2x32xf32>
    %781 = vector.extract_strided_slice %771 {offsets = [0, 32], sizes = [2, 32], strides = [1, 1]} : vector<2x96xf32> to vector<2x32xf32>
    %782 = arith.addf %780, %781 : vector<2x32xf32>
    %783 = arith.negf %782 : vector<2x32xf32>
    %784 = math.exp %783 : vector<2x32xf32>
    %cst_124 = arith.constant 1.000000e+00 : f32
    %785 = vector.broadcast %cst_124 : f32 to vector<2x32xf32>
    %786 = arith.addf %785, %784 : vector<2x32xf32>
    %787 = arith.divf %785, %786 : vector<2x32xf32>
    %788 = vector.extract_strided_slice %768 {offsets = [0, 64], sizes = [2, 32], strides = [1, 1]} : vector<2x96xf32> to vector<2x32xf32>
    %789 = vector.extract_strided_slice %771 {offsets = [0, 64], sizes = [2, 32], strides = [1, 1]} : vector<2x96xf32> to vector<2x32xf32>
    %790 = arith.mulf %779, %789 : vector<2x32xf32>
    %791 = arith.addf %788, %790 : vector<2x32xf32>
    %792 = math.tanh %791 : vector<2x32xf32>
    %cst_125 = arith.constant 1.000000e+00 : f32
    %793 = vector.broadcast %cst_125 : f32 to vector<2x32xf32>
    %794 = arith.subf %793, %787 : vector<2x32xf32>
    %795 = arith.mulf %794, %792 : vector<2x32xf32>
    %796 = arith.mulf %787, %767 : vector<2x32xf32>
    %797 = arith.addf %795, %796 : vector<2x32xf32>
    %798 = vector.extract_strided_slice %762 {offsets = [12, 0], sizes = [2, 96], strides = [1, 1]} : vector<16x96xf32> to vector<2x96xf32>
    %cst_126 = arith.constant dense<0.000000e+00> : vector<2x96xf32>
    %799 = tpu.matmul %797, %764, %cst_126 {dimension_numbers = #tpu.dot_dimension_numbers<[1], [0], [0], [1], [0, 0, 1, 1], [], []>} : vector<2x32xf32>, vector<32x96xf32>, vector<2x96xf32> -> vector<2x96xf32>
    %800 = vector.broadcast %766 : vector<1x96xf32> to vector<2x96xf32>
    %801 = arith.addf %799, %800 : vector<2x96xf32>
    %802 = vector.extract_strided_slice %798 {offsets = [0, 0], sizes = [2, 32], strides = [1, 1]} : vector<2x96xf32> to vector<2x32xf32>
    %803 = vector.extract_strided_slice %801 {offsets = [0, 0], sizes = [2, 32], strides = [1, 1]} : vector<2x96xf32> to vector<2x32xf32>
    %804 = arith.addf %802, %803 : vector<2x32xf32>
    %805 = arith.negf %804 : vector<2x32xf32>
    %806 = math.exp %805 : vector<2x32xf32>
    %cst_127 = arith.constant 1.000000e+00 : f32
    %807 = vector.broadcast %cst_127 : f32 to vector<2x32xf32>
    %808 = arith.addf %807, %806 : vector<2x32xf32>
    %809 = arith.divf %807, %808 : vector<2x32xf32>
    %810 = vector.extract_strided_slice %798 {offsets = [0, 32], sizes = [2, 32], strides = [1, 1]} : vector<2x96xf32> to vector<2x32xf32>
    %811 = vector.extract_strided_slice %801 {offsets = [0, 32], sizes = [2, 32], strides = [1, 1]} : vector<2x96xf32> to vector<2x32xf32>
    %812 = arith.addf %810, %811 : vector<2x32xf32>
    %813 = arith.negf %812 : vector<2x32xf32>
    %814 = math.exp %813 : vector<2x32xf32>
    %cst_128 = arith.constant 1.000000e+00 : f32
    %815 = vector.broadcast %cst_128 : f32 to vector<2x32xf32>
    %816 = arith.addf %815, %814 : vector<2x32xf32>
    %817 = arith.divf %815, %816 : vector<2x32xf32>
    %818 = vector.extract_strided_slice %798 {offsets = [0, 64], sizes = [2, 32], strides = [1, 1]} : vector<2x96xf32> to vector<2x32xf32>
    %819 = vector.extract_strided_slice %801 {offsets = [0, 64], sizes = [2, 32], strides = [1, 1]} : vector<2x96xf32> to vector<2x32xf32>
    %820 = arith.mulf %809, %819 : vector<2x32xf32>
    %821 = arith.addf %818, %820 : vector<2x32xf32>
    %822 = math.tanh %821 : vector<2x32xf32>
    %cst_129 = arith.constant 1.000000e+00 : f32
    %823 = vector.broadcast %cst_129 : f32 to vector<2x32xf32>
    %824 = arith.subf %823, %817 : vector<2x32xf32>
    %825 = arith.mulf %824, %822 : vector<2x32xf32>
    %826 = arith.mulf %817, %797 : vector<2x32xf32>
    %827 = arith.addf %825, %826 : vector<2x32xf32>
    %828 = vector.extract_strided_slice %762 {offsets = [10, 0], sizes = [2, 96], strides = [1, 1]} : vector<16x96xf32> to vector<2x96xf32>
    %cst_130 = arith.constant dense<0.000000e+00> : vector<2x96xf32>
    %829 = tpu.matmul %827, %764, %cst_130 {dimension_numbers = #tpu.dot_dimension_numbers<[1], [0], [0], [1], [0, 0, 1, 1], [], []>} : vector<2x32xf32>, vector<32x96xf32>, vector<2x96xf32> -> vector<2x96xf32>
    %830 = vector.broadcast %766 : vector<1x96xf32> to vector<2x96xf32>
    %831 = arith.addf %829, %830 : vector<2x96xf32>
    %832 = vector.extract_strided_slice %828 {offsets = [0, 0], sizes = [2, 32], strides = [1, 1]} : vector<2x96xf32> to vector<2x32xf32>
    %833 = vector.extract_strided_slice %831 {offsets = [0, 0], sizes = [2, 32], strides = [1, 1]} : vector<2x96xf32> to vector<2x32xf32>
    %834 = arith.addf %832, %833 : vector<2x32xf32>
    %835 = arith.negf %834 : vector<2x32xf32>
    %836 = math.exp %835 : vector<2x32xf32>
    %cst_131 = arith.constant 1.000000e+00 : f32
    %837 = vector.broadcast %cst_131 : f32 to vector<2x32xf32>
    %838 = arith.addf %837, %836 : vector<2x32xf32>
    %839 = arith.divf %837, %838 : vector<2x32xf32>
    %840 = vector.extract_strided_slice %828 {offsets = [0, 32], sizes = [2, 32], strides = [1, 1]} : vector<2x96xf32> to vector<2x32xf32>
    %841 = vector.extract_strided_slice %831 {offsets = [0, 32], sizes = [2, 32], strides = [1, 1]} : vector<2x96xf32> to vector<2x32xf32>
    %842 = arith.addf %840, %841 : vector<2x32xf32>
    %843 = arith.negf %842 : vector<2x32xf32>
    %844 = math.exp %843 : vector<2x32xf32>
    %cst_132 = arith.constant 1.000000e+00 : f32
    %845 = vector.broadcast %cst_132 : f32 to vector<2x32xf32>
    %846 = arith.addf %845, %844 : vector<2x32xf32>
    %847 = arith.divf %845, %846 : vector<2x32xf32>
    %848 = vector.extract_strided_slice %828 {offsets = [0, 64], sizes = [2, 32], strides = [1, 1]} : vector<2x96xf32> to vector<2x32xf32>
    %849 = vector.extract_strided_slice %831 {offsets = [0, 64], sizes = [2, 32], strides = [1, 1]} : vector<2x96xf32> to vector<2x32xf32>
    %850 = arith.mulf %839, %849 : vector<2x32xf32>
    %851 = arith.addf %848, %850 : vector<2x32xf32>
    %852 = math.tanh %851 : vector<2x32xf32>
    %cst_133 = arith.constant 1.000000e+00 : f32
    %853 = vector.broadcast %cst_133 : f32 to vector<2x32xf32>
    %854 = arith.subf %853, %847 : vector<2x32xf32>
    %855 = arith.mulf %854, %852 : vector<2x32xf32>
    %856 = arith.mulf %847, %827 : vector<2x32xf32>
    %857 = arith.addf %855, %856 : vector<2x32xf32>
    %858 = vector.extract_strided_slice %762 {offsets = [8, 0], sizes = [2, 96], strides = [1, 1]} : vector<16x96xf32> to vector<2x96xf32>
    %cst_134 = arith.constant dense<0.000000e+00> : vector<2x96xf32>
    %859 = tpu.matmul %857, %764, %cst_134 {dimension_numbers = #tpu.dot_dimension_numbers<[1], [0], [0], [1], [0, 0, 1, 1], [], []>} : vector<2x32xf32>, vector<32x96xf32>, vector<2x96xf32> -> vector<2x96xf32>
    %860 = vector.broadcast %766 : vector<1x96xf32> to vector<2x96xf32>
    %861 = arith.addf %859, %860 : vector<2x96xf32>
    %862 = vector.extract_strided_slice %858 {offsets = [0, 0], sizes = [2, 32], strides = [1, 1]} : vector<2x96xf32> to vector<2x32xf32>
    %863 = vector.extract_strided_slice %861 {offsets = [0, 0], sizes = [2, 32], strides = [1, 1]} : vector<2x96xf32> to vector<2x32xf32>
    %864 = arith.addf %862, %863 : vector<2x32xf32>
    %865 = arith.negf %864 : vector<2x32xf32>
    %866 = math.exp %865 : vector<2x32xf32>
    %cst_135 = arith.constant 1.000000e+00 : f32
    %867 = vector.broadcast %cst_135 : f32 to vector<2x32xf32>
    %868 = arith.addf %867, %866 : vector<2x32xf32>
    %869 = arith.divf %867, %868 : vector<2x32xf32>
    %870 = vector.extract_strided_slice %858 {offsets = [0, 32], sizes = [2, 32], strides = [1, 1]} : vector<2x96xf32> to vector<2x32xf32>
    %871 = vector.extract_strided_slice %861 {offsets = [0, 32], sizes = [2, 32], strides = [1, 1]} : vector<2x96xf32> to vector<2x32xf32>
    %872 = arith.addf %870, %871 : vector<2x32xf32>
    %873 = arith.negf %872 : vector<2x32xf32>
    %874 = math.exp %873 : vector<2x32xf32>
    %cst_136 = arith.constant 1.000000e+00 : f32
    %875 = vector.broadcast %cst_136 : f32 to vector<2x32xf32>
    %876 = arith.addf %875, %874 : vector<2x32xf32>
    %877 = arith.divf %875, %876 : vector<2x32xf32>
    %878 = vector.extract_strided_slice %858 {offsets = [0, 64], sizes = [2, 32], strides = [1, 1]} : vector<2x96xf32> to vector<2x32xf32>
    %879 = vector.extract_strided_slice %861 {offsets = [0, 64], sizes = [2, 32], strides = [1, 1]} : vector<2x96xf32> to vector<2x32xf32>
    %880 = arith.mulf %869, %879 : vector<2x32xf32>
    %881 = arith.addf %878, %880 : vector<2x32xf32>
    %882 = math.tanh %881 : vector<2x32xf32>
    %cst_137 = arith.constant 1.000000e+00 : f32
    %883 = vector.broadcast %cst_137 : f32 to vector<2x32xf32>
    %884 = arith.subf %883, %877 : vector<2x32xf32>
    %885 = arith.mulf %884, %882 : vector<2x32xf32>
    %886 = arith.mulf %877, %857 : vector<2x32xf32>
    %887 = arith.addf %885, %886 : vector<2x32xf32>
    %888 = vector.extract_strided_slice %762 {offsets = [6, 0], sizes = [2, 96], strides = [1, 1]} : vector<16x96xf32> to vector<2x96xf32>
    %cst_138 = arith.constant dense<0.000000e+00> : vector<2x96xf32>
    %889 = tpu.matmul %887, %764, %cst_138 {dimension_numbers = #tpu.dot_dimension_numbers<[1], [0], [0], [1], [0, 0, 1, 1], [], []>} : vector<2x32xf32>, vector<32x96xf32>, vector<2x96xf32> -> vector<2x96xf32>
    %890 = vector.broadcast %766 : vector<1x96xf32> to vector<2x96xf32>
    %891 = arith.addf %889, %890 : vector<2x96xf32>
    %892 = vector.extract_strided_slice %888 {offsets = [0, 0], sizes = [2, 32], strides = [1, 1]} : vector<2x96xf32> to vector<2x32xf32>
    %893 = vector.extract_strided_slice %891 {offsets = [0, 0], sizes = [2, 32], strides = [1, 1]} : vector<2x96xf32> to vector<2x32xf32>
    %894 = arith.addf %892, %893 : vector<2x32xf32>
    %895 = arith.negf %894 : vector<2x32xf32>
    %896 = math.exp %895 : vector<2x32xf32>
    %cst_139 = arith.constant 1.000000e+00 : f32
    %897 = vector.broadcast %cst_139 : f32 to vector<2x32xf32>
    %898 = arith.addf %897, %896 : vector<2x32xf32>
    %899 = arith.divf %897, %898 : vector<2x32xf32>
    %900 = vector.extract_strided_slice %888 {offsets = [0, 32], sizes = [2, 32], strides = [1, 1]} : vector<2x96xf32> to vector<2x32xf32>
    %901 = vector.extract_strided_slice %891 {offsets = [0, 32], sizes = [2, 32], strides = [1, 1]} : vector<2x96xf32> to vector<2x32xf32>
    %902 = arith.addf %900, %901 : vector<2x32xf32>
    %903 = arith.negf %902 : vector<2x32xf32>
    %904 = math.exp %903 : vector<2x32xf32>
    %cst_140 = arith.constant 1.000000e+00 : f32
    %905 = vector.broadcast %cst_140 : f32 to vector<2x32xf32>
    %906 = arith.addf %905, %904 : vector<2x32xf32>
    %907 = arith.divf %905, %906 : vector<2x32xf32>
    %908 = vector.extract_strided_slice %888 {offsets = [0, 64], sizes = [2, 32], strides = [1, 1]} : vector<2x96xf32> to vector<2x32xf32>
    %909 = vector.extract_strided_slice %891 {offsets = [0, 64], sizes = [2, 32], strides = [1, 1]} : vector<2x96xf32> to vector<2x32xf32>
    %910 = arith.mulf %899, %909 : vector<2x32xf32>
    %911 = arith.addf %908, %910 : vector<2x32xf32>
    %912 = math.tanh %911 : vector<2x32xf32>
    %cst_141 = arith.constant 1.000000e+00 : f32
    %913 = vector.broadcast %cst_141 : f32 to vector<2x32xf32>
    %914 = arith.subf %913, %907 : vector<2x32xf32>
    %915 = arith.mulf %914, %912 : vector<2x32xf32>
    %916 = arith.mulf %907, %887 : vector<2x32xf32>
    %917 = arith.addf %915, %916 : vector<2x32xf32>
    %918 = vector.extract_strided_slice %762 {offsets = [4, 0], sizes = [2, 96], strides = [1, 1]} : vector<16x96xf32> to vector<2x96xf32>
    %cst_142 = arith.constant dense<0.000000e+00> : vector<2x96xf32>
    %919 = tpu.matmul %917, %764, %cst_142 {dimension_numbers = #tpu.dot_dimension_numbers<[1], [0], [0], [1], [0, 0, 1, 1], [], []>} : vector<2x32xf32>, vector<32x96xf32>, vector<2x96xf32> -> vector<2x96xf32>
    %920 = vector.broadcast %766 : vector<1x96xf32> to vector<2x96xf32>
    %921 = arith.addf %919, %920 : vector<2x96xf32>
    %922 = vector.extract_strided_slice %918 {offsets = [0, 0], sizes = [2, 32], strides = [1, 1]} : vector<2x96xf32> to vector<2x32xf32>
    %923 = vector.extract_strided_slice %921 {offsets = [0, 0], sizes = [2, 32], strides = [1, 1]} : vector<2x96xf32> to vector<2x32xf32>
    %924 = arith.addf %922, %923 : vector<2x32xf32>
    %925 = arith.negf %924 : vector<2x32xf32>
    %926 = math.exp %925 : vector<2x32xf32>
    %cst_143 = arith.constant 1.000000e+00 : f32
    %927 = vector.broadcast %cst_143 : f32 to vector<2x32xf32>
    %928 = arith.addf %927, %926 : vector<2x32xf32>
    %929 = arith.divf %927, %928 : vector<2x32xf32>
    %930 = vector.extract_strided_slice %918 {offsets = [0, 32], sizes = [2, 32], strides = [1, 1]} : vector<2x96xf32> to vector<2x32xf32>
    %931 = vector.extract_strided_slice %921 {offsets = [0, 32], sizes = [2, 32], strides = [1, 1]} : vector<2x96xf32> to vector<2x32xf32>
    %932 = arith.addf %930, %931 : vector<2x32xf32>
    %933 = arith.negf %932 : vector<2x32xf32>
    %934 = math.exp %933 : vector<2x32xf32>
    %cst_144 = arith.constant 1.000000e+00 : f32
    %935 = vector.broadcast %cst_144 : f32 to vector<2x32xf32>
    %936 = arith.addf %935, %934 : vector<2x32xf32>
    %937 = arith.divf %935, %936 : vector<2x32xf32>
    %938 = vector.extract_strided_slice %918 {offsets = [0, 64], sizes = [2, 32], strides = [1, 1]} : vector<2x96xf32> to vector<2x32xf32>
    %939 = vector.extract_strided_slice %921 {offsets = [0, 64], sizes = [2, 32], strides = [1, 1]} : vector<2x96xf32> to vector<2x32xf32>
    %940 = arith.mulf %929, %939 : vector<2x32xf32>
    %941 = arith.addf %938, %940 : vector<2x32xf32>
    %942 = math.tanh %941 : vector<2x32xf32>
    %cst_145 = arith.constant 1.000000e+00 : f32
    %943 = vector.broadcast %cst_145 : f32 to vector<2x32xf32>
    %944 = arith.subf %943, %937 : vector<2x32xf32>
    %945 = arith.mulf %944, %942 : vector<2x32xf32>
    %946 = arith.mulf %937, %917 : vector<2x32xf32>
    %947 = arith.addf %945, %946 : vector<2x32xf32>
    %948 = vector.extract_strided_slice %762 {offsets = [2, 0], sizes = [2, 96], strides = [1, 1]} : vector<16x96xf32> to vector<2x96xf32>
    %cst_146 = arith.constant dense<0.000000e+00> : vector<2x96xf32>
    %949 = tpu.matmul %947, %764, %cst_146 {dimension_numbers = #tpu.dot_dimension_numbers<[1], [0], [0], [1], [0, 0, 1, 1], [], []>} : vector<2x32xf32>, vector<32x96xf32>, vector<2x96xf32> -> vector<2x96xf32>
    %950 = vector.broadcast %766 : vector<1x96xf32> to vector<2x96xf32>
    %951 = arith.addf %949, %950 : vector<2x96xf32>
    %952 = vector.extract_strided_slice %948 {offsets = [0, 0], sizes = [2, 32], strides = [1, 1]} : vector<2x96xf32> to vector<2x32xf32>
    %953 = vector.extract_strided_slice %951 {offsets = [0, 0], sizes = [2, 32], strides = [1, 1]} : vector<2x96xf32> to vector<2x32xf32>
    %954 = arith.addf %952, %953 : vector<2x32xf32>
    %955 = arith.negf %954 : vector<2x32xf32>
    %956 = math.exp %955 : vector<2x32xf32>
    %cst_147 = arith.constant 1.000000e+00 : f32
    %957 = vector.broadcast %cst_147 : f32 to vector<2x32xf32>
    %958 = arith.addf %957, %956 : vector<2x32xf32>
    %959 = arith.divf %957, %958 : vector<2x32xf32>
    %960 = vector.extract_strided_slice %948 {offsets = [0, 32], sizes = [2, 32], strides = [1, 1]} : vector<2x96xf32> to vector<2x32xf32>
    %961 = vector.extract_strided_slice %951 {offsets = [0, 32], sizes = [2, 32], strides = [1, 1]} : vector<2x96xf32> to vector<2x32xf32>
    %962 = arith.addf %960, %961 : vector<2x32xf32>
    %963 = arith.negf %962 : vector<2x32xf32>
    %964 = math.exp %963 : vector<2x32xf32>
    %cst_148 = arith.constant 1.000000e+00 : f32
    %965 = vector.broadcast %cst_148 : f32 to vector<2x32xf32>
    %966 = arith.addf %965, %964 : vector<2x32xf32>
    %967 = arith.divf %965, %966 : vector<2x32xf32>
    %968 = vector.extract_strided_slice %948 {offsets = [0, 64], sizes = [2, 32], strides = [1, 1]} : vector<2x96xf32> to vector<2x32xf32>
    %969 = vector.extract_strided_slice %951 {offsets = [0, 64], sizes = [2, 32], strides = [1, 1]} : vector<2x96xf32> to vector<2x32xf32>
    %970 = arith.mulf %959, %969 : vector<2x32xf32>
    %971 = arith.addf %968, %970 : vector<2x32xf32>
    %972 = math.tanh %971 : vector<2x32xf32>
    %cst_149 = arith.constant 1.000000e+00 : f32
    %973 = vector.broadcast %cst_149 : f32 to vector<2x32xf32>
    %974 = arith.subf %973, %967 : vector<2x32xf32>
    %975 = arith.mulf %974, %972 : vector<2x32xf32>
    %976 = arith.mulf %967, %947 : vector<2x32xf32>
    %977 = arith.addf %975, %976 : vector<2x32xf32>
    %978 = vector.extract_strided_slice %762 {offsets = [0, 0], sizes = [2, 96], strides = [1, 1]} : vector<16x96xf32> to vector<2x96xf32>
    %cst_150 = arith.constant dense<0.000000e+00> : vector<2x96xf32>
    %979 = tpu.matmul %977, %764, %cst_150 {dimension_numbers = #tpu.dot_dimension_numbers<[1], [0], [0], [1], [0, 0, 1, 1], [], []>} : vector<2x32xf32>, vector<32x96xf32>, vector<2x96xf32> -> vector<2x96xf32>
    %980 = vector.broadcast %766 : vector<1x96xf32> to vector<2x96xf32>
    %981 = arith.addf %979, %980 : vector<2x96xf32>
    %982 = vector.extract_strided_slice %978 {offsets = [0, 0], sizes = [2, 32], strides = [1, 1]} : vector<2x96xf32> to vector<2x32xf32>
    %983 = vector.extract_strided_slice %981 {offsets = [0, 0], sizes = [2, 32], strides = [1, 1]} : vector<2x96xf32> to vector<2x32xf32>
    %984 = arith.addf %982, %983 : vector<2x32xf32>
    %985 = arith.negf %984 : vector<2x32xf32>
    %986 = math.exp %985 : vector<2x32xf32>
    %cst_151 = arith.constant 1.000000e+00 : f32
    %987 = vector.broadcast %cst_151 : f32 to vector<2x32xf32>
    %988 = arith.addf %987, %986 : vector<2x32xf32>
    %989 = arith.divf %987, %988 : vector<2x32xf32>
    %990 = vector.extract_strided_slice %978 {offsets = [0, 32], sizes = [2, 32], strides = [1, 1]} : vector<2x96xf32> to vector<2x32xf32>
    %991 = vector.extract_strided_slice %981 {offsets = [0, 32], sizes = [2, 32], strides = [1, 1]} : vector<2x96xf32> to vector<2x32xf32>
    %992 = arith.addf %990, %991 : vector<2x32xf32>
    %993 = arith.negf %992 : vector<2x32xf32>
    %994 = math.exp %993 : vector<2x32xf32>
    %cst_152 = arith.constant 1.000000e+00 : f32
    %995 = vector.broadcast %cst_152 : f32 to vector<2x32xf32>
    %996 = arith.addf %995, %994 : vector<2x32xf32>
    %997 = arith.divf %995, %996 : vector<2x32xf32>
    %998 = vector.extract_strided_slice %978 {offsets = [0, 64], sizes = [2, 32], strides = [1, 1]} : vector<2x96xf32> to vector<2x32xf32>
    %999 = vector.extract_strided_slice %981 {offsets = [0, 64], sizes = [2, 32], strides = [1, 1]} : vector<2x96xf32> to vector<2x32xf32>
    %1000 = arith.mulf %989, %999 : vector<2x32xf32>
    %1001 = arith.addf %998, %1000 : vector<2x32xf32>
    %1002 = math.tanh %1001 : vector<2x32xf32>
    %cst_153 = arith.constant 1.000000e+00 : f32
    %1003 = vector.broadcast %cst_153 : f32 to vector<2x32xf32>
    %1004 = arith.subf %1003, %997 : vector<2x32xf32>
    %1005 = arith.mulf %1004, %1002 : vector<2x32xf32>
    %1006 = arith.mulf %997, %977 : vector<2x32xf32>
    %1007 = arith.addf %1005, %1006 : vector<2x32xf32>
    %1008 = tpu.concatenate %253, %499 in 1 : vector<2x32xf32>, vector<2x32xf32> -> vector<2x64xf32>
    %1009 = tpu.concatenate %761, %1007 in 1 : vector<2x32xf32>, vector<2x32xf32> -> vector<2x64xf32>
    %c0_154 = arith.constant 0 : index
    %c0_155 = arith.constant 0 : index
    %1010 = vector.load %arg11[%c0_154, %c0_155] : memref<14x192xf32, #tpu.memory_space<vmem>>, vector<14x192xf32>
    %c0_156 = arith.constant 0 : index
    %c0_157 = arith.constant 0 : index
    %1011 = vector.load %arg12[%c0_156, %c0_157] : memref<64x192xf32, #tpu.memory_space<vmem>>, vector<64x192xf32>
    %c0_158 = arith.constant 0 : index
    %c0_159 = arith.constant 0 : index
    %1012 = vector.load %arg13[%c0_158, %c0_159] : memref<1x192xf32, #tpu.memory_space<vmem>>, vector<1x192xf32>
    %c0_160 = arith.constant 0 : index
    %c0_161 = arith.constant 0 : index
    %1013 = vector.load %arg14[%c0_160, %c0_161] : memref<1x192xf32, #tpu.memory_space<vmem>>, vector<1x192xf32>
    %c0_162 = arith.constant 0 : index
    %c0_163 = arith.constant 0 : index
    %1014 = vector.load %arg15[%c0_162, %c0_163] : memref<64x192xf32, #tpu.memory_space<vmem>>, vector<64x192xf32>
    %c0_164 = arith.constant 0 : index
    %c0_165 = arith.constant 0 : index
    %1015 = vector.load %arg16[%c0_164, %c0_165] : memref<64x192xf32, #tpu.memory_space<vmem>>, vector<64x192xf32>
    %c0_166 = arith.constant 0 : index
    %c0_167 = arith.constant 0 : index
    %1016 = vector.load %arg17[%c0_166, %c0_167] : memref<1x192xf32, #tpu.memory_space<vmem>>, vector<1x192xf32>
    %c0_168 = arith.constant 0 : index
    %c0_169 = arith.constant 0 : index
    %1017 = vector.load %arg18[%c0_168, %c0_169] : memref<1x192xf32, #tpu.memory_space<vmem>>, vector<1x192xf32>
    %c0_170 = arith.constant 0 : index
    %c0_171 = arith.constant 0 : index
    %1018 = vector.load %arg1[%c0_170, %c0_171] : memref<2x14xf32, #tpu.memory_space<vmem>>, vector<2x14xf32>
    %cst_172 = arith.constant dense<0.000000e+00> : vector<2x192xf32>
    %1019 = tpu.matmul %1018, %1010, %cst_172 {dimension_numbers = #tpu.dot_dimension_numbers<[1], [0], [0], [1], [0, 0, 1, 1], [], []>} : vector<2x14xf32>, vector<14x192xf32>, vector<2x192xf32> -> vector<2x192xf32>
    %1020 = vector.broadcast %1012 : vector<1x192xf32> to vector<2x192xf32>
    %1021 = arith.addf %1019, %1020 : vector<2x192xf32>
    %c0_173 = arith.constant 0 : index
    %c0_174 = arith.constant 0 : index
    %1022 = vector.load %arg2[%c0_173, %c0_174] : memref<10x14xf32, #tpu.memory_space<vmem>>, vector<10x14xf32>
    %cst_175 = arith.constant dense<0.000000e+00> : vector<10x192xf32>
    %1023 = tpu.matmul %1022, %1010, %cst_175 {dimension_numbers = #tpu.dot_dimension_numbers<[1], [0], [0], [1], [0, 0, 1, 1], [], []>} : vector<10x14xf32>, vector<14x192xf32>, vector<10x192xf32> -> vector<10x192xf32>
    %1024 = vector.broadcast %1012 : vector<1x192xf32> to vector<10x192xf32>
    %1025 = arith.addf %1023, %1024 : vector<10x192xf32>
    %cst_176 = arith.constant dense<0.000000e+00> : vector<2x192xf32>
    %1026 = tpu.matmul %1008, %1011, %cst_176 {dimension_numbers = #tpu.dot_dimension_numbers<[1], [0], [0], [1], [0, 0, 1, 1], [], []>} : vector<2x64xf32>, vector<64x192xf32>, vector<2x192xf32> -> vector<2x192xf32>
    %1027 = vector.broadcast %1013 : vector<1x192xf32> to vector<2x192xf32>
    %1028 = arith.addf %1026, %1027 : vector<2x192xf32>
    %1029 = vector.extract_strided_slice %1021 {offsets = [0, 0], sizes = [2, 64], strides = [1, 1]} : vector<2x192xf32> to vector<2x64xf32>
    %1030 = vector.extract_strided_slice %1028 {offsets = [0, 0], sizes = [2, 64], strides = [1, 1]} : vector<2x192xf32> to vector<2x64xf32>
    %1031 = arith.addf %1029, %1030 : vector<2x64xf32>
    %1032 = arith.negf %1031 : vector<2x64xf32>
    %1033 = math.exp %1032 : vector<2x64xf32>
    %cst_177 = arith.constant 1.000000e+00 : f32
    %1034 = vector.broadcast %cst_177 : f32 to vector<2x64xf32>
    %1035 = arith.addf %1034, %1033 : vector<2x64xf32>
    %1036 = arith.divf %1034, %1035 : vector<2x64xf32>
    %1037 = vector.extract_strided_slice %1021 {offsets = [0, 64], sizes = [2, 64], strides = [1, 1]} : vector<2x192xf32> to vector<2x64xf32>
    %1038 = vector.extract_strided_slice %1028 {offsets = [0, 64], sizes = [2, 64], strides = [1, 1]} : vector<2x192xf32> to vector<2x64xf32>
    %1039 = arith.addf %1037, %1038 : vector<2x64xf32>
    %1040 = arith.negf %1039 : vector<2x64xf32>
    %1041 = math.exp %1040 : vector<2x64xf32>
    %cst_178 = arith.constant 1.000000e+00 : f32
    %1042 = vector.broadcast %cst_178 : f32 to vector<2x64xf32>
    %1043 = arith.addf %1042, %1041 : vector<2x64xf32>
    %1044 = arith.divf %1042, %1043 : vector<2x64xf32>
    %1045 = vector.extract_strided_slice %1021 {offsets = [0, 128], sizes = [2, 64], strides = [1, 1]} : vector<2x192xf32> to vector<2x64xf32>
    %1046 = vector.extract_strided_slice %1028 {offsets = [0, 128], sizes = [2, 64], strides = [1, 1]} : vector<2x192xf32> to vector<2x64xf32>
    %1047 = arith.mulf %1036, %1046 : vector<2x64xf32>
    %1048 = arith.addf %1045, %1047 : vector<2x64xf32>
    %1049 = math.tanh %1048 : vector<2x64xf32>
    %cst_179 = arith.constant 1.000000e+00 : f32
    %1050 = vector.broadcast %cst_179 : f32 to vector<2x64xf32>
    %1051 = arith.subf %1050, %1044 : vector<2x64xf32>
    %1052 = arith.mulf %1051, %1049 : vector<2x64xf32>
    %1053 = arith.mulf %1044, %1008 : vector<2x64xf32>
    %1054 = arith.addf %1052, %1053 : vector<2x64xf32>
    %cst_180 = arith.constant dense<0.000000e+00> : vector<2x192xf32>
    %1055 = tpu.matmul %1054, %1014, %cst_180 {dimension_numbers = #tpu.dot_dimension_numbers<[1], [0], [0], [1], [0, 0, 1, 1], [], []>} : vector<2x64xf32>, vector<64x192xf32>, vector<2x192xf32> -> vector<2x192xf32>
    %1056 = vector.broadcast %1016 : vector<1x192xf32> to vector<2x192xf32>
    %1057 = arith.addf %1055, %1056 : vector<2x192xf32>
    %cst_181 = arith.constant dense<0.000000e+00> : vector<2x192xf32>
    %1058 = tpu.matmul %1009, %1015, %cst_181 {dimension_numbers = #tpu.dot_dimension_numbers<[1], [0], [0], [1], [0, 0, 1, 1], [], []>} : vector<2x64xf32>, vector<64x192xf32>, vector<2x192xf32> -> vector<2x192xf32>
    %1059 = vector.broadcast %1017 : vector<1x192xf32> to vector<2x192xf32>
    %1060 = arith.addf %1058, %1059 : vector<2x192xf32>
    %1061 = vector.extract_strided_slice %1057 {offsets = [0, 0], sizes = [2, 64], strides = [1, 1]} : vector<2x192xf32> to vector<2x64xf32>
    %1062 = vector.extract_strided_slice %1060 {offsets = [0, 0], sizes = [2, 64], strides = [1, 1]} : vector<2x192xf32> to vector<2x64xf32>
    %1063 = arith.addf %1061, %1062 : vector<2x64xf32>
    %1064 = arith.negf %1063 : vector<2x64xf32>
    %1065 = math.exp %1064 : vector<2x64xf32>
    %cst_182 = arith.constant 1.000000e+00 : f32
    %1066 = vector.broadcast %cst_182 : f32 to vector<2x64xf32>
    %1067 = arith.addf %1066, %1065 : vector<2x64xf32>
    %1068 = arith.divf %1066, %1067 : vector<2x64xf32>
    %1069 = vector.extract_strided_slice %1057 {offsets = [0, 64], sizes = [2, 64], strides = [1, 1]} : vector<2x192xf32> to vector<2x64xf32>
    %1070 = vector.extract_strided_slice %1060 {offsets = [0, 64], sizes = [2, 64], strides = [1, 1]} : vector<2x192xf32> to vector<2x64xf32>
    %1071 = arith.addf %1069, %1070 : vector<2x64xf32>
    %1072 = arith.negf %1071 : vector<2x64xf32>
    %1073 = math.exp %1072 : vector<2x64xf32>
    %cst_183 = arith.constant 1.000000e+00 : f32
    %1074 = vector.broadcast %cst_183 : f32 to vector<2x64xf32>
    %1075 = arith.addf %1074, %1073 : vector<2x64xf32>
    %1076 = arith.divf %1074, %1075 : vector<2x64xf32>
    %1077 = vector.extract_strided_slice %1057 {offsets = [0, 128], sizes = [2, 64], strides = [1, 1]} : vector<2x192xf32> to vector<2x64xf32>
    %1078 = vector.extract_strided_slice %1060 {offsets = [0, 128], sizes = [2, 64], strides = [1, 1]} : vector<2x192xf32> to vector<2x64xf32>
    %1079 = arith.mulf %1068, %1078 : vector<2x64xf32>
    %1080 = arith.addf %1077, %1079 : vector<2x64xf32>
    %1081 = math.tanh %1080 : vector<2x64xf32>
    %cst_184 = arith.constant 1.000000e+00 : f32
    %1082 = vector.broadcast %cst_184 : f32 to vector<2x64xf32>
    %1083 = arith.subf %1082, %1076 : vector<2x64xf32>
    %1084 = arith.mulf %1083, %1081 : vector<2x64xf32>
    %1085 = arith.mulf %1076, %1009 : vector<2x64xf32>
    %1086 = arith.addf %1084, %1085 : vector<2x64xf32>
    %1087 = vector.extract_strided_slice %1025 {offsets = [0, 0], sizes = [2, 192], strides = [1, 1]} : vector<10x192xf32> to vector<2x192xf32>
    %cst_185 = arith.constant dense<0.000000e+00> : vector<2x192xf32>
    %1088 = tpu.matmul %1054, %1011, %cst_185 {dimension_numbers = #tpu.dot_dimension_numbers<[1], [0], [0], [1], [0, 0, 1, 1], [], []>} : vector<2x64xf32>, vector<64x192xf32>, vector<2x192xf32> -> vector<2x192xf32>
    %1089 = vector.broadcast %1013 : vector<1x192xf32> to vector<2x192xf32>
    %1090 = arith.addf %1088, %1089 : vector<2x192xf32>
    %1091 = vector.extract_strided_slice %1087 {offsets = [0, 0], sizes = [2, 64], strides = [1, 1]} : vector<2x192xf32> to vector<2x64xf32>
    %1092 = vector.extract_strided_slice %1090 {offsets = [0, 0], sizes = [2, 64], strides = [1, 1]} : vector<2x192xf32> to vector<2x64xf32>
    %1093 = arith.addf %1091, %1092 : vector<2x64xf32>
    %1094 = arith.negf %1093 : vector<2x64xf32>
    %1095 = math.exp %1094 : vector<2x64xf32>
    %cst_186 = arith.constant 1.000000e+00 : f32
    %1096 = vector.broadcast %cst_186 : f32 to vector<2x64xf32>
    %1097 = arith.addf %1096, %1095 : vector<2x64xf32>
    %1098 = arith.divf %1096, %1097 : vector<2x64xf32>
    %1099 = vector.extract_strided_slice %1087 {offsets = [0, 64], sizes = [2, 64], strides = [1, 1]} : vector<2x192xf32> to vector<2x64xf32>
    %1100 = vector.extract_strided_slice %1090 {offsets = [0, 64], sizes = [2, 64], strides = [1, 1]} : vector<2x192xf32> to vector<2x64xf32>
    %1101 = arith.addf %1099, %1100 : vector<2x64xf32>
    %1102 = arith.negf %1101 : vector<2x64xf32>
    %1103 = math.exp %1102 : vector<2x64xf32>
    %cst_187 = arith.constant 1.000000e+00 : f32
    %1104 = vector.broadcast %cst_187 : f32 to vector<2x64xf32>
    %1105 = arith.addf %1104, %1103 : vector<2x64xf32>
    %1106 = arith.divf %1104, %1105 : vector<2x64xf32>
    %1107 = vector.extract_strided_slice %1087 {offsets = [0, 128], sizes = [2, 64], strides = [1, 1]} : vector<2x192xf32> to vector<2x64xf32>
    %1108 = vector.extract_strided_slice %1090 {offsets = [0, 128], sizes = [2, 64], strides = [1, 1]} : vector<2x192xf32> to vector<2x64xf32>
    %1109 = arith.mulf %1098, %1108 : vector<2x64xf32>
    %1110 = arith.addf %1107, %1109 : vector<2x64xf32>
    %1111 = math.tanh %1110 : vector<2x64xf32>
    %cst_188 = arith.constant 1.000000e+00 : f32
    %1112 = vector.broadcast %cst_188 : f32 to vector<2x64xf32>
    %1113 = arith.subf %1112, %1106 : vector<2x64xf32>
    %1114 = arith.mulf %1113, %1111 : vector<2x64xf32>
    %1115 = arith.mulf %1106, %1054 : vector<2x64xf32>
    %1116 = arith.addf %1114, %1115 : vector<2x64xf32>
    %cst_189 = arith.constant dense<0.000000e+00> : vector<2x192xf32>
    %1117 = tpu.matmul %1116, %1014, %cst_189 {dimension_numbers = #tpu.dot_dimension_numbers<[1], [0], [0], [1], [0, 0, 1, 1], [], []>} : vector<2x64xf32>, vector<64x192xf32>, vector<2x192xf32> -> vector<2x192xf32>
    %1118 = vector.broadcast %1016 : vector<1x192xf32> to vector<2x192xf32>
    %1119 = arith.addf %1117, %1118 : vector<2x192xf32>
    %cst_190 = arith.constant dense<0.000000e+00> : vector<2x192xf32>
    %1120 = tpu.matmul %1086, %1015, %cst_190 {dimension_numbers = #tpu.dot_dimension_numbers<[1], [0], [0], [1], [0, 0, 1, 1], [], []>} : vector<2x64xf32>, vector<64x192xf32>, vector<2x192xf32> -> vector<2x192xf32>
    %1121 = vector.broadcast %1017 : vector<1x192xf32> to vector<2x192xf32>
    %1122 = arith.addf %1120, %1121 : vector<2x192xf32>
    %1123 = vector.extract_strided_slice %1119 {offsets = [0, 0], sizes = [2, 64], strides = [1, 1]} : vector<2x192xf32> to vector<2x64xf32>
    %1124 = vector.extract_strided_slice %1122 {offsets = [0, 0], sizes = [2, 64], strides = [1, 1]} : vector<2x192xf32> to vector<2x64xf32>
    %1125 = arith.addf %1123, %1124 : vector<2x64xf32>
    %1126 = arith.negf %1125 : vector<2x64xf32>
    %1127 = math.exp %1126 : vector<2x64xf32>
    %cst_191 = arith.constant 1.000000e+00 : f32
    %1128 = vector.broadcast %cst_191 : f32 to vector<2x64xf32>
    %1129 = arith.addf %1128, %1127 : vector<2x64xf32>
    %1130 = arith.divf %1128, %1129 : vector<2x64xf32>
    %1131 = vector.extract_strided_slice %1119 {offsets = [0, 64], sizes = [2, 64], strides = [1, 1]} : vector<2x192xf32> to vector<2x64xf32>
    %1132 = vector.extract_strided_slice %1122 {offsets = [0, 64], sizes = [2, 64], strides = [1, 1]} : vector<2x192xf32> to vector<2x64xf32>
    %1133 = arith.addf %1131, %1132 : vector<2x64xf32>
    %1134 = arith.negf %1133 : vector<2x64xf32>
    %1135 = math.exp %1134 : vector<2x64xf32>
    %cst_192 = arith.constant 1.000000e+00 : f32
    %1136 = vector.broadcast %cst_192 : f32 to vector<2x64xf32>
    %1137 = arith.addf %1136, %1135 : vector<2x64xf32>
    %1138 = arith.divf %1136, %1137 : vector<2x64xf32>
    %1139 = vector.extract_strided_slice %1119 {offsets = [0, 128], sizes = [2, 64], strides = [1, 1]} : vector<2x192xf32> to vector<2x64xf32>
    %1140 = vector.extract_strided_slice %1122 {offsets = [0, 128], sizes = [2, 64], strides = [1, 1]} : vector<2x192xf32> to vector<2x64xf32>
    %1141 = arith.mulf %1130, %1140 : vector<2x64xf32>
    %1142 = arith.addf %1139, %1141 : vector<2x64xf32>
    %1143 = math.tanh %1142 : vector<2x64xf32>
    %cst_193 = arith.constant 1.000000e+00 : f32
    %1144 = vector.broadcast %cst_193 : f32 to vector<2x64xf32>
    %1145 = arith.subf %1144, %1138 : vector<2x64xf32>
    %1146 = arith.mulf %1145, %1143 : vector<2x64xf32>
    %1147 = arith.mulf %1138, %1086 : vector<2x64xf32>
    %1148 = arith.addf %1146, %1147 : vector<2x64xf32>
    %1149 = vector.extract_strided_slice %1025 {offsets = [2, 0], sizes = [2, 192], strides = [1, 1]} : vector<10x192xf32> to vector<2x192xf32>
    %cst_194 = arith.constant dense<0.000000e+00> : vector<2x192xf32>
    %1150 = tpu.matmul %1116, %1011, %cst_194 {dimension_numbers = #tpu.dot_dimension_numbers<[1], [0], [0], [1], [0, 0, 1, 1], [], []>} : vector<2x64xf32>, vector<64x192xf32>, vector<2x192xf32> -> vector<2x192xf32>
    %1151 = vector.broadcast %1013 : vector<1x192xf32> to vector<2x192xf32>
    %1152 = arith.addf %1150, %1151 : vector<2x192xf32>
    %1153 = vector.extract_strided_slice %1149 {offsets = [0, 0], sizes = [2, 64], strides = [1, 1]} : vector<2x192xf32> to vector<2x64xf32>
    %1154 = vector.extract_strided_slice %1152 {offsets = [0, 0], sizes = [2, 64], strides = [1, 1]} : vector<2x192xf32> to vector<2x64xf32>
    %1155 = arith.addf %1153, %1154 : vector<2x64xf32>
    %1156 = arith.negf %1155 : vector<2x64xf32>
    %1157 = math.exp %1156 : vector<2x64xf32>
    %cst_195 = arith.constant 1.000000e+00 : f32
    %1158 = vector.broadcast %cst_195 : f32 to vector<2x64xf32>
    %1159 = arith.addf %1158, %1157 : vector<2x64xf32>
    %1160 = arith.divf %1158, %1159 : vector<2x64xf32>
    %1161 = vector.extract_strided_slice %1149 {offsets = [0, 64], sizes = [2, 64], strides = [1, 1]} : vector<2x192xf32> to vector<2x64xf32>
    %1162 = vector.extract_strided_slice %1152 {offsets = [0, 64], sizes = [2, 64], strides = [1, 1]} : vector<2x192xf32> to vector<2x64xf32>
    %1163 = arith.addf %1161, %1162 : vector<2x64xf32>
    %1164 = arith.negf %1163 : vector<2x64xf32>
    %1165 = math.exp %1164 : vector<2x64xf32>
    %cst_196 = arith.constant 1.000000e+00 : f32
    %1166 = vector.broadcast %cst_196 : f32 to vector<2x64xf32>
    %1167 = arith.addf %1166, %1165 : vector<2x64xf32>
    %1168 = arith.divf %1166, %1167 : vector<2x64xf32>
    %1169 = vector.extract_strided_slice %1149 {offsets = [0, 128], sizes = [2, 64], strides = [1, 1]} : vector<2x192xf32> to vector<2x64xf32>
    %1170 = vector.extract_strided_slice %1152 {offsets = [0, 128], sizes = [2, 64], strides = [1, 1]} : vector<2x192xf32> to vector<2x64xf32>
    %1171 = arith.mulf %1160, %1170 : vector<2x64xf32>
    %1172 = arith.addf %1169, %1171 : vector<2x64xf32>
    %1173 = math.tanh %1172 : vector<2x64xf32>
    %cst_197 = arith.constant 1.000000e+00 : f32
    %1174 = vector.broadcast %cst_197 : f32 to vector<2x64xf32>
    %1175 = arith.subf %1174, %1168 : vector<2x64xf32>
    %1176 = arith.mulf %1175, %1173 : vector<2x64xf32>
    %1177 = arith.mulf %1168, %1116 : vector<2x64xf32>
    %1178 = arith.addf %1176, %1177 : vector<2x64xf32>
    %cst_198 = arith.constant dense<0.000000e+00> : vector<2x192xf32>
    %1179 = tpu.matmul %1178, %1014, %cst_198 {dimension_numbers = #tpu.dot_dimension_numbers<[1], [0], [0], [1], [0, 0, 1, 1], [], []>} : vector<2x64xf32>, vector<64x192xf32>, vector<2x192xf32> -> vector<2x192xf32>
    %1180 = vector.broadcast %1016 : vector<1x192xf32> to vector<2x192xf32>
    %1181 = arith.addf %1179, %1180 : vector<2x192xf32>
    %cst_199 = arith.constant dense<0.000000e+00> : vector<2x192xf32>
    %1182 = tpu.matmul %1148, %1015, %cst_199 {dimension_numbers = #tpu.dot_dimension_numbers<[1], [0], [0], [1], [0, 0, 1, 1], [], []>} : vector<2x64xf32>, vector<64x192xf32>, vector<2x192xf32> -> vector<2x192xf32>
    %1183 = vector.broadcast %1017 : vector<1x192xf32> to vector<2x192xf32>
    %1184 = arith.addf %1182, %1183 : vector<2x192xf32>
    %1185 = vector.extract_strided_slice %1181 {offsets = [0, 0], sizes = [2, 64], strides = [1, 1]} : vector<2x192xf32> to vector<2x64xf32>
    %1186 = vector.extract_strided_slice %1184 {offsets = [0, 0], sizes = [2, 64], strides = [1, 1]} : vector<2x192xf32> to vector<2x64xf32>
    %1187 = arith.addf %1185, %1186 : vector<2x64xf32>
    %1188 = arith.negf %1187 : vector<2x64xf32>
    %1189 = math.exp %1188 : vector<2x64xf32>
    %cst_200 = arith.constant 1.000000e+00 : f32
    %1190 = vector.broadcast %cst_200 : f32 to vector<2x64xf32>
    %1191 = arith.addf %1190, %1189 : vector<2x64xf32>
    %1192 = arith.divf %1190, %1191 : vector<2x64xf32>
    %1193 = vector.extract_strided_slice %1181 {offsets = [0, 64], sizes = [2, 64], strides = [1, 1]} : vector<2x192xf32> to vector<2x64xf32>
    %1194 = vector.extract_strided_slice %1184 {offsets = [0, 64], sizes = [2, 64], strides = [1, 1]} : vector<2x192xf32> to vector<2x64xf32>
    %1195 = arith.addf %1193, %1194 : vector<2x64xf32>
    %1196 = arith.negf %1195 : vector<2x64xf32>
    %1197 = math.exp %1196 : vector<2x64xf32>
    %cst_201 = arith.constant 1.000000e+00 : f32
    %1198 = vector.broadcast %cst_201 : f32 to vector<2x64xf32>
    %1199 = arith.addf %1198, %1197 : vector<2x64xf32>
    %1200 = arith.divf %1198, %1199 : vector<2x64xf32>
    %1201 = vector.extract_strided_slice %1181 {offsets = [0, 128], sizes = [2, 64], strides = [1, 1]} : vector<2x192xf32> to vector<2x64xf32>
    %1202 = vector.extract_strided_slice %1184 {offsets = [0, 128], sizes = [2, 64], strides = [1, 1]} : vector<2x192xf32> to vector<2x64xf32>
    %1203 = arith.mulf %1192, %1202 : vector<2x64xf32>
    %1204 = arith.addf %1201, %1203 : vector<2x64xf32>
    %1205 = math.tanh %1204 : vector<2x64xf32>
    %cst_202 = arith.constant 1.000000e+00 : f32
    %1206 = vector.broadcast %cst_202 : f32 to vector<2x64xf32>
    %1207 = arith.subf %1206, %1200 : vector<2x64xf32>
    %1208 = arith.mulf %1207, %1205 : vector<2x64xf32>
    %1209 = arith.mulf %1200, %1148 : vector<2x64xf32>
    %1210 = arith.addf %1208, %1209 : vector<2x64xf32>
    %1211 = vector.extract_strided_slice %1025 {offsets = [4, 0], sizes = [2, 192], strides = [1, 1]} : vector<10x192xf32> to vector<2x192xf32>
    %cst_203 = arith.constant dense<0.000000e+00> : vector<2x192xf32>
    %1212 = tpu.matmul %1178, %1011, %cst_203 {dimension_numbers = #tpu.dot_dimension_numbers<[1], [0], [0], [1], [0, 0, 1, 1], [], []>} : vector<2x64xf32>, vector<64x192xf32>, vector<2x192xf32> -> vector<2x192xf32>
    %1213 = vector.broadcast %1013 : vector<1x192xf32> to vector<2x192xf32>
    %1214 = arith.addf %1212, %1213 : vector<2x192xf32>
    %1215 = vector.extract_strided_slice %1211 {offsets = [0, 0], sizes = [2, 64], strides = [1, 1]} : vector<2x192xf32> to vector<2x64xf32>
    %1216 = vector.extract_strided_slice %1214 {offsets = [0, 0], sizes = [2, 64], strides = [1, 1]} : vector<2x192xf32> to vector<2x64xf32>
    %1217 = arith.addf %1215, %1216 : vector<2x64xf32>
    %1218 = arith.negf %1217 : vector<2x64xf32>
    %1219 = math.exp %1218 : vector<2x64xf32>
    %cst_204 = arith.constant 1.000000e+00 : f32
    %1220 = vector.broadcast %cst_204 : f32 to vector<2x64xf32>
    %1221 = arith.addf %1220, %1219 : vector<2x64xf32>
    %1222 = arith.divf %1220, %1221 : vector<2x64xf32>
    %1223 = vector.extract_strided_slice %1211 {offsets = [0, 64], sizes = [2, 64], strides = [1, 1]} : vector<2x192xf32> to vector<2x64xf32>
    %1224 = vector.extract_strided_slice %1214 {offsets = [0, 64], sizes = [2, 64], strides = [1, 1]} : vector<2x192xf32> to vector<2x64xf32>
    %1225 = arith.addf %1223, %1224 : vector<2x64xf32>
    %1226 = arith.negf %1225 : vector<2x64xf32>
    %1227 = math.exp %1226 : vector<2x64xf32>
    %cst_205 = arith.constant 1.000000e+00 : f32
    %1228 = vector.broadcast %cst_205 : f32 to vector<2x64xf32>
    %1229 = arith.addf %1228, %1227 : vector<2x64xf32>
    %1230 = arith.divf %1228, %1229 : vector<2x64xf32>
    %1231 = vector.extract_strided_slice %1211 {offsets = [0, 128], sizes = [2, 64], strides = [1, 1]} : vector<2x192xf32> to vector<2x64xf32>
    %1232 = vector.extract_strided_slice %1214 {offsets = [0, 128], sizes = [2, 64], strides = [1, 1]} : vector<2x192xf32> to vector<2x64xf32>
    %1233 = arith.mulf %1222, %1232 : vector<2x64xf32>
    %1234 = arith.addf %1231, %1233 : vector<2x64xf32>
    %1235 = math.tanh %1234 : vector<2x64xf32>
    %cst_206 = arith.constant 1.000000e+00 : f32
    %1236 = vector.broadcast %cst_206 : f32 to vector<2x64xf32>
    %1237 = arith.subf %1236, %1230 : vector<2x64xf32>
    %1238 = arith.mulf %1237, %1235 : vector<2x64xf32>
    %1239 = arith.mulf %1230, %1178 : vector<2x64xf32>
    %1240 = arith.addf %1238, %1239 : vector<2x64xf32>
    %cst_207 = arith.constant dense<0.000000e+00> : vector<2x192xf32>
    %1241 = tpu.matmul %1240, %1014, %cst_207 {dimension_numbers = #tpu.dot_dimension_numbers<[1], [0], [0], [1], [0, 0, 1, 1], [], []>} : vector<2x64xf32>, vector<64x192xf32>, vector<2x192xf32> -> vector<2x192xf32>
    %1242 = vector.broadcast %1016 : vector<1x192xf32> to vector<2x192xf32>
    %1243 = arith.addf %1241, %1242 : vector<2x192xf32>
    %cst_208 = arith.constant dense<0.000000e+00> : vector<2x192xf32>
    %1244 = tpu.matmul %1210, %1015, %cst_208 {dimension_numbers = #tpu.dot_dimension_numbers<[1], [0], [0], [1], [0, 0, 1, 1], [], []>} : vector<2x64xf32>, vector<64x192xf32>, vector<2x192xf32> -> vector<2x192xf32>
    %1245 = vector.broadcast %1017 : vector<1x192xf32> to vector<2x192xf32>
    %1246 = arith.addf %1244, %1245 : vector<2x192xf32>
    %1247 = vector.extract_strided_slice %1243 {offsets = [0, 0], sizes = [2, 64], strides = [1, 1]} : vector<2x192xf32> to vector<2x64xf32>
    %1248 = vector.extract_strided_slice %1246 {offsets = [0, 0], sizes = [2, 64], strides = [1, 1]} : vector<2x192xf32> to vector<2x64xf32>
    %1249 = arith.addf %1247, %1248 : vector<2x64xf32>
    %1250 = arith.negf %1249 : vector<2x64xf32>
    %1251 = math.exp %1250 : vector<2x64xf32>
    %cst_209 = arith.constant 1.000000e+00 : f32
    %1252 = vector.broadcast %cst_209 : f32 to vector<2x64xf32>
    %1253 = arith.addf %1252, %1251 : vector<2x64xf32>
    %1254 = arith.divf %1252, %1253 : vector<2x64xf32>
    %1255 = vector.extract_strided_slice %1243 {offsets = [0, 64], sizes = [2, 64], strides = [1, 1]} : vector<2x192xf32> to vector<2x64xf32>
    %1256 = vector.extract_strided_slice %1246 {offsets = [0, 64], sizes = [2, 64], strides = [1, 1]} : vector<2x192xf32> to vector<2x64xf32>
    %1257 = arith.addf %1255, %1256 : vector<2x64xf32>
    %1258 = arith.negf %1257 : vector<2x64xf32>
    %1259 = math.exp %1258 : vector<2x64xf32>
    %cst_210 = arith.constant 1.000000e+00 : f32
    %1260 = vector.broadcast %cst_210 : f32 to vector<2x64xf32>
    %1261 = arith.addf %1260, %1259 : vector<2x64xf32>
    %1262 = arith.divf %1260, %1261 : vector<2x64xf32>
    %1263 = vector.extract_strided_slice %1243 {offsets = [0, 128], sizes = [2, 64], strides = [1, 1]} : vector<2x192xf32> to vector<2x64xf32>
    %1264 = vector.extract_strided_slice %1246 {offsets = [0, 128], sizes = [2, 64], strides = [1, 1]} : vector<2x192xf32> to vector<2x64xf32>
    %1265 = arith.mulf %1254, %1264 : vector<2x64xf32>
    %1266 = arith.addf %1263, %1265 : vector<2x64xf32>
    %1267 = math.tanh %1266 : vector<2x64xf32>
    %cst_211 = arith.constant 1.000000e+00 : f32
    %1268 = vector.broadcast %cst_211 : f32 to vector<2x64xf32>
    %1269 = arith.subf %1268, %1262 : vector<2x64xf32>
    %1270 = arith.mulf %1269, %1267 : vector<2x64xf32>
    %1271 = arith.mulf %1262, %1210 : vector<2x64xf32>
    %1272 = arith.addf %1270, %1271 : vector<2x64xf32>
    %1273 = vector.extract_strided_slice %1025 {offsets = [6, 0], sizes = [2, 192], strides = [1, 1]} : vector<10x192xf32> to vector<2x192xf32>
    %cst_212 = arith.constant dense<0.000000e+00> : vector<2x192xf32>
    %1274 = tpu.matmul %1240, %1011, %cst_212 {dimension_numbers = #tpu.dot_dimension_numbers<[1], [0], [0], [1], [0, 0, 1, 1], [], []>} : vector<2x64xf32>, vector<64x192xf32>, vector<2x192xf32> -> vector<2x192xf32>
    %1275 = vector.broadcast %1013 : vector<1x192xf32> to vector<2x192xf32>
    %1276 = arith.addf %1274, %1275 : vector<2x192xf32>
    %1277 = vector.extract_strided_slice %1273 {offsets = [0, 0], sizes = [2, 64], strides = [1, 1]} : vector<2x192xf32> to vector<2x64xf32>
    %1278 = vector.extract_strided_slice %1276 {offsets = [0, 0], sizes = [2, 64], strides = [1, 1]} : vector<2x192xf32> to vector<2x64xf32>
    %1279 = arith.addf %1277, %1278 : vector<2x64xf32>
    %1280 = arith.negf %1279 : vector<2x64xf32>
    %1281 = math.exp %1280 : vector<2x64xf32>
    %cst_213 = arith.constant 1.000000e+00 : f32
    %1282 = vector.broadcast %cst_213 : f32 to vector<2x64xf32>
    %1283 = arith.addf %1282, %1281 : vector<2x64xf32>
    %1284 = arith.divf %1282, %1283 : vector<2x64xf32>
    %1285 = vector.extract_strided_slice %1273 {offsets = [0, 64], sizes = [2, 64], strides = [1, 1]} : vector<2x192xf32> to vector<2x64xf32>
    %1286 = vector.extract_strided_slice %1276 {offsets = [0, 64], sizes = [2, 64], strides = [1, 1]} : vector<2x192xf32> to vector<2x64xf32>
    %1287 = arith.addf %1285, %1286 : vector<2x64xf32>
    %1288 = arith.negf %1287 : vector<2x64xf32>
    %1289 = math.exp %1288 : vector<2x64xf32>
    %cst_214 = arith.constant 1.000000e+00 : f32
    %1290 = vector.broadcast %cst_214 : f32 to vector<2x64xf32>
    %1291 = arith.addf %1290, %1289 : vector<2x64xf32>
    %1292 = arith.divf %1290, %1291 : vector<2x64xf32>
    %1293 = vector.extract_strided_slice %1273 {offsets = [0, 128], sizes = [2, 64], strides = [1, 1]} : vector<2x192xf32> to vector<2x64xf32>
    %1294 = vector.extract_strided_slice %1276 {offsets = [0, 128], sizes = [2, 64], strides = [1, 1]} : vector<2x192xf32> to vector<2x64xf32>
    %1295 = arith.mulf %1284, %1294 : vector<2x64xf32>
    %1296 = arith.addf %1293, %1295 : vector<2x64xf32>
    %1297 = math.tanh %1296 : vector<2x64xf32>
    %cst_215 = arith.constant 1.000000e+00 : f32
    %1298 = vector.broadcast %cst_215 : f32 to vector<2x64xf32>
    %1299 = arith.subf %1298, %1292 : vector<2x64xf32>
    %1300 = arith.mulf %1299, %1297 : vector<2x64xf32>
    %1301 = arith.mulf %1292, %1240 : vector<2x64xf32>
    %1302 = arith.addf %1300, %1301 : vector<2x64xf32>
    %cst_216 = arith.constant dense<0.000000e+00> : vector<2x192xf32>
    %1303 = tpu.matmul %1302, %1014, %cst_216 {dimension_numbers = #tpu.dot_dimension_numbers<[1], [0], [0], [1], [0, 0, 1, 1], [], []>} : vector<2x64xf32>, vector<64x192xf32>, vector<2x192xf32> -> vector<2x192xf32>
    %1304 = vector.broadcast %1016 : vector<1x192xf32> to vector<2x192xf32>
    %1305 = arith.addf %1303, %1304 : vector<2x192xf32>
    %cst_217 = arith.constant dense<0.000000e+00> : vector<2x192xf32>
    %1306 = tpu.matmul %1272, %1015, %cst_217 {dimension_numbers = #tpu.dot_dimension_numbers<[1], [0], [0], [1], [0, 0, 1, 1], [], []>} : vector<2x64xf32>, vector<64x192xf32>, vector<2x192xf32> -> vector<2x192xf32>
    %1307 = vector.broadcast %1017 : vector<1x192xf32> to vector<2x192xf32>
    %1308 = arith.addf %1306, %1307 : vector<2x192xf32>
    %1309 = vector.extract_strided_slice %1305 {offsets = [0, 0], sizes = [2, 64], strides = [1, 1]} : vector<2x192xf32> to vector<2x64xf32>
    %1310 = vector.extract_strided_slice %1308 {offsets = [0, 0], sizes = [2, 64], strides = [1, 1]} : vector<2x192xf32> to vector<2x64xf32>
    %1311 = arith.addf %1309, %1310 : vector<2x64xf32>
    %1312 = arith.negf %1311 : vector<2x64xf32>
    %1313 = math.exp %1312 : vector<2x64xf32>
    %cst_218 = arith.constant 1.000000e+00 : f32
    %1314 = vector.broadcast %cst_218 : f32 to vector<2x64xf32>
    %1315 = arith.addf %1314, %1313 : vector<2x64xf32>
    %1316 = arith.divf %1314, %1315 : vector<2x64xf32>
    %1317 = vector.extract_strided_slice %1305 {offsets = [0, 64], sizes = [2, 64], strides = [1, 1]} : vector<2x192xf32> to vector<2x64xf32>
    %1318 = vector.extract_strided_slice %1308 {offsets = [0, 64], sizes = [2, 64], strides = [1, 1]} : vector<2x192xf32> to vector<2x64xf32>
    %1319 = arith.addf %1317, %1318 : vector<2x64xf32>
    %1320 = arith.negf %1319 : vector<2x64xf32>
    %1321 = math.exp %1320 : vector<2x64xf32>
    %cst_219 = arith.constant 1.000000e+00 : f32
    %1322 = vector.broadcast %cst_219 : f32 to vector<2x64xf32>
    %1323 = arith.addf %1322, %1321 : vector<2x64xf32>
    %1324 = arith.divf %1322, %1323 : vector<2x64xf32>
    %1325 = vector.extract_strided_slice %1305 {offsets = [0, 128], sizes = [2, 64], strides = [1, 1]} : vector<2x192xf32> to vector<2x64xf32>
    %1326 = vector.extract_strided_slice %1308 {offsets = [0, 128], sizes = [2, 64], strides = [1, 1]} : vector<2x192xf32> to vector<2x64xf32>
    %1327 = arith.mulf %1316, %1326 : vector<2x64xf32>
    %1328 = arith.addf %1325, %1327 : vector<2x64xf32>
    %1329 = math.tanh %1328 : vector<2x64xf32>
    %cst_220 = arith.constant 1.000000e+00 : f32
    %1330 = vector.broadcast %cst_220 : f32 to vector<2x64xf32>
    %1331 = arith.subf %1330, %1324 : vector<2x64xf32>
    %1332 = arith.mulf %1331, %1329 : vector<2x64xf32>
    %1333 = arith.mulf %1324, %1272 : vector<2x64xf32>
    %1334 = arith.addf %1332, %1333 : vector<2x64xf32>
    %1335 = tpu.concatenate %1054, %1116, %1178, %1240, %1302 in 0 : vector<2x64xf32>, vector<2x64xf32>, vector<2x64xf32>, vector<2x64xf32>, vector<2x64xf32> -> vector<10x64xf32>
    %1336 = tpu.concatenate %1086, %1148, %1210, %1272, %1334 in 0 : vector<2x64xf32>, vector<2x64xf32>, vector<2x64xf32>, vector<2x64xf32>, vector<2x64xf32> -> vector<10x64xf32>
    %c0_221 = arith.constant 0 : index
    %c0_222 = arith.constant 0 : index
    %1337 = vector.load %arg19[%c0_221, %c0_222] : memref<64x256xf32, #tpu.memory_space<vmem>>, vector<64x256xf32>
    %cst_223 = arith.constant dense<0.000000e+00> : vector<10x256xf32>
    %1338 = tpu.matmul %1335, %1337, %cst_223 {dimension_numbers = #tpu.dot_dimension_numbers<[1], [0], [0], [1], [0, 0, 1, 1], [], []>} : vector<10x64xf32>, vector<64x256xf32>, vector<10x256xf32> -> vector<10x256xf32>
    %c0_224 = arith.constant 0 : index
    %c0_225 = arith.constant 0 : index
    %1339 = vector.load %arg20[%c0_224, %c0_225] : memref<1x256xf32, #tpu.memory_space<vmem>>, vector<1x256xf32>
    %1340 = vector.broadcast %1339 : vector<1x256xf32> to vector<10x256xf32>
    %1341 = arith.addf %1338, %1340 : vector<10x256xf32>
    %c0_226 = arith.constant 0 : index
    %c0_227 = arith.constant 0 : index
    %1342 = vector.load %arg21[%c0_226, %c0_227] : memref<256x8xf32, #tpu.memory_space<vmem>>, vector<256x8xf32>
    %cst_228 = arith.constant dense<0.000000e+00> : vector<10x8xf32>
    %1343 = tpu.matmul %1341, %1342, %cst_228 {dimension_numbers = #tpu.dot_dimension_numbers<[1], [0], [0], [1], [0, 0, 1, 1], [], []>} : vector<10x256xf32>, vector<256x8xf32>, vector<10x8xf32> -> vector<10x8xf32>
    %c0_229 = arith.constant 0 : index
    %c0_230 = arith.constant 0 : index
    %1344 = vector.load %arg22[%c0_229, %c0_230] : memref<1x8xf32, #tpu.memory_space<vmem>>, vector<1x8xf32>
    %1345 = vector.broadcast %1344 : vector<1x8xf32> to vector<10x8xf32>
    %1346 = arith.addf %1343, %1345 : vector<10x8xf32>
    %c0_231 = arith.constant 0 : index
    %c0_232 = arith.constant 0 : index
    %1347 = vector.load %arg23[%c0_231, %c0_232] : memref<64x128xf32, #tpu.memory_space<vmem>>, vector<64x128xf32>
    %cst_233 = arith.constant dense<0.000000e+00> : vector<10x128xf32>
    %1348 = tpu.matmul %1336, %1347, %cst_233 {dimension_numbers = #tpu.dot_dimension_numbers<[1], [0], [0], [1], [0, 0, 1, 1], [], []>} : vector<10x64xf32>, vector<64x128xf32>, vector<10x128xf32> -> vector<10x128xf32>
    %c0_234 = arith.constant 0 : index
    %c0_235 = arith.constant 0 : index
    %1349 = vector.load %arg24[%c0_234, %c0_235] : memref<1x128xf32, #tpu.memory_space<vmem>>, vector<1x128xf32>
    %1350 = vector.broadcast %1349 : vector<1x128xf32> to vector<10x128xf32>
    %1351 = arith.addf %1348, %1350 : vector<10x128xf32>
    %cst_236 = arith.constant 0.000000e+00 : f32
    %1352 = vector.broadcast %cst_236 : f32 to vector<10x128xf32>
    %1353 = arith.maximumf %1351, %1352 : vector<10x128xf32>
    %c0_237 = arith.constant 0 : index
    %c0_238 = arith.constant 0 : index
    %1354 = vector.load %arg25[%c0_237, %c0_238] : memref<128x6xf32, #tpu.memory_space<vmem>>, vector<128x6xf32>
    %cst_239 = arith.constant dense<0.000000e+00> : vector<10x6xf32>
    %1355 = tpu.matmul %1353, %1354, %cst_239 {dimension_numbers = #tpu.dot_dimension_numbers<[1], [0], [0], [1], [0, 0, 1, 1], [], []>} : vector<10x128xf32>, vector<128x6xf32>, vector<10x6xf32> -> vector<10x6xf32>
    %c0_240 = arith.constant 0 : index
    %c0_241 = arith.constant 0 : index
    %1356 = vector.load %arg26[%c0_240, %c0_241] : memref<1x6xf32, #tpu.memory_space<vmem>>, vector<1x6xf32>
    %1357 = vector.broadcast %1356 : vector<1x6xf32> to vector<10x6xf32>
    %1358 = arith.addf %1355, %1357 : vector<10x6xf32>
    %c0_242 = arith.constant 0 : index
    %c0_243 = arith.constant 0 : index
    %1359 = vector.load %arg27[%c0_242, %c0_243] : memref<64x128xf32, #tpu.memory_space<vmem>>, vector<64x128xf32>
    %cst_244 = arith.constant dense<0.000000e+00> : vector<10x128xf32>
    %1360 = tpu.matmul %1335, %1359, %cst_244 {dimension_numbers = #tpu.dot_dimension_numbers<[1], [0], [0], [1], [0, 0, 1, 1], [], []>} : vector<10x64xf32>, vector<64x128xf32>, vector<10x128xf32> -> vector<10x128xf32>
    %c0_245 = arith.constant 0 : index
    %c0_246 = arith.constant 0 : index
    %1361 = vector.load %arg28[%c0_245, %c0_246] : memref<1x128xf32, #tpu.memory_space<vmem>>, vector<1x128xf32>
    %1362 = vector.broadcast %1361 : vector<1x128xf32> to vector<10x128xf32>
    %1363 = arith.addf %1360, %1362 : vector<10x128xf32>
    %cst_247 = arith.constant 0.000000e+00 : f32
    %1364 = vector.broadcast %cst_247 : f32 to vector<10x128xf32>
    %1365 = arith.maximumf %1363, %1364 : vector<10x128xf32>
    %c0_248 = arith.constant 0 : index
    %c0_249 = arith.constant 0 : index
    %1366 = vector.load %arg29[%c0_248, %c0_249] : memref<128x1xf32, #tpu.memory_space<vmem>>, vector<128x1xf32>
    %cst_250 = arith.constant dense<0.000000e+00> : vector<10x1xf32>
    %1367 = tpu.matmul %1365, %1366, %cst_250 {dimension_numbers = #tpu.dot_dimension_numbers<[1], [0], [0], [1], [0, 0, 1, 1], [], []>} : vector<10x128xf32>, vector<128x1xf32>, vector<10x1xf32> -> vector<10x1xf32>
    %c0_251 = arith.constant 0 : index
    %c0_252 = arith.constant 0 : index
    %1368 = vector.load %arg30[%c0_251, %c0_252] : memref<1x1xf32, #tpu.memory_space<vmem>>, vector<1x1xf32>
    %1369 = vector.broadcast %1368 : vector<1x1xf32> to vector<10x1xf32>
    %1370 = arith.addf %1367, %1369 : vector<10x1xf32>
    %1371 = tpu.concatenate %1346, %1358 in 1 : vector<10x8xf32>, vector<10x6xf32> -> vector<10x14xf32>
    %c0_253 = arith.constant 0 : index
    %c0_254 = arith.constant 0 : index
    %1372 = vector.load %arg31[%c0_253, %c0_254] : memref<10x14xf32, #tpu.memory_space<vmem>>, vector<10x14xf32>
    tpu.vector_store %arg31[%c0_253, %c0_254], %1371 {strides = array<i32>} : memref<10x14xf32, #tpu.memory_space<vmem>>, vector<10x14xf32>,
    %c0_255 = arith.constant 0 : index
    %c0_256 = arith.constant 0 : index
    %1373 = vector.load %arg32[%c0_255, %c0_256] : memref<10x1xf32, #tpu.memory_space<vmem>>, vector<10x1xf32>
    tpu.vector_store %arg32[%c0_255, %c0_256], %1370 {strides = array<i32>} : memref<10x1xf32, #tpu.memory_space<vmem>>, vector<10x1xf32>,
    return
  }
}

</mosaic_0001>

<llo_original>
// kernel: seq2seq_forward.1
$region0: #{seq2seq_forward.1}
  #allocation0 [shape = 'u32[]', space=smem, size = 0x4, offset = 0x4, fixed_abs, tag = 'smem constant byte address 0x4 - core index']
  #allocation1 [shape = 'u32[144,128]{1,0:T(1,128)}', space=vmem, size = 0x12000, scoped, tag = 'internal scratch']
  #allocation2 [shape = 'f32[1,1]{1,0:T(1,128)S(1)}', space=vmem, size = 0x200, scoped, tag = 'scoped memory for seq2seq_forward.1']
  %s0 = inlined_call_operand.smem [shape: u32[33], index: -1, kind: input, shape index: {}]
  %s1 = sld [smem:[%s0]]
  %s2 = scalar_lea.smem %s0, 1
  %s3 = sld [smem:[%s2]]
  %s4 = scalar_lea.smem %s0, 2
  %s5 = sld [smem:[%s4]]
  %s6 = scalar_lea.smem %s0, 3
  %s7 = sld [smem:[%s6]]
  %s8 = scalar_lea.smem %s0, 4
  %s9 = sld [smem:[%s8]]
  %s10 = scalar_lea.smem %s0, 5
  %s11 = sld [smem:[%s10]]
  %s12 = scalar_lea.smem %s0, 6
  %s13 = sld [smem:[%s12]]
  %s14 = scalar_lea.smem %s0, 7
  %s15 = sld [smem:[%s14]]
  %s16 = scalar_lea.smem %s0, 8
  %s17 = sld [smem:[%s16]]
  %s18 = scalar_lea.smem %s0, 9
  %s19 = sld [smem:[%s18]]
  %s20 = scalar_lea.smem %s0, 10
  %s21 = sld [smem:[%s20]]
  %s22 = scalar_lea.smem %s0, 11
  %s23 = sld [smem:[%s22]]
  %s24 = scalar_lea.smem %s0, 12
  %s25 = sld [smem:[%s24]]
  %s26 = scalar_lea.smem %s0, 13
  %s27 = sld [smem:[%s26]]
  %s28 = scalar_lea.smem %s0, 14
  %s29 = sld [smem:[%s28]]
  %s30 = scalar_lea.smem %s0, 15
  %s31 = sld [smem:[%s30]]
  %s32 = scalar_lea.smem %s0, 16
  %s33 = sld [smem:[%s32]]
  %s34 = scalar_lea.smem %s0, 17
  %s35 = sld [smem:[%s34]]
  %s36 = scalar_lea.smem %s0, 18
  %s37 = sld [smem:[%s36]]
  %s38 = scalar_lea.smem %s0, 19
  %s39 = sld [smem:[%s38]]
  %s40 = scalar_lea.smem %s0, 20
  %s41 = sld [smem:[%s40]]
  %s42 = scalar_lea.smem %s0, 21
  %s43 = sld [smem:[%s42]]
  %s44 = scalar_lea.smem %s0, 22
  %s45 = sld [smem:[%s44]]
  %s46 = scalar_lea.smem %s0, 23
  %s47 = sld [smem:[%s46]]
  %s48 = scalar_lea.smem %s0, 24
  %s49 = sld [smem:[%s48]]
  %s50 = scalar_lea.smem %s0, 25
  %s51 = sld [smem:[%s50]]
  %s52 = scalar_lea.smem %s0, 26
  %s53 = sld [smem:[%s52]]
  %s54 = scalar_lea.smem %s0, 27
  %s55 = sld [smem:[%s54]]
  %s56 = scalar_lea.smem %s0, 28
  %s57 = sld [smem:[%s56]]
  %s58 = scalar_lea.smem %s0, 29
  %s59 = sld [smem:[%s58]]
  %s60 = scalar_lea.smem %s0, 30
  %s61 = sld [smem:[%s60]]
  %s62 = scalar_lea.smem %s0, 31
  %s63 = sld [smem:[%s62]]
  %s64 = scalar_lea.smem %s0, 32
  %s65 = sld [smem:[%s64]]
  %66 = xla_tuple %s63, %s65
  %s67 = sld [smem:[#allocation0]]
  $region210: #{seq2seq_forward.1} parent=0
    _
  %s69 = ssub.s32 1, %s67
  %s70 = scalar_select 0, %s69, %s67
  %v71 = vstv %s61
  %72 = vst [vmem:[#allocation2] sm:$0x1] %v71
  $region1: #{seq2seq_forward.1} parent=0
    #allocation3 [shape = 'u8[16384]{0}', space=vmem, size = 0x4000, scoped, tag = 'input window, operand 3, single buffered']
    #allocation4 [shape = 's32[1]{0}', space=sflag, size = 0x4, scoped, tag = 'scoped memory for seq2seq_forward.1']
    #allocation5 [shape = 'u8[1024]{0}', space=vmem, size = 0x400, scoped, tag = 'input window, operand 5, single buffered']
    #allocation6 [shape = 's32[1]{0}', space=sflag, size = 0x4, scoped, tag = 'scoped memory for seq2seq_forward.1']
    #allocation7 [shape = 'u8[1024]{0}', space=vmem, size = 0x400, scoped, tag = 'input window, operand 6, single buffered']
    #allocation8 [shape = 'u8[1024]{0}', space=vmem, size = 0x400, scoped, tag = 'input window, operand 10, single buffered']
    #allocation9 [shape = 's32[1]{0}', space=sflag, size = 0x4, scoped, tag = 'scoped memory for seq2seq_forward.1']
    #allocation10 [shape = 'u8[16384]{0}', space=vmem, size = 0x4000, scoped, tag = 'input window, operand 11, single buffered']
    #allocation11 [shape = 'u8[1024]{0}', space=vmem, size = 0x400, scoped, tag = 'input window, operand 13, single buffered']
    #allocation12 [shape = 's32[1]{0}', space=sflag, size = 0x4, scoped, tag = 'scoped memory for seq2seq_forward.1']
    #allocation13 [shape = 'u8[1024]{0}', space=vmem, size = 0x400, scoped, tag = 'input window, operand 14, single buffered']
    #allocation14 [shape = 'u8[1024]{0}', space=vmem, size = 0x400, scoped, tag = 'input window, operand 17, single buffered']
    #allocation15 [shape = 's32[1]{0}', space=sflag, size = 0x4, scoped, tag = 'scoped memory for seq2seq_forward.1']
    #allocation16 [shape = 'u8[1024]{0}', space=vmem, size = 0x400, scoped, tag = 'input window, operand 18, single buffered']
    #allocation17 [shape = 'u8[65536]{0}', space=vmem, size = 0x10000, scoped, tag = 'input window, operand 19, single buffered']
    #allocation18 [shape = 's32[1]{0}', space=sflag, size = 0x4, scoped, tag = 'scoped memory for seq2seq_forward.1']
    #allocation19 [shape = 'u8[1024]{0}', space=vmem, size = 0x400, scoped, tag = 'input window, operand 20, single buffered']
    #allocation20 [shape = 'u8[512]{0}', space=vmem, size = 0x400, scoped, tag = 'input window, operand 22, single buffered']
    #allocation21 [shape = 's32[1]{0}', space=sflag, size = 0x4, scoped, tag = 'scoped memory for seq2seq_forward.1']
    #allocation22 [shape = 'u8[32768]{0}', space=vmem, size = 0x8000, scoped, tag = 'input window, operand 23, single buffered']
    #allocation23 [shape = 'u8[512]{0}', space=vmem, size = 0x400, scoped, tag = 'input window, operand 24, single buffered']
    #allocation24 [shape = 's32[1]{0}', space=sflag, size = 0x4, scoped, tag = 'scoped memory for seq2seq_forward.1']
    #allocation25 [shape = 'u8[512]{0}', space=vmem, size = 0x400, scoped, tag = 'input window, operand 26, single buffered']
    #allocation26 [shape = 'u8[32768]{0}', space=vmem, size = 0x8000, scoped, tag = 'input window, operand 27, single buffered']
    #allocation27 [shape = 's32[1]{0}', space=sflag, size = 0x4, scoped, tag = 'scoped memory for seq2seq_forward.1']
    #allocation28 [shape = 'u8[512]{0}', space=vmem, size = 0x400, scoped, tag = 'input window, operand 28, single buffered']
    %73 = vsyncpa [#allocation4], 0
    %74 = vsyncpa [#allocation6], 0
    %75 = vsyncpa [#allocation9], 0
    %76 = vsyncpa [#allocation12], 0
    %77 = vsyncpa [#allocation15], 0
    %78 = vsyncpa [#allocation18], 0
    %79 = vsyncpa [#allocation21], 0
    %80 = vsyncpa [#allocation24], 0
    %81 = vsyncpa [#allocation27], 0
    // Predicated region
    $region2: #{seq2seq_forward.1} parent=1 // pred_check
      _
    $region3: #{seq2seq_forward.1} parent=1 // pred_check_branch
      %83 = sbr.rel (0) target = $region5
    $region4: #{seq2seq_forward.1} parent=1 // pred_region
      _
    $region5: #{seq2seq_forward.1} parent=1 // pred_fallthru
      _
    // Predicated region
    $region6: #{seq2seq_forward.1} parent=1 // pred_check
      _
    $region7: #{seq2seq_forward.1} parent=1 // pred_check_branch
      %85 = sbr.rel (0) target = $region9
    $region8: #{seq2seq_forward.1} parent=1 // pred_region
      _
    $region9: #{seq2seq_forward.1} parent=1 // pred_fallthru
      _
    // Predicated region
    $region10: #{seq2seq_forward.1} parent=1 // pred_check
      _
    $region11: #{seq2seq_forward.1} parent=1 // pred_check_branch
      %87 = sbr.rel (0) target = $region13
    $region12: #{seq2seq_forward.1} parent=1 // pred_region
      _
    $region13: #{seq2seq_forward.1} parent=1 // pred_fallthru
      _
    // Predicated region
    $region14: #{seq2seq_forward.1} parent=1 // pred_check
      _
    $region15: #{seq2seq_forward.1} parent=1 // pred_check_branch
      %89 = sbr.rel (0) target = $region17
    $region16: #{seq2seq_forward.1} parent=1 // pred_region
      %s91 = ssub.s32 512, 512
      %92 = vsyncadd [#allocation4], %s91
      %s93 = sshll.u32 [#allocation3], 4
      %s94 = int_to_ptr.vmem [resolvable:$true] %s93
      %99 = dma.hbm_to_vmem [thread:$0]  %s7, 512, %s94, [#allocation4], 256, 256, 16
    $region17: #{seq2seq_forward.1} parent=1 // pred_fallthru
      _
    // Predicated region
    $region18: #{seq2seq_forward.1} parent=1 // pred_check
      _
    $region19: #{seq2seq_forward.1} parent=1 // pred_check_branch
      %101 = sbr.rel (0) target = $region21
    $region20: #{seq2seq_forward.1} parent=1 // pred_region
      _
    $region21: #{seq2seq_forward.1} parent=1 // pred_fallthru
      _
    // Predicated region
    $region22: #{seq2seq_forward.1} parent=1 // pred_check
      _
    $region23: #{seq2seq_forward.1} parent=1 // pred_check_branch
      %103 = sbr.rel (0) target = $region25
    $region24: #{seq2seq_forward.1} parent=1 // pred_region
      %s105 = ssub.s32 32, 32
      %106 = vsyncadd [#allocation6], %s105
      %s108 = sshll.u32 [#allocation5], 4
      %s109 = int_to_ptr.vmem [resolvable:$true] %s108
      %111 = dma.hbm_to_vmem [thread:$0]  %s11, 32, %s109, [#allocation6]
    $region25: #{seq2seq_forward.1} parent=1 // pred_fallthru
      _
    // Predicated region
    $region26: #{seq2seq_forward.1} parent=1 // pred_check
      _
    $region27: #{seq2seq_forward.1} parent=1 // pred_check_branch
      %113 = sbr.rel (0) target = $region29
    $region28: #{seq2seq_forward.1} parent=1 // pred_region
      %s115 = ssub.s32 32, 32
      %116 = vsyncadd [#allocation6], %s115
      %s117 = sshll.u32 [#allocation7], 4
      %s118 = int_to_ptr.vmem [resolvable:$true] %s117
      %123 = dma.hbm_to_vmem [thread:$0]  %s13, 32, %s118, [#allocation6], 16, 16, 1
    $region29: #{seq2seq_forward.1} parent=1 // pred_fallthru
      _
    // Predicated region
    $region30: #{seq2seq_forward.1} parent=1 // pred_check
      _
    $region31: #{seq2seq_forward.1} parent=1 // pred_check_branch
      %125 = sbr.rel (0) target = $region33
    $region32: #{seq2seq_forward.1} parent=1 // pred_region
      _
    $region33: #{seq2seq_forward.1} parent=1 // pred_fallthru
      _
    // Predicated region
    $region34: #{seq2seq_forward.1} parent=1 // pred_check
      _
    $region35: #{seq2seq_forward.1} parent=1 // pred_check_branch
      %127 = sbr.rel (0) target = $region37
    $region36: #{seq2seq_forward.1} parent=1 // pred_region
      _
    $region37: #{seq2seq_forward.1} parent=1 // pred_fallthru
      _
    // Predicated region
    $region38: #{seq2seq_forward.1} parent=1 // pred_check
      _
    $region39: #{seq2seq_forward.1} parent=1 // pred_check_branch
      %129 = sbr.rel (0) target = $region41
    $region40: #{seq2seq_forward.1} parent=1 // pred_region
      _
    $region41: #{seq2seq_forward.1} parent=1 // pred_fallthru
      _
    // Predicated region
    $region42: #{seq2seq_forward.1} parent=1 // pred_check
      _
    $region43: #{seq2seq_forward.1} parent=1 // pred_check_branch
      %131 = sbr.rel (0) target = $region45
    $region44: #{seq2seq_forward.1} parent=1 // pred_region
      %s133 = ssub.s32 32, 32
      %134 = vsyncadd [#allocation9], %s133
      %s135 = sshll.u32 [#allocation8], 4
      %s136 = int_to_ptr.vmem [resolvable:$true] %s135
      %141 = dma.hbm_to_vmem [thread:$0]  %s21, 32, %s136, [#allocation9], 16, 16, 1
    $region45: #{seq2seq_forward.1} parent=1 // pred_fallthru
      _
    // Predicated region
    $region46: #{seq2seq_forward.1} parent=1 // pred_check
      _
    $region47: #{seq2seq_forward.1} parent=1 // pred_check_branch
      %143 = sbr.rel (0) target = $region49
    $region48: #{seq2seq_forward.1} parent=1 // pred_region
      %s145 = ssub.s32 512, 512
      %146 = vsyncadd [#allocation9], %s145
      %s147 = sshll.u32 [#allocation10], 4
      %s148 = int_to_ptr.vmem [resolvable:$true] %s147
      %153 = dma.hbm_to_vmem [thread:$0]  %s23, 512, %s148, [#allocation9], 256, 256, 16
    $region49: #{seq2seq_forward.1} parent=1 // pred_fallthru
      _
    // Predicated region
    $region50: #{seq2seq_forward.1} parent=1 // pred_check
      _
    $region51: #{seq2seq_forward.1} parent=1 // pred_check_branch
      %155 = sbr.rel (0) target = $region53
    $region52: #{seq2seq_forward.1} parent=1 // pred_region
      _
    $region53: #{seq2seq_forward.1} parent=1 // pred_fallthru
      _
    // Predicated region
    $region54: #{seq2seq_forward.1} parent=1 // pred_check
      _
    $region55: #{seq2seq_forward.1} parent=1 // pred_check_branch
      %157 = sbr.rel (0) target = $region57
    $region56: #{seq2seq_forward.1} parent=1 // pred_region
      %s159 = ssub.s32 32, 32
      %160 = vsyncadd [#allocation12], %s159
      %s162 = sshll.u32 [#allocation11], 4
      %s163 = int_to_ptr.vmem [resolvable:$true] %s162
      %165 = dma.hbm_to_vmem [thread:$0]  %s27, 32, %s163, [#allocation12]
    $region57: #{seq2seq_forward.1} parent=1 // pred_fallthru
      _
    // Predicated region
    $region58: #{seq2seq_forward.1} parent=1 // pred_check
      _
    $region59: #{seq2seq_forward.1} parent=1 // pred_check_branch
      %167 = sbr.rel (0) target = $region61
    $region60: #{seq2seq_forward.1} parent=1 // pred_region
      %s169 = ssub.s32 32, 32
      %170 = vsyncadd [#allocation12], %s169
      %s172 = sshll.u32 [#allocation13], 4
      %s173 = int_to_ptr.vmem [resolvable:$true] %s172
      %175 = dma.hbm_to_vmem [thread:$0]  %s29, 32, %s173, [#allocation12]
    $region61: #{seq2seq_forward.1} parent=1 // pred_fallthru
      _
    // Predicated region
    $region62: #{seq2seq_forward.1} parent=1 // pred_check
      _
    $region63: #{seq2seq_forward.1} parent=1 // pred_check_branch
      %177 = sbr.rel (0) target = $region65
    $region64: #{seq2seq_forward.1} parent=1 // pred_region
      _
    $region65: #{seq2seq_forward.1} parent=1 // pred_fallthru
      _
    // Predicated region
    $region66: #{seq2seq_forward.1} parent=1 // pred_check
      _
    $region67: #{seq2seq_forward.1} parent=1 // pred_check_branch
      %179 = sbr.rel (0) target = $region69
    $region68: #{seq2seq_forward.1} parent=1 // pred_region
      _
    $region69: #{seq2seq_forward.1} parent=1 // pred_fallthru
      _
    // Predicated region
    $region70: #{seq2seq_forward.1} parent=1 // pred_check
      _
    $region71: #{seq2seq_forward.1} parent=1 // pred_check_branch
      %181 = sbr.rel (0) target = $region73
    $region72: #{seq2seq_forward.1} parent=1 // pred_region
      %s183 = ssub.s32 32, 32
      %184 = vsyncadd [#allocation15], %s183
      %s186 = sshll.u32 [#allocation14], 4
      %s187 = int_to_ptr.vmem [resolvable:$true] %s186
      %189 = dma.hbm_to_vmem [thread:$0]  %s35, 32, %s187, [#allocation15]
    $region73: #{seq2seq_forward.1} parent=1 // pred_fallthru
      _
    // Predicated region
    $region74: #{seq2seq_forward.1} parent=1 // pred_check
      _
    $region75: #{seq2seq_forward.1} parent=1 // pred_check_branch
      %191 = sbr.rel (0) target = $region77
    $region76: #{seq2seq_forward.1} parent=1 // pred_region
      %s193 = ssub.s32 32, 32
      %194 = vsyncadd [#allocation15], %s193
      %s196 = sshll.u32 [#allocation16], 4
      %s197 = int_to_ptr.vmem [resolvable:$true] %s196
      %199 = dma.hbm_to_vmem [thread:$0]  %s37, 32, %s197, [#allocation15]
    $region77: #{seq2seq_forward.1} parent=1 // pred_fallthru
      _
    // Predicated region
    $region78: #{seq2seq_forward.1} parent=1 // pred_check
      _
    $region79: #{seq2seq_forward.1} parent=1 // pred_check_branch
      %201 = sbr.rel (0) target = $region81
    $region80: #{seq2seq_forward.1} parent=1 // pred_region
      %s203 = ssub.s32 2048, 2048
      %204 = vsyncadd [#allocation18], %s203
      %s205 = sshll.u32 [#allocation17], 4
      %s206 = int_to_ptr.vmem [resolvable:$true] %s205
      %211 = dma.hbm_to_vmem [thread:$0]  %s39, 2048, %s206, [#allocation18], 256, 256, 16
    $region81: #{seq2seq_forward.1} parent=1 // pred_fallthru
      _
    // Predicated region
    $region82: #{seq2seq_forward.1} parent=1 // pred_check
      _
    $region83: #{seq2seq_forward.1} parent=1 // pred_check_branch
      %213 = sbr.rel (0) target = $region85
    $region84: #{seq2seq_forward.1} parent=1 // pred_region
      %s215 = ssub.s32 32, 32
      %216 = vsyncadd [#allocation18], %s215
      %s218 = sshll.u32 [#allocation19], 4
      %s219 = int_to_ptr.vmem [resolvable:$true] %s218
      %221 = dma.hbm_to_vmem [thread:$0]  %s41, 32, %s219, [#allocation18]
    $region85: #{seq2seq_forward.1} parent=1 // pred_fallthru
      _
    // Predicated region
    $region86: #{seq2seq_forward.1} parent=1 // pred_check
      _
    $region87: #{seq2seq_forward.1} parent=1 // pred_check_branch
      %223 = sbr.rel (0) target = $region89
    $region88: #{seq2seq_forward.1} parent=1 // pred_region
      _
    $region89: #{seq2seq_forward.1} parent=1 // pred_fallthru
      _
    // Predicated region
    $region90: #{seq2seq_forward.1} parent=1 // pred_check
      _
    $region91: #{seq2seq_forward.1} parent=1 // pred_check_branch
      %225 = sbr.rel (0) target = $region93
    $region92: #{seq2seq_forward.1} parent=1 // pred_region
      %s227 = ssub.s32 16, 16
      %228 = vsyncadd [#allocation21], %s227
      %s230 = sshll.u32 [#allocation20], 4
      %s231 = int_to_ptr.vmem [resolvable:$true] %s230
      %233 = dma.hbm_to_vmem [thread:$0]  %s45, 16, %s231, [#allocation21]
    $region93: #{seq2seq_forward.1} parent=1 // pred_fallthru
      _
    // Predicated region
    $region94: #{seq2seq_forward.1} parent=1 // pred_check
      _
    $region95: #{seq2seq_forward.1} parent=1 // pred_check_branch
      %235 = sbr.rel (0) target = $region97
    $region96: #{seq2seq_forward.1} parent=1 // pred_region
      %s237 = ssub.s32 1024, 1024
      %238 = vsyncadd [#allocation21], %s237
      %s239 = sshll.u32 [#allocation22], 4
      %s240 = int_to_ptr.vmem [resolvable:$true] %s239
      %245 = dma.hbm_to_vmem [thread:$0]  %s47, 1024, %s240, [#allocation21], 128, 128, 8
    $region97: #{seq2seq_forward.1} parent=1 // pred_fallthru
      _
    // Predicated region
    $region98: #{seq2seq_forward.1} parent=1 // pred_check
      _
    $region99: #{seq2seq_forward.1} parent=1 // pred_check_branch
      %247 = sbr.rel (0) target = $region101
    $region100: #{seq2seq_forward.1} parent=1 // pred_region
      %s249 = ssub.s32 16, 16
      %250 = vsyncadd [#allocation24], %s249
      %s252 = sshll.u32 [#allocation23], 4
      %s253 = int_to_ptr.vmem [resolvable:$true] %s252
      %255 = dma.hbm_to_vmem [thread:$0]  %s49, 16, %s253, [#allocation24]
    $region101: #{seq2seq_forward.1} parent=1 // pred_fallthru
      _
    // Predicated region
    $region102: #{seq2seq_forward.1} parent=1 // pred_check
      _
    $region103: #{seq2seq_forward.1} parent=1 // pred_check_branch
      %257 = sbr.rel (0) target = $region105
    $region104: #{seq2seq_forward.1} parent=1 // pred_region
      _
    $region105: #{seq2seq_forward.1} parent=1 // pred_fallthru
      _
    // Predicated region
    $region106: #{seq2seq_forward.1} parent=1 // pred_check
      _
    $region107: #{seq2seq_forward.1} parent=1 // pred_check_branch
      %259 = sbr.rel (0) target = $region109
    $region108: #{seq2seq_forward.1} parent=1 // pred_region
      %s261 = ssub.s32 16, 16
      %262 = vsyncadd [#allocation24], %s261
      %s264 = sshll.u32 [#allocation25], 4
      %s265 = int_to_ptr.vmem [resolvable:$true] %s264
      %267 = dma.hbm_to_vmem [thread:$0]  %s53, 16, %s265, [#allocation24]
    $region109: #{seq2seq_forward.1} parent=1 // pred_fallthru
      _
    // Predicated region
    $region110: #{seq2seq_forward.1} parent=1 // pred_check
      _
    $region111: #{seq2seq_forward.1} parent=1 // pred_check_branch
      %269 = sbr.rel (0) target = $region113
    $region112: #{seq2seq_forward.1} parent=1 // pred_region
      %s271 = ssub.s32 1024, 1024
      %272 = vsyncadd [#allocation27], %s271
      %s273 = sshll.u32 [#allocation26], 4
      %s274 = int_to_ptr.vmem [resolvable:$true] %s273
      %279 = dma.hbm_to_vmem [thread:$0]  %s55, 1024, %s274, [#allocation27], 128, 128, 8
    $region113: #{seq2seq_forward.1} parent=1 // pred_fallthru
      _
    // Predicated region
    $region114: #{seq2seq_forward.1} parent=1 // pred_check
      _
    $region115: #{seq2seq_forward.1} parent=1 // pred_check_branch
      %281 = sbr.rel (0) target = $region117
    $region116: #{seq2seq_forward.1} parent=1 // pred_region
      %s283 = ssub.s32 16, 16
      %284 = vsyncadd [#allocation27], %s283
      %s286 = sshll.u32 [#allocation28], 4
      %s287 = int_to_ptr.vmem [resolvable:$true] %s286
      %289 = dma.hbm_to_vmem [thread:$0]  %s57, 16, %s287, [#allocation27]
    $region117: #{seq2seq_forward.1} parent=1 // pred_fallthru
      _
    // Predicated region
    $region118: #{seq2seq_forward.1} parent=1 // pred_check
      _
    $region119: #{seq2seq_forward.1} parent=1 // pred_check_branch
      %291 = sbr.rel (0) target = $region121
    $region120: #{seq2seq_forward.1} parent=1 // pred_region
      _
    $region121: #{seq2seq_forward.1} parent=1 // pred_fallthru
      _
    // Predicated region
    $region122: #{seq2seq_forward.1} parent=1 // pred_check
      _
    $region123: #{seq2seq_forward.1} parent=1 // pred_check_branch
      %293 = sbr.rel (0) target = $region125
    $region124: #{seq2seq_forward.1} parent=1 // pred_region
      _
    $region125: #{seq2seq_forward.1} parent=1 // pred_fallthru
      _
    // Predicated region
    $region126: #{seq2seq_forward.1} parent=1 // pred_check
      _
    $region127: #{seq2seq_forward.1} parent=1 // pred_check_branch
      %295 = sbr.rel (0) target = $region129
    $region128: #{seq2seq_forward.1} parent=1 // pred_region
      %296 = dma.done [#allocation4], 512
    $region129: #{seq2seq_forward.1} parent=1 // pred_fallthru
      _
    // Predicated region
    $region130: #{seq2seq_forward.1} parent=1 // pred_check
      _
    $region131: #{seq2seq_forward.1} parent=1 // pred_check_branch
      %298 = sbr.rel (0) target = $region133
    $region132: #{seq2seq_forward.1} parent=1 // pred_region
      %299 = dma.done [#allocation6], 32
    $region133: #{seq2seq_forward.1} parent=1 // pred_fallthru
      _
    // Predicated region
    $region134: #{seq2seq_forward.1} parent=1 // pred_check
      _
    $region135: #{seq2seq_forward.1} parent=1 // pred_check_branch
      %301 = sbr.rel (0) target = $region137
    $region136: #{seq2seq_forward.1} parent=1 // pred_region
      %302 = dma.done [#allocation6], 32
    $region137: #{seq2seq_forward.1} parent=1 // pred_fallthru
      _
    // Predicated region
    $region138: #{seq2seq_forward.1} parent=1 // pred_check
      _
    $region139: #{seq2seq_forward.1} parent=1 // pred_check_branch
      %304 = sbr.rel (0) target = $region141
    $region140: #{seq2seq_forward.1} parent=1 // pred_region
      %305 = dma.done [#allocation9], 32
    $region141: #{seq2seq_forward.1} parent=1 // pred_fallthru
      _
    // Predicated region
    $region142: #{seq2seq_forward.1} parent=1 // pred_check
      _
    $region143: #{seq2seq_forward.1} parent=1 // pred_check_branch
      %307 = sbr.rel (0) target = $region145
    $region144: #{seq2seq_forward.1} parent=1 // pred_region
      %308 = dma.done [#allocation9], 512
    $region145: #{seq2seq_forward.1} parent=1 // pred_fallthru
      _
    // Predicated region
    $region146: #{seq2seq_forward.1} parent=1 // pred_check
      _
    $region147: #{seq2seq_forward.1} parent=1 // pred_check_branch
      %310 = sbr.rel (0) target = $region149
    $region148: #{seq2seq_forward.1} parent=1 // pred_region
      %311 = dma.done [#allocation12], 32
    $region149: #{seq2seq_forward.1} parent=1 // pred_fallthru
      _
    // Predicated region
    $region150: #{seq2seq_forward.1} parent=1 // pred_check
      _
    $region151: #{seq2seq_forward.1} parent=1 // pred_check_branch
      %313 = sbr.rel (0) target = $region153
    $region152: #{seq2seq_forward.1} parent=1 // pred_region
      %314 = dma.done [#allocation12], 32
    $region153: #{seq2seq_forward.1} parent=1 // pred_fallthru
      _
    // Predicated region
    $region154: #{seq2seq_forward.1} parent=1 // pred_check
      _
    $region155: #{seq2seq_forward.1} parent=1 // pred_check_branch
      %316 = sbr.rel (0) target = $region157
    $region156: #{seq2seq_forward.1} parent=1 // pred_region
      %317 = dma.done [#allocation15], 32
    $region157: #{seq2seq_forward.1} parent=1 // pred_fallthru
      _
    // Predicated region
    $region158: #{seq2seq_forward.1} parent=1 // pred_check
      _
    $region159: #{seq2seq_forward.1} parent=1 // pred_check_branch
      %319 = sbr.rel (0) target = $region161
    $region160: #{seq2seq_forward.1} parent=1 // pred_region
      %320 = dma.done [#allocation15], 32
    $region161: #{seq2seq_forward.1} parent=1 // pred_fallthru
      _
    // Predicated region
    $region162: #{seq2seq_forward.1} parent=1 // pred_check
      _
    $region163: #{seq2seq_forward.1} parent=1 // pred_check_branch
      %322 = sbr.rel (0) target = $region165
    $region164: #{seq2seq_forward.1} parent=1 // pred_region
      %323 = dma.done [#allocation18], 2048
    $region165: #{seq2seq_forward.1} parent=1 // pred_fallthru
      _
    // Predicated region
    $region166: #{seq2seq_forward.1} parent=1 // pred_check
      _
    $region167: #{seq2seq_forward.1} parent=1 // pred_check_branch
      %325 = sbr.rel (0) target = $region169
    $region168: #{seq2seq_forward.1} parent=1 // pred_region
      %326 = dma.done [#allocation18], 32
    $region169: #{seq2seq_forward.1} parent=1 // pred_fallthru
      _
    // Predicated region
    $region170: #{seq2seq_forward.1} parent=1 // pred_check
      _
    $region171: #{seq2seq_forward.1} parent=1 // pred_check_branch
      %328 = sbr.rel (0) target = $region173
    $region172: #{seq2seq_forward.1} parent=1 // pred_region
      %329 = dma.done [#allocation21], 16
    $region173: #{seq2seq_forward.1} parent=1 // pred_fallthru
      _
    // Predicated region
    $region174: #{seq2seq_forward.1} parent=1 // pred_check
      _
    $region175: #{seq2seq_forward.1} parent=1 // pred_check_branch
      %331 = sbr.rel (0) target = $region177
    $region176: #{seq2seq_forward.1} parent=1 // pred_region
      %332 = dma.done [#allocation21], 1024
    $region177: #{seq2seq_forward.1} parent=1 // pred_fallthru
      _
    // Predicated region
    $region178: #{seq2seq_forward.1} parent=1 // pred_check
      _
    $region179: #{seq2seq_forward.1} parent=1 // pred_check_branch
      %334 = sbr.rel (0) target = $region181
    $region180: #{seq2seq_forward.1} parent=1 // pred_region
      %335 = dma.done [#allocation24], 16
    $region181: #{seq2seq_forward.1} parent=1 // pred_fallthru
      _
    // Predicated region
    $region182: #{seq2seq_forward.1} parent=1 // pred_check
      _
    $region183: #{seq2seq_forward.1} parent=1 // pred_check_branch
      %337 = sbr.rel (0) target = $region185
    $region184: #{seq2seq_forward.1} parent=1 // pred_region
      %338 = dma.done [#allocation24], 16
    $region185: #{seq2seq_forward.1} parent=1 // pred_fallthru
      _
    // Predicated region
    $region186: #{seq2seq_forward.1} parent=1 // pred_check
      _
    $region187: #{seq2seq_forward.1} parent=1 // pred_check_branch
      %340 = sbr.rel (0) target = $region189
    $region188: #{seq2seq_forward.1} parent=1 // pred_region
      %341 = dma.done [#allocation27], 1024
    $region189: #{seq2seq_forward.1} parent=1 // pred_fallthru
      _
    // Predicated region
    $region190: #{seq2seq_forward.1} parent=1 // pred_check
      _
    $region191: #{seq2seq_forward.1} parent=1 // pred_check_branch
      %343 = sbr.rel (0) target = $region193
    $region192: #{seq2seq_forward.1} parent=1 // pred_region
      %344 = dma.done [#allocation27], 16
    $region193: #{seq2seq_forward.1} parent=1 // pred_fallthru
      _
    %v345 = vld [vmem:[%s1] sm:$0xff]
    %v346 = vld [vmem:[%s1 + $0x8] sm:$0xff]
    %v347 = vld [vmem:[#allocation3] sm:$0xff]
    %v348 = vld [vmem:[#allocation3 + $0x8] sm:$0xff]
    %v349 = vld [vmem:[#allocation3 + $0x10] sm:$0xff]
    %v350 = vld [vmem:[#allocation3 + $0x18] sm:$0xff]
    %v351 = vld [vmem:[%s9] sm:$0xff]
    %v352 = vld [vmem:[%s9 + $0x8] sm:$0xff]
    %v353 = vld [vmem:[%s9 + $0x10] sm:$0xff]
    %v354 = vld [vmem:[%s9 + $0x18] sm:$0xff]
    %v355 = vld [vmem:[%s9 + $0x20] sm:$0xff]
    %v356 = vld [vmem:[%s9 + $0x28] sm:$0xff]
    %v357 = vld [vmem:[%s9 + $0x30] sm:$0xff]
    %v358 = vld [vmem:[%s9 + $0x38] sm:$0xff]
    %v359 = vld [vmem:[#allocation5] sm:$0x3]
    %v360 = vld [vmem:[#allocation7] sm:$0x1]
    %v361 = vld [vmem:[#allocation7 + $0x1] sm:$0x1]
    %v363 = vlaneseq
    %v364 = vshrl.u32 %v363, 7
    %v365 = vsub.s32 0, %v364
    %v366 = vrot.slane %v359, %v365
    %v367 = vlaneseq
    %v368 = vshrl.u32 %v367, 7
    %v369 = vsub.s32 1, %v368
    %v370 = vrot.slane %v359, %v369
    %vm373 = vcmask 130048
    %v375 = vsel %vm373, %v345, 0
    %v378 = vsel %vm373, %v346, 0
    %380 = vmatprep.subr.mxu0 %v348
    %381 = vmatpush1.msra.mxu0 %v347
    %382 = vmatprep.subr.mxu0 %v350
    %383 = vmatpush1.msra.mxu0 %v349
    %384 = vmatprep.subr.mxu0 0.0
    %385 = vmatpush1.msra.mxu0 0.0
    %386 = vmatprep.subr.mxu0 0.0
    %387 = vmatpush1.msra.mxu0 0.0
    %388 = vmatprep.subr.mxu0 0.0
    %389 = vmatpush1.msra.mxu0 0.0
    %390 = vmatprep.subr.mxu0 0.0
    %391 = vmatpush1.msra.mxu0 0.0
    %392 = vmatprep.subr.mxu0 0.0
    %393 = vmatpush1.msra.mxu0 0.0
    %394 = vmatprep.subr.mxu0 0.0
    %395 = vmatpush1.msra.mxu0 0.0
    %396 = vmatprep.subr.mxu0 0.0
    %397 = vmatpush1.msra.mxu0 0.0
    %398 = vmatprep.subr.mxu0 0.0
    %399 = vmatpush1.msra.mxu0 0.0
    %400 = vmatprep.subr.mxu0 0.0
    %401 = vmatpush1.msra.mxu0 0.0
    %402 = vmatprep.subr.mxu0 0.0
    %403 = vmatpush1.msra.mxu0 0.0
    %404 = vmatprep.subr.mxu0 0.0
    %405 = vmatpush1.msra.mxu0 0.0
    %406 = vmatprep.subr.mxu0 0.0
    %407 = vmatpush1.msra.mxu0 0.0
    %408 = vmatprep.subr.mxu0 0.0
    %409 = vmatpush1.msra.mxu0 0.0
    %410 = vmatprep.subr.mxu0 0.0
    %411 = vmatpush1.msra.mxu0 0.0
    %412 = vmatprep.subr.mxu0 0.0
    %413 = vmatpush1.msra.mxu0 0.0
    %414 = vmatprep.subr.mxu0 0.0
    %415 = vmatpush1.msra.mxu0 0.0
    %416 = vmatprep.subr.mxu0 0.0
    %417 = vmatpush1.msra.mxu0 0.0
    %418 = vmatprep.subr.mxu0 0.0
    %419 = vmatpush1.msra.mxu0 0.0
    %420 = vmatprep.subr.mxu0 0.0
    %421 = vmatpush1.msra.mxu0 0.0
    %422 = vmatprep.subr.mxu0 0.0
    %423 = vmatpush1.msra.mxu0 0.0
    %424 = vmatprep.subr.mxu0 0.0
    %425 = vmatpush1.msra.mxu0 0.0
    %426 = vmatprep.subr.mxu0 0.0
    %427 = vmatpush1.msra.mxu0 0.0
    %428 = vmatprep.subr.mxu0 0.0
    %429 = vmatpush1.msra.mxu0 0.0
    %430 = vmatprep.subr.mxu0 0.0
    %431 = vmatpush1.msra.mxu0 0.0
    %432 = vmatprep.subr.mxu0 0.0
    %433 = vmatpush1.msra.mxu0 0.0
    %434 = vmatprep.subr.mxu0 0.0
    %435 = vmatpush1.msra.mxu0 0.0
    %436 = vmatprep.subr.mxu0 0.0
    %437 = vmatpush1.msra.mxu0 0.0
    %438 = vmatprep.subr.mxu0 0.0
    %439 = vmatpush1.msra.mxu0 0.0
    %440 = vmatprep.subr.mxu0 0.0
    %441 = vmatpush1.msra.mxu0 0.0
    %442 = vmatprep.subr.mxu0 0.0
    %443 = vmatpush1.msra.mxu0 0.0
    %444 = vmatprep.mubr.f32.mxu0 0.0
    %445 = vmatmul.mubr.f32.gmra.mrb[0].mxu0 %v375
    %v446 = vpop.f32.mrb[0].mxu0
    %v447 = vadd.f32 %v366, %v446
    %v448 = vpop.f32.mrb[0].mxu0
    %v449 = vadd.f32 %v370, %v448
    %450 = vmatprep.mubr.f32.mxu0 0.0
    %451 = vmatmul.mubr.f32.gmra.mrb[0].mxu0 %v378
    %v452 = vpop.f32.mrb[0].mxu0
    %v453 = vadd.f32 %v366, %v452
    %v454 = vpop.f32.mrb[0].mxu0
    %v455 = vadd.f32 %v370, %v454
    %456 = vdwg.mxu0
    %v458 = vlaneseq
    %v459 = vshrl.u32 %v458, 7
    %v460 = vsub.s32 0, %v459
    %v461 = vrot.slane %v360, %v460
    %vm463 = vcmask 261120
    %v465 = vsel %vm463, 0.0, 0
    %467 = vmatprep.subr.mxu0 0.0
    %468 = vmatpush1.msra.mxu0 %v351
    %469 = vmatprep.subr.mxu0 0.0
    %470 = vmatpush1.msra.mxu0 %v352
    %471 = vmatprep.subr.mxu0 0.0
    %472 = vmatpush1.msra.mxu0 %v353
    %473 = vmatprep.subr.mxu0 0.0
    %474 = vmatpush1.msra.mxu0 %v354
    %475 = vmatprep.subr.mxu0 0.0
    %476 = vmatpush1.msra.mxu0 0.0
    %477 = vmatprep.subr.mxu0 0.0
    %478 = vmatpush1.msra.mxu0 0.0
    %479 = vmatprep.subr.mxu0 0.0
    %480 = vmatpush1.msra.mxu0 0.0
    %481 = vmatprep.subr.mxu0 0.0
    %482 = vmatpush1.msra.mxu0 0.0
    %483 = vmatprep.subr.mxu0 0.0
    %484 = vmatpush1.msra.mxu0 0.0
    %485 = vmatprep.subr.mxu0 0.0
    %486 = vmatpush1.msra.mxu0 0.0
    %487 = vmatprep.subr.mxu0 0.0
    %488 = vmatpush1.msra.mxu0 0.0
    %489 = vmatprep.subr.mxu0 0.0
    %490 = vmatpush1.msra.mxu0 0.0
    %491 = vmatprep.subr.mxu0 0.0
    %492 = vmatpush1.msra.mxu0 0.0
    %493 = vmatprep.subr.mxu0 0.0
    %494 = vmatpush1.msra.mxu0 0.0
    %495 = vmatprep.subr.mxu0 0.0
    %496 = vmatpush1.msra.mxu0 0.0
    %497 = vmatprep.subr.mxu0 0.0
    %498 = vmatpush1.msra.mxu0 0.0
    %499 = vmatprep.subr.mxu0 0.0
    %500 = vmatpush1.msra.mxu0 0.0
    %501 = vmatprep.subr.mxu0 0.0
    %502 = vmatpush1.msra.mxu0 0.0
    %503 = vmatprep.subr.mxu0 0.0
    %504 = vmatpush1.msra.mxu0 0.0
    %505 = vmatprep.subr.mxu0 0.0
    %506 = vmatpush1.msra.mxu0 0.0
    %507 = vmatprep.subr.mxu0 0.0
    %508 = vmatpush1.msra.mxu0 0.0
    %509 = vmatprep.subr.mxu0 0.0
    %510 = vmatpush1.msra.mxu0 0.0
    %511 = vmatprep.subr.mxu0 0.0
    %512 = vmatpush1.msra.mxu0 0.0
    %513 = vmatprep.subr.mxu0 0.0
    %514 = vmatpush1.msra.mxu0 0.0
    %515 = vmatprep.subr.mxu0 0.0
    %516 = vmatpush1.msra.mxu0 0.0
    %517 = vmatprep.subr.mxu0 0.0
    %518 = vmatpush1.msra.mxu0 0.0
    %519 = vmatprep.subr.mxu0 0.0
    %520 = vmatpush1.msra.mxu0 0.0
    %521 = vmatprep.subr.mxu0 0.0
    %522 = vmatpush1.msra.mxu0 0.0
    %523 = vmatprep.subr.mxu0 0.0
    %524 = vmatpush1.msra.mxu0 0.0
    %525 = vmatprep.subr.mxu0 0.0
    %526 = vmatpush1.msra.mxu0 0.0
    %527 = vmatprep.subr.mxu0 0.0
    %528 = vmatpush1.msra.mxu0 0.0
    %529 = vmatprep.subr.mxu0 0.0
    %530 = vmatpush1.msra.mxu0 0.0
    %531 = vmatprep.mubr.f32.mxu0 0.0
    %532 = vmatmul.mubr.f32.gmra.mrb[0].mxu0 %v465
    %v533 = vpop.f32.mrb[0].mxu0
    %v534 = vadd.f32 %v461, %v533
    %v535 = vpop.f32.mrb[0].mxu0
    %536 = vdwg.mxu0
    %v537 = vadd.f32 %v447, %v534
    %v538 = vxor.u32 %v537, 2147483648
    %v539 = vmul.f32 %v538, 1.442695
    %v540 = vpow.pop %v539
    %v541 = vadd.f32 %v540, 1.0
    %v542 = vrcp.pop %v541
    %v543 = vmul.f32 1.0, %v542
    %545 = vrot.lane.b32.xlu0 %v534, 64
    %v546 = vpop.permute.xlu0 %545
    %v548 = vmul.f32 %v543, %v546
    %550 = vrot.lane.b32.xlu0 %v548, 64
    %v551 = vpop.permute.xlu0 %550
    %v553 = vadd.f32 %v447, %v551
    %v554 = vtanh.pop %v553
    %v555 = vsub.f32 1.0, %v543
    %557 = vrot.lane.b32.xlu0 %v554, 96
    %v558 = vpop.permute.xlu0 %557
    %v560 = vmul.f32 %v555, %v558
    %v561 = vmul.f32 %v543, 0.0
    %v562 = vadd.f32 %v560, %v561
    %564 = vrot.lane.b32.xlu0 %v562, 96
    %v565 = vpop.permute.xlu0 %564
    %v566 = vsel %vm463, %v565, 0
    %568 = vmatprep.subr.mxu0 0.0
    %569 = vmatpush1.msra.mxu0 %v351
    %570 = vmatprep.subr.mxu0 0.0
    %571 = vmatpush1.msra.mxu0 %v352
    %572 = vmatprep.subr.mxu0 0.0
    %573 = vmatpush1.msra.mxu0 %v353
    %574 = vmatprep.subr.mxu0 0.0
    %575 = vmatpush1.msra.mxu0 %v354
    %576 = vmatprep.subr.mxu0 0.0
    %577 = vmatpush1.msra.mxu0 0.0
    %578 = vmatprep.subr.mxu0 0.0
    %579 = vmatpush1.msra.mxu0 0.0
    %580 = vmatprep.subr.mxu0 0.0
    %581 = vmatpush1.msra.mxu0 0.0
    %582 = vmatprep.subr.mxu0 0.0
    %583 = vmatpush1.msra.mxu0 0.0
    %584 = vmatprep.subr.mxu0 0.0
    %585 = vmatpush1.msra.mxu0 0.0
    %586 = vmatprep.subr.mxu0 0.0
    %587 = vmatpush1.msra.mxu0 0.0
    %588 = vmatprep.subr.mxu0 0.0
    %589 = vmatpush1.msra.mxu0 0.0
    %590 = vmatprep.subr.mxu0 0.0
    %591 = vmatpush1.msra.mxu0 0.0
    %592 = vmatprep.subr.mxu0 0.0
    %593 = vmatpush1.msra.mxu0 0.0
    %594 = vmatprep.subr.mxu0 0.0
    %595 = vmatpush1.msra.mxu0 0.0
    %596 = vmatprep.subr.mxu0 0.0
    %597 = vmatpush1.msra.mxu0 0.0
    %598 = vmatprep.subr.mxu0 0.0
    %599 = vmatpush1.msra.mxu0 0.0
    %600 = vmatprep.subr.mxu0 0.0
    %601 = vmatpush1.msra.mxu0 0.0
    %602 = vmatprep.subr.mxu0 0.0
    %603 = vmatpush1.msra.mxu0 0.0
    %604 = vmatprep.subr.mxu0 0.0
    %605 = vmatpush1.msra.mxu0 0.0
    %606 = vmatprep.subr.mxu0 0.0
    %607 = vmatpush1.msra.mxu0 0.0
    %608 = vmatprep.subr.mxu0 0.0
    %609 = vmatpush1.msra.mxu0 0.0
    %610 = vmatprep.subr.mxu0 0.0
    %611 = vmatpush1.msra.mxu0 0.0
    %612 = vmatprep.subr.mxu0 0.0
    %613 = vmatpush1.msra.mxu0 0.0
    %614 = vmatprep.subr.mxu0 0.0
    %615 = vmatpush1.msra.mxu0 0.0
    %616 = vmatprep.subr.mxu0 0.0
    %617 = vmatpush1.msra.mxu0 0.0
    %618 = vmatprep.subr.mxu0 0.0
    %619 = vmatpush1.msra.mxu0 0.0
    %620 = vmatprep.subr.mxu0 0.0
    %621 = vmatpush1.msra.mxu0 0.0
    %622 = vmatprep.subr.mxu0 0.0
    %623 = vmatpush1.msra.mxu0 0.0
    %624 = vmatprep.subr.mxu0 0.0
    %625 = vmatpush1.msra.mxu0 0.0
    %626 = vmatprep.subr.mxu0 0.0
    %627 = vmatpush1.msra.mxu0 0.0
    %628 = vmatprep.subr.mxu0 0.0
    %629 = vmatpush1.msra.mxu0 0.0
    %630 = vmatprep.subr.mxu0 0.0
    %631 = vmatpush1.msra.mxu0 0.0
    %632 = vmatprep.mubr.f32.mxu0 0.0
    %633 = vmatmul.mubr.f32.gmra.mrb[0].mxu0 %v566
    %v634 = vpop.f32.mrb[0].mxu0
    %v635 = vadd.f32 %v461, %v634
    %v636 = vpop.f32.mrb[0].mxu0
    %637 = vdwg.mxu0
    %v639 = vrot.slane %v635, 6
    %v641 = vadd.f32 %v447, %v639
    %v642 = vxor.u32 %v641, 2147483648
    %v643 = vmul.f32 %v642, 1.442695
    %v644 = vpow.pop %v643
    %v645 = vadd.f32 %v644, 1.0
    %v646 = vrcp.pop %v645
    %v647 = vmul.f32 1.0, %v646
    %648 = vrot.lane.b32.xlu0 %v639, 64
    %v649 = vpop.permute.xlu0 %648
    %v651 = vmul.f32 %v647, %v649
    %653 = vrot.lane.b32.xlu0 %v651, 64
    %v654 = vpop.permute.xlu0 %653
    %v656 = vadd.f32 %v447, %v654
    %v657 = vtanh.pop %v656
    %v658 = vsub.f32 1.0, %v647
    %660 = vrot.lane.b32.xlu0 %v657, 96
    %v661 = vpop.permute.xlu0 %660
    %v663 = vmul.f32 %v658, %v661
    %v664 = vrot.slane %v562, 6
    %v666 = vmul.f32 %v647, %v664
    %v667 = vadd.f32 %v663, %v666
    %v669 = vrot.slane %v667, 2
    %670 = vrot.lane.b32.xlu0 %v669, 96
    %v671 = vpop.permute.xlu0 %670
    %v672 = vsel %vm463, %v671, 0
    %674 = vmatprep.subr.mxu0 0.0
    %675 = vmatpush1.msra.mxu0 %v351
    %676 = vmatprep.subr.mxu0 0.0
    %677 = vmatpush1.msra.mxu0 %v352
    %678 = vmatprep.subr.mxu0 0.0
    %679 = vmatpush1.msra.mxu0 %v353
    %680 = vmatprep.subr.mxu0 0.0
    %681 = vmatpush1.msra.mxu0 %v354
    %682 = vmatprep.subr.mxu0 0.0
    %683 = vmatpush1.msra.mxu0 0.0
    %684 = vmatprep.subr.mxu0 0.0
    %685 = vmatpush1.msra.mxu0 0.0
    %686 = vmatprep.subr.mxu0 0.0
    %687 = vmatpush1.msra.mxu0 0.0
    %688 = vmatprep.subr.mxu0 0.0
    %689 = vmatpush1.msra.mxu0 0.0
    %690 = vmatprep.subr.mxu0 0.0
    %691 = vmatpush1.msra.mxu0 0.0
    %692 = vmatprep.subr.mxu0 0.0
    %693 = vmatpush1.msra.mxu0 0.0
    %694 = vmatprep.subr.mxu0 0.0
    %695 = vmatpush1.msra.mxu0 0.0
    %696 = vmatprep.subr.mxu0 0.0
    %697 = vmatpush1.msra.mxu0 0.0
    %698 = vmatprep.subr.mxu0 0.0
    %699 = vmatpush1.msra.mxu0 0.0
    %700 = vmatprep.subr.mxu0 0.0
    %701 = vmatpush1.msra.mxu0 0.0
    %702 = vmatprep.subr.mxu0 0.0
    %703 = vmatpush1.msra.mxu0 0.0
    %704 = vmatprep.subr.mxu0 0.0
    %705 = vmatpush1.msra.mxu0 0.0
    %706 = vmatprep.subr.mxu0 0.0
    %707 = vmatpush1.msra.mxu0 0.0
    %708 = vmatprep.subr.mxu0 0.0
    %709 = vmatpush1.msra.mxu0 0.0
    %710 = vmatprep.subr.mxu0 0.0
    %711 = vmatpush1.msra.mxu0 0.0
    %712 = vmatprep.subr.mxu0 0.0
    %713 = vmatpush1.msra.mxu0 0.0
    %714 = vmatprep.subr.mxu0 0.0
    %715 = vmatpush1.msra.mxu0 0.0
    %716 = vmatprep.subr.mxu0 0.0
    %717 = vmatpush1.msra.mxu0 0.0
    %718 = vmatprep.subr.mxu0 0.0
    %719 = vmatpush1.msra.mxu0 0.0
    %720 = vmatprep.subr.mxu0 0.0
    %721 = vmatpush1.msra.mxu0 0.0
    %722 = vmatprep.subr.mxu0 0.0
    %723 = vmatpush1.msra.mxu0 0.0
    %724 = vmatprep.subr.mxu0 0.0
    %725 = vmatpush1.msra.mxu0 0.0
    %726 = vmatprep.subr.mxu0 0.0
    %727 = vmatpush1.msra.mxu0 0.0
    %728 = vmatprep.subr.mxu0 0.0
    %729 = vmatpush1.msra.mxu0 0.0
    %730 = vmatprep.subr.mxu0 0.0
    %731 = vmatpush1.msra.mxu0 0.0
    %732 = vmatprep.subr.mxu0 0.0
    %733 = vmatpush1.msra.mxu0 0.0
    %734 = vmatprep.subr.mxu0 0.0
    %735 = vmatpush1.msra.mxu0 0.0
    %736 = vmatprep.subr.mxu0 0.0
    %737 = vmatpush1.msra.mxu0 0.0
    %738 = vmatprep.mubr.f32.mxu0 0.0
    %739 = vmatmul.mubr.f32.gmra.mrb[0].mxu0 %v672
    %v740 = vpop.f32.mrb[0].mxu0
    %v741 = vadd.f32 %v461, %v740
    %v742 = vpop.f32.mrb[0].mxu0
    %743 = vdwg.mxu0
    %v745 = vrot.slane %v741, 4
    %v747 = vadd.f32 %v447, %v745
    %v748 = vxor.u32 %v747, 2147483648
    %v749 = vmul.f32 %v748, 1.442695
    %v750 = vpow.pop %v749
    %v751 = vadd.f32 %v750, 1.0
    %v752 = vrcp.pop %v751
    %v753 = vmul.f32 1.0, %v752
    %754 = vrot.lane.b32.xlu0 %v745, 64
    %v755 = vpop.permute.xlu0 %754
    %v757 = vmul.f32 %v753, %v755
    %759 = vrot.lane.b32.xlu0 %v757, 64
    %v760 = vpop.permute.xlu0 %759
    %v762 = vadd.f32 %v447, %v760
    %v763 = vtanh.pop %v762
    %v764 = vsub.f32 1.0, %v753
    %766 = vrot.lane.b32.xlu0 %v763, 96
    %v767 = vpop.permute.xlu0 %766
    %v769 = vmul.f32 %v764, %v767
    %v770 = vrot.slane %v667, 6
    %v772 = vmul.f32 %v753, %v770
    %v773 = vadd.f32 %v769, %v772
    %v775 = vrot.slane %v773, 4
    %776 = vrot.lane.b32.xlu0 %v775, 96
    %v777 = vpop.permute.xlu0 %776
    %v778 = vsel %vm463, %v777, 0
    %780 = vmatprep.subr.mxu0 0.0
    %781 = vmatpush1.msra.mxu0 %v351
    %782 = vmatprep.subr.mxu0 0.0
    %783 = vmatpush1.msra.mxu0 %v352
    %784 = vmatprep.subr.mxu0 0.0
    %785 = vmatpush1.msra.mxu0 %v353
    %786 = vmatprep.subr.mxu0 0.0
    %787 = vmatpush1.msra.mxu0 %v354
    %788 = vmatprep.subr.mxu0 0.0
    %789 = vmatpush1.msra.mxu0 0.0
    %790 = vmatprep.subr.mxu0 0.0
    %791 = vmatpush1.msra.mxu0 0.0
    %792 = vmatprep.subr.mxu0 0.0
    %793 = vmatpush1.msra.mxu0 0.0
    %794 = vmatprep.subr.mxu0 0.0
    %795 = vmatpush1.msra.mxu0 0.0
    %796 = vmatprep.subr.mxu0 0.0
    %797 = vmatpush1.msra.mxu0 0.0
    %798 = vmatprep.subr.mxu0 0.0
    %799 = vmatpush1.msra.mxu0 0.0
    %800 = vmatprep.subr.mxu0 0.0
    %801 = vmatpush1.msra.mxu0 0.0
    %802 = vmatprep.subr.mxu0 0.0
    %803 = vmatpush1.msra.mxu0 0.0
    %804 = vmatprep.subr.mxu0 0.0
    %805 = vmatpush1.msra.mxu0 0.0
    %806 = vmatprep.subr.mxu0 0.0
    %807 = vmatpush1.msra.mxu0 0.0
    %808 = vmatprep.subr.mxu0 0.0
    %809 = vmatpush1.msra.mxu0 0.0
    %810 = vmatprep.subr.mxu0 0.0
    %811 = vmatpush1.msra.mxu0 0.0
    %812 = vmatprep.subr.mxu0 0.0
    %813 = vmatpush1.msra.mxu0 0.0
    %814 = vmatprep.subr.mxu0 0.0
    %815 = vmatpush1.msra.mxu0 0.0
    %816 = vmatprep.subr.mxu0 0.0
    %817 = vmatpush1.msra.mxu0 0.0
    %818 = vmatprep.subr.mxu0 0.0
    %819 = vmatpush1.msra.mxu0 0.0
    %820 = vmatprep.subr.mxu0 0.0
    %821 = vmatpush1.msra.mxu0 0.0
    %822 = vmatprep.subr.mxu0 0.0
    %823 = vmatpush1.msra.mxu0 0.0
    %824 = vmatprep.subr.mxu0 0.0
    %825 = vmatpush1.msra.mxu0 0.0
    %826 = vmatprep.subr.mxu0 0.0
    %827 = vmatpush1.msra.mxu0 0.0
    %828 = vmatprep.subr.mxu0 0.0
    %829 = vmatpush1.msra.mxu0 0.0
    %830 = vmatprep.subr.mxu0 0.0
    %831 = vmatpush1.msra.mxu0 0.0
    %832 = vmatprep.subr.mxu0 0.0
    %833 = vmatpush1.msra.mxu0 0.0
    %834 = vmatprep.subr.mxu0 0.0
    %835 = vmatpush1.msra.mxu0 0.0
    %836 = vmatprep.subr.mxu0 0.0
    %837 = vmatpush1.msra.mxu0 0.0
    %838 = vmatprep.subr.mxu0 0.0
    %839 = vmatpush1.msra.mxu0 0.0
    %840 = vmatprep.subr.mxu0 0.0
    %841 = vmatpush1.msra.mxu0 0.0
    %842 = vmatprep.subr.mxu0 0.0
    %843 = vmatpush1.msra.mxu0 0.0
    %844 = vmatprep.mubr.f32.mxu0 0.0
    %845 = vmatmul.mubr.f32.gmra.mrb[0].mxu0 %v778
    %v846 = vpop.f32.mrb[0].mxu0
    %v847 = vadd.f32 %v461, %v846
    %v848 = vpop.f32.mrb[0].mxu0
    %849 = vdwg.mxu0
    %v851 = vrot.slane %v847, 2
    %v853 = vadd.f32 %v447, %v851
    %v854 = vxor.u32 %v853, 2147483648
    %v855 = vmul.f32 %v854, 1.442695
    %v856 = vpow.pop %v855
    %v857 = vadd.f32 %v856, 1.0
    %v858 = vrcp.pop %v857
    %v859 = vmul.f32 1.0, %v858
    %860 = vrot.lane.b32.xlu0 %v851, 64
    %v861 = vpop.permute.xlu0 %860
    %v863 = vmul.f32 %v859, %v861
    %865 = vrot.lane.b32.xlu0 %v863, 64
    %v866 = vpop.permute.xlu0 %865
    %v868 = vadd.f32 %v447, %v866
    %v869 = vtanh.pop %v868
    %v870 = vsub.f32 1.0, %v859
    %872 = vrot.lane.b32.xlu0 %v869, 96
    %v873 = vpop.permute.xlu0 %872
    %v875 = vmul.f32 %v870, %v873
    %v876 = vrot.slane %v773, 6
    %v878 = vmul.f32 %v859, %v876
    %v879 = vadd.f32 %v875, %v878
    %v881 = vrot.slane %v879, 6
    %882 = vrot.lane.b32.xlu0 %v881, 96
    %v883 = vpop.permute.xlu0 %882
    %v884 = vsel %vm463, %v883, 0
    %886 = vmatprep.subr.mxu0 0.0
    %887 = vmatpush1.msra.mxu0 %v351
    %888 = vmatprep.subr.mxu0 0.0
    %889 = vmatpush1.msra.mxu0 %v352
    %890 = vmatprep.subr.mxu0 0.0
    %891 = vmatpush1.msra.mxu0 %v353
    %892 = vmatprep.subr.mxu0 0.0
    %893 = vmatpush1.msra.mxu0 %v354
    %894 = vmatprep.subr.mxu0 0.0
    %895 = vmatpush1.msra.mxu0 0.0
    %896 = vmatprep.subr.mxu0 0.0
    %897 = vmatpush1.msra.mxu0 0.0
    %898 = vmatprep.subr.mxu0 0.0
    %899 = vmatpush1.msra.mxu0 0.0
    %900 = vmatprep.subr.mxu0 0.0
    %901 = vmatpush1.msra.mxu0 0.0
    %902 = vmatprep.subr.mxu0 0.0
    %903 = vmatpush1.msra.mxu0 0.0
    %904 = vmatprep.subr.mxu0 0.0
    %905 = vmatpush1.msra.mxu0 0.0
    %906 = vmatprep.subr.mxu0 0.0
    %907 = vmatpush1.msra.mxu0 0.0
    %908 = vmatprep.subr.mxu0 0.0
    %909 = vmatpush1.msra.mxu0 0.0
    %910 = vmatprep.subr.mxu0 0.0
    %911 = vmatpush1.msra.mxu0 0.0
    %912 = vmatprep.subr.mxu0 0.0
    %913 = vmatpush1.msra.mxu0 0.0
    %914 = vmatprep.subr.mxu0 0.0
    %915 = vmatpush1.msra.mxu0 0.0
    %916 = vmatprep.subr.mxu0 0.0
    %917 = vmatpush1.msra.mxu0 0.0
    %918 = vmatprep.subr.mxu0 0.0
    %919 = vmatpush1.msra.mxu0 0.0
    %920 = vmatprep.subr.mxu0 0.0
    %921 = vmatpush1.msra.mxu0 0.0
    %922 = vmatprep.subr.mxu0 0.0
    %923 = vmatpush1.msra.mxu0 0.0
    %924 = vmatprep.subr.mxu0 0.0
    %925 = vmatpush1.msra.mxu0 0.0
    %926 = vmatprep.subr.mxu0 0.0
    %927 = vmatpush1.msra.mxu0 0.0
    %928 = vmatprep.subr.mxu0 0.0
    %929 = vmatpush1.msra.mxu0 0.0
    %930 = vmatprep.subr.mxu0 0.0
    %931 = vmatpush1.msra.mxu0 0.0
    %932 = vmatprep.subr.mxu0 0.0
    %933 = vmatpush1.msra.mxu0 0.0
    %934 = vmatprep.subr.mxu0 0.0
    %935 = vmatpush1.msra.mxu0 0.0
    %936 = vmatprep.subr.mxu0 0.0
    %937 = vmatpush1.msra.mxu0 0.0
    %938 = vmatprep.subr.mxu0 0.0
    %939 = vmatpush1.msra.mxu0 0.0
    %940 = vmatprep.subr.mxu0 0.0
    %941 = vmatpush1.msra.mxu0 0.0
    %942 = vmatprep.subr.mxu0 0.0
    %943 = vmatpush1.msra.mxu0 0.0
    %944 = vmatprep.subr.mxu0 0.0
    %945 = vmatpush1.msra.mxu0 0.0
    %946 = vmatprep.subr.mxu0 0.0
    %947 = vmatpush1.msra.mxu0 0.0
    %948 = vmatprep.subr.mxu0 0.0
    %949 = vmatpush1.msra.mxu0 0.0
    %950 = vmatprep.mubr.f32.mxu0 0.0
    %951 = vmatmul.mubr.f32.gmra.mrb[0].mxu0 %v884
    %v952 = vpop.f32.mrb[0].mxu0
    %v953 = vadd.f32 %v461, %v952
    %v954 = vpop.f32.mrb[0].mxu0
    %955 = vdwg.mxu0
    %v956 = vadd.f32 %v453, %v953
    %v957 = vxor.u32 %v956, 2147483648
    %v958 = vmul.f32 %v957, 1.442695
    %v959 = vpow.pop %v958
    %v960 = vadd.f32 %v959, 1.0
    %v961 = vrcp.pop %v960
    %v962 = vmul.f32 1.0, %v961
    %964 = vrot.lane.b32.xlu0 %v953, 64
    %v965 = vpop.permute.xlu0 %964
    %v967 = vmul.f32 %v962, %v965
    %969 = vrot.lane.b32.xlu0 %v967, 64
    %v970 = vpop.permute.xlu0 %969
    %v972 = vadd.f32 %v453, %v970
    %v973 = vtanh.pop %v972
    %v974 = vsub.f32 1.0, %v962
    %976 = vrot.lane.b32.xlu0 %v973, 96
    %v977 = vpop.permute.xlu0 %976
    %v979 = vmul.f32 %v974, %v977
    %v981 = vmul.f32 %v962, %v881
    %v982 = vadd.f32 %v979, %v981
    %984 = vrot.lane.b32.xlu0 %v982, 96
    %v985 = vpop.permute.xlu0 %984
    %v986 = vsel %vm463, %v985, 0
    %988 = vmatprep.subr.mxu0 0.0
    %989 = vmatpush1.msra.mxu0 %v351
    %990 = vmatprep.subr.mxu0 0.0
    %991 = vmatpush1.msra.mxu0 %v352
    %992 = vmatprep.subr.mxu0 0.0
    %993 = vmatpush1.msra.mxu0 %v353
    %994 = vmatprep.subr.mxu0 0.0
    %995 = vmatpush1.msra.mxu0 %v354
    %996 = vmatprep.subr.mxu0 0.0
    %997 = vmatpush1.msra.mxu0 0.0
    %998 = vmatprep.subr.mxu0 0.0
    %999 = vmatpush1.msra.mxu0 0.0
    %1000 = vmatprep.subr.mxu0 0.0
    %1001 = vmatpush1.msra.mxu0 0.0
    %1002 = vmatprep.subr.mxu0 0.0
    %1003 = vmatpush1.msra.mxu0 0.0
    %1004 = vmatprep.subr.mxu0 0.0
    %1005 = vmatpush1.msra.mxu0 0.0
    %1006 = vmatprep.subr.mxu0 0.0
    %1007 = vmatpush1.msra.mxu0 0.0
    %1008 = vmatprep.subr.mxu0 0.0
    %1009 = vmatpush1.msra.mxu0 0.0
    %1010 = vmatprep.subr.mxu0 0.0
    %1011 = vmatpush1.msra.mxu0 0.0
    %1012 = vmatprep.subr.mxu0 0.0
    %1013 = vmatpush1.msra.mxu0 0.0
    %1014 = vmatprep.subr.mxu0 0.0
    %1015 = vmatpush1.msra.mxu0 0.0
    %1016 = vmatprep.subr.mxu0 0.0
    %1017 = vmatpush1.msra.mxu0 0.0
    %1018 = vmatprep.subr.mxu0 0.0
    %1019 = vmatpush1.msra.mxu0 0.0
    %1020 = vmatprep.subr.mxu0 0.0
    %1021 = vmatpush1.msra.mxu0 0.0
    %1022 = vmatprep.subr.mxu0 0.0
    %1023 = vmatpush1.msra.mxu0 0.0
    %1024 = vmatprep.subr.mxu0 0.0
    %1025 = vmatpush1.msra.mxu0 0.0
    %1026 = vmatprep.subr.mxu0 0.0
    %1027 = vmatpush1.msra.mxu0 0.0
    %1028 = vmatprep.subr.mxu0 0.0
    %1029 = vmatpush1.msra.mxu0 0.0
    %1030 = vmatprep.subr.mxu0 0.0
    %1031 = vmatpush1.msra.mxu0 0.0
    %1032 = vmatprep.subr.mxu0 0.0
    %1033 = vmatpush1.msra.mxu0 0.0
    %1034 = vmatprep.subr.mxu0 0.0
    %1035 = vmatpush1.msra.mxu0 0.0
    %1036 = vmatprep.subr.mxu0 0.0
    %1037 = vmatpush1.msra.mxu0 0.0
    %1038 = vmatprep.subr.mxu0 0.0
    %1039 = vmatpush1.msra.mxu0 0.0
    %1040 = vmatprep.subr.mxu0 0.0
    %1041 = vmatpush1.msra.mxu0 0.0
    %1042 = vmatprep.subr.mxu0 0.0
    %1043 = vmatpush1.msra.mxu0 0.0
    %1044 = vmatprep.subr.mxu0 0.0
    %1045 = vmatpush1.msra.mxu0 0.0
    %1046 = vmatprep.subr.mxu0 0.0
    %1047 = vmatpush1.msra.mxu0 0.0
    %1048 = vmatprep.subr.mxu0 0.0
    %1049 = vmatpush1.msra.mxu0 0.0
    %1050 = vmatprep.subr.mxu0 0.0
    %1051 = vmatpush1.msra.mxu0 0.0
    %1052 = vmatprep.mubr.f32.mxu0 0.0
    %1053 = vmatmul.mubr.f32.gmra.mrb[0].mxu0 %v986
    %v1054 = vpop.f32.mrb[0].mxu0
    %v1055 = vadd.f32 %v461, %v1054
    %v1056 = vpop.f32.mrb[0].mxu0
    %1057 = vdwg.mxu0
    %v1059 = vrot.slane %v1055, 6
    %v1061 = vadd.f32 %v453, %v1059
    %v1062 = vxor.u32 %v1061, 2147483648
    %v1063 = vmul.f32 %v1062, 1.442695
    %v1064 = vpow.pop %v1063
    %v1065 = vadd.f32 %v1064, 1.0
    %v1066 = vrcp.pop %v1065
    %v1067 = vmul.f32 1.0, %v1066
    %1068 = vrot.lane.b32.xlu0 %v1059, 64
    %v1069 = vpop.permute.xlu0 %1068
    %v1071 = vmul.f32 %v1067, %v1069
    %1073 = vrot.lane.b32.xlu0 %v1071, 64
    %v1074 = vpop.permute.xlu0 %1073
    %v1076 = vadd.f32 %v453, %v1074
    %v1077 = vtanh.pop %v1076
    %v1078 = vsub.f32 1.0, %v1067
    %1080 = vrot.lane.b32.xlu0 %v1077, 96
    %v1081 = vpop.permute.xlu0 %1080
    %v1083 = vmul.f32 %v1078, %v1081
    %v1084 = vrot.slane %v982, 6
    %v1086 = vmul.f32 %v1067, %v1084
    %v1087 = vadd.f32 %v1083, %v1086
    %v1089 = vrot.slane %v1087, 2
    %1090 = vrot.lane.b32.xlu0 %v1089, 96
    %v1091 = vpop.permute.xlu0 %1090
    %v1092 = vsel %vm463, %v1091, 0
    %1094 = vmatprep.subr.mxu0 0.0
    %1095 = vmatpush1.msra.mxu0 %v351
    %1096 = vmatprep.subr.mxu0 0.0
    %1097 = vmatpush1.msra.mxu0 %v352
    %1098 = vmatprep.subr.mxu0 0.0
    %1099 = vmatpush1.msra.mxu0 %v353
    %1100 = vmatprep.subr.mxu0 0.0
    %1101 = vmatpush1.msra.mxu0 %v354
    %1102 = vmatprep.subr.mxu0 0.0
    %1103 = vmatpush1.msra.mxu0 0.0
    %1104 = vmatprep.subr.mxu0 0.0
    %1105 = vmatpush1.msra.mxu0 0.0
    %1106 = vmatprep.subr.mxu0 0.0
    %1107 = vmatpush1.msra.mxu0 0.0
    %1108 = vmatprep.subr.mxu0 0.0
    %1109 = vmatpush1.msra.mxu0 0.0
    %1110 = vmatprep.subr.mxu0 0.0
    %1111 = vmatpush1.msra.mxu0 0.0
    %1112 = vmatprep.subr.mxu0 0.0
    %1113 = vmatpush1.msra.mxu0 0.0
    %1114 = vmatprep.subr.mxu0 0.0
    %1115 = vmatpush1.msra.mxu0 0.0
    %1116 = vmatprep.subr.mxu0 0.0
    %1117 = vmatpush1.msra.mxu0 0.0
    %1118 = vmatprep.subr.mxu0 0.0
    %1119 = vmatpush1.msra.mxu0 0.0
    %1120 = vmatprep.subr.mxu0 0.0
    %1121 = vmatpush1.msra.mxu0 0.0
    %1122 = vmatprep.subr.mxu0 0.0
    %1123 = vmatpush1.msra.mxu0 0.0
    %1124 = vmatprep.subr.mxu0 0.0
    %1125 = vmatpush1.msra.mxu0 0.0
    %1126 = vmatprep.subr.mxu0 0.0
    %1127 = vmatpush1.msra.mxu0 0.0
    %1128 = vmatprep.subr.mxu0 0.0
    %1129 = vmatpush1.msra.mxu0 0.0
    %1130 = vmatprep.subr.mxu0 0.0
    %1131 = vmatpush1.msra.mxu0 0.0
    %1132 = vmatprep.subr.mxu0 0.0
    %1133 = vmatpush1.msra.mxu0 0.0
    %1134 = vmatprep.subr.mxu0 0.0
    %1135 = vmatpush1.msra.mxu0 0.0
    %1136 = vmatprep.subr.mxu0 0.0
    %1137 = vmatpush1.msra.mxu0 0.0
    %1138 = vmatprep.subr.mxu0 0.0
    %1139 = vmatpush1.msra.mxu0 0.0
    %1140 = vmatprep.subr.mxu0 0.0
    %1141 = vmatpush1.msra.mxu0 0.0
    %1142 = vmatprep.subr.mxu0 0.0
    %1143 = vmatpush1.msra.mxu0 0.0
    %1144 = vmatprep.subr.mxu0 0.0
    %1145 = vmatpush1.msra.mxu0 0.0
    %1146 = vmatprep.subr.mxu0 0.0
    %1147 = vmatpush1.msra.mxu0 0.0
    %1148 = vmatprep.subr.mxu0 0.0
    %1149 = vmatpush1.msra.mxu0 0.0
    %1150 = vmatprep.subr.mxu0 0.0
    %1151 = vmatpush1.msra.mxu0 0.0
    %1152 = vmatprep.subr.mxu0 0.0
    %1153 = vmatpush1.msra.mxu0 0.0
    %1154 = vmatprep.subr.mxu0 0.0
    %1155 = vmatpush1.msra.mxu0 0.0
    %1156 = vmatprep.subr.mxu0 0.0
    %1157 = vmatpush1.msra.mxu0 0.0
    %1158 = vmatprep.mubr.f32.mxu0 0.0
    %1159 = vmatmul.mubr.f32.gmra.mrb[0].mxu0 %v1092
    %v1160 = vpop.f32.mrb[0].mxu0
    %v1161 = vadd.f32 %v461, %v1160
    %v1162 = vpop.f32.mrb[0].mxu0
    %1163 = vdwg.mxu0
    %v1165 = vrot.slane %v1161, 4
    %v1167 = vadd.f32 %v453, %v1165
    %v1168 = vxor.u32 %v1167, 2147483648
    %v1169 = vmul.f32 %v1168, 1.442695
    %v1170 = vpow.pop %v1169
    %v1171 = vadd.f32 %v1170, 1.0
    %v1172 = vrcp.pop %v1171
    %v1173 = vmul.f32 1.0, %v1172
    %1174 = vrot.lane.b32.xlu0 %v1165, 64
    %v1175 = vpop.permute.xlu0 %1174
    %v1177 = vmul.f32 %v1173, %v1175
    %1179 = vrot.lane.b32.xlu0 %v1177, 64
    %v1180 = vpop.permute.xlu0 %1179
    %v1182 = vadd.f32 %v453, %v1180
    %v1183 = vtanh.pop %v1182
    %v1184 = vsub.f32 1.0, %v1173
    %1186 = vrot.lane.b32.xlu0 %v1183, 96
    %v1187 = vpop.permute.xlu0 %1186
    %v1189 = vmul.f32 %v1184, %v1187
    %v1190 = vrot.slane %v1087, 6
    %v1192 = vmul.f32 %v1173, %v1190
    %v1193 = vadd.f32 %v1189, %v1192
    %v1195 = vrot.slane %v1193, 4
    %1196 = vrot.lane.b32.xlu0 %v1195, 96
    %v1197 = vpop.permute.xlu0 %1196
    %v1198 = vsel %vm463, %v1197, 0
    %1200 = vmatprep.subr.mxu0 0.0
    %1201 = vmatpush1.msra.mxu0 %v351
    %1202 = vmatprep.subr.mxu0 0.0
    %1203 = vmatpush1.msra.mxu0 %v352
    %1204 = vmatprep.subr.mxu0 0.0
    %1205 = vmatpush1.msra.mxu0 %v353
    %1206 = vmatprep.subr.mxu0 0.0
    %1207 = vmatpush1.msra.mxu0 %v354
    %1208 = vmatprep.subr.mxu0 0.0
    %1209 = vmatpush1.msra.mxu0 0.0
    %1210 = vmatprep.subr.mxu0 0.0
    %1211 = vmatpush1.msra.mxu0 0.0
    %1212 = vmatprep.subr.mxu0 0.0
    %1213 = vmatpush1.msra.mxu0 0.0
    %1214 = vmatprep.subr.mxu0 0.0
    %1215 = vmatpush1.msra.mxu0 0.0
    %1216 = vmatprep.subr.mxu0 0.0
    %1217 = vmatpush1.msra.mxu0 0.0
    %1218 = vmatprep.subr.mxu0 0.0
    %1219 = vmatpush1.msra.mxu0 0.0
    %1220 = vmatprep.subr.mxu0 0.0
    %1221 = vmatpush1.msra.mxu0 0.0
    %1222 = vmatprep.subr.mxu0 0.0
    %1223 = vmatpush1.msra.mxu0 0.0
    %1224 = vmatprep.subr.mxu0 0.0
    %1225 = vmatpush1.msra.mxu0 0.0
    %1226 = vmatprep.subr.mxu0 0.0
    %1227 = vmatpush1.msra.mxu0 0.0
    %1228 = vmatprep.subr.mxu0 0.0
    %1229 = vmatpush1.msra.mxu0 0.0
    %1230 = vmatprep.subr.mxu0 0.0
    %1231 = vmatpush1.msra.mxu0 0.0
    %1232 = vmatprep.subr.mxu0 0.0
    %1233 = vmatpush1.msra.mxu0 0.0
    %1234 = vmatprep.subr.mxu0 0.0
    %1235 = vmatpush1.msra.mxu0 0.0
    %1236 = vmatprep.subr.mxu0 0.0
    %1237 = vmatpush1.msra.mxu0 0.0
    %1238 = vmatprep.subr.mxu0 0.0
    %1239 = vmatpush1.msra.mxu0 0.0
    %1240 = vmatprep.subr.mxu0 0.0
    %1241 = vmatpush1.msra.mxu0 0.0
    %1242 = vmatprep.subr.mxu0 0.0
    %1243 = vmatpush1.msra.mxu0 0.0
    %1244 = vmatprep.subr.mxu0 0.0
    %1245 = vmatpush1.msra.mxu0 0.0
    %1246 = vmatprep.subr.mxu0 0.0
    %1247 = vmatpush1.msra.mxu0 0.0
    %1248 = vmatprep.subr.mxu0 0.0
    %1249 = vmatpush1.msra.mxu0 0.0
    %1250 = vmatprep.subr.mxu0 0.0
    %1251 = vmatpush1.msra.mxu0 0.0
    %1252 = vmatprep.subr.mxu0 0.0
    %1253 = vmatpush1.msra.mxu0 0.0
    %1254 = vmatprep.subr.mxu0 0.0
    %1255 = vmatpush1.msra.mxu0 0.0
    %1256 = vmatprep.subr.mxu0 0.0
    %1257 = vmatpush1.msra.mxu0 0.0
    %1258 = vmatprep.subr.mxu0 0.0
    %1259 = vmatpush1.msra.mxu0 0.0
    %1260 = vmatprep.subr.mxu0 0.0
    %1261 = vmatpush1.msra.mxu0 0.0
    %1262 = vmatprep.subr.mxu0 0.0
    %1263 = vmatpush1.msra.mxu0 0.0
    %1264 = vmatprep.mubr.f32.mxu0 0.0
    %1265 = vmatmul.mubr.f32.gmra.mrb[0].mxu0 %v1198
    %v1266 = vpop.f32.mrb[0].mxu0
    %v1267 = vadd.f32 %v461, %v1266
    %v1268 = vpop.f32.mrb[0].mxu0
    %1269 = vdwg.mxu0
    %v1271 = vrot.slane %v1267, 2
    %v1273 = vadd.f32 %v453, %v1271
    %v1274 = vxor.u32 %v1273, 2147483648
    %v1275 = vmul.f32 %v1274, 1.442695
    %v1276 = vpow.pop %v1275
    %v1277 = vadd.f32 %v1276, 1.0
    %v1278 = vrcp.pop %v1277
    %v1279 = vmul.f32 1.0, %v1278
    %1280 = vrot.lane.b32.xlu0 %v1271, 64
    %v1281 = vpop.permute.xlu0 %1280
    %v1283 = vmul.f32 %v1279, %v1281
    %1285 = vrot.lane.b32.xlu0 %v1283, 64
    %v1286 = vpop.permute.xlu0 %1285
    %v1288 = vadd.f32 %v453, %v1286
    %v1289 = vtanh.pop %v1288
    %v1290 = vsub.f32 1.0, %v1279
    %1292 = vrot.lane.b32.xlu0 %v1289, 96
    %v1293 = vpop.permute.xlu0 %1292
    %v1295 = vmul.f32 %v1290, %v1293
    %v1296 = vrot.slane %v1193, 6
    %v1298 = vmul.f32 %v1279, %v1296
    %v1299 = vadd.f32 %v1295, %v1298
    %v1301 = vlaneseq
    %v1302 = vshrl.u32 %v1301, 7
    %v1303 = vsub.s32 0, %v1302
    %v1304 = vrot.slane %v361, %v1303
    %1306 = vmatprep.subr.mxu0 0.0
    %1307 = vmatpush1.msra.mxu0 %v355
    %1308 = vmatprep.subr.mxu0 0.0
    %1309 = vmatpush1.msra.mxu0 %v356
    %1310 = vmatprep.subr.mxu0 0.0
    %1311 = vmatpush1.msra.mxu0 %v357
    %1312 = vmatprep.subr.mxu0 0.0
    %1313 = vmatpush1.msra.mxu0 %v358
    %1314 = vmatprep.subr.mxu0 0.0
    %1315 = vmatpush1.msra.mxu0 0.0
    %1316 = vmatprep.subr.mxu0 0.0
    %1317 = vmatpush1.msra.mxu0 0.0
    %1318 = vmatprep.subr.mxu0 0.0
    %1319 = vmatpush1.msra.mxu0 0.0
    %1320 = vmatprep.subr.mxu0 0.0
    %1321 = vmatpush1.msra.mxu0 0.0
    %1322 = vmatprep.subr.mxu0 0.0
    %1323 = vmatpush1.msra.mxu0 0.0
    %1324 = vmatprep.subr.mxu0 0.0
    %1325 = vmatpush1.msra.mxu0 0.0
    %1326 = vmatprep.subr.mxu0 0.0
    %1327 = vmatpush1.msra.mxu0 0.0
    %1328 = vmatprep.subr.mxu0 0.0
    %1329 = vmatpush1.msra.mxu0 0.0
    %1330 = vmatprep.subr.mxu0 0.0
    %1331 = vmatpush1.msra.mxu0 0.0
    %1332 = vmatprep.subr.mxu0 0.0
    %1333 = vmatpush1.msra.mxu0 0.0
    %1334 = vmatprep.subr.mxu0 0.0
    %1335 = vmatpush1.msra.mxu0 0.0
    %1336 = vmatprep.subr.mxu0 0.0
    %1337 = vmatpush1.msra.mxu0 0.0
    %1338 = vmatprep.subr.mxu0 0.0
    %1339 = vmatpush1.msra.mxu0 0.0
    %1340 = vmatprep.subr.mxu0 0.0
    %1341 = vmatpush1.msra.mxu0 0.0
    %1342 = vmatprep.subr.mxu0 0.0
    %1343 = vmatpush1.msra.mxu0 0.0
    %1344 = vmatprep.subr.mxu0 0.0
    %1345 = vmatpush1.msra.mxu0 0.0
    %1346 = vmatprep.subr.mxu0 0.0
    %1347 = vmatpush1.msra.mxu0 0.0
    %1348 = vmatprep.subr.mxu0 0.0
    %1349 = vmatpush1.msra.mxu0 0.0
    %1350 = vmatprep.subr.mxu0 0.0
    %1351 = vmatpush1.msra.mxu0 0.0
    %1352 = vmatprep.subr.mxu0 0.0
    %1353 = vmatpush1.msra.mxu0 0.0
    %1354 = vmatprep.subr.mxu0 0.0
    %1355 = vmatpush1.msra.mxu0 0.0
    %1356 = vmatprep.subr.mxu0 0.0
    %1357 = vmatpush1.msra.mxu0 0.0
    %1358 = vmatprep.subr.mxu0 0.0
    %1359 = vmatpush1.msra.mxu0 0.0
    %1360 = vmatprep.subr.mxu0 0.0
    %1361 = vmatpush1.msra.mxu0 0.0
    %1362 = vmatprep.subr.mxu0 0.0
    %1363 = vmatpush1.msra.mxu0 0.0
    %1364 = vmatprep.subr.mxu0 0.0
    %1365 = vmatpush1.msra.mxu0 0.0
    %1366 = vmatprep.subr.mxu0 0.0
    %1367 = vmatpush1.msra.mxu0 0.0
    %1368 = vmatprep.subr.mxu0 0.0
    %1369 = vmatpush1.msra.mxu0 0.0
    %1370 = vmatprep.mubr.f32.mxu0 0.0
    %1371 = vmatmul.mubr.f32.gmra.mrb[0].mxu0 %v465
    %v1372 = vpop.f32.mrb[0].mxu0
    %v1373 = vadd.f32 %v1304, %v1372
    %v1374 = vpop.f32.mrb[0].mxu0
    %1375 = vdwg.mxu0
    %v1377 = vrot.slane %v1373, 2
    %1378 = vrot.lane.b32.xlu0 %v1377, 96
    %v1379 = vpop.permute.xlu0 %1378
    %v1381 = vadd.f32 %v453, %v1379
    %v1382 = vxor.u32 %v1381, 2147483648
    %v1383 = vmul.f32 %v1382, 1.442695
    %v1384 = vpow.pop %v1383
    %v1385 = vadd.f32 %v1384, 1.0
    %v1386 = vrcp.pop %v1385
    %v1387 = vmul.f32 1.0, %v1386
    %v1388 = vadd.f32 %v455, %v1379
    %v1389 = vxor.u32 %v1388, 2147483648
    %v1390 = vmul.f32 %v1389, 1.442695
    %v1391 = vpow.pop %v1390
    %v1392 = vadd.f32 %v1391, 1.0
    %v1393 = vrcp.pop %v1392
    %v1394 = vmul.f32 1.0, %v1393
    %1395 = vrot.lane.b32.xlu0 %v1377, 32
    %v1396 = vpop.permute.xlu0 %1395
    %v1398 = vmul.f32 %v1387, %v1396
    %1400 = vrot.lane.b32.xlu0 %v1398, 64
    %v1401 = vpop.permute.xlu0 %1400
    %v1403 = vadd.f32 %v455, %v1401
    %v1404 = vtanh.pop %v1403
    %v1405 = vsub.f32 1.0, %v1394
    %1407 = vrot.lane.b32.xlu0 %v1404, 96
    %v1408 = vpop.permute.xlu0 %1407
    %v1410 = vmul.f32 %v1405, %v1408
    %v1411 = vmul.f32 %v1394, 0.0
    %v1412 = vadd.f32 %v1410, %v1411
    %v1414 = vrot.slane %v1412, 6
    %v1415 = vsel %vm463, %v1414, 0
    %1417 = vmatprep.subr.mxu0 0.0
    %1418 = vmatpush1.msra.mxu0 %v355
    %1419 = vmatprep.subr.mxu0 0.0
    %1420 = vmatpush1.msra.mxu0 %v356
    %1421 = vmatprep.subr.mxu0 0.0
    %1422 = vmatpush1.msra.mxu0 %v357
    %1423 = vmatprep.subr.mxu0 0.0
    %1424 = vmatpush1.msra.mxu0 %v358
    %1425 = vmatprep.subr.mxu0 0.0
    %1426 = vmatpush1.msra.mxu0 0.0
    %1427 = vmatprep.subr.mxu0 0.0
    %1428 = vmatpush1.msra.mxu0 0.0
    %1429 = vmatprep.subr.mxu0 0.0
    %1430 = vmatpush1.msra.mxu0 0.0
    %1431 = vmatprep.subr.mxu0 0.0
    %1432 = vmatpush1.msra.mxu0 0.0
    %1433 = vmatprep.subr.mxu0 0.0
    %1434 = vmatpush1.msra.mxu0 0.0
    %1435 = vmatprep.subr.mxu0 0.0
    %1436 = vmatpush1.msra.mxu0 0.0
    %1437 = vmatprep.subr.mxu0 0.0
    %1438 = vmatpush1.msra.mxu0 0.0
    %1439 = vmatprep.subr.mxu0 0.0
    %1440 = vmatpush1.msra.mxu0 0.0
    %1441 = vmatprep.subr.mxu0 0.0
    %1442 = vmatpush1.msra.mxu0 0.0
    %1443 = vmatprep.subr.mxu0 0.0
    %1444 = vmatpush1.msra.mxu0 0.0
    %1445 = vmatprep.subr.mxu0 0.0
    %1446 = vmatpush1.msra.mxu0 0.0
    %1447 = vmatprep.subr.mxu0 0.0
    %1448 = vmatpush1.msra.mxu0 0.0
    %1449 = vmatprep.subr.mxu0 0.0
    %1450 = vmatpush1.msra.mxu0 0.0
    %1451 = vmatprep.subr.mxu0 0.0
    %1452 = vmatpush1.msra.mxu0 0.0
    %1453 = vmatprep.subr.mxu0 0.0
    %1454 = vmatpush1.msra.mxu0 0.0
    %1455 = vmatprep.subr.mxu0 0.0
    %1456 = vmatpush1.msra.mxu0 0.0
    %1457 = vmatprep.subr.mxu0 0.0
    %1458 = vmatpush1.msra.mxu0 0.0
    %1459 = vmatprep.subr.mxu0 0.0
    %1460 = vmatpush1.msra.mxu0 0.0
    %1461 = vmatprep.subr.mxu0 0.0
    %1462 = vmatpush1.msra.mxu0 0.0
    %1463 = vmatprep.subr.mxu0 0.0
    %1464 = vmatpush1.msra.mxu0 0.0
    %1465 = vmatprep.subr.mxu0 0.0
    %1466 = vmatpush1.msra.mxu0 0.0
    %1467 = vmatprep.subr.mxu0 0.0
    %1468 = vmatpush1.msra.mxu0 0.0
    %1469 = vmatprep.subr.mxu0 0.0
    %1470 = vmatpush1.msra.mxu0 0.0
    %1471 = vmatprep.subr.mxu0 0.0
    %1472 = vmatpush1.msra.mxu0 0.0
    %1473 = vmatprep.subr.mxu0 0.0
    %1474 = vmatpush1.msra.mxu0 0.0
    %1475 = vmatprep.subr.mxu0 0.0
    %1476 = vmatpush1.msra.mxu0 0.0
    %1477 = vmatprep.subr.mxu0 0.0
    %1478 = vmatpush1.msra.mxu0 0.0
    %1479 = vmatprep.subr.mxu0 0.0
    %1480 = vmatpush1.msra.mxu0 0.0
    %1481 = vmatprep.mubr.f32.mxu0 0.0
    %1482 = vmatmul.mubr.f32.gmra.mrb[0].mxu0 %v1415
    %v1483 = vpop.f32.mrb[0].mxu0
    %v1484 = vadd.f32 %v1304, %v1483
    %v1485 = vpop.f32.mrb[0].mxu0
    %1486 = vdwg.mxu0
    %v1488 = vrot.slane %v1484, 4
    %1489 = vrot.lane.b32.xlu0 %v1488, 96
    %v1490 = vpop.permute.xlu0 %1489
    %v1492 = vadd.f32 %v453, %v1490
    %v1493 = vxor.u32 %v1492, 2147483648
    %v1494 = vmul.f32 %v1493, 1.442695
    %v1495 = vpow.pop %v1494
    %v1496 = vadd.f32 %v1495, 1.0
    %v1497 = vrcp.pop %v1496
    %v1498 = vmul.f32 1.0, %v1497
    %v1499 = vadd.f32 %v455, %v1490
    %v1500 = vxor.u32 %v1499, 2147483648
    %v1501 = vmul.f32 %v1500, 1.442695
    %v1502 = vpow.pop %v1501
    %v1503 = vadd.f32 %v1502, 1.0
    %v1504 = vrcp.pop %v1503
    %v1505 = vmul.f32 1.0, %v1504
    %1506 = vrot.lane.b32.xlu0 %v1488, 32
    %v1507 = vpop.permute.xlu0 %1506
    %v1509 = vmul.f32 %v1498, %v1507
    %1511 = vrot.lane.b32.xlu0 %v1509, 64
    %v1512 = vpop.permute.xlu0 %1511
    %v1514 = vadd.f32 %v455, %v1512
    %v1515 = vtanh.pop %v1514
    %v1516 = vsub.f32 1.0, %v1505
    %1518 = vrot.lane.b32.xlu0 %v1515, 96
    %v1519 = vpop.permute.xlu0 %1518
    %v1521 = vmul.f32 %v1516, %v1519
    %v1522 = vrot.slane %v1412, 2
    %v1524 = vmul.f32 %v1505, %v1522
    %v1525 = vadd.f32 %v1521, %v1524
    %v1527 = vrot.slane %v1525, 4
    %v1528 = vsel %vm463, %v1527, 0
    %1530 = vmatprep.subr.mxu0 0.0
    %1531 = vmatpush1.msra.mxu0 %v355
    %1532 = vmatprep.subr.mxu0 0.0
    %1533 = vmatpush1.msra.mxu0 %v356
    %1534 = vmatprep.subr.mxu0 0.0
    %1535 = vmatpush1.msra.mxu0 %v357
    %1536 = vmatprep.subr.mxu0 0.0
    %1537 = vmatpush1.msra.mxu0 %v358
    %1538 = vmatprep.subr.mxu0 0.0
    %1539 = vmatpush1.msra.mxu0 0.0
    %1540 = vmatprep.subr.mxu0 0.0
    %1541 = vmatpush1.msra.mxu0 0.0
    %1542 = vmatprep.subr.mxu0 0.0
    %1543 = vmatpush1.msra.mxu0 0.0
    %1544 = vmatprep.subr.mxu0 0.0
    %1545 = vmatpush1.msra.mxu0 0.0
    %1546 = vmatprep.subr.mxu0 0.0
    %1547 = vmatpush1.msra.mxu0 0.0
    %1548 = vmatprep.subr.mxu0 0.0
    %1549 = vmatpush1.msra.mxu0 0.0
    %1550 = vmatprep.subr.mxu0 0.0
    %1551 = vmatpush1.msra.mxu0 0.0
    %1552 = vmatprep.subr.mxu0 0.0
    %1553 = vmatpush1.msra.mxu0 0.0
    %1554 = vmatprep.subr.mxu0 0.0
    %1555 = vmatpush1.msra.mxu0 0.0
    %1556 = vmatprep.subr.mxu0 0.0
    %1557 = vmatpush1.msra.mxu0 0.0
    %1558 = vmatprep.subr.mxu0 0.0
    %1559 = vmatpush1.msra.mxu0 0.0
    %1560 = vmatprep.subr.mxu0 0.0
    %1561 = vmatpush1.msra.mxu0 0.0
    %1562 = vmatprep.subr.mxu0 0.0
    %1563 = vmatpush1.msra.mxu0 0.0
    %1564 = vmatprep.subr.mxu0 0.0
    %1565 = vmatpush1.msra.mxu0 0.0
    %1566 = vmatprep.subr.mxu0 0.0
    %1567 = vmatpush1.msra.mxu0 0.0
    %1568 = vmatprep.subr.mxu0 0.0
    %1569 = vmatpush1.msra.mxu0 0.0
    %1570 = vmatprep.subr.mxu0 0.0
    %1571 = vmatpush1.msra.mxu0 0.0
    %1572 = vmatprep.subr.mxu0 0.0
    %1573 = vmatpush1.msra.mxu0 0.0
    %1574 = vmatprep.subr.mxu0 0.0
    %1575 = vmatpush1.msra.mxu0 0.0
    %1576 = vmatprep.subr.mxu0 0.0
    %1577 = vmatpush1.msra.mxu0 0.0
    %1578 = vmatprep.subr.mxu0 0.0
    %1579 = vmatpush1.msra.mxu0 0.0
    %1580 = vmatprep.subr.mxu0 0.0
    %1581 = vmatpush1.msra.mxu0 0.0
    %1582 = vmatprep.subr.mxu0 0.0
    %1583 = vmatpush1.msra.mxu0 0.0
    %1584 = vmatprep.subr.mxu0 0.0
    %1585 = vmatpush1.msra.mxu0 0.0
    %1586 = vmatprep.subr.mxu0 0.0
    %1587 = vmatpush1.msra.mxu0 0.0
    %1588 = vmatprep.subr.mxu0 0.0
    %1589 = vmatpush1.msra.mxu0 0.0
    %1590 = vmatprep.subr.mxu0 0.0
    %1591 = vmatpush1.msra.mxu0 0.0
    %1592 = vmatprep.subr.mxu0 0.0
    %1593 = vmatpush1.msra.mxu0 0.0
    %1594 = vmatprep.mubr.f32.mxu0 0.0
    %1595 = vmatmul.mubr.f32.gmra.mrb[0].mxu0 %v1528
    %v1596 = vpop.f32.mrb[0].mxu0
    %v1597 = vadd.f32 %v1304, %v1596
    %v1598 = vpop.f32.mrb[0].mxu0
    %1599 = vdwg.mxu0
    %v1601 = vrot.slane %v1597, 6
    %1602 = vrot.lane.b32.xlu0 %v1601, 96
    %v1603 = vpop.permute.xlu0 %1602
    %v1605 = vadd.f32 %v453, %v1603
    %v1606 = vxor.u32 %v1605, 2147483648
    %v1607 = vmul.f32 %v1606, 1.442695
    %v1608 = vpow.pop %v1607
    %v1609 = vadd.f32 %v1608, 1.0
    %v1610 = vrcp.pop %v1609
    %v1611 = vmul.f32 1.0, %v1610
    %v1612 = vadd.f32 %v455, %v1603
    %v1613 = vxor.u32 %v1612, 2147483648
    %v1614 = vmul.f32 %v1613, 1.442695
    %v1615 = vpow.pop %v1614
    %v1616 = vadd.f32 %v1615, 1.0
    %v1617 = vrcp.pop %v1616
    %v1618 = vmul.f32 1.0, %v1617
    %1619 = vrot.lane.b32.xlu0 %v1601, 32
    %v1620 = vpop.permute.xlu0 %1619
    %v1622 = vmul.f32 %v1611, %v1620
    %1624 = vrot.lane.b32.xlu0 %v1622, 64
    %v1625 = vpop.permute.xlu0 %1624
    %v1627 = vadd.f32 %v455, %v1625
    %v1628 = vtanh.pop %v1627
    %v1629 = vsub.f32 1.0, %v1618
    %1631 = vrot.lane.b32.xlu0 %v1628, 96
    %v1632 = vpop.permute.xlu0 %1631
    %v1634 = vmul.f32 %v1629, %v1632
    %v1635 = vrot.slane %v1525, 2
    %v1637 = vmul.f32 %v1618, %v1635
    %v1638 = vadd.f32 %v1634, %v1637
    %v1640 = vrot.slane %v1638, 2
    %v1641 = vsel %vm463, %v1640, 0
    %1643 = vmatprep.subr.mxu0 0.0
    %1644 = vmatpush1.msra.mxu0 %v355
    %1645 = vmatprep.subr.mxu0 0.0
    %1646 = vmatpush1.msra.mxu0 %v356
    %1647 = vmatprep.subr.mxu0 0.0
    %1648 = vmatpush1.msra.mxu0 %v357
    %1649 = vmatprep.subr.mxu0 0.0
    %1650 = vmatpush1.msra.mxu0 %v358
    %1651 = vmatprep.subr.mxu0 0.0
    %1652 = vmatpush1.msra.mxu0 0.0
    %1653 = vmatprep.subr.mxu0 0.0
    %1654 = vmatpush1.msra.mxu0 0.0
    %1655 = vmatprep.subr.mxu0 0.0
    %1656 = vmatpush1.msra.mxu0 0.0
    %1657 = vmatprep.subr.mxu0 0.0
    %1658 = vmatpush1.msra.mxu0 0.0
    %1659 = vmatprep.subr.mxu0 0.0
    %1660 = vmatpush1.msra.mxu0 0.0
    %1661 = vmatprep.subr.mxu0 0.0
    %1662 = vmatpush1.msra.mxu0 0.0
    %1663 = vmatprep.subr.mxu0 0.0
    %1664 = vmatpush1.msra.mxu0 0.0
    %1665 = vmatprep.subr.mxu0 0.0
    %1666 = vmatpush1.msra.mxu0 0.0
    %1667 = vmatprep.subr.mxu0 0.0
    %1668 = vmatpush1.msra.mxu0 0.0
    %1669 = vmatprep.subr.mxu0 0.0
    %1670 = vmatpush1.msra.mxu0 0.0
    %1671 = vmatprep.subr.mxu0 0.0
    %1672 = vmatpush1.msra.mxu0 0.0
    %1673 = vmatprep.subr.mxu0 0.0
    %1674 = vmatpush1.msra.mxu0 0.0
    %1675 = vmatprep.subr.mxu0 0.0
    %1676 = vmatpush1.msra.mxu0 0.0
    %1677 = vmatprep.subr.mxu0 0.0
    %1678 = vmatpush1.msra.mxu0 0.0
    %1679 = vmatprep.subr.mxu0 0.0
    %1680 = vmatpush1.msra.mxu0 0.0
    %1681 = vmatprep.subr.mxu0 0.0
    %1682 = vmatpush1.msra.mxu0 0.0
    %1683 = vmatprep.subr.mxu0 0.0
    %1684 = vmatpush1.msra.mxu0 0.0
    %1685 = vmatprep.subr.mxu0 0.0
    %1686 = vmatpush1.msra.mxu0 0.0
    %1687 = vmatprep.subr.mxu0 0.0
    %1688 = vmatpush1.msra.mxu0 0.0
    %1689 = vmatprep.subr.mxu0 0.0
    %1690 = vmatpush1.msra.mxu0 0.0
    %1691 = vmatprep.subr.mxu0 0.0
    %1692 = vmatpush1.msra.mxu0 0.0
    %1693 = vmatprep.subr.mxu0 0.0
    %1694 = vmatpush1.msra.mxu0 0.0
    %1695 = vmatprep.subr.mxu0 0.0
    %1696 = vmatpush1.msra.mxu0 0.0
    %1697 = vmatprep.subr.mxu0 0.0
    %1698 = vmatpush1.msra.mxu0 0.0
    %1699 = vmatprep.subr.mxu0 0.0
    %1700 = vmatpush1.msra.mxu0 0.0
    %1701 = vmatprep.subr.mxu0 0.0
    %1702 = vmatpush1.msra.mxu0 0.0
    %1703 = vmatprep.subr.mxu0 0.0
    %1704 = vmatpush1.msra.mxu0 0.0
    %1705 = vmatprep.subr.mxu0 0.0
    %1706 = vmatpush1.msra.mxu0 0.0
    %1707 = vmatprep.mubr.f32.mxu0 0.0
    %1708 = vmatmul.mubr.f32.gmra.mrb[0].mxu0 %v1641
    %v1709 = vpop.f32.mrb[0].mxu0
    %v1710 = vadd.f32 %v1304, %v1709
    %v1711 = vpop.f32.mrb[0].mxu0
    %1712 = vdwg.mxu0
    %1714 = vrot.lane.b32.xlu0 %v1710, 96
    %v1715 = vpop.permute.xlu0 %1714
    %v1717 = vadd.f32 %v453, %v1715
    %v1718 = vxor.u32 %v1717, 2147483648
    %v1719 = vmul.f32 %v1718, 1.442695
    %v1720 = vpow.pop %v1719
    %v1721 = vadd.f32 %v1720, 1.0
    %v1722 = vrcp.pop %v1721
    %v1723 = vmul.f32 1.0, %v1722
    %v1724 = vadd.f32 %v455, %v1715
    %v1725 = vxor.u32 %v1724, 2147483648
    %v1726 = vmul.f32 %v1725, 1.442695
    %v1727 = vpow.pop %v1726
    %v1728 = vadd.f32 %v1727, 1.0
    %v1729 = vrcp.pop %v1728
    %v1730 = vmul.f32 1.0, %v1729
    %1731 = vrot.lane.b32.xlu0 %v1710, 32
    %v1732 = vpop.permute.xlu0 %1731
    %v1734 = vmul.f32 %v1723, %v1732
    %1736 = vrot.lane.b32.xlu0 %v1734, 64
    %v1737 = vpop.permute.xlu0 %1736
    %v1739 = vadd.f32 %v455, %v1737
    %v1740 = vtanh.pop %v1739
    %v1741 = vsub.f32 1.0, %v1730
    %1743 = vrot.lane.b32.xlu0 %v1740, 96
    %v1744 = vpop.permute.xlu0 %1743
    %v1746 = vmul.f32 %v1741, %v1744
    %v1748 = vmul.f32 %v1730, %v1640
    %v1749 = vadd.f32 %v1746, %v1748
    %v1751 = vsel %vm463, %v1749, 0
    %1753 = vmatprep.subr.mxu0 0.0
    %1754 = vmatpush1.msra.mxu0 %v355
    %1755 = vmatprep.subr.mxu0 0.0
    %1756 = vmatpush1.msra.mxu0 %v356
    %1757 = vmatprep.subr.mxu0 0.0
    %1758 = vmatpush1.msra.mxu0 %v357
    %1759 = vmatprep.subr.mxu0 0.0
    %1760 = vmatpush1.msra.mxu0 %v358
    %1761 = vmatprep.subr.mxu0 0.0
    %1762 = vmatpush1.msra.mxu0 0.0
    %1763 = vmatprep.subr.mxu0 0.0
    %1764 = vmatpush1.msra.mxu0 0.0
    %1765 = vmatprep.subr.mxu0 0.0
    %1766 = vmatpush1.msra.mxu0 0.0
    %1767 = vmatprep.subr.mxu0 0.0
    %1768 = vmatpush1.msra.mxu0 0.0
    %1769 = vmatprep.subr.mxu0 0.0
    %1770 = vmatpush1.msra.mxu0 0.0
    %1771 = vmatprep.subr.mxu0 0.0
    %1772 = vmatpush1.msra.mxu0 0.0
    %1773 = vmatprep.subr.mxu0 0.0
    %1774 = vmatpush1.msra.mxu0 0.0
    %1775 = vmatprep.subr.mxu0 0.0
    %1776 = vmatpush1.msra.mxu0 0.0
    %1777 = vmatprep.subr.mxu0 0.0
    %1778 = vmatpush1.msra.mxu0 0.0
    %1779 = vmatprep.subr.mxu0 0.0
    %1780 = vmatpush1.msra.mxu0 0.0
    %1781 = vmatprep.subr.mxu0 0.0
    %1782 = vmatpush1.msra.mxu0 0.0
    %1783 = vmatprep.subr.mxu0 0.0
    %1784 = vmatpush1.msra.mxu0 0.0
    %1785 = vmatprep.subr.mxu0 0.0
    %1786 = vmatpush1.msra.mxu0 0.0
    %1787 = vmatprep.subr.mxu0 0.0
    %1788 = vmatpush1.msra.mxu0 0.0
    %1789 = vmatprep.subr.mxu0 0.0
    %1790 = vmatpush1.msra.mxu0 0.0
    %1791 = vmatprep.subr.mxu0 0.0
    %1792 = vmatpush1.msra.mxu0 0.0
    %1793 = vmatprep.subr.mxu0 0.0
    %1794 = vmatpush1.msra.mxu0 0.0
    %1795 = vmatprep.subr.mxu0 0.0
    %1796 = vmatpush1.msra.mxu0 0.0
    %1797 = vmatprep.subr.mxu0 0.0
    %1798 = vmatpush1.msra.mxu0 0.0
    %1799 = vmatprep.subr.mxu0 0.0
    %1800 = vmatpush1.msra.mxu0 0.0
    %1801 = vmatprep.subr.mxu0 0.0
    %1802 = vmatpush1.msra.mxu0 0.0
    %1803 = vmatprep.subr.mxu0 0.0
    %1804 = vmatpush1.msra.mxu0 0.0
    %1805 = vmatprep.subr.mxu0 0.0
    %1806 = vmatpush1.msra.mxu0 0.0
    %1807 = vmatprep.subr.mxu0 0.0
    %1808 = vmatpush1.msra.mxu0 0.0
    %1809 = vmatprep.subr.mxu0 0.0
    %1810 = vmatpush1.msra.mxu0 0.0
    %1811 = vmatprep.subr.mxu0 0.0
    %1812 = vmatpush1.msra.mxu0 0.0
    %1813 = vmatprep.subr.mxu0 0.0
    %1814 = vmatpush1.msra.mxu0 0.0
    %1815 = vmatprep.subr.mxu0 0.0
    %1816 = vmatpush1.msra.mxu0 0.0
    %1817 = vmatprep.mubr.f32.mxu0 0.0
    %1818 = vmatmul.mubr.f32.gmra.mrb[0].mxu0 %v1751
    %v1819 = vpop.f32.mrb[0].mxu0
    %v1820 = vadd.f32 %v1304, %v1819
    %v1821 = vpop.f32.mrb[0].mxu0
    %1822 = vdwg.mxu0
    %v1824 = vrot.slane %v1820, 2
    %1825 = vrot.lane.b32.xlu0 %v1824, 96
    %v1826 = vpop.permute.xlu0 %1825
    %v1828 = vadd.f32 %v447, %v1826
    %v1829 = vxor.u32 %v1828, 2147483648
    %v1830 = vmul.f32 %v1829, 1.442695
    %v1831 = vpow.pop %v1830
    %v1832 = vadd.f32 %v1831, 1.0
    %v1833 = vrcp.pop %v1832
    %v1834 = vmul.f32 1.0, %v1833
    %v1835 = vadd.f32 %v449, %v1826
    %v1836 = vxor.u32 %v1835, 2147483648
    %v1837 = vmul.f32 %v1836, 1.442695
    %v1838 = vpow.pop %v1837
    %v1839 = vadd.f32 %v1838, 1.0
    %v1840 = vrcp.pop %v1839
    %v1841 = vmul.f32 1.0, %v1840
    %1842 = vrot.lane.b32.xlu0 %v1824, 32
    %v1843 = vpop.permute.xlu0 %1842
    %v1845 = vmul.f32 %v1834, %v1843
    %1847 = vrot.lane.b32.xlu0 %v1845, 64
    %v1848 = vpop.permute.xlu0 %1847
    %v1850 = vadd.f32 %v449, %v1848
    %v1851 = vtanh.pop %v1850
    %v1852 = vsub.f32 1.0, %v1841
    %1854 = vrot.lane.b32.xlu0 %v1851, 96
    %v1855 = vpop.permute.xlu0 %1854
    %v1857 = vmul.f32 %v1852, %v1855
    %v1858 = vrot.slane %v1749, 2
    %v1860 = vmul.f32 %v1841, %v1858
    %v1861 = vadd.f32 %v1857, %v1860
    %v1863 = vrot.slane %v1861, 6
    %v1864 = vsel %vm463, %v1863, 0
    %1866 = vmatprep.subr.mxu0 0.0
    %1867 = vmatpush1.msra.mxu0 %v355
    %1868 = vmatprep.subr.mxu0 0.0
    %1869 = vmatpush1.msra.mxu0 %v356
    %1870 = vmatprep.subr.mxu0 0.0
    %1871 = vmatpush1.msra.mxu0 %v357
    %1872 = vmatprep.subr.mxu0 0.0
    %1873 = vmatpush1.msra.mxu0 %v358
    %1874 = vmatprep.subr.mxu0 0.0
    %1875 = vmatpush1.msra.mxu0 0.0
    %1876 = vmatprep.subr.mxu0 0.0
    %1877 = vmatpush1.msra.mxu0 0.0
    %1878 = vmatprep.subr.mxu0 0.0
    %1879 = vmatpush1.msra.mxu0 0.0
    %1880 = vmatprep.subr.mxu0 0.0
    %1881 = vmatpush1.msra.mxu0 0.0
    %1882 = vmatprep.subr.mxu0 0.0
    %1883 = vmatpush1.msra.mxu0 0.0
    %1884 = vmatprep.subr.mxu0 0.0
    %1885 = vmatpush1.msra.mxu0 0.0
    %1886 = vmatprep.subr.mxu0 0.0
    %1887 = vmatpush1.msra.mxu0 0.0
    %1888 = vmatprep.subr.mxu0 0.0
    %1889 = vmatpush1.msra.mxu0 0.0
    %1890 = vmatprep.subr.mxu0 0.0
    %1891 = vmatpush1.msra.mxu0 0.0
    %1892 = vmatprep.subr.mxu0 0.0
    %1893 = vmatpush1.msra.mxu0 0.0
    %1894 = vmatprep.subr.mxu0 0.0
    %1895 = vmatpush1.msra.mxu0 0.0
    %1896 = vmatprep.subr.mxu0 0.0
    %1897 = vmatpush1.msra.mxu0 0.0
    %1898 = vmatprep.subr.mxu0 0.0
    %1899 = vmatpush1.msra.mxu0 0.0
    %1900 = vmatprep.subr.mxu0 0.0
    %1901 = vmatpush1.msra.mxu0 0.0
    %1902 = vmatprep.subr.mxu0 0.0
    %1903 = vmatpush1.msra.mxu0 0.0
    %1904 = vmatprep.subr.mxu0 0.0
    %1905 = vmatpush1.msra.mxu0 0.0
    %1906 = vmatprep.subr.mxu0 0.0
    %1907 = vmatpush1.msra.mxu0 0.0
    %1908 = vmatprep.subr.mxu0 0.0
    %1909 = vmatpush1.msra.mxu0 0.0
    %1910 = vmatprep.subr.mxu0 0.0
    %1911 = vmatpush1.msra.mxu0 0.0
    %1912 = vmatprep.subr.mxu0 0.0
    %1913 = vmatpush1.msra.mxu0 0.0
    %1914 = vmatprep.subr.mxu0 0.0
    %1915 = vmatpush1.msra.mxu0 0.0
    %1916 = vmatprep.subr.mxu0 0.0
    %1917 = vmatpush1.msra.mxu0 0.0
    %1918 = vmatprep.subr.mxu0 0.0
    %1919 = vmatpush1.msra.mxu0 0.0
    %1920 = vmatprep.subr.mxu0 0.0
    %1921 = vmatpush1.msra.mxu0 0.0
    %1922 = vmatprep.subr.mxu0 0.0
    %1923 = vmatpush1.msra.mxu0 0.0
    %1924 = vmatprep.subr.mxu0 0.0
    %1925 = vmatpush1.msra.mxu0 0.0
    %1926 = vmatprep.subr.mxu0 0.0
    %1927 = vmatpush1.msra.mxu0 0.0
    %1928 = vmatprep.subr.mxu0 0.0
    %1929 = vmatpush1.msra.mxu0 0.0
    %1930 = vmatprep.mubr.f32.mxu0 0.0
    %1931 = vmatmul.mubr.f32.gmra.mrb[0].mxu0 %v1864
    %v1932 = vpop.f32.mrb[0].mxu0
    %v1933 = vadd.f32 %v1304, %v1932
    %v1934 = vpop.f32.mrb[0].mxu0
    %1935 = vdwg.mxu0
    %v1937 = vrot.slane %v1933, 4
    %1938 = vrot.lane.b32.xlu0 %v1937, 96
    %v1939 = vpop.permute.xlu0 %1938
    %v1941 = vadd.f32 %v447, %v1939
    %v1942 = vxor.u32 %v1941, 2147483648
    %v1943 = vmul.f32 %v1942, 1.442695
    %v1944 = vpow.pop %v1943
    %v1945 = vadd.f32 %v1944, 1.0
    %v1946 = vrcp.pop %v1945
    %v1947 = vmul.f32 1.0, %v1946
    %v1948 = vadd.f32 %v449, %v1939
    %v1949 = vxor.u32 %v1948, 2147483648
    %v1950 = vmul.f32 %v1949, 1.442695
    %v1951 = vpow.pop %v1950
    %v1952 = vadd.f32 %v1951, 1.0
    %v1953 = vrcp.pop %v1952
    %v1954 = vmul.f32 1.0, %v1953
    %1955 = vrot.lane.b32.xlu0 %v1937, 32
    %v1956 = vpop.permute.xlu0 %1955
    %v1958 = vmul.f32 %v1947, %v1956
    %1960 = vrot.lane.b32.xlu0 %v1958, 64
    %v1961 = vpop.permute.xlu0 %1960
    %v1963 = vadd.f32 %v449, %v1961
    %v1964 = vtanh.pop %v1963
    %v1965 = vsub.f32 1.0, %v1954
    %1967 = vrot.lane.b32.xlu0 %v1964, 96
    %v1968 = vpop.permute.xlu0 %1967
    %v1970 = vmul.f32 %v1965, %v1968
    %v1971 = vrot.slane %v1861, 2
    %v1973 = vmul.f32 %v1954, %v1971
    %v1974 = vadd.f32 %v1970, %v1973
    %v1976 = vrot.slane %v1974, 4
    %v1977 = vsel %vm463, %v1976, 0
    %1979 = vmatprep.subr.mxu0 0.0
    %1980 = vmatpush1.msra.mxu0 %v355
    %1981 = vmatprep.subr.mxu0 0.0
    %1982 = vmatpush1.msra.mxu0 %v356
    %1983 = vmatprep.subr.mxu0 0.0
    %1984 = vmatpush1.msra.mxu0 %v357
    %1985 = vmatprep.subr.mxu0 0.0
    %1986 = vmatpush1.msra.mxu0 %v358
    %1987 = vmatprep.subr.mxu0 0.0
    %1988 = vmatpush1.msra.mxu0 0.0
    %1989 = vmatprep.subr.mxu0 0.0
    %1990 = vmatpush1.msra.mxu0 0.0
    %1991 = vmatprep.subr.mxu0 0.0
    %1992 = vmatpush1.msra.mxu0 0.0
    %1993 = vmatprep.subr.mxu0 0.0
    %1994 = vmatpush1.msra.mxu0 0.0
    %1995 = vmatprep.subr.mxu0 0.0
    %1996 = vmatpush1.msra.mxu0 0.0
    %1997 = vmatprep.subr.mxu0 0.0
    %1998 = vmatpush1.msra.mxu0 0.0
    %1999 = vmatprep.subr.mxu0 0.0
    %2000 = vmatpush1.msra.mxu0 0.0
    %2001 = vmatprep.subr.mxu0 0.0
    %2002 = vmatpush1.msra.mxu0 0.0
    %2003 = vmatprep.subr.mxu0 0.0
    %2004 = vmatpush1.msra.mxu0 0.0
    %2005 = vmatprep.subr.mxu0 0.0
    %2006 = vmatpush1.msra.mxu0 0.0
    %2007 = vmatprep.subr.mxu0 0.0
    %2008 = vmatpush1.msra.mxu0 0.0
    %2009 = vmatprep.subr.mxu0 0.0
    %2010 = vmatpush1.msra.mxu0 0.0
    %2011 = vmatprep.subr.mxu0 0.0
    %2012 = vmatpush1.msra.mxu0 0.0
    %2013 = vmatprep.subr.mxu0 0.0
    %2014 = vmatpush1.msra.mxu0 0.0
    %2015 = vmatprep.subr.mxu0 0.0
    %2016 = vmatpush1.msra.mxu0 0.0
    %2017 = vmatprep.subr.mxu0 0.0
    %2018 = vmatpush1.msra.mxu0 0.0
    %2019 = vmatprep.subr.mxu0 0.0
    %2020 = vmatpush1.msra.mxu0 0.0
    %2021 = vmatprep.subr.mxu0 0.0
    %2022 = vmatpush1.msra.mxu0 0.0
    %2023 = vmatprep.subr.mxu0 0.0
    %2024 = vmatpush1.msra.mxu0 0.0
    %2025 = vmatprep.subr.mxu0 0.0
    %2026 = vmatpush1.msra.mxu0 0.0
    %2027 = vmatprep.subr.mxu0 0.0
    %2028 = vmatpush1.msra.mxu0 0.0
    %2029 = vmatprep.subr.mxu0 0.0
    %2030 = vmatpush1.msra.mxu0 0.0
    %2031 = vmatprep.subr.mxu0 0.0
    %2032 = vmatpush1.msra.mxu0 0.0
    %2033 = vmatprep.subr.mxu0 0.0
    %2034 = vmatpush1.msra.mxu0 0.0
    %2035 = vmatprep.subr.mxu0 0.0
    %2036 = vmatpush1.msra.mxu0 0.0
    %2037 = vmatprep.subr.mxu0 0.0
    %2038 = vmatpush1.msra.mxu0 0.0
    %2039 = vmatprep.subr.mxu0 0.0
    %2040 = vmatpush1.msra.mxu0 0.0
    %2041 = vmatprep.subr.mxu0 0.0
    %2042 = vmatpush1.msra.mxu0 0.0
    %2043 = vmatprep.mubr.f32.mxu0 0.0
    %2044 = vmatmul.mubr.f32.gmra.mrb[0].mxu0 %v1977
    %v2045 = vpop.f32.mrb[0].mxu0
    %v2046 = vadd.f32 %v1304, %v2045
    %v2047 = vpop.f32.mrb[0].mxu0
    %2048 = vdwg.mxu0
    %v2050 = vrot.slane %v2046, 6
    %2051 = vrot.lane.b32.xlu0 %v2050, 96
    %v2052 = vpop.permute.xlu0 %2051
    %v2054 = vadd.f32 %v447, %v2052
    %v2055 = vxor.u32 %v2054, 2147483648
    %v2056 = vmul.f32 %v2055, 1.442695
    %v2057 = vpow.pop %v2056
    %v2058 = vadd.f32 %v2057, 1.0
    %v2059 = vrcp.pop %v2058
    %v2060 = vmul.f32 1.0, %v2059
    %v2061 = vadd.f32 %v449, %v2052
    %v2062 = vxor.u32 %v2061, 2147483648
    %v2063 = vmul.f32 %v2062, 1.442695
    %v2064 = vpow.pop %v2063
    %v2065 = vadd.f32 %v2064, 1.0
    %v2066 = vrcp.pop %v2065
    %v2067 = vmul.f32 1.0, %v2066
    %2068 = vrot.lane.b32.xlu0 %v2050, 32
    %v2069 = vpop.permute.xlu0 %2068
    %v2071 = vmul.f32 %v2060, %v2069
    %2073 = vrot.lane.b32.xlu0 %v2071, 64
    %v2074 = vpop.permute.xlu0 %2073
    %v2076 = vadd.f32 %v449, %v2074
    %v2077 = vtanh.pop %v2076
    %v2078 = vsub.f32 1.0, %v2067
    %2080 = vrot.lane.b32.xlu0 %v2077, 96
    %v2081 = vpop.permute.xlu0 %2080
    %v2083 = vmul.f32 %v2078, %v2081
    %v2084 = vrot.slane %v1974, 2
    %v2086 = vmul.f32 %v2067, %v2084
    %v2087 = vadd.f32 %v2083, %v2086
    %v2089 = vrot.slane %v2087, 2
    %v2090 = vsel %vm463, %v2089, 0
    %2092 = vmatprep.subr.mxu0 0.0
    %2093 = vmatpush1.msra.mxu0 %v355
    %2094 = vmatprep.subr.mxu0 0.0
    %2095 = vmatpush1.msra.mxu0 %v356
    %2096 = vmatprep.subr.mxu0 0.0
    %2097 = vmatpush1.msra.mxu0 %v357
    %2098 = vmatprep.subr.mxu0 0.0
    %2099 = vmatpush1.msra.mxu0 %v358
    %2100 = vmatprep.subr.mxu0 0.0
    %2101 = vmatpush1.msra.mxu0 0.0
    %2102 = vmatprep.subr.mxu0 0.0
    %2103 = vmatpush1.msra.mxu0 0.0
    %2104 = vmatprep.subr.mxu0 0.0
    %2105 = vmatpush1.msra.mxu0 0.0
    %2106 = vmatprep.subr.mxu0 0.0
    %2107 = vmatpush1.msra.mxu0 0.0
    %2108 = vmatprep.subr.mxu0 0.0
    %2109 = vmatpush1.msra.mxu0 0.0
    %2110 = vmatprep.subr.mxu0 0.0
    %2111 = vmatpush1.msra.mxu0 0.0
    %2112 = vmatprep.subr.mxu0 0.0
    %2113 = vmatpush1.msra.mxu0 0.0
    %2114 = vmatprep.subr.mxu0 0.0
    %2115 = vmatpush1.msra.mxu0 0.0
    %2116 = vmatprep.subr.mxu0 0.0
    %2117 = vmatpush1.msra.mxu0 0.0
    %2118 = vmatprep.subr.mxu0 0.0
    %2119 = vmatpush1.msra.mxu0 0.0
    %2120 = vmatprep.subr.mxu0 0.0
    %2121 = vmatpush1.msra.mxu0 0.0
    %2122 = vmatprep.subr.mxu0 0.0
    %2123 = vmatpush1.msra.mxu0 0.0
    %2124 = vmatprep.subr.mxu0 0.0
    %2125 = vmatpush1.msra.mxu0 0.0
    %2126 = vmatprep.subr.mxu0 0.0
    %2127 = vmatpush1.msra.mxu0 0.0
    %2128 = vmatprep.subr.mxu0 0.0
    %2129 = vmatpush1.msra.mxu0 0.0
    %2130 = vmatprep.subr.mxu0 0.0
    %2131 = vmatpush1.msra.mxu0 0.0
    %2132 = vmatprep.subr.mxu0 0.0
    %2133 = vmatpush1.msra.mxu0 0.0
    %2134 = vmatprep.subr.mxu0 0.0
    %2135 = vmatpush1.msra.mxu0 0.0
    %2136 = vmatprep.subr.mxu0 0.0
    %2137 = vmatpush1.msra.mxu0 0.0
    %2138 = vmatprep.subr.mxu0 0.0
    %2139 = vmatpush1.msra.mxu0 0.0
    %2140 = vmatprep.subr.mxu0 0.0
    %2141 = vmatpush1.msra.mxu0 0.0
    %2142 = vmatprep.subr.mxu0 0.0
    %2143 = vmatpush1.msra.mxu0 0.0
    %2144 = vmatprep.subr.mxu0 0.0
    %2145 = vmatpush1.msra.mxu0 0.0
    %2146 = vmatprep.subr.mxu0 0.0
    %2147 = vmatpush1.msra.mxu0 0.0
    %2148 = vmatprep.subr.mxu0 0.0
    %2149 = vmatpush1.msra.mxu0 0.0
    %2150 = vmatprep.subr.mxu0 0.0
    %2151 = vmatpush1.msra.mxu0 0.0
    %2152 = vmatprep.subr.mxu0 0.0
    %2153 = vmatpush1.msra.mxu0 0.0
    %2154 = vmatprep.subr.mxu0 0.0
    %2155 = vmatpush1.msra.mxu0 0.0
    %2156 = vmatprep.mubr.f32.mxu0 0.0
    %2157 = vmatmul.mubr.f32.gmra.mrb[0].mxu0 %v2090
    %v2158 = vpop.f32.mrb[0].mxu0
    %v2159 = vadd.f32 %v1304, %v2158
    %v2160 = vpop.f32.mrb[0].mxu0
    %2161 = vdwg.mxu0
    %2163 = vrot.lane.b32.xlu0 %v2159, 96
    %v2164 = vpop.permute.xlu0 %2163
    %v2166 = vadd.f32 %v447, %v2164
    %v2167 = vxor.u32 %v2166, 2147483648
    %v2168 = vmul.f32 %v2167, 1.442695
    %v2169 = vpow.pop %v2168
    %v2170 = vadd.f32 %v2169, 1.0
    %v2171 = vrcp.pop %v2170
    %v2172 = vmul.f32 1.0, %v2171
    %v2173 = vadd.f32 %v449, %v2164
    %v2174 = vxor.u32 %v2173, 2147483648
    %v2175 = vmul.f32 %v2174, 1.442695
    %v2176 = vpow.pop %v2175
    %v2177 = vadd.f32 %v2176, 1.0
    %v2178 = vrcp.pop %v2177
    %v2179 = vmul.f32 1.0, %v2178
    %2180 = vrot.lane.b32.xlu0 %v2159, 32
    %v2181 = vpop.permute.xlu0 %2180
    %v2183 = vmul.f32 %v2172, %v2181
    %2185 = vrot.lane.b32.xlu0 %v2183, 64
    %v2186 = vpop.permute.xlu0 %2185
    %v2188 = vadd.f32 %v449, %v2186
    %v2189 = vtanh.pop %v2188
    %v2190 = vsub.f32 1.0, %v2179
    %2192 = vrot.lane.b32.xlu0 %v2189, 96
    %v2193 = vpop.permute.xlu0 %2192
    %v2195 = vmul.f32 %v2190, %v2193
    %v2197 = vmul.f32 %v2179, %v2089
    %v2198 = vadd.f32 %v2195, %v2197
    %2201 = vrot.lane.b32.xlu0 %v2198, 32
    %v2202 = vpop.permute.xlu0 %2201
    %v2204 = vsel %vm463, %v565, %v2202
    %2205 = vrot.lane.b32.xlu0 %v667, 96
    %v2206 = vpop.permute.xlu0 %2205
    %2208 = vrot.lane.b32.xlu0 %v2087, 32
    %v2209 = vpop.permute.xlu0 %2208
    %v2211 = vsel %vm463, %v2206, %v2209
    %2212 = vrot.lane.b32.xlu0 %v773, 96
    %v2213 = vpop.permute.xlu0 %2212
    %2215 = vrot.lane.b32.xlu0 %v1974, 32
    %v2216 = vpop.permute.xlu0 %2215
    %v2218 = vsel %vm463, %v2213, %v2216
    %2219 = vrot.lane.b32.xlu0 %v879, 96
    %v2220 = vpop.permute.xlu0 %2219
    %2222 = vrot.lane.b32.xlu0 %v1861, 32
    %v2223 = vpop.permute.xlu0 %2222
    %v2225 = vsel %vm463, %v2220, %v2223
    %2227 = vrot.lane.b32.xlu0 %v1749, 32
    %v2228 = vpop.permute.xlu0 %2227
    %v2230 = vsel %vm463, %v985, %v2228
    %2231 = vrot.lane.b32.xlu0 %v1087, 96
    %v2232 = vpop.permute.xlu0 %2231
    %2234 = vrot.lane.b32.xlu0 %v1638, 32
    %v2235 = vpop.permute.xlu0 %2234
    %v2237 = vsel %vm463, %v2232, %v2235
    %2238 = vrot.lane.b32.xlu0 %v1193, 96
    %v2239 = vpop.permute.xlu0 %2238
    %2241 = vrot.lane.b32.xlu0 %v1525, 32
    %v2242 = vpop.permute.xlu0 %2241
    %v2244 = vsel %vm463, %v2239, %v2242
    %2246 = vrot.lane.b32.xlu0 %v1299, 96
    %v2247 = vpop.permute.xlu0 %2246
    %2249 = vrot.lane.b32.xlu0 %v1412, 32
    %v2250 = vpop.permute.xlu0 %2249
    %v2252 = vsel %vm463, %v2247, %v2250
    %vm2253 = vcmask 1041408
    %v2254 = vsel %vm2253, %v2204, %v2211
    %vm2255 = vcmask 1043456
    %v2256 = vsel %vm2255, %v2254, %v2218
    %vm2257 = vcmask 1045504
    %v2258 = vsel %vm2257, %v2256, %v2225
    %v2259 = vsel %vm2253, %v2230, %v2237
    %v2260 = vsel %vm2255, %v2259, %v2244
    %v2261 = vsel %vm2257, %v2260, %v2252
    %v2262 = vld [vmem:[%s15] sm:$0xff]
    %v2263 = vld [vmem:[%s15 + $0x8] sm:$0xff]
    %v2264 = vld [vmem:[%s15 + $0x10] sm:$0xff]
    %v2265 = vld [vmem:[%s15 + $0x18] sm:$0xff]
    %v2266 = vld [vmem:[%s15 + $0x20] sm:$0xff]
    %v2267 = vld [vmem:[%s15 + $0x28] sm:$0xff]
    %v2268 = vld [vmem:[%s15 + $0x30] sm:$0xff]
    %v2269 = vld [vmem:[%s15 + $0x38] sm:$0xff]
    %v2270 = vld [vmem:[%s15 + $0x40] sm:$0xff]
    %v2271 = vld [vmem:[%s15 + $0x48] sm:$0xff]
    %v2272 = vld [vmem:[%s15 + $0x50] sm:$0xff]
    %v2273 = vld [vmem:[%s15 + $0x58] sm:$0xff]
    %v2274 = vld [vmem:[%s15 + $0x60] sm:$0xff]
    %v2275 = vld [vmem:[%s15 + $0x68] sm:$0xff]
    %v2276 = vld [vmem:[%s15 + $0x70] sm:$0xff]
    %v2277 = vld [vmem:[%s15 + $0x78] sm:$0xff]
    %v2278 = vld [vmem:[%s17] sm:$0xff]
    %v2279 = vld [vmem:[%s17 + $0x8] sm:$0xff]
    %v2280 = vld [vmem:[%s17 + $0x10] sm:$0xff]
    %v2281 = vld [vmem:[%s17 + $0x18] sm:$0xff]
    %v2282 = vld [vmem:[%s17 + $0x20] sm:$0xff]
    %v2283 = vld [vmem:[%s17 + $0x28] sm:$0xff]
    %v2284 = vld [vmem:[%s17 + $0x30] sm:$0xff]
    %v2285 = vld [vmem:[%s17 + $0x38] sm:$0xff]
    %v2286 = vld [vmem:[%s19] sm:$0x3]
    %v2287 = vld [vmem:[#allocation8] sm:$0x1]
    %v2288 = vld [vmem:[#allocation8 + $0x1] sm:$0x1]
    %v2290 = vlaneseq
    %v2291 = vshrl.u32 %v2290, 7
    %v2292 = vsub.s32 0, %v2291
    %v2293 = vrot.slane %v2286, %v2292
    %v2294 = vlaneseq
    %v2295 = vshrl.u32 %v2294, 7
    %v2296 = vsub.s32 1, %v2295
    %v2297 = vrot.slane %v2286, %v2296
    %vm2300 = vcmask 523264
    %v2302 = vsel %vm2300, %v2258, 0
    %v2305 = vsel %vm2300, %v2261, 0
    %2307 = vmatprep.subr.mxu0 %v2263
    %2308 = vmatpush1.msra.mxu0 %v2262
    %2309 = vmatprep.subr.mxu0 %v2265
    %2310 = vmatpush1.msra.mxu0 %v2264
    %2311 = vmatprep.subr.mxu0 %v2267
    %2312 = vmatpush1.msra.mxu0 %v2266
    %2313 = vmatprep.subr.mxu0 %v2269
    %2314 = vmatpush1.msra.mxu0 %v2268
    %2315 = vmatprep.subr.mxu0 %v2271
    %2316 = vmatpush1.msra.mxu0 %v2270
    %2317 = vmatprep.subr.mxu0 %v2273
    %2318 = vmatpush1.msra.mxu0 %v2272
    %2319 = vmatprep.subr.mxu0 %v2275
    %2320 = vmatpush1.msra.mxu0 %v2274
    %2321 = vmatprep.subr.mxu0 %v2277
    %2322 = vmatpush1.msra.mxu0 %v2276
    %2323 = vmatprep.subr.mxu0 0.0
    %2324 = vmatpush1.msra.mxu0 0.0
    %2325 = vmatprep.subr.mxu0 0.0
    %2326 = vmatpush1.msra.mxu0 0.0
    %2327 = vmatprep.subr.mxu0 0.0
    %2328 = vmatpush1.msra.mxu0 0.0
    %2329 = vmatprep.subr.mxu0 0.0
    %2330 = vmatpush1.msra.mxu0 0.0
    %2331 = vmatprep.subr.mxu0 0.0
    %2332 = vmatpush1.msra.mxu0 0.0
    %2333 = vmatprep.subr.mxu0 0.0
    %2334 = vmatpush1.msra.mxu0 0.0
    %2335 = vmatprep.subr.mxu0 0.0
    %2336 = vmatpush1.msra.mxu0 0.0
    %2337 = vmatprep.subr.mxu0 0.0
    %2338 = vmatpush1.msra.mxu0 0.0
    %2339 = vmatprep.subr.mxu0 0.0
    %2340 = vmatpush1.msra.mxu0 0.0
    %2341 = vmatprep.subr.mxu0 0.0
    %2342 = vmatpush1.msra.mxu0 0.0
    %2343 = vmatprep.subr.mxu0 0.0
    %2344 = vmatpush1.msra.mxu0 0.0
    %2345 = vmatprep.subr.mxu0 0.0
    %2346 = vmatpush1.msra.mxu0 0.0
    %2347 = vmatprep.subr.mxu0 0.0
    %2348 = vmatpush1.msra.mxu0 0.0
    %2349 = vmatprep.subr.mxu0 0.0
    %2350 = vmatpush1.msra.mxu0 0.0
    %2351 = vmatprep.subr.mxu0 0.0
    %2352 = vmatpush1.msra.mxu0 0.0
    %2353 = vmatprep.subr.mxu0 0.0
    %2354 = vmatpush1.msra.mxu0 0.0
    %2355 = vmatprep.subr.mxu0 0.0
    %2356 = vmatpush1.msra.mxu0 0.0
    %2357 = vmatprep.subr.mxu0 0.0
    %2358 = vmatpush1.msra.mxu0 0.0
    %2359 = vmatprep.subr.mxu0 0.0
    %2360 = vmatpush1.msra.mxu0 0.0
    %2361 = vmatprep.subr.mxu0 0.0
    %2362 = vmatpush1.msra.mxu0 0.0
    %2363 = vmatprep.subr.mxu0 0.0
    %2364 = vmatpush1.msra.mxu0 0.0
    %2365 = vmatprep.subr.mxu0 0.0
    %2366 = vmatpush1.msra.mxu0 0.0
    %2367 = vmatprep.subr.mxu0 0.0
    %2368 = vmatpush1.msra.mxu0 0.0
    %2369 = vmatprep.subr.mxu0 0.0
    %2370 = vmatpush1.msra.mxu0 0.0
    %2371 = vmatprep.mubr.f32.mxu0 0.0
    %2372 = vmatmul.mubr.f32.gmra.mrb[0].mxu0 %v2302
    %v2373 = vpop.f32.mrb[0].mxu0
    %v2374 = vadd.f32 %v2293, %v2373
    %v2375 = vpop.f32.mrb[0].mxu0
    %v2376 = vadd.f32 %v2297, %v2375
    %2377 = vmatprep.mubr.f32.mxu0 0.0
    %2378 = vmatmul.mubr.f32.gmra.mrb[0].mxu0 %v2305
    %v2379 = vpop.f32.mrb[0].mxu0
    %v2380 = vadd.f32 %v2293, %v2379
    %v2381 = vpop.f32.mrb[0].mxu0
    %v2382 = vadd.f32 %v2297, %v2381
    %2383 = vdwg.mxu0
    %v2385 = vlaneseq
    %v2386 = vshrl.u32 %v2385, 7
    %v2387 = vsub.s32 0, %v2386
    %v2388 = vrot.slane %v2287, %v2387
    %2390 = vmatprep.subr.mxu0 0.0
    %2391 = vmatpush1.msra.mxu0 %v2278
    %2392 = vmatprep.subr.mxu0 0.0
    %2393 = vmatpush1.msra.mxu0 %v2279
    %2394 = vmatprep.subr.mxu0 0.0
    %2395 = vmatpush1.msra.mxu0 %v2280
    %2396 = vmatprep.subr.mxu0 0.0
    %2397 = vmatpush1.msra.mxu0 %v2281
    %2398 = vmatprep.subr.mxu0 0.0
    %2399 = vmatpush1.msra.mxu0 0.0
    %2400 = vmatprep.subr.mxu0 0.0
    %2401 = vmatpush1.msra.mxu0 0.0
    %2402 = vmatprep.subr.mxu0 0.0
    %2403 = vmatpush1.msra.mxu0 0.0
    %2404 = vmatprep.subr.mxu0 0.0
    %2405 = vmatpush1.msra.mxu0 0.0
    %2406 = vmatprep.subr.mxu0 0.0
    %2407 = vmatpush1.msra.mxu0 0.0
    %2408 = vmatprep.subr.mxu0 0.0
    %2409 = vmatpush1.msra.mxu0 0.0
    %2410 = vmatprep.subr.mxu0 0.0
    %2411 = vmatpush1.msra.mxu0 0.0
    %2412 = vmatprep.subr.mxu0 0.0
    %2413 = vmatpush1.msra.mxu0 0.0
    %2414 = vmatprep.subr.mxu0 0.0
    %2415 = vmatpush1.msra.mxu0 0.0
    %2416 = vmatprep.subr.mxu0 0.0
    %2417 = vmatpush1.msra.mxu0 0.0
    %2418 = vmatprep.subr.mxu0 0.0
    %2419 = vmatpush1.msra.mxu0 0.0
    %2420 = vmatprep.subr.mxu0 0.0
    %2421 = vmatpush1.msra.mxu0 0.0
    %2422 = vmatprep.subr.mxu0 0.0
    %2423 = vmatpush1.msra.mxu0 0.0
    %2424 = vmatprep.subr.mxu0 0.0
    %2425 = vmatpush1.msra.mxu0 0.0
    %2426 = vmatprep.subr.mxu0 0.0
    %2427 = vmatpush1.msra.mxu0 0.0
    %2428 = vmatprep.subr.mxu0 0.0
    %2429 = vmatpush1.msra.mxu0 0.0
    %2430 = vmatprep.subr.mxu0 0.0
    %2431 = vmatpush1.msra.mxu0 0.0
    %2432 = vmatprep.subr.mxu0 0.0
    %2433 = vmatpush1.msra.mxu0 0.0
    %2434 = vmatprep.subr.mxu0 0.0
    %2435 = vmatpush1.msra.mxu0 0.0
    %2436 = vmatprep.subr.mxu0 0.0
    %2437 = vmatpush1.msra.mxu0 0.0
    %2438 = vmatprep.subr.mxu0 0.0
    %2439 = vmatpush1.msra.mxu0 0.0
    %2440 = vmatprep.subr.mxu0 0.0
    %2441 = vmatpush1.msra.mxu0 0.0
    %2442 = vmatprep.subr.mxu0 0.0
    %2443 = vmatpush1.msra.mxu0 0.0
    %2444 = vmatprep.subr.mxu0 0.0
    %2445 = vmatpush1.msra.mxu0 0.0
    %2446 = vmatprep.subr.mxu0 0.0
    %2447 = vmatpush1.msra.mxu0 0.0
    %2448 = vmatprep.subr.mxu0 0.0
    %2449 = vmatpush1.msra.mxu0 0.0
    %2450 = vmatprep.subr.mxu0 0.0
    %2451 = vmatpush1.msra.mxu0 0.0
    %2452 = vmatprep.subr.mxu0 0.0
    %2453 = vmatpush1.msra.mxu0 0.0
    %2454 = vmatprep.mubr.f32.mxu0 0.0
    %2455 = vmatmul.mubr.f32.gmra.mrb[0].mxu0 %v465
    %v2456 = vpop.f32.mrb[0].mxu0
    %v2457 = vadd.f32 %v2388, %v2456
    %v2458 = vpop.f32.mrb[0].mxu0
    %2459 = vdwg.mxu0
    %v2460 = vadd.f32 %v2374, %v2457
    %v2461 = vxor.u32 %v2460, 2147483648
    %v2462 = vmul.f32 %v2461, 1.442695
    %v2463 = vpow.pop %v2462
    %v2464 = vadd.f32 %v2463, 1.0
    %v2465 = vrcp.pop %v2464
    %v2466 = vmul.f32 1.0, %v2465
    %2468 = vrot.lane.b32.xlu0 %v2457, 64
    %v2469 = vpop.permute.xlu0 %2468
    %v2471 = vmul.f32 %v2466, %v2469
    %2473 = vrot.lane.b32.xlu0 %v2471, 64
    %v2474 = vpop.permute.xlu0 %2473
    %v2476 = vadd.f32 %v2374, %v2474
    %v2477 = vtanh.pop %v2476
    %v2478 = vsub.f32 1.0, %v2466
    %2480 = vrot.lane.b32.xlu0 %v2477, 96
    %v2481 = vpop.permute.xlu0 %2480
    %v2483 = vmul.f32 %v2478, %v2481
    %v2484 = vmul.f32 %v2466, 0.0
    %v2485 = vadd.f32 %v2483, %v2484
    %2487 = vrot.lane.b32.xlu0 %v2485, 96
    %v2488 = vpop.permute.xlu0 %2487
    %v2489 = vsel %vm463, %v2488, 0
    %2491 = vmatprep.subr.mxu0 0.0
    %2492 = vmatpush1.msra.mxu0 %v2278
    %2493 = vmatprep.subr.mxu0 0.0
    %2494 = vmatpush1.msra.mxu0 %v2279
    %2495 = vmatprep.subr.mxu0 0.0
    %2496 = vmatpush1.msra.mxu0 %v2280
    %2497 = vmatprep.subr.mxu0 0.0
    %2498 = vmatpush1.msra.mxu0 %v2281
    %2499 = vmatprep.subr.mxu0 0.0
    %2500 = vmatpush1.msra.mxu0 0.0
    %2501 = vmatprep.subr.mxu0 0.0
    %2502 = vmatpush1.msra.mxu0 0.0
    %2503 = vmatprep.subr.mxu0 0.0
    %2504 = vmatpush1.msra.mxu0 0.0
    %2505 = vmatprep.subr.mxu0 0.0
    %2506 = vmatpush1.msra.mxu0 0.0
    %2507 = vmatprep.subr.mxu0 0.0
    %2508 = vmatpush1.msra.mxu0 0.0
    %2509 = vmatprep.subr.mxu0 0.0
    %2510 = vmatpush1.msra.mxu0 0.0
    %2511 = vmatprep.subr.mxu0 0.0
    %2512 = vmatpush1.msra.mxu0 0.0
    %2513 = vmatprep.subr.mxu0 0.0
    %2514 = vmatpush1.msra.mxu0 0.0
    %2515 = vmatprep.subr.mxu0 0.0
    %2516 = vmatpush1.msra.mxu0 0.0
    %2517 = vmatprep.subr.mxu0 0.0
    %2518 = vmatpush1.msra.mxu0 0.0
    %2519 = vmatprep.subr.mxu0 0.0
    %2520 = vmatpush1.msra.mxu0 0.0
    %2521 = vmatprep.subr.mxu0 0.0
    %2522 = vmatpush1.msra.mxu0 0.0
    %2523 = vmatprep.subr.mxu0 0.0
    %2524 = vmatpush1.msra.mxu0 0.0
    %2525 = vmatprep.subr.mxu0 0.0
    %2526 = vmatpush1.msra.mxu0 0.0
    %2527 = vmatprep.subr.mxu0 0.0
    %2528 = vmatpush1.msra.mxu0 0.0
    %2529 = vmatprep.subr.mxu0 0.0
    %2530 = vmatpush1.msra.mxu0 0.0
    %2531 = vmatprep.subr.mxu0 0.0
    %2532 = vmatpush1.msra.mxu0 0.0
    %2533 = vmatprep.subr.mxu0 0.0
    %2534 = vmatpush1.msra.mxu0 0.0
    %2535 = vmatprep.subr.mxu0 0.0
    %2536 = vmatpush1.msra.mxu0 0.0
    %2537 = vmatprep.subr.mxu0 0.0
    %2538 = vmatpush1.msra.mxu0 0.0
    %2539 = vmatprep.subr.mxu0 0.0
    %2540 = vmatpush1.msra.mxu0 0.0
    %2541 = vmatprep.subr.mxu0 0.0
    %2542 = vmatpush1.msra.mxu0 0.0
    %2543 = vmatprep.subr.mxu0 0.0
    %2544 = vmatpush1.msra.mxu0 0.0
    %2545 = vmatprep.subr.mxu0 0.0
    %2546 = vmatpush1.msra.mxu0 0.0
    %2547 = vmatprep.subr.mxu0 0.0
    %2548 = vmatpush1.msra.mxu0 0.0
    %2549 = vmatprep.subr.mxu0 0.0
    %2550 = vmatpush1.msra.mxu0 0.0
    %2551 = vmatprep.subr.mxu0 0.0
    %2552 = vmatpush1.msra.mxu0 0.0
    %2553 = vmatprep.subr.mxu0 0.0
    %2554 = vmatpush1.msra.mxu0 0.0
    %2555 = vmatprep.mubr.f32.mxu0 0.0
    %2556 = vmatmul.mubr.f32.gmra.mrb[0].mxu0 %v2489
    %v2557 = vpop.f32.mrb[0].mxu0
    %v2558 = vadd.f32 %v2388, %v2557
    %v2559 = vpop.f32.mrb[0].mxu0
    %2560 = vdwg.mxu0
    %v2562 = vrot.slane %v2558, 6
    %v2564 = vadd.f32 %v2374, %v2562
    %v2565 = vxor.u32 %v2564, 2147483648
    %v2566 = vmul.f32 %v2565, 1.442695
    %v2567 = vpow.pop %v2566
    %v2568 = vadd.f32 %v2567, 1.0
    %v2569 = vrcp.pop %v2568
    %v2570 = vmul.f32 1.0, %v2569
    %2571 = vrot.lane.b32.xlu0 %v2562, 64
    %v2572 = vpop.permute.xlu0 %2571
    %v2574 = vmul.f32 %v2570, %v2572
    %2576 = vrot.lane.b32.xlu0 %v2574, 64
    %v2577 = vpop.permute.xlu0 %2576
    %v2579 = vadd.f32 %v2374, %v2577
    %v2580 = vtanh.pop %v2579
    %v2581 = vsub.f32 1.0, %v2570
    %2583 = vrot.lane.b32.xlu0 %v2580, 96
    %v2584 = vpop.permute.xlu0 %2583
    %v2586 = vmul.f32 %v2581, %v2584
    %v2587 = vrot.slane %v2485, 6
    %v2589 = vmul.f32 %v2570, %v2587
    %v2590 = vadd.f32 %v2586, %v2589
    %v2592 = vrot.slane %v2590, 2
    %2593 = vrot.lane.b32.xlu0 %v2592, 96
    %v2594 = vpop.permute.xlu0 %2593
    %v2595 = vsel %vm463, %v2594, 0
    %2597 = vmatprep.subr.mxu0 0.0
    %2598 = vmatpush1.msra.mxu0 %v2278
    %2599 = vmatprep.subr.mxu0 0.0
    %2600 = vmatpush1.msra.mxu0 %v2279
    %2601 = vmatprep.subr.mxu0 0.0
    %2602 = vmatpush1.msra.mxu0 %v2280
    %2603 = vmatprep.subr.mxu0 0.0
    %2604 = vmatpush1.msra.mxu0 %v2281
    %2605 = vmatprep.subr.mxu0 0.0
    %2606 = vmatpush1.msra.mxu0 0.0
    %2607 = vmatprep.subr.mxu0 0.0
    %2608 = vmatpush1.msra.mxu0 0.0
    %2609 = vmatprep.subr.mxu0 0.0
    %2610 = vmatpush1.msra.mxu0 0.0
    %2611 = vmatprep.subr.mxu0 0.0
    %2612 = vmatpush1.msra.mxu0 0.0
    %2613 = vmatprep.subr.mxu0 0.0
    %2614 = vmatpush1.msra.mxu0 0.0
    %2615 = vmatprep.subr.mxu0 0.0
    %2616 = vmatpush1.msra.mxu0 0.0
    %2617 = vmatprep.subr.mxu0 0.0
    %2618 = vmatpush1.msra.mxu0 0.0
    %2619 = vmatprep.subr.mxu0 0.0
    %2620 = vmatpush1.msra.mxu0 0.0
    %2621 = vmatprep.subr.mxu0 0.0
    %2622 = vmatpush1.msra.mxu0 0.0
    %2623 = vmatprep.subr.mxu0 0.0
    %2624 = vmatpush1.msra.mxu0 0.0
    %2625 = vmatprep.subr.mxu0 0.0
    %2626 = vmatpush1.msra.mxu0 0.0
    %2627 = vmatprep.subr.mxu0 0.0
    %2628 = vmatpush1.msra.mxu0 0.0
    %2629 = vmatprep.subr.mxu0 0.0
    %2630 = vmatpush1.msra.mxu0 0.0
    %2631 = vmatprep.subr.mxu0 0.0
    %2632 = vmatpush1.msra.mxu0 0.0
    %2633 = vmatprep.subr.mxu0 0.0
    %2634 = vmatpush1.msra.mxu0 0.0
    %2635 = vmatprep.subr.mxu0 0.0
    %2636 = vmatpush1.msra.mxu0 0.0
    %2637 = vmatprep.subr.mxu0 0.0
    %2638 = vmatpush1.msra.mxu0 0.0
    %2639 = vmatprep.subr.mxu0 0.0
    %2640 = vmatpush1.msra.mxu0 0.0
    %2641 = vmatprep.subr.mxu0 0.0
    %2642 = vmatpush1.msra.mxu0 0.0
    %2643 = vmatprep.subr.mxu0 0.0
    %2644 = vmatpush1.msra.mxu0 0.0
    %2645 = vmatprep.subr.mxu0 0.0
    %2646 = vmatpush1.msra.mxu0 0.0
    %2647 = vmatprep.subr.mxu0 0.0
    %2648 = vmatpush1.msra.mxu0 0.0
    %2649 = vmatprep.subr.mxu0 0.0
    %2650 = vmatpush1.msra.mxu0 0.0
    %2651 = vmatprep.subr.mxu0 0.0
    %2652 = vmatpush1.msra.mxu0 0.0
    %2653 = vmatprep.subr.mxu0 0.0
    %2654 = vmatpush1.msra.mxu0 0.0
    %2655 = vmatprep.subr.mxu0 0.0
    %2656 = vmatpush1.msra.mxu0 0.0
    %2657 = vmatprep.subr.mxu0 0.0
    %2658 = vmatpush1.msra.mxu0 0.0
    %2659 = vmatprep.subr.mxu0 0.0
    %2660 = vmatpush1.msra.mxu0 0.0
    %2661 = vmatprep.mubr.f32.mxu0 0.0
    %2662 = vmatmul.mubr.f32.gmra.mrb[0].mxu0 %v2595
    %v2663 = vpop.f32.mrb[0].mxu0
    %v2664 = vadd.f32 %v2388, %v2663
    %v2665 = vpop.f32.mrb[0].mxu0
    %2666 = vdwg.mxu0
    %v2668 = vrot.slane %v2664, 4
    %v2670 = vadd.f32 %v2374, %v2668
    %v2671 = vxor.u32 %v2670, 2147483648
    %v2672 = vmul.f32 %v2671, 1.442695
    %v2673 = vpow.pop %v2672
    %v2674 = vadd.f32 %v2673, 1.0
    %v2675 = vrcp.pop %v2674
    %v2676 = vmul.f32 1.0, %v2675
    %2677 = vrot.lane.b32.xlu0 %v2668, 64
    %v2678 = vpop.permute.xlu0 %2677
    %v2680 = vmul.f32 %v2676, %v2678
    %2682 = vrot.lane.b32.xlu0 %v2680, 64
    %v2683 = vpop.permute.xlu0 %2682
    %v2685 = vadd.f32 %v2374, %v2683
    %v2686 = vtanh.pop %v2685
    %v2687 = vsub.f32 1.0, %v2676
    %2689 = vrot.lane.b32.xlu0 %v2686, 96
    %v2690 = vpop.permute.xlu0 %2689
    %v2692 = vmul.f32 %v2687, %v2690
    %v2693 = vrot.slane %v2590, 6
    %v2695 = vmul.f32 %v2676, %v2693
    %v2696 = vadd.f32 %v2692, %v2695
    %v2698 = vrot.slane %v2696, 4
    %2699 = vrot.lane.b32.xlu0 %v2698, 96
    %v2700 = vpop.permute.xlu0 %2699
    %v2701 = vsel %vm463, %v2700, 0
    %2703 = vmatprep.subr.mxu0 0.0
    %2704 = vmatpush1.msra.mxu0 %v2278
    %2705 = vmatprep.subr.mxu0 0.0
    %2706 = vmatpush1.msra.mxu0 %v2279
    %2707 = vmatprep.subr.mxu0 0.0
    %2708 = vmatpush1.msra.mxu0 %v2280
    %2709 = vmatprep.subr.mxu0 0.0
    %2710 = vmatpush1.msra.mxu0 %v2281
    %2711 = vmatprep.subr.mxu0 0.0
    %2712 = vmatpush1.msra.mxu0 0.0
    %2713 = vmatprep.subr.mxu0 0.0
    %2714 = vmatpush1.msra.mxu0 0.0
    %2715 = vmatprep.subr.mxu0 0.0
    %2716 = vmatpush1.msra.mxu0 0.0
    %2717 = vmatprep.subr.mxu0 0.0
    %2718 = vmatpush1.msra.mxu0 0.0
    %2719 = vmatprep.subr.mxu0 0.0
    %2720 = vmatpush1.msra.mxu0 0.0
    %2721 = vmatprep.subr.mxu0 0.0
    %2722 = vmatpush1.msra.mxu0 0.0
    %2723 = vmatprep.subr.mxu0 0.0
    %2724 = vmatpush1.msra.mxu0 0.0
    %2725 = vmatprep.subr.mxu0 0.0
    %2726 = vmatpush1.msra.mxu0 0.0
    %2727 = vmatprep.subr.mxu0 0.0
    %2728 = vmatpush1.msra.mxu0 0.0
    %2729 = vmatprep.subr.mxu0 0.0
    %2730 = vmatpush1.msra.mxu0 0.0
    %2731 = vmatprep.subr.mxu0 0.0
    %2732 = vmatpush1.msra.mxu0 0.0
    %2733 = vmatprep.subr.mxu0 0.0
    %2734 = vmatpush1.msra.mxu0 0.0
    %2735 = vmatprep.subr.mxu0 0.0
    %2736 = vmatpush1.msra.mxu0 0.0
    %2737 = vmatprep.subr.mxu0 0.0
    %2738 = vmatpush1.msra.mxu0 0.0
    %2739 = vmatprep.subr.mxu0 0.0
    %2740 = vmatpush1.msra.mxu0 0.0
    %2741 = vmatprep.subr.mxu0 0.0
    %2742 = vmatpush1.msra.mxu0 0.0
    %2743 = vmatprep.subr.mxu0 0.0
    %2744 = vmatpush1.msra.mxu0 0.0
    %2745 = vmatprep.subr.mxu0 0.0
    %2746 = vmatpush1.msra.mxu0 0.0
    %2747 = vmatprep.subr.mxu0 0.0
    %2748 = vmatpush1.msra.mxu0 0.0
    %2749 = vmatprep.subr.mxu0 0.0
    %2750 = vmatpush1.msra.mxu0 0.0
    %2751 = vmatprep.subr.mxu0 0.0
    %2752 = vmatpush1.msra.mxu0 0.0
    %2753 = vmatprep.subr.mxu0 0.0
    %2754 = vmatpush1.msra.mxu0 0.0
    %2755 = vmatprep.subr.mxu0 0.0
    %2756 = vmatpush1.msra.mxu0 0.0
    %2757 = vmatprep.subr.mxu0 0.0
    %2758 = vmatpush1.msra.mxu0 0.0
    %2759 = vmatprep.subr.mxu0 0.0
    %2760 = vmatpush1.msra.mxu0 0.0
    %2761 = vmatprep.subr.mxu0 0.0
    %2762 = vmatpush1.msra.mxu0 0.0
    %2763 = vmatprep.subr.mxu0 0.0
    %2764 = vmatpush1.msra.mxu0 0.0
    %2765 = vmatprep.subr.mxu0 0.0
    %2766 = vmatpush1.msra.mxu0 0.0
    %2767 = vmatprep.mubr.f32.mxu0 0.0
    %2768 = vmatmul.mubr.f32.gmra.mrb[0].mxu0 %v2701
    %v2769 = vpop.f32.mrb[0].mxu0
    %v2770 = vadd.f32 %v2388, %v2769
    %v2771 = vpop.f32.mrb[0].mxu0
    %2772 = vdwg.mxu0
    %v2774 = vrot.slane %v2770, 2
    %v2776 = vadd.f32 %v2374, %v2774
    %v2777 = vxor.u32 %v2776, 2147483648
    %v2778 = vmul.f32 %v2777, 1.442695
    %v2779 = vpow.pop %v2778
    %v2780 = vadd.f32 %v2779, 1.0
    %v2781 = vrcp.pop %v2780
    %v2782 = vmul.f32 1.0, %v2781
    %2783 = vrot.lane.b32.xlu0 %v2774, 64
    %v2784 = vpop.permute.xlu0 %2783
    %v2786 = vmul.f32 %v2782, %v2784
    %2788 = vrot.lane.b32.xlu0 %v2786, 64
    %v2789 = vpop.permute.xlu0 %2788
    %v2791 = vadd.f32 %v2374, %v2789
    %v2792 = vtanh.pop %v2791
    %v2793 = vsub.f32 1.0, %v2782
    %2795 = vrot.lane.b32.xlu0 %v2792, 96
    %v2796 = vpop.permute.xlu0 %2795
    %v2798 = vmul.f32 %v2793, %v2796
    %v2799 = vrot.slane %v2696, 6
    %v2801 = vmul.f32 %v2782, %v2799
    %v2802 = vadd.f32 %v2798, %v2801
    %v2804 = vrot.slane %v2802, 6
    %2805 = vrot.lane.b32.xlu0 %v2804, 96
    %v2806 = vpop.permute.xlu0 %2805
    %v2807 = vsel %vm463, %v2806, 0
    %2809 = vmatprep.subr.mxu0 0.0
    %2810 = vmatpush1.msra.mxu0 %v2278
    %2811 = vmatprep.subr.mxu0 0.0
    %2812 = vmatpush1.msra.mxu0 %v2279
    %2813 = vmatprep.subr.mxu0 0.0
    %2814 = vmatpush1.msra.mxu0 %v2280
    %2815 = vmatprep.subr.mxu0 0.0
    %2816 = vmatpush1.msra.mxu0 %v2281
    %2817 = vmatprep.subr.mxu0 0.0
    %2818 = vmatpush1.msra.mxu0 0.0
    %2819 = vmatprep.subr.mxu0 0.0
    %2820 = vmatpush1.msra.mxu0 0.0
    %2821 = vmatprep.subr.mxu0 0.0
    %2822 = vmatpush1.msra.mxu0 0.0
    %2823 = vmatprep.subr.mxu0 0.0
    %2824 = vmatpush1.msra.mxu0 0.0
    %2825 = vmatprep.subr.mxu0 0.0
    %2826 = vmatpush1.msra.mxu0 0.0
    %2827 = vmatprep.subr.mxu0 0.0
    %2828 = vmatpush1.msra.mxu0 0.0
    %2829 = vmatprep.subr.mxu0 0.0
    %2830 = vmatpush1.msra.mxu0 0.0
    %2831 = vmatprep.subr.mxu0 0.0
    %2832 = vmatpush1.msra.mxu0 0.0
    %2833 = vmatprep.subr.mxu0 0.0
    %2834 = vmatpush1.msra.mxu0 0.0
    %2835 = vmatprep.subr.mxu0 0.0
    %2836 = vmatpush1.msra.mxu0 0.0
    %2837 = vmatprep.subr.mxu0 0.0
    %2838 = vmatpush1.msra.mxu0 0.0
    %2839 = vmatprep.subr.mxu0 0.0
    %2840 = vmatpush1.msra.mxu0 0.0
    %2841 = vmatprep.subr.mxu0 0.0
    %2842 = vmatpush1.msra.mxu0 0.0
    %2843 = vmatprep.subr.mxu0 0.0
    %2844 = vmatpush1.msra.mxu0 0.0
    %2845 = vmatprep.subr.mxu0 0.0
    %2846 = vmatpush1.msra.mxu0 0.0
    %2847 = vmatprep.subr.mxu0 0.0
    %2848 = vmatpush1.msra.mxu0 0.0
    %2849 = vmatprep.subr.mxu0 0.0
    %2850 = vmatpush1.msra.mxu0 0.0
    %2851 = vmatprep.subr.mxu0 0.0
    %2852 = vmatpush1.msra.mxu0 0.0
    %2853 = vmatprep.subr.mxu0 0.0
    %2854 = vmatpush1.msra.mxu0 0.0
    %2855 = vmatprep.subr.mxu0 0.0
    %2856 = vmatpush1.msra.mxu0 0.0
    %2857 = vmatprep.subr.mxu0 0.0
    %2858 = vmatpush1.msra.mxu0 0.0
    %2859 = vmatprep.subr.mxu0 0.0
    %2860 = vmatpush1.msra.mxu0 0.0
    %2861 = vmatprep.subr.mxu0 0.0
    %2862 = vmatpush1.msra.mxu0 0.0
    %2863 = vmatprep.subr.mxu0 0.0
    %2864 = vmatpush1.msra.mxu0 0.0
    %2865 = vmatprep.subr.mxu0 0.0
    %2866 = vmatpush1.msra.mxu0 0.0
    %2867 = vmatprep.subr.mxu0 0.0
    %2868 = vmatpush1.msra.mxu0 0.0
    %2869 = vmatprep.subr.mxu0 0.0
    %2870 = vmatpush1.msra.mxu0 0.0
    %2871 = vmatprep.subr.mxu0 0.0
    %2872 = vmatpush1.msra.mxu0 0.0
    %2873 = vmatprep.mubr.f32.mxu0 0.0
    %2874 = vmatmul.mubr.f32.gmra.mrb[0].mxu0 %v2807
    %v2875 = vpop.f32.mrb[0].mxu0
    %v2876 = vadd.f32 %v2388, %v2875
    %v2877 = vpop.f32.mrb[0].mxu0
    %2878 = vdwg.mxu0
    %v2879 = vadd.f32 %v2380, %v2876
    %v2880 = vxor.u32 %v2879, 2147483648
    %v2881 = vmul.f32 %v2880, 1.442695
    %v2882 = vpow.pop %v2881
    %v2883 = vadd.f32 %v2882, 1.0
    %v2884 = vrcp.pop %v2883
    %v2885 = vmul.f32 1.0, %v2884
    %2887 = vrot.lane.b32.xlu0 %v2876, 64
    %v2888 = vpop.permute.xlu0 %2887
    %v2890 = vmul.f32 %v2885, %v2888
    %2892 = vrot.lane.b32.xlu0 %v2890, 64
    %v2893 = vpop.permute.xlu0 %2892
    %v2895 = vadd.f32 %v2380, %v2893
    %v2896 = vtanh.pop %v2895
    %v2897 = vsub.f32 1.0, %v2885
    %2899 = vrot.lane.b32.xlu0 %v2896, 96
    %v2900 = vpop.permute.xlu0 %2899
    %v2902 = vmul.f32 %v2897, %v2900
    %v2904 = vmul.f32 %v2885, %v2804
    %v2905 = vadd.f32 %v2902, %v2904
    %2907 = vrot.lane.b32.xlu0 %v2905, 96
    %v2908 = vpop.permute.xlu0 %2907
    %v2909 = vsel %vm463, %v2908, 0
    %2911 = vmatprep.subr.mxu0 0.0
    %2912 = vmatpush1.msra.mxu0 %v2278
    %2913 = vmatprep.subr.mxu0 0.0
    %2914 = vmatpush1.msra.mxu0 %v2279
    %2915 = vmatprep.subr.mxu0 0.0
    %2916 = vmatpush1.msra.mxu0 %v2280
    %2917 = vmatprep.subr.mxu0 0.0
    %2918 = vmatpush1.msra.mxu0 %v2281
    %2919 = vmatprep.subr.mxu0 0.0
    %2920 = vmatpush1.msra.mxu0 0.0
    %2921 = vmatprep.subr.mxu0 0.0
    %2922 = vmatpush1.msra.mxu0 0.0
    %2923 = vmatprep.subr.mxu0 0.0
    %2924 = vmatpush1.msra.mxu0 0.0
    %2925 = vmatprep.subr.mxu0 0.0
    %2926 = vmatpush1.msra.mxu0 0.0
    %2927 = vmatprep.subr.mxu0 0.0
    %2928 = vmatpush1.msra.mxu0 0.0
    %2929 = vmatprep.subr.mxu0 0.0
    %2930 = vmatpush1.msra.mxu0 0.0
    %2931 = vmatprep.subr.mxu0 0.0
    %2932 = vmatpush1.msra.mxu0 0.0
    %2933 = vmatprep.subr.mxu0 0.0
    %2934 = vmatpush1.msra.mxu0 0.0
    %2935 = vmatprep.subr.mxu0 0.0
    %2936 = vmatpush1.msra.mxu0 0.0
    %2937 = vmatprep.subr.mxu0 0.0
    %2938 = vmatpush1.msra.mxu0 0.0
    %2939 = vmatprep.subr.mxu0 0.0
    %2940 = vmatpush1.msra.mxu0 0.0
    %2941 = vmatprep.subr.mxu0 0.0
    %2942 = vmatpush1.msra.mxu0 0.0
    %2943 = vmatprep.subr.mxu0 0.0
    %2944 = vmatpush1.msra.mxu0 0.0
    %2945 = vmatprep.subr.mxu0 0.0
    %2946 = vmatpush1.msra.mxu0 0.0
    %2947 = vmatprep.subr.mxu0 0.0
    %2948 = vmatpush1.msra.mxu0 0.0
    %2949 = vmatprep.subr.mxu0 0.0
    %2950 = vmatpush1.msra.mxu0 0.0
    %2951 = vmatprep.subr.mxu0 0.0
    %2952 = vmatpush1.msra.mxu0 0.0
    %2953 = vmatprep.subr.mxu0 0.0
    %2954 = vmatpush1.msra.mxu0 0.0
    %2955 = vmatprep.subr.mxu0 0.0
    %2956 = vmatpush1.msra.mxu0 0.0
    %2957 = vmatprep.subr.mxu0 0.0
    %2958 = vmatpush1.msra.mxu0 0.0
    %2959 = vmatprep.subr.mxu0 0.0
    %2960 = vmatpush1.msra.mxu0 0.0
    %2961 = vmatprep.subr.mxu0 0.0
    %2962 = vmatpush1.msra.mxu0 0.0
    %2963 = vmatprep.subr.mxu0 0.0
    %2964 = vmatpush1.msra.mxu0 0.0
    %2965 = vmatprep.subr.mxu0 0.0
    %2966 = vmatpush1.msra.mxu0 0.0
    %2967 = vmatprep.subr.mxu0 0.0
    %2968 = vmatpush1.msra.mxu0 0.0
    %2969 = vmatprep.subr.mxu0 0.0
    %2970 = vmatpush1.msra.mxu0 0.0
    %2971 = vmatprep.subr.mxu0 0.0
    %2972 = vmatpush1.msra.mxu0 0.0
    %2973 = vmatprep.subr.mxu0 0.0
    %2974 = vmatpush1.msra.mxu0 0.0
    %2975 = vmatprep.mubr.f32.mxu0 0.0
    %2976 = vmatmul.mubr.f32.gmra.mrb[0].mxu0 %v2909
    %v2977 = vpop.f32.mrb[0].mxu0
    %v2978 = vadd.f32 %v2388, %v2977
    %v2979 = vpop.f32.mrb[0].mxu0
    %2980 = vdwg.mxu0
    %v2982 = vrot.slane %v2978, 6
    %v2984 = vadd.f32 %v2380, %v2982
    %v2985 = vxor.u32 %v2984, 2147483648
    %v2986 = vmul.f32 %v2985, 1.442695
    %v2987 = vpow.pop %v2986
    %v2988 = vadd.f32 %v2987, 1.0
    %v2989 = vrcp.pop %v2988
    %v2990 = vmul.f32 1.0, %v2989
    %2991 = vrot.lane.b32.xlu0 %v2982, 64
    %v2992 = vpop.permute.xlu0 %2991
    %v2994 = vmul.f32 %v2990, %v2992
    %2996 = vrot.lane.b32.xlu0 %v2994, 64
    %v2997 = vpop.permute.xlu0 %2996
    %v2999 = vadd.f32 %v2380, %v2997
    %v3000 = vtanh.pop %v2999
    %v3001 = vsub.f32 1.0, %v2990
    %3003 = vrot.lane.b32.xlu0 %v3000, 96
    %v3004 = vpop.permute.xlu0 %3003
    %v3006 = vmul.f32 %v3001, %v3004
    %v3007 = vrot.slane %v2905, 6
    %v3009 = vmul.f32 %v2990, %v3007
    %v3010 = vadd.f32 %v3006, %v3009
    %v3012 = vrot.slane %v3010, 2
    %3013 = vrot.lane.b32.xlu0 %v3012, 96
    %v3014 = vpop.permute.xlu0 %3013
    %v3015 = vsel %vm463, %v3014, 0
    %3017 = vmatprep.subr.mxu0 0.0
    %3018 = vmatpush1.msra.mxu0 %v2278
    %3019 = vmatprep.subr.mxu0 0.0
    %3020 = vmatpush1.msra.mxu0 %v2279
    %3021 = vmatprep.subr.mxu0 0.0
    %3022 = vmatpush1.msra.mxu0 %v2280
    %3023 = vmatprep.subr.mxu0 0.0
    %3024 = vmatpush1.msra.mxu0 %v2281
    %3025 = vmatprep.subr.mxu0 0.0
    %3026 = vmatpush1.msra.mxu0 0.0
    %3027 = vmatprep.subr.mxu0 0.0
    %3028 = vmatpush1.msra.mxu0 0.0
    %3029 = vmatprep.subr.mxu0 0.0
    %3030 = vmatpush1.msra.mxu0 0.0
    %3031 = vmatprep.subr.mxu0 0.0
    %3032 = vmatpush1.msra.mxu0 0.0
    %3033 = vmatprep.subr.mxu0 0.0
    %3034 = vmatpush1.msra.mxu0 0.0
    %3035 = vmatprep.subr.mxu0 0.0
    %3036 = vmatpush1.msra.mxu0 0.0
    %3037 = vmatprep.subr.mxu0 0.0
    %3038 = vmatpush1.msra.mxu0 0.0
    %3039 = vmatprep.subr.mxu0 0.0
    %3040 = vmatpush1.msra.mxu0 0.0
    %3041 = vmatprep.subr.mxu0 0.0
    %3042 = vmatpush1.msra.mxu0 0.0
    %3043 = vmatprep.subr.mxu0 0.0
    %3044 = vmatpush1.msra.mxu0 0.0
    %3045 = vmatprep.subr.mxu0 0.0
    %3046 = vmatpush1.msra.mxu0 0.0
    %3047 = vmatprep.subr.mxu0 0.0
    %3048 = vmatpush1.msra.mxu0 0.0
    %3049 = vmatprep.subr.mxu0 0.0
    %3050 = vmatpush1.msra.mxu0 0.0
    %3051 = vmatprep.subr.mxu0 0.0
    %3052 = vmatpush1.msra.mxu0 0.0
    %3053 = vmatprep.subr.mxu0 0.0
    %3054 = vmatpush1.msra.mxu0 0.0
    %3055 = vmatprep.subr.mxu0 0.0
    %3056 = vmatpush1.msra.mxu0 0.0
    %3057 = vmatprep.subr.mxu0 0.0
    %3058 = vmatpush1.msra.mxu0 0.0
    %3059 = vmatprep.subr.mxu0 0.0
    %3060 = vmatpush1.msra.mxu0 0.0
    %3061 = vmatprep.subr.mxu0 0.0
    %3062 = vmatpush1.msra.mxu0 0.0
    %3063 = vmatprep.subr.mxu0 0.0
    %3064 = vmatpush1.msra.mxu0 0.0
    %3065 = vmatprep.subr.mxu0 0.0
    %3066 = vmatpush1.msra.mxu0 0.0
    %3067 = vmatprep.subr.mxu0 0.0
    %3068 = vmatpush1.msra.mxu0 0.0
    %3069 = vmatprep.subr.mxu0 0.0
    %3070 = vmatpush1.msra.mxu0 0.0
    %3071 = vmatprep.subr.mxu0 0.0
    %3072 = vmatpush1.msra.mxu0 0.0
    %3073 = vmatprep.subr.mxu0 0.0
    %3074 = vmatpush1.msra.mxu0 0.0
    %3075 = vmatprep.subr.mxu0 0.0
    %3076 = vmatpush1.msra.mxu0 0.0
    %3077 = vmatprep.subr.mxu0 0.0
    %3078 = vmatpush1.msra.mxu0 0.0
    %3079 = vmatprep.subr.mxu0 0.0
    %3080 = vmatpush1.msra.mxu0 0.0
    %3081 = vmatprep.mubr.f32.mxu0 0.0
    %3082 = vmatmul.mubr.f32.gmra.mrb[0].mxu0 %v3015
    %v3083 = vpop.f32.mrb[0].mxu0
    %v3084 = vadd.f32 %v2388, %v3083
    %v3085 = vpop.f32.mrb[0].mxu0
    %3086 = vdwg.mxu0
    %v3088 = vrot.slane %v3084, 4
    %v3090 = vadd.f32 %v2380, %v3088
    %v3091 = vxor.u32 %v3090, 2147483648
    %v3092 = vmul.f32 %v3091, 1.442695
    %v3093 = vpow.pop %v3092
    %v3094 = vadd.f32 %v3093, 1.0
    %v3095 = vrcp.pop %v3094
    %v3096 = vmul.f32 1.0, %v3095
    %3097 = vrot.lane.b32.xlu0 %v3088, 64
    %v3098 = vpop.permute.xlu0 %3097
    %v3100 = vmul.f32 %v3096, %v3098
    %3102 = vrot.lane.b32.xlu0 %v3100, 64
    %v3103 = vpop.permute.xlu0 %3102
    %v3105 = vadd.f32 %v2380, %v3103
    %v3106 = vtanh.pop %v3105
    %v3107 = vsub.f32 1.0, %v3096
    %3109 = vrot.lane.b32.xlu0 %v3106, 96
    %v3110 = vpop.permute.xlu0 %3109
    %v3112 = vmul.f32 %v3107, %v3110
    %v3113 = vrot.slane %v3010, 6
    %v3115 = vmul.f32 %v3096, %v3113
    %v3116 = vadd.f32 %v3112, %v3115
    %v3118 = vrot.slane %v3116, 4
    %3119 = vrot.lane.b32.xlu0 %v3118, 96
    %v3120 = vpop.permute.xlu0 %3119
    %v3121 = vsel %vm463, %v3120, 0
    %3123 = vmatprep.subr.mxu0 0.0
    %3124 = vmatpush1.msra.mxu0 %v2278
    %3125 = vmatprep.subr.mxu0 0.0
    %3126 = vmatpush1.msra.mxu0 %v2279
    %3127 = vmatprep.subr.mxu0 0.0
    %3128 = vmatpush1.msra.mxu0 %v2280
    %3129 = vmatprep.subr.mxu0 0.0
    %3130 = vmatpush1.msra.mxu0 %v2281
    %3131 = vmatprep.subr.mxu0 0.0
    %3132 = vmatpush1.msra.mxu0 0.0
    %3133 = vmatprep.subr.mxu0 0.0
    %3134 = vmatpush1.msra.mxu0 0.0
    %3135 = vmatprep.subr.mxu0 0.0
    %3136 = vmatpush1.msra.mxu0 0.0
    %3137 = vmatprep.subr.mxu0 0.0
    %3138 = vmatpush1.msra.mxu0 0.0
    %3139 = vmatprep.subr.mxu0 0.0
    %3140 = vmatpush1.msra.mxu0 0.0
    %3141 = vmatprep.subr.mxu0 0.0
    %3142 = vmatpush1.msra.mxu0 0.0
    %3143 = vmatprep.subr.mxu0 0.0
    %3144 = vmatpush1.msra.mxu0 0.0
    %3145 = vmatprep.subr.mxu0 0.0
    %3146 = vmatpush1.msra.mxu0 0.0
    %3147 = vmatprep.subr.mxu0 0.0
    %3148 = vmatpush1.msra.mxu0 0.0
    %3149 = vmatprep.subr.mxu0 0.0
    %3150 = vmatpush1.msra.mxu0 0.0
    %3151 = vmatprep.subr.mxu0 0.0
    %3152 = vmatpush1.msra.mxu0 0.0
    %3153 = vmatprep.subr.mxu0 0.0
    %3154 = vmatpush1.msra.mxu0 0.0
    %3155 = vmatprep.subr.mxu0 0.0
    %3156 = vmatpush1.msra.mxu0 0.0
    %3157 = vmatprep.subr.mxu0 0.0
    %3158 = vmatpush1.msra.mxu0 0.0
    %3159 = vmatprep.subr.mxu0 0.0
    %3160 = vmatpush1.msra.mxu0 0.0
    %3161 = vmatprep.subr.mxu0 0.0
    %3162 = vmatpush1.msra.mxu0 0.0
    %3163 = vmatprep.subr.mxu0 0.0
    %3164 = vmatpush1.msra.mxu0 0.0
    %3165 = vmatprep.subr.mxu0 0.0
    %3166 = vmatpush1.msra.mxu0 0.0
    %3167 = vmatprep.subr.mxu0 0.0
    %3168 = vmatpush1.msra.mxu0 0.0
    %3169 = vmatprep.subr.mxu0 0.0
    %3170 = vmatpush1.msra.mxu0 0.0
    %3171 = vmatprep.subr.mxu0 0.0
    %3172 = vmatpush1.msra.mxu0 0.0
    %3173 = vmatprep.subr.mxu0 0.0
    %3174 = vmatpush1.msra.mxu0 0.0
    %3175 = vmatprep.subr.mxu0 0.0
    %3176 = vmatpush1.msra.mxu0 0.0
    %3177 = vmatprep.subr.mxu0 0.0
    %3178 = vmatpush1.msra.mxu0 0.0
    %3179 = vmatprep.subr.mxu0 0.0
    %3180 = vmatpush1.msra.mxu0 0.0
    %3181 = vmatprep.subr.mxu0 0.0
    %3182 = vmatpush1.msra.mxu0 0.0
    %3183 = vmatprep.subr.mxu0 0.0
    %3184 = vmatpush1.msra.mxu0 0.0
    %3185 = vmatprep.subr.mxu0 0.0
    %3186 = vmatpush1.msra.mxu0 0.0
    %3187 = vmatprep.mubr.f32.mxu0 0.0
    %3188 = vmatmul.mubr.f32.gmra.mrb[0].mxu0 %v3121
    %v3189 = vpop.f32.mrb[0].mxu0
    %v3190 = vadd.f32 %v2388, %v3189
    %v3191 = vpop.f32.mrb[0].mxu0
    %3192 = vdwg.mxu0
    %v3194 = vrot.slane %v3190, 2
    %v3196 = vadd.f32 %v2380, %v3194
    %v3197 = vxor.u32 %v3196, 2147483648
    %v3198 = vmul.f32 %v3197, 1.442695
    %v3199 = vpow.pop %v3198
    %v3200 = vadd.f32 %v3199, 1.0
    %v3201 = vrcp.pop %v3200
    %v3202 = vmul.f32 1.0, %v3201
    %3203 = vrot.lane.b32.xlu0 %v3194, 64
    %v3204 = vpop.permute.xlu0 %3203
    %v3206 = vmul.f32 %v3202, %v3204
    %3208 = vrot.lane.b32.xlu0 %v3206, 64
    %v3209 = vpop.permute.xlu0 %3208
    %v3211 = vadd.f32 %v2380, %v3209
    %v3212 = vtanh.pop %v3211
    %v3213 = vsub.f32 1.0, %v3202
    %3215 = vrot.lane.b32.xlu0 %v3212, 96
    %v3216 = vpop.permute.xlu0 %3215
    %v3218 = vmul.f32 %v3213, %v3216
    %v3219 = vrot.slane %v3116, 6
    %v3221 = vmul.f32 %v3202, %v3219
    %v3222 = vadd.f32 %v3218, %v3221
    %v3224 = vlaneseq
    %v3225 = vshrl.u32 %v3224, 7
    %v3226 = vsub.s32 0, %v3225
    %v3227 = vrot.slane %v2288, %v3226
    %3229 = vmatprep.subr.mxu0 0.0
    %3230 = vmatpush1.msra.mxu0 %v2282
    %3231 = vmatprep.subr.mxu0 0.0
    %3232 = vmatpush1.msra.mxu0 %v2283
    %3233 = vmatprep.subr.mxu0 0.0
    %3234 = vmatpush1.msra.mxu0 %v2284
    %3235 = vmatprep.subr.mxu0 0.0
    %3236 = vmatpush1.msra.mxu0 %v2285
    %3237 = vmatprep.subr.mxu0 0.0
    %3238 = vmatpush1.msra.mxu0 0.0
    %3239 = vmatprep.subr.mxu0 0.0
    %3240 = vmatpush1.msra.mxu0 0.0
    %3241 = vmatprep.subr.mxu0 0.0
    %3242 = vmatpush1.msra.mxu0 0.0
    %3243 = vmatprep.subr.mxu0 0.0
    %3244 = vmatpush1.msra.mxu0 0.0
    %3245 = vmatprep.subr.mxu0 0.0
    %3246 = vmatpush1.msra.mxu0 0.0
    %3247 = vmatprep.subr.mxu0 0.0
    %3248 = vmatpush1.msra.mxu0 0.0
    %3249 = vmatprep.subr.mxu0 0.0
    %3250 = vmatpush1.msra.mxu0 0.0
    %3251 = vmatprep.subr.mxu0 0.0
    %3252 = vmatpush1.msra.mxu0 0.0
    %3253 = vmatprep.subr.mxu0 0.0
    %3254 = vmatpush1.msra.mxu0 0.0
    %3255 = vmatprep.subr.mxu0 0.0
    %3256 = vmatpush1.msra.mxu0 0.0
    %3257 = vmatprep.subr.mxu0 0.0
    %3258 = vmatpush1.msra.mxu0 0.0
    %3259 = vmatprep.subr.mxu0 0.0
    %3260 = vmatpush1.msra.mxu0 0.0
    %3261 = vmatprep.subr.mxu0 0.0
    %3262 = vmatpush1.msra.mxu0 0.0
    %3263 = vmatprep.subr.mxu0 0.0
    %3264 = vmatpush1.msra.mxu0 0.0
    %3265 = vmatprep.subr.mxu0 0.0
    %3266 = vmatpush1.msra.mxu0 0.0
    %3267 = vmatprep.subr.mxu0 0.0
    %3268 = vmatpush1.msra.mxu0 0.0
    %3269 = vmatprep.subr.mxu0 0.0
    %3270 = vmatpush1.msra.mxu0 0.0
    %3271 = vmatprep.subr.mxu0 0.0
    %3272 = vmatpush1.msra.mxu0 0.0
    %3273 = vmatprep.subr.mxu0 0.0
    %3274 = vmatpush1.msra.mxu0 0.0
    %3275 = vmatprep.subr.mxu0 0.0
    %3276 = vmatpush1.msra.mxu0 0.0
    %3277 = vmatprep.subr.mxu0 0.0
    %3278 = vmatpush1.msra.mxu0 0.0
    %3279 = vmatprep.subr.mxu0 0.0
    %3280 = vmatpush1.msra.mxu0 0.0
    %3281 = vmatprep.subr.mxu0 0.0
    %3282 = vmatpush1.msra.mxu0 0.0
    %3283 = vmatprep.subr.mxu0 0.0
    %3284 = vmatpush1.msra.mxu0 0.0
    %3285 = vmatprep.subr.mxu0 0.0
    %3286 = vmatpush1.msra.mxu0 0.0
    %3287 = vmatprep.subr.mxu0 0.0
    %3288 = vmatpush1.msra.mxu0 0.0
    %3289 = vmatprep.subr.mxu0 0.0
    %3290 = vmatpush1.msra.mxu0 0.0
    %3291 = vmatprep.subr.mxu0 0.0
    %3292 = vmatpush1.msra.mxu0 0.0
    %3293 = vmatprep.mubr.f32.mxu0 0.0
    %3294 = vmatmul.mubr.f32.gmra.mrb[0].mxu0 %v465
    %v3295 = vpop.f32.mrb[0].mxu0
    %v3296 = vadd.f32 %v3227, %v3295
    %v3297 = vpop.f32.mrb[0].mxu0
    %3298 = vdwg.mxu0
    %v3300 = vrot.slane %v3296, 2
    %3301 = vrot.lane.b32.xlu0 %v3300, 96
    %v3302 = vpop.permute.xlu0 %3301
    %v3304 = vadd.f32 %v2380, %v3302
    %v3305 = vxor.u32 %v3304, 2147483648
    %v3306 = vmul.f32 %v3305, 1.442695
    %v3307 = vpow.pop %v3306
    %v3308 = vadd.f32 %v3307, 1.0
    %v3309 = vrcp.pop %v3308
    %v3310 = vmul.f32 1.0, %v3309
    %v3311 = vadd.f32 %v2382, %v3302
    %v3312 = vxor.u32 %v3311, 2147483648
    %v3313 = vmul.f32 %v3312, 1.442695
    %v3314 = vpow.pop %v3313
    %v3315 = vadd.f32 %v3314, 1.0
    %v3316 = vrcp.pop %v3315
    %v3317 = vmul.f32 1.0, %v3316
    %3318 = vrot.lane.b32.xlu0 %v3300, 32
    %v3319 = vpop.permute.xlu0 %3318
    %v3321 = vmul.f32 %v3310, %v3319
    %3323 = vrot.lane.b32.xlu0 %v3321, 64
    %v3324 = vpop.permute.xlu0 %3323
    %v3326 = vadd.f32 %v2382, %v3324
    %v3327 = vtanh.pop %v3326
    %v3328 = vsub.f32 1.0, %v3317
    %3330 = vrot.lane.b32.xlu0 %v3327, 96
    %v3331 = vpop.permute.xlu0 %3330
    %v3333 = vmul.f32 %v3328, %v3331
    %v3334 = vmul.f32 %v3317, 0.0
    %v3335 = vadd.f32 %v3333, %v3334
    %v3337 = vrot.slane %v3335, 6
    %v3338 = vsel %vm463, %v3337, 0
    %3340 = vmatprep.subr.mxu0 0.0
    %3341 = vmatpush1.msra.mxu0 %v2282
    %3342 = vmatprep.subr.mxu0 0.0
    %3343 = vmatpush1.msra.mxu0 %v2283
    %3344 = vmatprep.subr.mxu0 0.0
    %3345 = vmatpush1.msra.mxu0 %v2284
    %3346 = vmatprep.subr.mxu0 0.0
    %3347 = vmatpush1.msra.mxu0 %v2285
    %3348 = vmatprep.subr.mxu0 0.0
    %3349 = vmatpush1.msra.mxu0 0.0
    %3350 = vmatprep.subr.mxu0 0.0
    %3351 = vmatpush1.msra.mxu0 0.0
    %3352 = vmatprep.subr.mxu0 0.0
    %3353 = vmatpush1.msra.mxu0 0.0
    %3354 = vmatprep.subr.mxu0 0.0
    %3355 = vmatpush1.msra.mxu0 0.0
    %3356 = vmatprep.subr.mxu0 0.0
    %3357 = vmatpush1.msra.mxu0 0.0
    %3358 = vmatprep.subr.mxu0 0.0
    %3359 = vmatpush1.msra.mxu0 0.0
    %3360 = vmatprep.subr.mxu0 0.0
    %3361 = vmatpush1.msra.mxu0 0.0
    %3362 = vmatprep.subr.mxu0 0.0
    %3363 = vmatpush1.msra.mxu0 0.0
    %3364 = vmatprep.subr.mxu0 0.0
    %3365 = vmatpush1.msra.mxu0 0.0
    %3366 = vmatprep.subr.mxu0 0.0
    %3367 = vmatpush1.msra.mxu0 0.0
    %3368 = vmatprep.subr.mxu0 0.0
    %3369 = vmatpush1.msra.mxu0 0.0
    %3370 = vmatprep.subr.mxu0 0.0
    %3371 = vmatpush1.msra.mxu0 0.0
    %3372 = vmatprep.subr.mxu0 0.0
    %3373 = vmatpush1.msra.mxu0 0.0
    %3374 = vmatprep.subr.mxu0 0.0
    %3375 = vmatpush1.msra.mxu0 0.0
    %3376 = vmatprep.subr.mxu0 0.0
    %3377 = vmatpush1.msra.mxu0 0.0
    %3378 = vmatprep.subr.mxu0 0.0
    %3379 = vmatpush1.msra.mxu0 0.0
    %3380 = vmatprep.subr.mxu0 0.0
    %3381 = vmatpush1.msra.mxu0 0.0
    %3382 = vmatprep.subr.mxu0 0.0
    %3383 = vmatpush1.msra.mxu0 0.0
    %3384 = vmatprep.subr.mxu0 0.0
    %3385 = vmatpush1.msra.mxu0 0.0
    %3386 = vmatprep.subr.mxu0 0.0
    %3387 = vmatpush1.msra.mxu0 0.0
    %3388 = vmatprep.subr.mxu0 0.0
    %3389 = vmatpush1.msra.mxu0 0.0
    %3390 = vmatprep.subr.mxu0 0.0
    %3391 = vmatpush1.msra.mxu0 0.0
    %3392 = vmatprep.subr.mxu0 0.0
    %3393 = vmatpush1.msra.mxu0 0.0
    %3394 = vmatprep.subr.mxu0 0.0
    %3395 = vmatpush1.msra.mxu0 0.0
    %3396 = vmatprep.subr.mxu0 0.0
    %3397 = vmatpush1.msra.mxu0 0.0
    %3398 = vmatprep.subr.mxu0 0.0
    %3399 = vmatpush1.msra.mxu0 0.0
    %3400 = vmatprep.subr.mxu0 0.0
    %3401 = vmatpush1.msra.mxu0 0.0
    %3402 = vmatprep.subr.mxu0 0.0
    %3403 = vmatpush1.msra.mxu0 0.0
    %3404 = vmatprep.mubr.f32.mxu0 0.0
    %3405 = vmatmul.mubr.f32.gmra.mrb[0].mxu0 %v3338
    %v3406 = vpop.f32.mrb[0].mxu0
    %v3407 = vadd.f32 %v3227, %v3406
    %v3408 = vpop.f32.mrb[0].mxu0
    %3409 = vdwg.mxu0
    %v3411 = vrot.slane %v3407, 4
    %3412 = vrot.lane.b32.xlu0 %v3411, 96
    %v3413 = vpop.permute.xlu0 %3412
    %v3415 = vadd.f32 %v2380, %v3413
    %v3416 = vxor.u32 %v3415, 2147483648
    %v3417 = vmul.f32 %v3416, 1.442695
    %v3418 = vpow.pop %v3417
    %v3419 = vadd.f32 %v3418, 1.0
    %v3420 = vrcp.pop %v3419
    %v3421 = vmul.f32 1.0, %v3420
    %v3422 = vadd.f32 %v2382, %v3413
    %v3423 = vxor.u32 %v3422, 2147483648
    %v3424 = vmul.f32 %v3423, 1.442695
    %v3425 = vpow.pop %v3424
    %v3426 = vadd.f32 %v3425, 1.0
    %v3427 = vrcp.pop %v3426
    %v3428 = vmul.f32 1.0, %v3427
    %3429 = vrot.lane.b32.xlu0 %v3411, 32
    %v3430 = vpop.permute.xlu0 %3429
    %v3432 = vmul.f32 %v3421, %v3430
    %3434 = vrot.lane.b32.xlu0 %v3432, 64
    %v3435 = vpop.permute.xlu0 %3434
    %v3437 = vadd.f32 %v2382, %v3435
    %v3438 = vtanh.pop %v3437
    %v3439 = vsub.f32 1.0, %v3428
    %3441 = vrot.lane.b32.xlu0 %v3438, 96
    %v3442 = vpop.permute.xlu0 %3441
    %v3444 = vmul.f32 %v3439, %v3442
    %v3445 = vrot.slane %v3335, 2
    %v3447 = vmul.f32 %v3428, %v3445
    %v3448 = vadd.f32 %v3444, %v3447
    %v3450 = vrot.slane %v3448, 4
    %v3451 = vsel %vm463, %v3450, 0
    %3453 = vmatprep.subr.mxu0 0.0
    %3454 = vmatpush1.msra.mxu0 %v2282
    %3455 = vmatprep.subr.mxu0 0.0
    %3456 = vmatpush1.msra.mxu0 %v2283
    %3457 = vmatprep.subr.mxu0 0.0
    %3458 = vmatpush1.msra.mxu0 %v2284
    %3459 = vmatprep.subr.mxu0 0.0
    %3460 = vmatpush1.msra.mxu0 %v2285
    %3461 = vmatprep.subr.mxu0 0.0
    %3462 = vmatpush1.msra.mxu0 0.0
    %3463 = vmatprep.subr.mxu0 0.0
    %3464 = vmatpush1.msra.mxu0 0.0
    %3465 = vmatprep.subr.mxu0 0.0
    %3466 = vmatpush1.msra.mxu0 0.0
    %3467 = vmatprep.subr.mxu0 0.0
    %3468 = vmatpush1.msra.mxu0 0.0
    %3469 = vmatprep.subr.mxu0 0.0
    %3470 = vmatpush1.msra.mxu0 0.0
    %3471 = vmatprep.subr.mxu0 0.0
    %3472 = vmatpush1.msra.mxu0 0.0
    %3473 = vmatprep.subr.mxu0 0.0
    %3474 = vmatpush1.msra.mxu0 0.0
    %3475 = vmatprep.subr.mxu0 0.0
    %3476 = vmatpush1.msra.mxu0 0.0
    %3477 = vmatprep.subr.mxu0 0.0
    %3478 = vmatpush1.msra.mxu0 0.0
    %3479 = vmatprep.subr.mxu0 0.0
    %3480 = vmatpush1.msra.mxu0 0.0
    %3481 = vmatprep.subr.mxu0 0.0
    %3482 = vmatpush1.msra.mxu0 0.0
    %3483 = vmatprep.subr.mxu0 0.0
    %3484 = vmatpush1.msra.mxu0 0.0
    %3485 = vmatprep.subr.mxu0 0.0
    %3486 = vmatpush1.msra.mxu0 0.0
    %3487 = vmatprep.subr.mxu0 0.0
    %3488 = vmatpush1.msra.mxu0 0.0
    %3489 = vmatprep.subr.mxu0 0.0
    %3490 = vmatpush1.msra.mxu0 0.0
    %3491 = vmatprep.subr.mxu0 0.0
    %3492 = vmatpush1.msra.mxu0 0.0
    %3493 = vmatprep.subr.mxu0 0.0
    %3494 = vmatpush1.msra.mxu0 0.0
    %3495 = vmatprep.subr.mxu0 0.0
    %3496 = vmatpush1.msra.mxu0 0.0
    %3497 = vmatprep.subr.mxu0 0.0
    %3498 = vmatpush1.msra.mxu0 0.0
    %3499 = vmatprep.subr.mxu0 0.0
    %3500 = vmatpush1.msra.mxu0 0.0
    %3501 = vmatprep.subr.mxu0 0.0
    %3502 = vmatpush1.msra.mxu0 0.0
    %3503 = vmatprep.subr.mxu0 0.0
    %3504 = vmatpush1.msra.mxu0 0.0
    %3505 = vmatprep.subr.mxu0 0.0
    %3506 = vmatpush1.msra.mxu0 0.0
    %3507 = vmatprep.subr.mxu0 0.0
    %3508 = vmatpush1.msra.mxu0 0.0
    %3509 = vmatprep.subr.mxu0 0.0
    %3510 = vmatpush1.msra.mxu0 0.0
    %3511 = vmatprep.subr.mxu0 0.0
    %3512 = vmatpush1.msra.mxu0 0.0
    %3513 = vmatprep.subr.mxu0 0.0
    %3514 = vmatpush1.msra.mxu0 0.0
    %3515 = vmatprep.subr.mxu0 0.0
    %3516 = vmatpush1.msra.mxu0 0.0
    %3517 = vmatprep.mubr.f32.mxu0 0.0
    %3518 = vmatmul.mubr.f32.gmra.mrb[0].mxu0 %v3451
    %v3519 = vpop.f32.mrb[0].mxu0
    %v3520 = vadd.f32 %v3227, %v3519
    %v3521 = vpop.f32.mrb[0].mxu0
    %3522 = vdwg.mxu0
    %v3524 = vrot.slane %v3520, 6
    %3525 = vrot.lane.b32.xlu0 %v3524, 96
    %v3526 = vpop.permute.xlu0 %3525
    %v3528 = vadd.f32 %v2380, %v3526
    %v3529 = vxor.u32 %v3528, 2147483648
    %v3530 = vmul.f32 %v3529, 1.442695
    %v3531 = vpow.pop %v3530
    %v3532 = vadd.f32 %v3531, 1.0
    %v3533 = vrcp.pop %v3532
    %v3534 = vmul.f32 1.0, %v3533
    %v3535 = vadd.f32 %v2382, %v3526
    %v3536 = vxor.u32 %v3535, 2147483648
    %v3537 = vmul.f32 %v3536, 1.442695
    %v3538 = vpow.pop %v3537
    %v3539 = vadd.f32 %v3538, 1.0
    %v3540 = vrcp.pop %v3539
    %v3541 = vmul.f32 1.0, %v3540
    %3542 = vrot.lane.b32.xlu0 %v3524, 32
    %v3543 = vpop.permute.xlu0 %3542
    %v3545 = vmul.f32 %v3534, %v3543
    %3547 = vrot.lane.b32.xlu0 %v3545, 64
    %v3548 = vpop.permute.xlu0 %3547
    %v3550 = vadd.f32 %v2382, %v3548
    %v3551 = vtanh.pop %v3550
    %v3552 = vsub.f32 1.0, %v3541
    %3554 = vrot.lane.b32.xlu0 %v3551, 96
    %v3555 = vpop.permute.xlu0 %3554
    %v3557 = vmul.f32 %v3552, %v3555
    %v3558 = vrot.slane %v3448, 2
    %v3560 = vmul.f32 %v3541, %v3558
    %v3561 = vadd.f32 %v3557, %v3560
    %v3563 = vrot.slane %v3561, 2
    %v3564 = vsel %vm463, %v3563, 0
    %3566 = vmatprep.subr.mxu0 0.0
    %3567 = vmatpush1.msra.mxu0 %v2282
    %3568 = vmatprep.subr.mxu0 0.0
    %3569 = vmatpush1.msra.mxu0 %v2283
    %3570 = vmatprep.subr.mxu0 0.0
    %3571 = vmatpush1.msra.mxu0 %v2284
    %3572 = vmatprep.subr.mxu0 0.0
    %3573 = vmatpush1.msra.mxu0 %v2285
    %3574 = vmatprep.subr.mxu0 0.0
    %3575 = vmatpush1.msra.mxu0 0.0
    %3576 = vmatprep.subr.mxu0 0.0
    %3577 = vmatpush1.msra.mxu0 0.0
    %3578 = vmatprep.subr.mxu0 0.0
    %3579 = vmatpush1.msra.mxu0 0.0
    %3580 = vmatprep.subr.mxu0 0.0
    %3581 = vmatpush1.msra.mxu0 0.0
    %3582 = vmatprep.subr.mxu0 0.0
    %3583 = vmatpush1.msra.mxu0 0.0
    %3584 = vmatprep.subr.mxu0 0.0
    %3585 = vmatpush1.msra.mxu0 0.0
    %3586 = vmatprep.subr.mxu0 0.0
    %3587 = vmatpush1.msra.mxu0 0.0
    %3588 = vmatprep.subr.mxu0 0.0
    %3589 = vmatpush1.msra.mxu0 0.0
    %3590 = vmatprep.subr.mxu0 0.0
    %3591 = vmatpush1.msra.mxu0 0.0
    %3592 = vmatprep.subr.mxu0 0.0
    %3593 = vmatpush1.msra.mxu0 0.0
    %3594 = vmatprep.subr.mxu0 0.0
    %3595 = vmatpush1.msra.mxu0 0.0
    %3596 = vmatprep.subr.mxu0 0.0
    %3597 = vmatpush1.msra.mxu0 0.0
    %3598 = vmatprep.subr.mxu0 0.0
    %3599 = vmatpush1.msra.mxu0 0.0
    %3600 = vmatprep.subr.mxu0 0.0
    %3601 = vmatpush1.msra.mxu0 0.0
    %3602 = vmatprep.subr.mxu0 0.0
    %3603 = vmatpush1.msra.mxu0 0.0
    %3604 = vmatprep.subr.mxu0 0.0
    %3605 = vmatpush1.msra.mxu0 0.0
    %3606 = vmatprep.subr.mxu0 0.0
    %3607 = vmatpush1.msra.mxu0 0.0
    %3608 = vmatprep.subr.mxu0 0.0
    %3609 = vmatpush1.msra.mxu0 0.0
    %3610 = vmatprep.subr.mxu0 0.0
    %3611 = vmatpush1.msra.mxu0 0.0
    %3612 = vmatprep.subr.mxu0 0.0
    %3613 = vmatpush1.msra.mxu0 0.0
    %3614 = vmatprep.subr.mxu0 0.0
    %3615 = vmatpush1.msra.mxu0 0.0
    %3616 = vmatprep.subr.mxu0 0.0
    %3617 = vmatpush1.msra.mxu0 0.0
    %3618 = vmatprep.subr.mxu0 0.0
    %3619 = vmatpush1.msra.mxu0 0.0
    %3620 = vmatprep.subr.mxu0 0.0
    %3621 = vmatpush1.msra.mxu0 0.0
    %3622 = vmatprep.subr.mxu0 0.0
    %3623 = vmatpush1.msra.mxu0 0.0
    %3624 = vmatprep.subr.mxu0 0.0
    %3625 = vmatpush1.msra.mxu0 0.0
    %3626 = vmatprep.subr.mxu0 0.0
    %3627 = vmatpush1.msra.mxu0 0.0
    %3628 = vmatprep.subr.mxu0 0.0
    %3629 = vmatpush1.msra.mxu0 0.0
    %3630 = vmatprep.mubr.f32.mxu0 0.0
    %3631 = vmatmul.mubr.f32.gmra.mrb[0].mxu0 %v3564
    %v3632 = vpop.f32.mrb[0].mxu0
    %v3633 = vadd.f32 %v3227, %v3632
    %v3634 = vpop.f32.mrb[0].mxu0
    %3635 = vdwg.mxu0
    %3637 = vrot.lane.b32.xlu0 %v3633, 96
    %v3638 = vpop.permute.xlu0 %3637
    %v3640 = vadd.f32 %v2380, %v3638
    %v3641 = vxor.u32 %v3640, 2147483648
    %v3642 = vmul.f32 %v3641, 1.442695
    %v3643 = vpow.pop %v3642
    %v3644 = vadd.f32 %v3643, 1.0
    %v3645 = vrcp.pop %v3644
    %v3646 = vmul.f32 1.0, %v3645
    %v3647 = vadd.f32 %v2382, %v3638
    %v3648 = vxor.u32 %v3647, 2147483648
    %v3649 = vmul.f32 %v3648, 1.442695
    %v3650 = vpow.pop %v3649
    %v3651 = vadd.f32 %v3650, 1.0
    %v3652 = vrcp.pop %v3651
    %v3653 = vmul.f32 1.0, %v3652
    %3654 = vrot.lane.b32.xlu0 %v3633, 32
    %v3655 = vpop.permute.xlu0 %3654
    %v3657 = vmul.f32 %v3646, %v3655
    %3659 = vrot.lane.b32.xlu0 %v3657, 64
    %v3660 = vpop.permute.xlu0 %3659
    %v3662 = vadd.f32 %v2382, %v3660
    %v3663 = vtanh.pop %v3662
    %v3664 = vsub.f32 1.0, %v3653
    %3666 = vrot.lane.b32.xlu0 %v3663, 96
    %v3667 = vpop.permute.xlu0 %3666
    %v3669 = vmul.f32 %v3664, %v3667
    %v3671 = vmul.f32 %v3653, %v3563
    %v3672 = vadd.f32 %v3669, %v3671
    %v3674 = vsel %vm463, %v3672, 0
    %3676 = vmatprep.subr.mxu0 0.0
    %3677 = vmatpush1.msra.mxu0 %v2282
    %3678 = vmatprep.subr.mxu0 0.0
    %3679 = vmatpush1.msra.mxu0 %v2283
    %3680 = vmatprep.subr.mxu0 0.0
    %3681 = vmatpush1.msra.mxu0 %v2284
    %3682 = vmatprep.subr.mxu0 0.0
    %3683 = vmatpush1.msra.mxu0 %v2285
    %3684 = vmatprep.subr.mxu0 0.0
    %3685 = vmatpush1.msra.mxu0 0.0
    %3686 = vmatprep.subr.mxu0 0.0
    %3687 = vmatpush1.msra.mxu0 0.0
    %3688 = vmatprep.subr.mxu0 0.0
    %3689 = vmatpush1.msra.mxu0 0.0
    %3690 = vmatprep.subr.mxu0 0.0
    %3691 = vmatpush1.msra.mxu0 0.0
    %3692 = vmatprep.subr.mxu0 0.0
    %3693 = vmatpush1.msra.mxu0 0.0
    %3694 = vmatprep.subr.mxu0 0.0
    %3695 = vmatpush1.msra.mxu0 0.0
    %3696 = vmatprep.subr.mxu0 0.0
    %3697 = vmatpush1.msra.mxu0 0.0
    %3698 = vmatprep.subr.mxu0 0.0
    %3699 = vmatpush1.msra.mxu0 0.0
    %3700 = vmatprep.subr.mxu0 0.0
    %3701 = vmatpush1.msra.mxu0 0.0
    %3702 = vmatprep.subr.mxu0 0.0
    %3703 = vmatpush1.msra.mxu0 0.0
    %3704 = vmatprep.subr.mxu0 0.0
    %3705 = vmatpush1.msra.mxu0 0.0
    %3706 = vmatprep.subr.mxu0 0.0
    %3707 = vmatpush1.msra.mxu0 0.0
    %3708 = vmatprep.subr.mxu0 0.0
    %3709 = vmatpush1.msra.mxu0 0.0
    %3710 = vmatprep.subr.mxu0 0.0
    %3711 = vmatpush1.msra.mxu0 0.0
    %3712 = vmatprep.subr.mxu0 0.0
    %3713 = vmatpush1.msra.mxu0 0.0
    %3714 = vmatprep.subr.mxu0 0.0
    %3715 = vmatpush1.msra.mxu0 0.0
    %3716 = vmatprep.subr.mxu0 0.0
    %3717 = vmatpush1.msra.mxu0 0.0
    %3718 = vmatprep.subr.mxu0 0.0
    %3719 = vmatpush1.msra.mxu0 0.0
    %3720 = vmatprep.subr.mxu0 0.0
    %3721 = vmatpush1.msra.mxu0 0.0
    %3722 = vmatprep.subr.mxu0 0.0
    %3723 = vmatpush1.msra.mxu0 0.0
    %3724 = vmatprep.subr.mxu0 0.0
    %3725 = vmatpush1.msra.mxu0 0.0
    %3726 = vmatprep.subr.mxu0 0.0
    %3727 = vmatpush1.msra.mxu0 0.0
    %3728 = vmatprep.subr.mxu0 0.0
    %3729 = vmatpush1.msra.mxu0 0.0
    %3730 = vmatprep.subr.mxu0 0.0
    %3731 = vmatpush1.msra.mxu0 0.0
    %3732 = vmatprep.subr.mxu0 0.0
    %3733 = vmatpush1.msra.mxu0 0.0
    %3734 = vmatprep.subr.mxu0 0.0
    %3735 = vmatpush1.msra.mxu0 0.0
    %3736 = vmatprep.subr.mxu0 0.0
    %3737 = vmatpush1.msra.mxu0 0.0
    %3738 = vmatprep.subr.mxu0 0.0
    %3739 = vmatpush1.msra.mxu0 0.0
    %3740 = vmatprep.mubr.f32.mxu0 0.0
    %3741 = vmatmul.mubr.f32.gmra.mrb[0].mxu0 %v3674
    %v3742 = vpop.f32.mrb[0].mxu0
    %v3743 = vadd.f32 %v3227, %v3742
    %v3744 = vpop.f32.mrb[0].mxu0
    %3745 = vdwg.mxu0
    %v3747 = vrot.slane %v3743, 2
    %3748 = vrot.lane.b32.xlu0 %v3747, 96
    %v3749 = vpop.permute.xlu0 %3748
    %v3751 = vadd.f32 %v2374, %v3749
    %v3752 = vxor.u32 %v3751, 2147483648
    %v3753 = vmul.f32 %v3752, 1.442695
    %v3754 = vpow.pop %v3753
    %v3755 = vadd.f32 %v3754, 1.0
    %v3756 = vrcp.pop %v3755
    %v3757 = vmul.f32 1.0, %v3756
    %v3758 = vadd.f32 %v2376, %v3749
    %v3759 = vxor.u32 %v3758, 2147483648
    %v3760 = vmul.f32 %v3759, 1.442695
    %v3761 = vpow.pop %v3760
    %v3762 = vadd.f32 %v3761, 1.0
    %v3763 = vrcp.pop %v3762
    %v3764 = vmul.f32 1.0, %v3763
    %3765 = vrot.lane.b32.xlu0 %v3747, 32
    %v3766 = vpop.permute.xlu0 %3765
    %v3768 = vmul.f32 %v3757, %v3766
    %3770 = vrot.lane.b32.xlu0 %v3768, 64
    %v3771 = vpop.permute.xlu0 %3770
    %v3773 = vadd.f32 %v2376, %v3771
    %v3774 = vtanh.pop %v3773
    %v3775 = vsub.f32 1.0, %v3764
    %3777 = vrot.lane.b32.xlu0 %v3774, 96
    %v3778 = vpop.permute.xlu0 %3777
    %v3780 = vmul.f32 %v3775, %v3778
    %v3781 = vrot.slane %v3672, 2
    %v3783 = vmul.f32 %v3764, %v3781
    %v3784 = vadd.f32 %v3780, %v3783
    %v3786 = vrot.slane %v3784, 6
    %v3787 = vsel %vm463, %v3786, 0
    %3789 = vmatprep.subr.mxu0 0.0
    %3790 = vmatpush1.msra.mxu0 %v2282
    %3791 = vmatprep.subr.mxu0 0.0
    %3792 = vmatpush1.msra.mxu0 %v2283
    %3793 = vmatprep.subr.mxu0 0.0
    %3794 = vmatpush1.msra.mxu0 %v2284
    %3795 = vmatprep.subr.mxu0 0.0
    %3796 = vmatpush1.msra.mxu0 %v2285
    %3797 = vmatprep.subr.mxu0 0.0
    %3798 = vmatpush1.msra.mxu0 0.0
    %3799 = vmatprep.subr.mxu0 0.0
    %3800 = vmatpush1.msra.mxu0 0.0
    %3801 = vmatprep.subr.mxu0 0.0
    %3802 = vmatpush1.msra.mxu0 0.0
    %3803 = vmatprep.subr.mxu0 0.0
    %3804 = vmatpush1.msra.mxu0 0.0
    %3805 = vmatprep.subr.mxu0 0.0
    %3806 = vmatpush1.msra.mxu0 0.0
    %3807 = vmatprep.subr.mxu0 0.0
    %3808 = vmatpush1.msra.mxu0 0.0
    %3809 = vmatprep.subr.mxu0 0.0
    %3810 = vmatpush1.msra.mxu0 0.0
    %3811 = vmatprep.subr.mxu0 0.0
    %3812 = vmatpush1.msra.mxu0 0.0
    %3813 = vmatprep.subr.mxu0 0.0
    %3814 = vmatpush1.msra.mxu0 0.0
    %3815 = vmatprep.subr.mxu0 0.0
    %3816 = vmatpush1.msra.mxu0 0.0
    %3817 = vmatprep.subr.mxu0 0.0
    %3818 = vmatpush1.msra.mxu0 0.0
    %3819 = vmatprep.subr.mxu0 0.0
    %3820 = vmatpush1.msra.mxu0 0.0
    %3821 = vmatprep.subr.mxu0 0.0
    %3822 = vmatpush1.msra.mxu0 0.0
    %3823 = vmatprep.subr.mxu0 0.0
    %3824 = vmatpush1.msra.mxu0 0.0
    %3825 = vmatprep.subr.mxu0 0.0
    %3826 = vmatpush1.msra.mxu0 0.0
    %3827 = vmatprep.subr.mxu0 0.0
    %3828 = vmatpush1.msra.mxu0 0.0
    %3829 = vmatprep.subr.mxu0 0.0
    %3830 = vmatpush1.msra.mxu0 0.0
    %3831 = vmatprep.subr.mxu0 0.0
    %3832 = vmatpush1.msra.mxu0 0.0
    %3833 = vmatprep.subr.mxu0 0.0
    %3834 = vmatpush1.msra.mxu0 0.0
    %3835 = vmatprep.subr.mxu0 0.0
    %3836 = vmatpush1.msra.mxu0 0.0
    %3837 = vmatprep.subr.mxu0 0.0
    %3838 = vmatpush1.msra.mxu0 0.0
    %3839 = vmatprep.subr.mxu0 0.0
    %3840 = vmatpush1.msra.mxu0 0.0
    %3841 = vmatprep.subr.mxu0 0.0
    %3842 = vmatpush1.msra.mxu0 0.0
    %3843 = vmatprep.subr.mxu0 0.0
    %3844 = vmatpush1.msra.mxu0 0.0
    %3845 = vmatprep.subr.mxu0 0.0
    %3846 = vmatpush1.msra.mxu0 0.0
    %3847 = vmatprep.subr.mxu0 0.0
    %3848 = vmatpush1.msra.mxu0 0.0
    %3849 = vmatprep.subr.mxu0 0.0
    %3850 = vmatpush1.msra.mxu0 0.0
    %3851 = vmatprep.subr.mxu0 0.0
    %3852 = vmatpush1.msra.mxu0 0.0
    %3853 = vmatprep.mubr.f32.mxu0 0.0
    %3854 = vmatmul.mubr.f32.gmra.mrb[0].mxu0 %v3787
    %v3855 = vpop.f32.mrb[0].mxu0
    %v3856 = vadd.f32 %v3227, %v3855
    %v3857 = vpop.f32.mrb[0].mxu0
    %3858 = vdwg.mxu0
    %v3860 = vrot.slane %v3856, 4
    %3861 = vrot.lane.b32.xlu0 %v3860, 96
    %v3862 = vpop.permute.xlu0 %3861
    %v3864 = vadd.f32 %v2374, %v3862
    %v3865 = vxor.u32 %v3864, 2147483648
    %v3866 = vmul.f32 %v3865, 1.442695
    %v3867 = vpow.pop %v3866
    %v3868 = vadd.f32 %v3867, 1.0
    %v3869 = vrcp.pop %v3868
    %v3870 = vmul.f32 1.0, %v3869
    %v3871 = vadd.f32 %v2376, %v3862
    %v3872 = vxor.u32 %v3871, 2147483648
    %v3873 = vmul.f32 %v3872, 1.442695
    %v3874 = vpow.pop %v3873
    %v3875 = vadd.f32 %v3874, 1.0
    %v3876 = vrcp.pop %v3875
    %v3877 = vmul.f32 1.0, %v3876
    %3878 = vrot.lane.b32.xlu0 %v3860, 32
    %v3879 = vpop.permute.xlu0 %3878
    %v3881 = vmul.f32 %v3870, %v3879
    %3883 = vrot.lane.b32.xlu0 %v3881, 64
    %v3884 = vpop.permute.xlu0 %3883
    %v3886 = vadd.f32 %v2376, %v3884
    %v3887 = vtanh.pop %v3886
    %v3888 = vsub.f32 1.0, %v3877
    %3890 = vrot.lane.b32.xlu0 %v3887, 96
    %v3891 = vpop.permute.xlu0 %3890
    %v3893 = vmul.f32 %v3888, %v3891
    %v3894 = vrot.slane %v3784, 2
    %v3896 = vmul.f32 %v3877, %v3894
    %v3897 = vadd.f32 %v3893, %v3896
    %v3899 = vrot.slane %v3897, 4
    %v3900 = vsel %vm463, %v3899, 0
    %3902 = vmatprep.subr.mxu0 0.0
    %3903 = vmatpush1.msra.mxu0 %v2282
    %3904 = vmatprep.subr.mxu0 0.0
    %3905 = vmatpush1.msra.mxu0 %v2283
    %3906 = vmatprep.subr.mxu0 0.0
    %3907 = vmatpush1.msra.mxu0 %v2284
    %3908 = vmatprep.subr.mxu0 0.0
    %3909 = vmatpush1.msra.mxu0 %v2285
    %3910 = vmatprep.subr.mxu0 0.0
    %3911 = vmatpush1.msra.mxu0 0.0
    %3912 = vmatprep.subr.mxu0 0.0
    %3913 = vmatpush1.msra.mxu0 0.0
    %3914 = vmatprep.subr.mxu0 0.0
    %3915 = vmatpush1.msra.mxu0 0.0
    %3916 = vmatprep.subr.mxu0 0.0
    %3917 = vmatpush1.msra.mxu0 0.0
    %3918 = vmatprep.subr.mxu0 0.0
    %3919 = vmatpush1.msra.mxu0 0.0
    %3920 = vmatprep.subr.mxu0 0.0
    %3921 = vmatpush1.msra.mxu0 0.0
    %3922 = vmatprep.subr.mxu0 0.0
    %3923 = vmatpush1.msra.mxu0 0.0
    %3924 = vmatprep.subr.mxu0 0.0
    %3925 = vmatpush1.msra.mxu0 0.0
    %3926 = vmatprep.subr.mxu0 0.0
    %3927 = vmatpush1.msra.mxu0 0.0
    %3928 = vmatprep.subr.mxu0 0.0
    %3929 = vmatpush1.msra.mxu0 0.0
    %3930 = vmatprep.subr.mxu0 0.0
    %3931 = vmatpush1.msra.mxu0 0.0
    %3932 = vmatprep.subr.mxu0 0.0
    %3933 = vmatpush1.msra.mxu0 0.0
    %3934 = vmatprep.subr.mxu0 0.0
    %3935 = vmatpush1.msra.mxu0 0.0
    %3936 = vmatprep.subr.mxu0 0.0
    %3937 = vmatpush1.msra.mxu0 0.0
    %3938 = vmatprep.subr.mxu0 0.0
    %3939 = vmatpush1.msra.mxu0 0.0
    %3940 = vmatprep.subr.mxu0 0.0
    %3941 = vmatpush1.msra.mxu0 0.0
    %3942 = vmatprep.subr.mxu0 0.0
    %3943 = vmatpush1.msra.mxu0 0.0
    %3944 = vmatprep.subr.mxu0 0.0
    %3945 = vmatpush1.msra.mxu0 0.0
    %3946 = vmatprep.subr.mxu0 0.0
    %3947 = vmatpush1.msra.mxu0 0.0
    %3948 = vmatprep.subr.mxu0 0.0
    %3949 = vmatpush1.msra.mxu0 0.0
    %3950 = vmatprep.subr.mxu0 0.0
    %3951 = vmatpush1.msra.mxu0 0.0
    %3952 = vmatprep.subr.mxu0 0.0
    %3953 = vmatpush1.msra.mxu0 0.0
    %3954 = vmatprep.subr.mxu0 0.0
    %3955 = vmatpush1.msra.mxu0 0.0
    %3956 = vmatprep.subr.mxu0 0.0
    %3957 = vmatpush1.msra.mxu0 0.0
    %3958 = vmatprep.subr.mxu0 0.0
    %3959 = vmatpush1.msra.mxu0 0.0
    %3960 = vmatprep.subr.mxu0 0.0
    %3961 = vmatpush1.msra.mxu0 0.0
    %3962 = vmatprep.subr.mxu0 0.0
    %3963 = vmatpush1.msra.mxu0 0.0
    %3964 = vmatprep.subr.mxu0 0.0
    %3965 = vmatpush1.msra.mxu0 0.0
    %3966 = vmatprep.mubr.f32.mxu0 0.0
    %3967 = vmatmul.mubr.f32.gmra.mrb[0].mxu0 %v3900
    %v3968 = vpop.f32.mrb[0].mxu0
    %v3969 = vadd.f32 %v3227, %v3968
    %v3970 = vpop.f32.mrb[0].mxu0
    %3971 = vdwg.mxu0
    %v3973 = vrot.slane %v3969, 6
    %3974 = vrot.lane.b32.xlu0 %v3973, 96
    %v3975 = vpop.permute.xlu0 %3974
    %v3977 = vadd.f32 %v2374, %v3975
    %v3978 = vxor.u32 %v3977, 2147483648
    %v3979 = vmul.f32 %v3978, 1.442695
    %v3980 = vpow.pop %v3979
    %v3981 = vadd.f32 %v3980, 1.0
    %v3982 = vrcp.pop %v3981
    %v3983 = vmul.f32 1.0, %v3982
    %v3984 = vadd.f32 %v2376, %v3975
    %v3985 = vxor.u32 %v3984, 2147483648
    %v3986 = vmul.f32 %v3985, 1.442695
    %v3987 = vpow.pop %v3986
    %v3988 = vadd.f32 %v3987, 1.0
    %v3989 = vrcp.pop %v3988
    %v3990 = vmul.f32 1.0, %v3989
    %3991 = vrot.lane.b32.xlu0 %v3973, 32
    %v3992 = vpop.permute.xlu0 %3991
    %v3994 = vmul.f32 %v3983, %v3992
    %3996 = vrot.lane.b32.xlu0 %v3994, 64
    %v3997 = vpop.permute.xlu0 %3996
    %v3999 = vadd.f32 %v2376, %v3997
    %v4000 = vtanh.pop %v3999
    %v4001 = vsub.f32 1.0, %v3990
    %4003 = vrot.lane.b32.xlu0 %v4000, 96
    %v4004 = vpop.permute.xlu0 %4003
    %v4006 = vmul.f32 %v4001, %v4004
    %v4007 = vrot.slane %v3897, 2
    %v4009 = vmul.f32 %v3990, %v4007
    %v4010 = vadd.f32 %v4006, %v4009
    %v4012 = vrot.slane %v4010, 2
    %v4013 = vsel %vm463, %v4012, 0
    %4015 = vmatprep.subr.mxu0 0.0
    %4016 = vmatpush1.msra.mxu0 %v2282
    %4017 = vmatprep.subr.mxu0 0.0
    %4018 = vmatpush1.msra.mxu0 %v2283
    %4019 = vmatprep.subr.mxu0 0.0
    %4020 = vmatpush1.msra.mxu0 %v2284
    %4021 = vmatprep.subr.mxu0 0.0
    %4022 = vmatpush1.msra.mxu0 %v2285
    %4023 = vmatprep.subr.mxu0 0.0
    %4024 = vmatpush1.msra.mxu0 0.0
    %4025 = vmatprep.subr.mxu0 0.0
    %4026 = vmatpush1.msra.mxu0 0.0
    %4027 = vmatprep.subr.mxu0 0.0
    %4028 = vmatpush1.msra.mxu0 0.0
    %4029 = vmatprep.subr.mxu0 0.0
    %4030 = vmatpush1.msra.mxu0 0.0
    %4031 = vmatprep.subr.mxu0 0.0
    %4032 = vmatpush1.msra.mxu0 0.0
    %4033 = vmatprep.subr.mxu0 0.0
    %4034 = vmatpush1.msra.mxu0 0.0
    %4035 = vmatprep.subr.mxu0 0.0
    %4036 = vmatpush1.msra.mxu0 0.0
    %4037 = vmatprep.subr.mxu0 0.0
    %4038 = vmatpush1.msra.mxu0 0.0
    %4039 = vmatprep.subr.mxu0 0.0
    %4040 = vmatpush1.msra.mxu0 0.0
    %4041 = vmatprep.subr.mxu0 0.0
    %4042 = vmatpush1.msra.mxu0 0.0
    %4043 = vmatprep.subr.mxu0 0.0
    %4044 = vmatpush1.msra.mxu0 0.0
    %4045 = vmatprep.subr.mxu0 0.0
    %4046 = vmatpush1.msra.mxu0 0.0
    %4047 = vmatprep.subr.mxu0 0.0
    %4048 = vmatpush1.msra.mxu0 0.0
    %4049 = vmatprep.subr.mxu0 0.0
    %4050 = vmatpush1.msra.mxu0 0.0
    %4051 = vmatprep.subr.mxu0 0.0
    %4052 = vmatpush1.msra.mxu0 0.0
    %4053 = vmatprep.subr.mxu0 0.0
    %4054 = vmatpush1.msra.mxu0 0.0
    %4055 = vmatprep.subr.mxu0 0.0
    %4056 = vmatpush1.msra.mxu0 0.0
    %4057 = vmatprep.subr.mxu0 0.0
    %4058 = vmatpush1.msra.mxu0 0.0
    %4059 = vmatprep.subr.mxu0 0.0
    %4060 = vmatpush1.msra.mxu0 0.0
    %4061 = vmatprep.subr.mxu0 0.0
    %4062 = vmatpush1.msra.mxu0 0.0
    %4063 = vmatprep.subr.mxu0 0.0
    %4064 = vmatpush1.msra.mxu0 0.0
    %4065 = vmatprep.subr.mxu0 0.0
    %4066 = vmatpush1.msra.mxu0 0.0
    %4067 = vmatprep.subr.mxu0 0.0
    %4068 = vmatpush1.msra.mxu0 0.0
    %4069 = vmatprep.subr.mxu0 0.0
    %4070 = vmatpush1.msra.mxu0 0.0
    %4071 = vmatprep.subr.mxu0 0.0
    %4072 = vmatpush1.msra.mxu0 0.0
    %4073 = vmatprep.subr.mxu0 0.0
    %4074 = vmatpush1.msra.mxu0 0.0
    %4075 = vmatprep.subr.mxu0 0.0
    %4076 = vmatpush1.msra.mxu0 0.0
    %4077 = vmatprep.subr.mxu0 0.0
    %4078 = vmatpush1.msra.mxu0 0.0
    %4079 = vmatprep.mubr.f32.mxu0 0.0
    %4080 = vmatmul.mubr.f32.gmra.mrb[0].mxu0 %v4013
    %v4081 = vpop.f32.mrb[0].mxu0
    %v4082 = vadd.f32 %v3227, %v4081
    %v4083 = vpop.f32.mrb[0].mxu0
    %4084 = vdwg.mxu0
    %4086 = vrot.lane.b32.xlu0 %v4082, 96
    %v4087 = vpop.permute.xlu0 %4086
    %v4089 = vadd.f32 %v2374, %v4087
    %v4090 = vxor.u32 %v4089, 2147483648
    %v4091 = vmul.f32 %v4090, 1.442695
    %v4092 = vpow.pop %v4091
    %v4093 = vadd.f32 %v4092, 1.0
    %v4094 = vrcp.pop %v4093
    %v4095 = vmul.f32 1.0, %v4094
    %v4096 = vadd.f32 %v2376, %v4087
    %v4097 = vxor.u32 %v4096, 2147483648
    %v4098 = vmul.f32 %v4097, 1.442695
    %v4099 = vpow.pop %v4098
    %v4100 = vadd.f32 %v4099, 1.0
    %v4101 = vrcp.pop %v4100
    %v4102 = vmul.f32 1.0, %v4101
    %4103 = vrot.lane.b32.xlu0 %v4082, 32
    %v4104 = vpop.permute.xlu0 %4103
    %v4106 = vmul.f32 %v4095, %v4104
    %4108 = vrot.lane.b32.xlu0 %v4106, 64
    %v4109 = vpop.permute.xlu0 %4108
    %v4111 = vadd.f32 %v2376, %v4109
    %v4112 = vtanh.pop %v4111
    %v4113 = vsub.f32 1.0, %v4102
    %4115 = vrot.lane.b32.xlu0 %v4112, 96
    %v4116 = vpop.permute.xlu0 %4115
    %v4118 = vmul.f32 %v4113, %v4116
    %v4120 = vmul.f32 %v4102, %v4012
    %v4121 = vadd.f32 %v4118, %v4120
    %v4122 = vrot.slane %v2198, 2
    %4123 = vrot.lane.b32.xlu0 %v4122, 32
    %v4124 = vpop.permute.xlu0 %4123
    %v4126 = vsel %vm463, %v2247, %v4124
    %4128 = vrot.lane.b32.xlu0 %v3222, 96
    %v4129 = vpop.permute.xlu0 %4128
    %v4132 = vrot.slane %v4121, 2
    %4133 = vrot.lane.b32.xlu0 %v4132, 32
    %v4134 = vpop.permute.xlu0 %4133
    %v4136 = vsel %vm463, %v4129, %v4134
    %v4137 = vld [vmem:[#allocation10] sm:$0xff]
    %v4138 = vld [vmem:[#allocation10 + $0x8] sm:$0xff]
    %v4139 = vld [vmem:[#allocation10 + $0x10] sm:$0x3f]
    %v4140 = vld [vmem:[#allocation10 + $0x18] sm:$0x3f]
    %v4141 = vld [vmem:[%s25] sm:$0xff]
    %v4142 = vld [vmem:[%s25 + $0x8] sm:$0xff]
    %v4143 = vld [vmem:[%s25 + $0x10] sm:$0xff]
    %v4144 = vld [vmem:[%s25 + $0x18] sm:$0xff]
    %v4145 = vld [vmem:[%s25 + $0x20] sm:$0xff]
    %v4146 = vld [vmem:[%s25 + $0x28] sm:$0xff]
    %v4147 = vld [vmem:[%s25 + $0x30] sm:$0xff]
    %v4148 = vld [vmem:[%s25 + $0x38] sm:$0xff]
    %v4149 = vld [vmem:[%s25 + $0x40] sm:$0xff]
    %v4150 = vld [vmem:[%s25 + $0x48] sm:$0xff]
    %v4151 = vld [vmem:[%s25 + $0x50] sm:$0xff]
    %v4152 = vld [vmem:[%s25 + $0x58] sm:$0xff]
    %v4153 = vld [vmem:[%s25 + $0x60] sm:$0xff]
    %v4154 = vld [vmem:[%s25 + $0x68] sm:$0xff]
    %v4155 = vld [vmem:[%s25 + $0x70] sm:$0xff]
    %v4156 = vld [vmem:[%s25 + $0x78] sm:$0xff]
    %v4157 = vld [vmem:[#allocation11] sm:$0x3]
    %v4158 = vld [vmem:[#allocation13] sm:$0x3]
    %v4159 = vld [vmem:[%s31] sm:$0xff]
    %v4160 = vld [vmem:[%s31 + $0x8] sm:$0xff]
    %v4161 = vld [vmem:[%s31 + $0x10] sm:$0xff]
    %v4162 = vld [vmem:[%s31 + $0x18] sm:$0xff]
    %v4163 = vld [vmem:[%s31 + $0x20] sm:$0xff]
    %v4164 = vld [vmem:[%s31 + $0x28] sm:$0xff]
    %v4165 = vld [vmem:[%s31 + $0x30] sm:$0xff]
    %v4166 = vld [vmem:[%s31 + $0x38] sm:$0xff]
    %v4167 = vld [vmem:[%s31 + $0x40] sm:$0xff]
    %v4168 = vld [vmem:[%s31 + $0x48] sm:$0xff]
    %v4169 = vld [vmem:[%s31 + $0x50] sm:$0xff]
    %v4170 = vld [vmem:[%s31 + $0x58] sm:$0xff]
    %v4171 = vld [vmem:[%s31 + $0x60] sm:$0xff]
    %v4172 = vld [vmem:[%s31 + $0x68] sm:$0xff]
    %v4173 = vld [vmem:[%s31 + $0x70] sm:$0xff]
    %v4174 = vld [vmem:[%s31 + $0x78] sm:$0xff]
    %v4175 = vld [vmem:[%s33] sm:$0xff]
    %v4176 = vld [vmem:[%s33 + $0x8] sm:$0xff]
    %v4177 = vld [vmem:[%s33 + $0x10] sm:$0xff]
    %v4178 = vld [vmem:[%s33 + $0x18] sm:$0xff]
    %v4179 = vld [vmem:[%s33 + $0x20] sm:$0xff]
    %v4180 = vld [vmem:[%s33 + $0x28] sm:$0xff]
    %v4181 = vld [vmem:[%s33 + $0x30] sm:$0xff]
    %v4182 = vld [vmem:[%s33 + $0x38] sm:$0xff]
    %v4183 = vld [vmem:[%s33 + $0x40] sm:$0xff]
    %v4184 = vld [vmem:[%s33 + $0x48] sm:$0xff]
    %v4185 = vld [vmem:[%s33 + $0x50] sm:$0xff]
    %v4186 = vld [vmem:[%s33 + $0x58] sm:$0xff]
    %v4187 = vld [vmem:[%s33 + $0x60] sm:$0xff]
    %v4188 = vld [vmem:[%s33 + $0x68] sm:$0xff]
    %v4189 = vld [vmem:[%s33 + $0x70] sm:$0xff]
    %v4190 = vld [vmem:[%s33 + $0x78] sm:$0xff]
    %v4191 = vld [vmem:[#allocation14] sm:$0x3]
    %v4192 = vld [vmem:[#allocation16] sm:$0x3]
    %v4193 = vld [vmem:[%s3] sm:$0x3]
    %v4195 = vlaneseq
    %v4196 = vshrl.u32 %v4195, 7
    %v4197 = vsub.s32 0, %v4196
    %v4198 = vrot.slane %v4157, %v4197
    %v4199 = vlaneseq
    %v4200 = vshrl.u32 %v4199, 7
    %v4201 = vsub.s32 1, %v4200
    %v4202 = vrot.slane %v4157, %v4201
    %vm4205 = vcmask 113664
    %v4207 = vsel %vm4205, %v4193, 0
    %v4210 = vsel %vm2257, %v4139, 0
    %v4213 = vsel %vm2257, %v4140, 0
    %4215 = vmatprep.subr.mxu0 %v4138
    %4216 = vmatpush1.msra.mxu0 %v4137
    %4217 = vmatprep.subr.mxu0 %v4213
    %4218 = vmatpush1.msra.mxu0 %v4210
    %4219 = vmatprep.subr.mxu0 0.0
    %4220 = vmatpush1.msra.mxu0 0.0
    %4221 = vmatprep.subr.mxu0 0.0
    %4222 = vmatpush1.msra.mxu0 0.0
    %4223 = vmatprep.subr.mxu0 0.0
    %4224 = vmatpush1.msra.mxu0 0.0
    %4225 = vmatprep.subr.mxu0 0.0
    %4226 = vmatpush1.msra.mxu0 0.0
    %4227 = vmatprep.subr.mxu0 0.0
    %4228 = vmatpush1.msra.mxu0 0.0
    %4229 = vmatprep.subr.mxu0 0.0
    %4230 = vmatpush1.msra.mxu0 0.0
    %4231 = vmatprep.subr.mxu0 0.0
    %4232 = vmatpush1.msra.mxu0 0.0
    %4233 = vmatprep.subr.mxu0 0.0
    %4234 = vmatpush1.msra.mxu0 0.0
    %4235 = vmatprep.subr.mxu0 0.0
    %4236 = vmatpush1.msra.mxu0 0.0
    %4237 = vmatprep.subr.mxu0 0.0
    %4238 = vmatpush1.msra.mxu0 0.0
    %4239 = vmatprep.subr.mxu0 0.0
    %4240 = vmatpush1.msra.mxu0 0.0
    %4241 = vmatprep.subr.mxu0 0.0
    %4242 = vmatpush1.msra.mxu0 0.0
    %4243 = vmatprep.subr.mxu0 0.0
    %4244 = vmatpush1.msra.mxu0 0.0
    %4245 = vmatprep.subr.mxu0 0.0
    %4246 = vmatpush1.msra.mxu0 0.0
    %4247 = vmatprep.subr.mxu0 0.0
    %4248 = vmatpush1.msra.mxu0 0.0
    %4249 = vmatprep.subr.mxu0 0.0
    %4250 = vmatpush1.msra.mxu0 0.0
    %4251 = vmatprep.subr.mxu0 0.0
    %4252 = vmatpush1.msra.mxu0 0.0
    %4253 = vmatprep.subr.mxu0 0.0
    %4254 = vmatpush1.msra.mxu0 0.0
    %4255 = vmatprep.subr.mxu0 0.0
    %4256 = vmatpush1.msra.mxu0 0.0
    %4257 = vmatprep.subr.mxu0 0.0
    %4258 = vmatpush1.msra.mxu0 0.0
    %4259 = vmatprep.subr.mxu0 0.0
    %4260 = vmatpush1.msra.mxu0 0.0
    %4261 = vmatprep.subr.mxu0 0.0
    %4262 = vmatpush1.msra.mxu0 0.0
    %4263 = vmatprep.subr.mxu0 0.0
    %4264 = vmatpush1.msra.mxu0 0.0
    %4265 = vmatprep.subr.mxu0 0.0
    %4266 = vmatpush1.msra.mxu0 0.0
    %4267 = vmatprep.subr.mxu0 0.0
    %4268 = vmatpush1.msra.mxu0 0.0
    %4269 = vmatprep.subr.mxu0 0.0
    %4270 = vmatpush1.msra.mxu0 0.0
    %4271 = vmatprep.subr.mxu0 0.0
    %4272 = vmatpush1.msra.mxu0 0.0
    %4273 = vmatprep.subr.mxu0 0.0
    %4274 = vmatpush1.msra.mxu0 0.0
    %4275 = vmatprep.subr.mxu0 0.0
    %4276 = vmatpush1.msra.mxu0 0.0
    %4277 = vmatprep.subr.mxu0 0.0
    %4278 = vmatpush1.msra.mxu0 0.0
    %4279 = vmatprep.mubr.f32.mxu0 0.0
    %4280 = vmatmul.mubr.f32.gmra.mrb[0].mxu0 %v4207
    %v4281 = vpop.f32.mrb[0].mxu0
    %v4282 = vadd.f32 %v4198, %v4281
    %v4283 = vpop.f32.mrb[0].mxu0
    %v4284 = vadd.f32 %v4202, %v4283
    %4285 = vdwg.mxu0
    %v4286 = vld [vmem:[%s5] sm:$0xff]
    %v4287 = vld [vmem:[%s5 + $0x8] sm:$0x3]
    %v4289 = vsel %vm4205, %v4286, 0
    %v4292 = vsel %vm4205, %v4287, 0
    %4294 = vmatprep.subr.mxu0 %v4138
    %4295 = vmatpush1.msra.mxu0 %v4137
    %4296 = vmatprep.subr.mxu0 %v4213
    %4297 = vmatpush1.msra.mxu0 %v4210
    %4298 = vmatprep.subr.mxu0 0.0
    %4299 = vmatpush1.msra.mxu0 0.0
    %4300 = vmatprep.subr.mxu0 0.0
    %4301 = vmatpush1.msra.mxu0 0.0
    %4302 = vmatprep.subr.mxu0 0.0
    %4303 = vmatpush1.msra.mxu0 0.0
    %4304 = vmatprep.subr.mxu0 0.0
    %4305 = vmatpush1.msra.mxu0 0.0
    %4306 = vmatprep.subr.mxu0 0.0
    %4307 = vmatpush1.msra.mxu0 0.0
    %4308 = vmatprep.subr.mxu0 0.0
    %4309 = vmatpush1.msra.mxu0 0.0
    %4310 = vmatprep.subr.mxu0 0.0
    %4311 = vmatpush1.msra.mxu0 0.0
    %4312 = vmatprep.subr.mxu0 0.0
    %4313 = vmatpush1.msra.mxu0 0.0
    %4314 = vmatprep.subr.mxu0 0.0
    %4315 = vmatpush1.msra.mxu0 0.0
    %4316 = vmatprep.subr.mxu0 0.0
    %4317 = vmatpush1.msra.mxu0 0.0
    %4318 = vmatprep.subr.mxu0 0.0
    %4319 = vmatpush1.msra.mxu0 0.0
    %4320 = vmatprep.subr.mxu0 0.0
    %4321 = vmatpush1.msra.mxu0 0.0
    %4322 = vmatprep.subr.mxu0 0.0
    %4323 = vmatpush1.msra.mxu0 0.0
    %4324 = vmatprep.subr.mxu0 0.0
    %4325 = vmatpush1.msra.mxu0 0.0
    %4326 = vmatprep.subr.mxu0 0.0
    %4327 = vmatpush1.msra.mxu0 0.0
    %4328 = vmatprep.subr.mxu0 0.0
    %4329 = vmatpush1.msra.mxu0 0.0
    %4330 = vmatprep.subr.mxu0 0.0
    %4331 = vmatpush1.msra.mxu0 0.0
    %4332 = vmatprep.subr.mxu0 0.0
    %4333 = vmatpush1.msra.mxu0 0.0
    %4334 = vmatprep.subr.mxu0 0.0
    %4335 = vmatpush1.msra.mxu0 0.0
    %4336 = vmatprep.subr.mxu0 0.0
    %4337 = vmatpush1.msra.mxu0 0.0
    %4338 = vmatprep.subr.mxu0 0.0
    %4339 = vmatpush1.msra.mxu0 0.0
    %4340 = vmatprep.subr.mxu0 0.0
    %4341 = vmatpush1.msra.mxu0 0.0
    %4342 = vmatprep.subr.mxu0 0.0
    %4343 = vmatpush1.msra.mxu0 0.0
    %4344 = vmatprep.subr.mxu0 0.0
    %4345 = vmatpush1.msra.mxu0 0.0
    %4346 = vmatprep.subr.mxu0 0.0
    %4347 = vmatpush1.msra.mxu0 0.0
    %4348 = vmatprep.subr.mxu0 0.0
    %4349 = vmatpush1.msra.mxu0 0.0
    %4350 = vmatprep.subr.mxu0 0.0
    %4351 = vmatpush1.msra.mxu0 0.0
    %4352 = vmatprep.subr.mxu0 0.0
    %4353 = vmatpush1.msra.mxu0 0.0
    %4354 = vmatprep.subr.mxu0 0.0
    %4355 = vmatpush1.msra.mxu0 0.0
    %4356 = vmatprep.subr.mxu0 0.0
    %4357 = vmatpush1.msra.mxu0 0.0
    %4358 = vmatprep.mubr.f32.mxu0 0.0
    %4359 = vmatmul.mubr.f32.gmra.mrb[0].mxu0 %v4289
    %v4360 = vpop.f32.mrb[0].mxu0
    %v4361 = vadd.f32 %v4198, %v4360
    %v4362 = vpop.f32.mrb[0].mxu0
    %v4363 = vadd.f32 %v4202, %v4362
    %4364 = vmatprep.mubr.f32.mxu0 0.0
    %4365 = vmatmul.mubr.f32.gmra.mrb[0].mxu0 %v4292
    %v4366 = vpop.f32.mrb[0].mxu0
    %v4367 = vpop.f32.mrb[0].mxu0
    %4368 = vdwg.mxu0
    %v4370 = vlaneseq
    %v4371 = vshrl.u32 %v4370, 7
    %v4372 = vsub.s32 0, %v4371
    %v4373 = vrot.slane %v4158, %v4372
    %v4374 = vlaneseq
    %v4375 = vshrl.u32 %v4374, 7
    %v4376 = vsub.s32 1, %v4375
    %v4377 = vrot.slane %v4158, %v4376
    %v4381 = vrot.slane %v4126, 6
    %v4382 = vsel %vm2300, %v4381, 0
    %4384 = vmatprep.subr.mxu0 %v4142
    %4385 = vmatpush1.msra.mxu0 %v4141
    %4386 = vmatprep.subr.mxu0 %v4144
    %4387 = vmatpush1.msra.mxu0 %v4143
    %4388 = vmatprep.subr.mxu0 %v4146
    %4389 = vmatpush1.msra.mxu0 %v4145
    %4390 = vmatprep.subr.mxu0 %v4148
    %4391 = vmatpush1.msra.mxu0 %v4147
    %4392 = vmatprep.subr.mxu0 %v4150
    %4393 = vmatpush1.msra.mxu0 %v4149
    %4394 = vmatprep.subr.mxu0 %v4152
    %4395 = vmatpush1.msra.mxu0 %v4151
    %4396 = vmatprep.subr.mxu0 %v4154
    %4397 = vmatpush1.msra.mxu0 %v4153
    %4398 = vmatprep.subr.mxu0 %v4156
    %4399 = vmatpush1.msra.mxu0 %v4155
    %4400 = vmatprep.subr.mxu0 0.0
    %4401 = vmatpush1.msra.mxu0 0.0
    %4402 = vmatprep.subr.mxu0 0.0
    %4403 = vmatpush1.msra.mxu0 0.0
    %4404 = vmatprep.subr.mxu0 0.0
    %4405 = vmatpush1.msra.mxu0 0.0
    %4406 = vmatprep.subr.mxu0 0.0
    %4407 = vmatpush1.msra.mxu0 0.0
    %4408 = vmatprep.subr.mxu0 0.0
    %4409 = vmatpush1.msra.mxu0 0.0
    %4410 = vmatprep.subr.mxu0 0.0
    %4411 = vmatpush1.msra.mxu0 0.0
    %4412 = vmatprep.subr.mxu0 0.0
    %4413 = vmatpush1.msra.mxu0 0.0
    %4414 = vmatprep.subr.mxu0 0.0
    %4415 = vmatpush1.msra.mxu0 0.0
    %4416 = vmatprep.subr.mxu0 0.0
    %4417 = vmatpush1.msra.mxu0 0.0
    %4418 = vmatprep.subr.mxu0 0.0
    %4419 = vmatpush1.msra.mxu0 0.0
    %4420 = vmatprep.subr.mxu0 0.0
    %4421 = vmatpush1.msra.mxu0 0.0
    %4422 = vmatprep.subr.mxu0 0.0
    %4423 = vmatpush1.msra.mxu0 0.0
    %4424 = vmatprep.subr.mxu0 0.0
    %4425 = vmatpush1.msra.mxu0 0.0
    %4426 = vmatprep.subr.mxu0 0.0
    %4427 = vmatpush1.msra.mxu0 0.0
    %4428 = vmatprep.subr.mxu0 0.0
    %4429 = vmatpush1.msra.mxu0 0.0
    %4430 = vmatprep.subr.mxu0 0.0
    %4431 = vmatpush1.msra.mxu0 0.0
    %4432 = vmatprep.subr.mxu0 0.0
    %4433 = vmatpush1.msra.mxu0 0.0
    %4434 = vmatprep.subr.mxu0 0.0
    %4435 = vmatpush1.msra.mxu0 0.0
    %4436 = vmatprep.subr.mxu0 0.0
    %4437 = vmatpush1.msra.mxu0 0.0
    %4438 = vmatprep.subr.mxu0 0.0
    %4439 = vmatpush1.msra.mxu0 0.0
    %4440 = vmatprep.subr.mxu0 0.0
    %4441 = vmatpush1.msra.mxu0 0.0
    %4442 = vmatprep.subr.mxu0 0.0
    %4443 = vmatpush1.msra.mxu0 0.0
    %4444 = vmatprep.subr.mxu0 0.0
    %4445 = vmatpush1.msra.mxu0 0.0
    %4446 = vmatprep.subr.mxu0 0.0
    %4447 = vmatpush1.msra.mxu0 0.0
    %4448 = vmatprep.mubr.f32.mxu0 0.0
    %4449 = vmatmul.mubr.f32.gmra.mrb[0].mxu0 %v4382
    %v4450 = vpop.f32.mrb[0].mxu0
    %v4451 = vadd.f32 %v4373, %v4450
    %v4452 = vpop.f32.mrb[0].mxu0
    %v4453 = vadd.f32 %v4377, %v4452
    %4454 = vdwg.mxu0
    %v4455 = vadd.f32 %v4282, %v4451
    %v4456 = vxor.u32 %v4455, 2147483648
    %v4457 = vmul.f32 %v4456, 1.442695
    %v4458 = vpow.pop %v4457
    %v4459 = vadd.f32 %v4458, 1.0
    %v4460 = vrcp.pop %v4459
    %v4461 = vmul.f32 1.0, %v4460
    %v4462 = vmul.f32 %v4461, %v4453
    %v4463 = vadd.f32 %v4284, %v4462
    %v4464 = vtanh.pop %v4463
    %v4465 = vsub.f32 1.0, %v4461
    %4467 = vrot.lane.b32.xlu0 %v4464, 64
    %v4468 = vpop.permute.xlu0 %4467
    %v4470 = vmul.f32 %v4465, %v4468
    %4471 = vrot.lane.b32.xlu0 %v4381, 64
    %v4472 = vpop.permute.xlu0 %4471
    %v4474 = vmul.f32 %v4461, %v4472
    %v4475 = vadd.f32 %v4470, %v4474
    %v4477 = vlaneseq
    %v4478 = vshrl.u32 %v4477, 7
    %v4479 = vsub.s32 0, %v4478
    %v4480 = vrot.slane %v4191, %v4479
    %v4481 = vlaneseq
    %v4482 = vshrl.u32 %v4481, 7
    %v4483 = vsub.s32 1, %v4482
    %v4484 = vrot.slane %v4191, %v4483
    %4488 = vrot.lane.b32.xlu0 %v4475, 64
    %v4489 = vpop.permute.xlu0 %4488
    %v4490 = vsel %vm2300, %v4489, 0
    %4492 = vmatprep.subr.mxu0 %v4160
    %4493 = vmatpush1.msra.mxu0 %v4159
    %4494 = vmatprep.subr.mxu0 %v4162
    %4495 = vmatpush1.msra.mxu0 %v4161
    %4496 = vmatprep.subr.mxu0 %v4164
    %4497 = vmatpush1.msra.mxu0 %v4163
    %4498 = vmatprep.subr.mxu0 %v4166
    %4499 = vmatpush1.msra.mxu0 %v4165
    %4500 = vmatprep.subr.mxu0 %v4168
    %4501 = vmatpush1.msra.mxu0 %v4167
    %4502 = vmatprep.subr.mxu0 %v4170
    %4503 = vmatpush1.msra.mxu0 %v4169
    %4504 = vmatprep.subr.mxu0 %v4172
    %4505 = vmatpush1.msra.mxu0 %v4171
    %4506 = vmatprep.subr.mxu0 %v4174
    %4507 = vmatpush1.msra.mxu0 %v4173
    %4508 = vmatprep.subr.mxu0 0.0
    %4509 = vmatpush1.msra.mxu0 0.0
    %4510 = vmatprep.subr.mxu0 0.0
    %4511 = vmatpush1.msra.mxu0 0.0
    %4512 = vmatprep.subr.mxu0 0.0
    %4513 = vmatpush1.msra.mxu0 0.0
    %4514 = vmatprep.subr.mxu0 0.0
    %4515 = vmatpush1.msra.mxu0 0.0
    %4516 = vmatprep.subr.mxu0 0.0
    %4517 = vmatpush1.msra.mxu0 0.0
    %4518 = vmatprep.subr.mxu0 0.0
    %4519 = vmatpush1.msra.mxu0 0.0
    %4520 = vmatprep.subr.mxu0 0.0
    %4521 = vmatpush1.msra.mxu0 0.0
    %4522 = vmatprep.subr.mxu0 0.0
    %4523 = vmatpush1.msra.mxu0 0.0
    %4524 = vmatprep.subr.mxu0 0.0
    %4525 = vmatpush1.msra.mxu0 0.0
    %4526 = vmatprep.subr.mxu0 0.0
    %4527 = vmatpush1.msra.mxu0 0.0
    %4528 = vmatprep.subr.mxu0 0.0
    %4529 = vmatpush1.msra.mxu0 0.0
    %4530 = vmatprep.subr.mxu0 0.0
    %4531 = vmatpush1.msra.mxu0 0.0
    %4532 = vmatprep.subr.mxu0 0.0
    %4533 = vmatpush1.msra.mxu0 0.0
    %4534 = vmatprep.subr.mxu0 0.0
    %4535 = vmatpush1.msra.mxu0 0.0
    %4536 = vmatprep.subr.mxu0 0.0
    %4537 = vmatpush1.msra.mxu0 0.0
    %4538 = vmatprep.subr.mxu0 0.0
    %4539 = vmatpush1.msra.mxu0 0.0
    %4540 = vmatprep.subr.mxu0 0.0
    %4541 = vmatpush1.msra.mxu0 0.0
    %4542 = vmatprep.subr.mxu0 0.0
    %4543 = vmatpush1.msra.mxu0 0.0
    %4544 = vmatprep.subr.mxu0 0.0
    %4545 = vmatpush1.msra.mxu0 0.0
    %4546 = vmatprep.subr.mxu0 0.0
    %4547 = vmatpush1.msra.mxu0 0.0
    %4548 = vmatprep.subr.mxu0 0.0
    %4549 = vmatpush1.msra.mxu0 0.0
    %4550 = vmatprep.subr.mxu0 0.0
    %4551 = vmatpush1.msra.mxu0 0.0
    %4552 = vmatprep.subr.mxu0 0.0
    %4553 = vmatpush1.msra.mxu0 0.0
    %4554 = vmatprep.subr.mxu0 0.0
    %4555 = vmatpush1.msra.mxu0 0.0
    %4556 = vmatprep.mubr.f32.mxu0 0.0
    %4557 = vmatmul.mubr.f32.gmra.mrb[0].mxu0 %v4490
    %v4558 = vpop.f32.mrb[0].mxu0
    %v4559 = vadd.f32 %v4480, %v4558
    %v4560 = vpop.f32.mrb[0].mxu0
    %v4561 = vadd.f32 %v4484, %v4560
    %4562 = vdwg.mxu0
    %v4564 = vlaneseq
    %v4565 = vshrl.u32 %v4564, 7
    %v4566 = vsub.s32 0, %v4565
    %v4567 = vrot.slane %v4192, %v4566
    %v4568 = vlaneseq
    %v4569 = vshrl.u32 %v4568, 7
    %v4570 = vsub.s32 1, %v4569
    %v4571 = vrot.slane %v4192, %v4570
    %v4575 = vrot.slane %v4136, 6
    %v4576 = vsel %vm2300, %v4575, 0
    %4578 = vmatprep.subr.mxu0 %v4176
    %4579 = vmatpush1.msra.mxu0 %v4175
    %4580 = vmatprep.subr.mxu0 %v4178
    %4581 = vmatpush1.msra.mxu0 %v4177
    %4582 = vmatprep.subr.mxu0 %v4180
    %4583 = vmatpush1.msra.mxu0 %v4179
    %4584 = vmatprep.subr.mxu0 %v4182
    %4585 = vmatpush1.msra.mxu0 %v4181
    %4586 = vmatprep.subr.mxu0 %v4184
    %4587 = vmatpush1.msra.mxu0 %v4183
    %4588 = vmatprep.subr.mxu0 %v4186
    %4589 = vmatpush1.msra.mxu0 %v4185
    %4590 = vmatprep.subr.mxu0 %v4188
    %4591 = vmatpush1.msra.mxu0 %v4187
    %4592 = vmatprep.subr.mxu0 %v4190
    %4593 = vmatpush1.msra.mxu0 %v4189
    %4594 = vmatprep.subr.mxu0 0.0
    %4595 = vmatpush1.msra.mxu0 0.0
    %4596 = vmatprep.subr.mxu0 0.0
    %4597 = vmatpush1.msra.mxu0 0.0
    %4598 = vmatprep.subr.mxu0 0.0
    %4599 = vmatpush1.msra.mxu0 0.0
    %4600 = vmatprep.subr.mxu0 0.0
    %4601 = vmatpush1.msra.mxu0 0.0
    %4602 = vmatprep.subr.mxu0 0.0
    %4603 = vmatpush1.msra.mxu0 0.0
    %4604 = vmatprep.subr.mxu0 0.0
    %4605 = vmatpush1.msra.mxu0 0.0
    %4606 = vmatprep.subr.mxu0 0.0
    %4607 = vmatpush1.msra.mxu0 0.0
    %4608 = vmatprep.subr.mxu0 0.0
    %4609 = vmatpush1.msra.mxu0 0.0
    %4610 = vmatprep.subr.mxu0 0.0
    %4611 = vmatpush1.msra.mxu0 0.0
    %4612 = vmatprep.subr.mxu0 0.0
    %4613 = vmatpush1.msra.mxu0 0.0
    %4614 = vmatprep.subr.mxu0 0.0
    %4615 = vmatpush1.msra.mxu0 0.0
    %4616 = vmatprep.subr.mxu0 0.0
    %4617 = vmatpush1.msra.mxu0 0.0
    %4618 = vmatprep.subr.mxu0 0.0
    %4619 = vmatpush1.msra.mxu0 0.0
    %4620 = vmatprep.subr.mxu0 0.0
    %4621 = vmatpush1.msra.mxu0 0.0
    %4622 = vmatprep.subr.mxu0 0.0
    %4623 = vmatpush1.msra.mxu0 0.0
    %4624 = vmatprep.subr.mxu0 0.0
    %4625 = vmatpush1.msra.mxu0 0.0
    %4626 = vmatprep.subr.mxu0 0.0
    %4627 = vmatpush1.msra.mxu0 0.0
    %4628 = vmatprep.subr.mxu0 0.0
    %4629 = vmatpush1.msra.mxu0 0.0
    %4630 = vmatprep.subr.mxu0 0.0
    %4631 = vmatpush1.msra.mxu0 0.0
    %4632 = vmatprep.subr.mxu0 0.0
    %4633 = vmatpush1.msra.mxu0 0.0
    %4634 = vmatprep.subr.mxu0 0.0
    %4635 = vmatpush1.msra.mxu0 0.0
    %4636 = vmatprep.subr.mxu0 0.0
    %4637 = vmatpush1.msra.mxu0 0.0
    %4638 = vmatprep.subr.mxu0 0.0
    %4639 = vmatpush1.msra.mxu0 0.0
    %4640 = vmatprep.subr.mxu0 0.0
    %4641 = vmatpush1.msra.mxu0 0.0
    %4642 = vmatprep.mubr.f32.mxu0 0.0
    %4643 = vmatmul.mubr.f32.gmra.mrb[0].mxu0 %v4576
    %v4644 = vpop.f32.mrb[0].mxu0
    %v4645 = vadd.f32 %v4567, %v4644
    %v4646 = vpop.f32.mrb[0].mxu0
    %v4647 = vadd.f32 %v4571, %v4646
    %4648 = vdwg.mxu0
    %v4649 = vadd.f32 %v4559, %v4645
    %v4650 = vxor.u32 %v4649, 2147483648
    %v4651 = vmul.f32 %v4650, 1.442695
    %v4652 = vpow.pop %v4651
    %v4653 = vadd.f32 %v4652, 1.0
    %v4654 = vrcp.pop %v4653
    %v4655 = vmul.f32 1.0, %v4654
    %v4656 = vmul.f32 %v4655, %v4647
    %v4657 = vadd.f32 %v4561, %v4656
    %v4658 = vtanh.pop %v4657
    %v4659 = vsub.f32 1.0, %v4655
    %4661 = vrot.lane.b32.xlu0 %v4658, 64
    %v4662 = vpop.permute.xlu0 %4661
    %v4664 = vmul.f32 %v4659, %v4662
    %4665 = vrot.lane.b32.xlu0 %v4575, 64
    %v4666 = vpop.permute.xlu0 %4665
    %v4668 = vmul.f32 %v4655, %v4666
    %v4669 = vadd.f32 %v4664, %v4668
    %4670 = vmatprep.subr.mxu0 %v4142
    %4671 = vmatpush1.msra.mxu0 %v4141
    %4672 = vmatprep.subr.mxu0 %v4144
    %4673 = vmatpush1.msra.mxu0 %v4143
    %4674 = vmatprep.subr.mxu0 %v4146
    %4675 = vmatpush1.msra.mxu0 %v4145
    %4676 = vmatprep.subr.mxu0 %v4148
    %4677 = vmatpush1.msra.mxu0 %v4147
    %4678 = vmatprep.subr.mxu0 %v4150
    %4679 = vmatpush1.msra.mxu0 %v4149
    %4680 = vmatprep.subr.mxu0 %v4152
    %4681 = vmatpush1.msra.mxu0 %v4151
    %4682 = vmatprep.subr.mxu0 %v4154
    %4683 = vmatpush1.msra.mxu0 %v4153
    %4684 = vmatprep.subr.mxu0 %v4156
    %4685 = vmatpush1.msra.mxu0 %v4155
    %4686 = vmatprep.subr.mxu0 0.0
    %4687 = vmatpush1.msra.mxu0 0.0
    %4688 = vmatprep.subr.mxu0 0.0
    %4689 = vmatpush1.msra.mxu0 0.0
    %4690 = vmatprep.subr.mxu0 0.0
    %4691 = vmatpush1.msra.mxu0 0.0
    %4692 = vmatprep.subr.mxu0 0.0
    %4693 = vmatpush1.msra.mxu0 0.0
    %4694 = vmatprep.subr.mxu0 0.0
    %4695 = vmatpush1.msra.mxu0 0.0
    %4696 = vmatprep.subr.mxu0 0.0
    %4697 = vmatpush1.msra.mxu0 0.0
    %4698 = vmatprep.subr.mxu0 0.0
    %4699 = vmatpush1.msra.mxu0 0.0
    %4700 = vmatprep.subr.mxu0 0.0
    %4701 = vmatpush1.msra.mxu0 0.0
    %4702 = vmatprep.subr.mxu0 0.0
    %4703 = vmatpush1.msra.mxu0 0.0
    %4704 = vmatprep.subr.mxu0 0.0
    %4705 = vmatpush1.msra.mxu0 0.0
    %4706 = vmatprep.subr.mxu0 0.0
    %4707 = vmatpush1.msra.mxu0 0.0
    %4708 = vmatprep.subr.mxu0 0.0
    %4709 = vmatpush1.msra.mxu0 0.0
    %4710 = vmatprep.subr.mxu0 0.0
    %4711 = vmatpush1.msra.mxu0 0.0
    %4712 = vmatprep.subr.mxu0 0.0
    %4713 = vmatpush1.msra.mxu0 0.0
    %4714 = vmatprep.subr.mxu0 0.0
    %4715 = vmatpush1.msra.mxu0 0.0
    %4716 = vmatprep.subr.mxu0 0.0
    %4717 = vmatpush1.msra.mxu0 0.0
    %4718 = vmatprep.subr.mxu0 0.0
    %4719 = vmatpush1.msra.mxu0 0.0
    %4720 = vmatprep.subr.mxu0 0.0
    %4721 = vmatpush1.msra.mxu0 0.0
    %4722 = vmatprep.subr.mxu0 0.0
    %4723 = vmatpush1.msra.mxu0 0.0
    %4724 = vmatprep.subr.mxu0 0.0
    %4725 = vmatpush1.msra.mxu0 0.0
    %4726 = vmatprep.subr.mxu0 0.0
    %4727 = vmatpush1.msra.mxu0 0.0
    %4728 = vmatprep.subr.mxu0 0.0
    %4729 = vmatpush1.msra.mxu0 0.0
    %4730 = vmatprep.subr.mxu0 0.0
    %4731 = vmatpush1.msra.mxu0 0.0
    %4732 = vmatprep.subr.mxu0 0.0
    %4733 = vmatpush1.msra.mxu0 0.0
    %4734 = vmatprep.mubr.f32.mxu0 0.0
    %4735 = vmatmul.mubr.f32.gmra.mrb[0].mxu0 %v4490
    %v4736 = vpop.f32.mrb[0].mxu0
    %v4737 = vadd.f32 %v4373, %v4736
    %v4738 = vpop.f32.mrb[0].mxu0
    %v4739 = vadd.f32 %v4377, %v4738
    %4740 = vdwg.mxu0
    %v4741 = vadd.f32 %v4361, %v4737
    %v4742 = vxor.u32 %v4741, 2147483648
    %v4743 = vmul.f32 %v4742, 1.442695
    %v4744 = vpow.pop %v4743
    %v4745 = vadd.f32 %v4744, 1.0
    %v4746 = vrcp.pop %v4745
    %v4747 = vmul.f32 1.0, %v4746
    %v4748 = vmul.f32 %v4747, %v4739
    %v4749 = vadd.f32 %v4363, %v4748
    %v4750 = vtanh.pop %v4749
    %v4751 = vsub.f32 1.0, %v4747
    %4753 = vrot.lane.b32.xlu0 %v4750, 64
    %v4754 = vpop.permute.xlu0 %4753
    %v4756 = vmul.f32 %v4751, %v4754
    %v4757 = vmul.f32 %v4747, %v4475
    %v4758 = vadd.f32 %v4756, %v4757
    %4760 = vrot.lane.b32.xlu0 %v4758, 64
    %v4761 = vpop.permute.xlu0 %4760
    %v4762 = vsel %vm2300, %v4761, 0
    %4764 = vmatprep.subr.mxu0 %v4160
    %4765 = vmatpush1.msra.mxu0 %v4159
    %4766 = vmatprep.subr.mxu0 %v4162
    %4767 = vmatpush1.msra.mxu0 %v4161
    %4768 = vmatprep.subr.mxu0 %v4164
    %4769 = vmatpush1.msra.mxu0 %v4163
    %4770 = vmatprep.subr.mxu0 %v4166
    %4771 = vmatpush1.msra.mxu0 %v4165
    %4772 = vmatprep.subr.mxu0 %v4168
    %4773 = vmatpush1.msra.mxu0 %v4167
    %4774 = vmatprep.subr.mxu0 %v4170
    %4775 = vmatpush1.msra.mxu0 %v4169
    %4776 = vmatprep.subr.mxu0 %v4172
    %4777 = vmatpush1.msra.mxu0 %v4171
    %4778 = vmatprep.subr.mxu0 %v4174
    %4779 = vmatpush1.msra.mxu0 %v4173
    %4780 = vmatprep.subr.mxu0 0.0
    %4781 = vmatpush1.msra.mxu0 0.0
    %4782 = vmatprep.subr.mxu0 0.0
    %4783 = vmatpush1.msra.mxu0 0.0
    %4784 = vmatprep.subr.mxu0 0.0
    %4785 = vmatpush1.msra.mxu0 0.0
    %4786 = vmatprep.subr.mxu0 0.0
    %4787 = vmatpush1.msra.mxu0 0.0
    %4788 = vmatprep.subr.mxu0 0.0
    %4789 = vmatpush1.msra.mxu0 0.0
    %4790 = vmatprep.subr.mxu0 0.0
    %4791 = vmatpush1.msra.mxu0 0.0
    %4792 = vmatprep.subr.mxu0 0.0
    %4793 = vmatpush1.msra.mxu0 0.0
    %4794 = vmatprep.subr.mxu0 0.0
    %4795 = vmatpush1.msra.mxu0 0.0
    %4796 = vmatprep.subr.mxu0 0.0
    %4797 = vmatpush1.msra.mxu0 0.0
    %4798 = vmatprep.subr.mxu0 0.0
    %4799 = vmatpush1.msra.mxu0 0.0
    %4800 = vmatprep.subr.mxu0 0.0
    %4801 = vmatpush1.msra.mxu0 0.0
    %4802 = vmatprep.subr.mxu0 0.0
    %4803 = vmatpush1.msra.mxu0 0.0
    %4804 = vmatprep.subr.mxu0 0.0
    %4805 = vmatpush1.msra.mxu0 0.0
    %4806 = vmatprep.subr.mxu0 0.0
    %4807 = vmatpush1.msra.mxu0 0.0
    %4808 = vmatprep.subr.mxu0 0.0
    %4809 = vmatpush1.msra.mxu0 0.0
    %4810 = vmatprep.subr.mxu0 0.0
    %4811 = vmatpush1.msra.mxu0 0.0
    %4812 = vmatprep.subr.mxu0 0.0
    %4813 = vmatpush1.msra.mxu0 0.0
    %4814 = vmatprep.subr.mxu0 0.0
    %4815 = vmatpush1.msra.mxu0 0.0
    %4816 = vmatprep.subr.mxu0 0.0
    %4817 = vmatpush1.msra.mxu0 0.0
    %4818 = vmatprep.subr.mxu0 0.0
    %4819 = vmatpush1.msra.mxu0 0.0
    %4820 = vmatprep.subr.mxu0 0.0
    %4821 = vmatpush1.msra.mxu0 0.0
    %4822 = vmatprep.subr.mxu0 0.0
    %4823 = vmatpush1.msra.mxu0 0.0
    %4824 = vmatprep.subr.mxu0 0.0
    %4825 = vmatpush1.msra.mxu0 0.0
    %4826 = vmatprep.subr.mxu0 0.0
    %4827 = vmatpush1.msra.mxu0 0.0
    %4828 = vmatprep.mubr.f32.mxu0 0.0
    %4829 = vmatmul.mubr.f32.gmra.mrb[0].mxu0 %v4762
    %v4830 = vpop.f32.mrb[0].mxu0
    %v4831 = vadd.f32 %v4480, %v4830
    %v4832 = vpop.f32.mrb[0].mxu0
    %v4833 = vadd.f32 %v4484, %v4832
    %4834 = vdwg.mxu0
    %4836 = vrot.lane.b32.xlu0 %v4669, 64
    %v4837 = vpop.permute.xlu0 %4836
    %v4838 = vsel %vm2300, %v4837, 0
    %4840 = vmatprep.subr.mxu0 %v4176
    %4841 = vmatpush1.msra.mxu0 %v4175
    %4842 = vmatprep.subr.mxu0 %v4178
    %4843 = vmatpush1.msra.mxu0 %v4177
    %4844 = vmatprep.subr.mxu0 %v4180
    %4845 = vmatpush1.msra.mxu0 %v4179
    %4846 = vmatprep.subr.mxu0 %v4182
    %4847 = vmatpush1.msra.mxu0 %v4181
    %4848 = vmatprep.subr.mxu0 %v4184
    %4849 = vmatpush1.msra.mxu0 %v4183
    %4850 = vmatprep.subr.mxu0 %v4186
    %4851 = vmatpush1.msra.mxu0 %v4185
    %4852 = vmatprep.subr.mxu0 %v4188
    %4853 = vmatpush1.msra.mxu0 %v4187
    %4854 = vmatprep.subr.mxu0 %v4190
    %4855 = vmatpush1.msra.mxu0 %v4189
    %4856 = vmatprep.subr.mxu0 0.0
    %4857 = vmatpush1.msra.mxu0 0.0
    %4858 = vmatprep.subr.mxu0 0.0
    %4859 = vmatpush1.msra.mxu0 0.0
    %4860 = vmatprep.subr.mxu0 0.0
    %4861 = vmatpush1.msra.mxu0 0.0
    %4862 = vmatprep.subr.mxu0 0.0
    %4863 = vmatpush1.msra.mxu0 0.0
    %4864 = vmatprep.subr.mxu0 0.0
    %4865 = vmatpush1.msra.mxu0 0.0
    %4866 = vmatprep.subr.mxu0 0.0
    %4867 = vmatpush1.msra.mxu0 0.0
    %4868 = vmatprep.subr.mxu0 0.0
    %4869 = vmatpush1.msra.mxu0 0.0
    %4870 = vmatprep.subr.mxu0 0.0
    %4871 = vmatpush1.msra.mxu0 0.0
    %4872 = vmatprep.subr.mxu0 0.0
    %4873 = vmatpush1.msra.mxu0 0.0
    %4874 = vmatprep.subr.mxu0 0.0
    %4875 = vmatpush1.msra.mxu0 0.0
    %4876 = vmatprep.subr.mxu0 0.0
    %4877 = vmatpush1.msra.mxu0 0.0
    %4878 = vmatprep.subr.mxu0 0.0
    %4879 = vmatpush1.msra.mxu0 0.0
    %4880 = vmatprep.subr.mxu0 0.0
    %4881 = vmatpush1.msra.mxu0 0.0
    %4882 = vmatprep.subr.mxu0 0.0
    %4883 = vmatpush1.msra.mxu0 0.0
    %4884 = vmatprep.subr.mxu0 0.0
    %4885 = vmatpush1.msra.mxu0 0.0
    %4886 = vmatprep.subr.mxu0 0.0
    %4887 = vmatpush1.msra.mxu0 0.0
    %4888 = vmatprep.subr.mxu0 0.0
    %4889 = vmatpush1.msra.mxu0 0.0
    %4890 = vmatprep.subr.mxu0 0.0
    %4891 = vmatpush1.msra.mxu0 0.0
    %4892 = vmatprep.subr.mxu0 0.0
    %4893 = vmatpush1.msra.mxu0 0.0
    %4894 = vmatprep.subr.mxu0 0.0
    %4895 = vmatpush1.msra.mxu0 0.0
    %4896 = vmatprep.subr.mxu0 0.0
    %4897 = vmatpush1.msra.mxu0 0.0
    %4898 = vmatprep.subr.mxu0 0.0
    %4899 = vmatpush1.msra.mxu0 0.0
    %4900 = vmatprep.subr.mxu0 0.0
    %4901 = vmatpush1.msra.mxu0 0.0
    %4902 = vmatprep.subr.mxu0 0.0
    %4903 = vmatpush1.msra.mxu0 0.0
    %4904 = vmatprep.mubr.f32.mxu0 0.0
    %4905 = vmatmul.mubr.f32.gmra.mrb[0].mxu0 %v4838
    %v4906 = vpop.f32.mrb[0].mxu0
    %v4907 = vadd.f32 %v4567, %v4906
    %v4908 = vpop.f32.mrb[0].mxu0
    %v4909 = vadd.f32 %v4571, %v4908
    %4910 = vdwg.mxu0
    %v4911 = vadd.f32 %v4831, %v4907
    %v4912 = vxor.u32 %v4911, 2147483648
    %v4913 = vmul.f32 %v4912, 1.442695
    %v4914 = vpow.pop %v4913
    %v4915 = vadd.f32 %v4914, 1.0
    %v4916 = vrcp.pop %v4915
    %v4917 = vmul.f32 1.0, %v4916
    %v4918 = vmul.f32 %v4917, %v4909
    %v4919 = vadd.f32 %v4833, %v4918
    %v4920 = vtanh.pop %v4919
    %v4921 = vsub.f32 1.0, %v4917
    %4923 = vrot.lane.b32.xlu0 %v4920, 64
    %v4924 = vpop.permute.xlu0 %4923
    %v4926 = vmul.f32 %v4921, %v4924
    %v4927 = vmul.f32 %v4917, %v4669
    %v4928 = vadd.f32 %v4926, %v4927
    %4929 = vmatprep.subr.mxu0 %v4142
    %4930 = vmatpush1.msra.mxu0 %v4141
    %4931 = vmatprep.subr.mxu0 %v4144
    %4932 = vmatpush1.msra.mxu0 %v4143
    %4933 = vmatprep.subr.mxu0 %v4146
    %4934 = vmatpush1.msra.mxu0 %v4145
    %4935 = vmatprep.subr.mxu0 %v4148
    %4936 = vmatpush1.msra.mxu0 %v4147
    %4937 = vmatprep.subr.mxu0 %v4150
    %4938 = vmatpush1.msra.mxu0 %v4149
    %4939 = vmatprep.subr.mxu0 %v4152
    %4940 = vmatpush1.msra.mxu0 %v4151
    %4941 = vmatprep.subr.mxu0 %v4154
    %4942 = vmatpush1.msra.mxu0 %v4153
    %4943 = vmatprep.subr.mxu0 %v4156
    %4944 = vmatpush1.msra.mxu0 %v4155
    %4945 = vmatprep.subr.mxu0 0.0
    %4946 = vmatpush1.msra.mxu0 0.0
    %4947 = vmatprep.subr.mxu0 0.0
    %4948 = vmatpush1.msra.mxu0 0.0
    %4949 = vmatprep.subr.mxu0 0.0
    %4950 = vmatpush1.msra.mxu0 0.0
    %4951 = vmatprep.subr.mxu0 0.0
    %4952 = vmatpush1.msra.mxu0 0.0
    %4953 = vmatprep.subr.mxu0 0.0
    %4954 = vmatpush1.msra.mxu0 0.0
    %4955 = vmatprep.subr.mxu0 0.0
    %4956 = vmatpush1.msra.mxu0 0.0
    %4957 = vmatprep.subr.mxu0 0.0
    %4958 = vmatpush1.msra.mxu0 0.0
    %4959 = vmatprep.subr.mxu0 0.0
    %4960 = vmatpush1.msra.mxu0 0.0
    %4961 = vmatprep.subr.mxu0 0.0
    %4962 = vmatpush1.msra.mxu0 0.0
    %4963 = vmatprep.subr.mxu0 0.0
    %4964 = vmatpush1.msra.mxu0 0.0
    %4965 = vmatprep.subr.mxu0 0.0
    %4966 = vmatpush1.msra.mxu0 0.0
    %4967 = vmatprep.subr.mxu0 0.0
    %4968 = vmatpush1.msra.mxu0 0.0
    %4969 = vmatprep.subr.mxu0 0.0
    %4970 = vmatpush1.msra.mxu0 0.0
    %4971 = vmatprep.subr.mxu0 0.0
    %4972 = vmatpush1.msra.mxu0 0.0
    %4973 = vmatprep.subr.mxu0 0.0
    %4974 = vmatpush1.msra.mxu0 0.0
    %4975 = vmatprep.subr.mxu0 0.0
    %4976 = vmatpush1.msra.mxu0 0.0
    %4977 = vmatprep.subr.mxu0 0.0
    %4978 = vmatpush1.msra.mxu0 0.0
    %4979 = vmatprep.subr.mxu0 0.0
    %4980 = vmatpush1.msra.mxu0 0.0
    %4981 = vmatprep.subr.mxu0 0.0
    %4982 = vmatpush1.msra.mxu0 0.0
    %4983 = vmatprep.subr.mxu0 0.0
    %4984 = vmatpush1.msra.mxu0 0.0
    %4985 = vmatprep.subr.mxu0 0.0
    %4986 = vmatpush1.msra.mxu0 0.0
    %4987 = vmatprep.subr.mxu0 0.0
    %4988 = vmatpush1.msra.mxu0 0.0
    %4989 = vmatprep.subr.mxu0 0.0
    %4990 = vmatpush1.msra.mxu0 0.0
    %4991 = vmatprep.subr.mxu0 0.0
    %4992 = vmatpush1.msra.mxu0 0.0
    %4993 = vmatprep.mubr.f32.mxu0 0.0
    %4994 = vmatmul.mubr.f32.gmra.mrb[0].mxu0 %v4762
    %v4995 = vpop.f32.mrb[0].mxu0
    %v4996 = vadd.f32 %v4373, %v4995
    %v4997 = vpop.f32.mrb[0].mxu0
    %v4998 = vadd.f32 %v4377, %v4997
    %4999 = vdwg.mxu0
    %v5001 = vrot.slane %v4996, 6
    %v5003 = vadd.f32 %v4361, %v5001
    %v5004 = vxor.u32 %v5003, 2147483648
    %v5005 = vmul.f32 %v5004, 1.442695
    %v5006 = vpow.pop %v5005
    %v5007 = vadd.f32 %v5006, 1.0
    %v5008 = vrcp.pop %v5007
    %v5009 = vmul.f32 1.0, %v5008
    %v5011 = vrot.slane %v4998, 6
    %v5013 = vmul.f32 %v5009, %v5011
    %v5014 = vadd.f32 %v4363, %v5013
    %v5015 = vtanh.pop %v5014
    %v5016 = vsub.f32 1.0, %v5009
    %5018 = vrot.lane.b32.xlu0 %v5015, 64
    %v5019 = vpop.permute.xlu0 %5018
    %v5021 = vmul.f32 %v5016, %v5019
    %v5022 = vrot.slane %v4758, 6
    %v5024 = vmul.f32 %v5009, %v5022
    %v5025 = vadd.f32 %v5021, %v5024
    %v5027 = vrot.slane %v5025, 2
    %5028 = vrot.lane.b32.xlu0 %v5027, 64
    %v5029 = vpop.permute.xlu0 %5028
    %v5030 = vsel %vm2300, %v5029, 0
    %5032 = vmatprep.subr.mxu0 %v4160
    %5033 = vmatpush1.msra.mxu0 %v4159
    %5034 = vmatprep.subr.mxu0 %v4162
    %5035 = vmatpush1.msra.mxu0 %v4161
    %5036 = vmatprep.subr.mxu0 %v4164
    %5037 = vmatpush1.msra.mxu0 %v4163
    %5038 = vmatprep.subr.mxu0 %v4166
    %5039 = vmatpush1.msra.mxu0 %v4165
    %5040 = vmatprep.subr.mxu0 %v4168
    %5041 = vmatpush1.msra.mxu0 %v4167
    %5042 = vmatprep.subr.mxu0 %v4170
    %5043 = vmatpush1.msra.mxu0 %v4169
    %5044 = vmatprep.subr.mxu0 %v4172
    %5045 = vmatpush1.msra.mxu0 %v4171
    %5046 = vmatprep.subr.mxu0 %v4174
    %5047 = vmatpush1.msra.mxu0 %v4173
    %5048 = vmatprep.subr.mxu0 0.0
    %5049 = vmatpush1.msra.mxu0 0.0
    %5050 = vmatprep.subr.mxu0 0.0
    %5051 = vmatpush1.msra.mxu0 0.0
    %5052 = vmatprep.subr.mxu0 0.0
    %5053 = vmatpush1.msra.mxu0 0.0
    %5054 = vmatprep.subr.mxu0 0.0
    %5055 = vmatpush1.msra.mxu0 0.0
    %5056 = vmatprep.subr.mxu0 0.0
    %5057 = vmatpush1.msra.mxu0 0.0
    %5058 = vmatprep.subr.mxu0 0.0
    %5059 = vmatpush1.msra.mxu0 0.0
    %5060 = vmatprep.subr.mxu0 0.0
    %5061 = vmatpush1.msra.mxu0 0.0
    %5062 = vmatprep.subr.mxu0 0.0
    %5063 = vmatpush1.msra.mxu0 0.0
    %5064 = vmatprep.subr.mxu0 0.0
    %5065 = vmatpush1.msra.mxu0 0.0
    %5066 = vmatprep.subr.mxu0 0.0
    %5067 = vmatpush1.msra.mxu0 0.0
    %5068 = vmatprep.subr.mxu0 0.0
    %5069 = vmatpush1.msra.mxu0 0.0
    %5070 = vmatprep.subr.mxu0 0.0
    %5071 = vmatpush1.msra.mxu0 0.0
    %5072 = vmatprep.subr.mxu0 0.0
    %5073 = vmatpush1.msra.mxu0 0.0
    %5074 = vmatprep.subr.mxu0 0.0
    %5075 = vmatpush1.msra.mxu0 0.0
    %5076 = vmatprep.subr.mxu0 0.0
    %5077 = vmatpush1.msra.mxu0 0.0
    %5078 = vmatprep.subr.mxu0 0.0
    %5079 = vmatpush1.msra.mxu0 0.0
    %5080 = vmatprep.subr.mxu0 0.0
    %5081 = vmatpush1.msra.mxu0 0.0
    %5082 = vmatprep.subr.mxu0 0.0
    %5083 = vmatpush1.msra.mxu0 0.0
    %5084 = vmatprep.subr.mxu0 0.0
    %5085 = vmatpush1.msra.mxu0 0.0
    %5086 = vmatprep.subr.mxu0 0.0
    %5087 = vmatpush1.msra.mxu0 0.0
    %5088 = vmatprep.subr.mxu0 0.0
    %5089 = vmatpush1.msra.mxu0 0.0
    %5090 = vmatprep.subr.mxu0 0.0
    %5091 = vmatpush1.msra.mxu0 0.0
    %5092 = vmatprep.subr.mxu0 0.0
    %5093 = vmatpush1.msra.mxu0 0.0
    %5094 = vmatprep.subr.mxu0 0.0
    %5095 = vmatpush1.msra.mxu0 0.0
    %5096 = vmatprep.mubr.f32.mxu0 0.0
    %5097 = vmatmul.mubr.f32.gmra.mrb[0].mxu0 %v5030
    %v5098 = vpop.f32.mrb[0].mxu0
    %v5099 = vadd.f32 %v4480, %v5098
    %v5100 = vpop.f32.mrb[0].mxu0
    %v5101 = vadd.f32 %v4484, %v5100
    %5102 = vdwg.mxu0
    %5104 = vrot.lane.b32.xlu0 %v4928, 64
    %v5105 = vpop.permute.xlu0 %5104
    %v5106 = vsel %vm2300, %v5105, 0
    %5108 = vmatprep.subr.mxu0 %v4176
    %5109 = vmatpush1.msra.mxu0 %v4175
    %5110 = vmatprep.subr.mxu0 %v4178
    %5111 = vmatpush1.msra.mxu0 %v4177
    %5112 = vmatprep.subr.mxu0 %v4180
    %5113 = vmatpush1.msra.mxu0 %v4179
    %5114 = vmatprep.subr.mxu0 %v4182
    %5115 = vmatpush1.msra.mxu0 %v4181
    %5116 = vmatprep.subr.mxu0 %v4184
    %5117 = vmatpush1.msra.mxu0 %v4183
    %5118 = vmatprep.subr.mxu0 %v4186
    %5119 = vmatpush1.msra.mxu0 %v4185
    %5120 = vmatprep.subr.mxu0 %v4188
    %5121 = vmatpush1.msra.mxu0 %v4187
    %5122 = vmatprep.subr.mxu0 %v4190
    %5123 = vmatpush1.msra.mxu0 %v4189
    %5124 = vmatprep.subr.mxu0 0.0
    %5125 = vmatpush1.msra.mxu0 0.0
    %5126 = vmatprep.subr.mxu0 0.0
    %5127 = vmatpush1.msra.mxu0 0.0
    %5128 = vmatprep.subr.mxu0 0.0
    %5129 = vmatpush1.msra.mxu0 0.0
    %5130 = vmatprep.subr.mxu0 0.0
    %5131 = vmatpush1.msra.mxu0 0.0
    %5132 = vmatprep.subr.mxu0 0.0
    %5133 = vmatpush1.msra.mxu0 0.0
    %5134 = vmatprep.subr.mxu0 0.0
    %5135 = vmatpush1.msra.mxu0 0.0
    %5136 = vmatprep.subr.mxu0 0.0
    %5137 = vmatpush1.msra.mxu0 0.0
    %5138 = vmatprep.subr.mxu0 0.0
    %5139 = vmatpush1.msra.mxu0 0.0
    %5140 = vmatprep.subr.mxu0 0.0
    %5141 = vmatpush1.msra.mxu0 0.0
    %5142 = vmatprep.subr.mxu0 0.0
    %5143 = vmatpush1.msra.mxu0 0.0
    %5144 = vmatprep.subr.mxu0 0.0
    %5145 = vmatpush1.msra.mxu0 0.0
    %5146 = vmatprep.subr.mxu0 0.0
    %5147 = vmatpush1.msra.mxu0 0.0
    %5148 = vmatprep.subr.mxu0 0.0
    %5149 = vmatpush1.msra.mxu0 0.0
    %5150 = vmatprep.subr.mxu0 0.0
    %5151 = vmatpush1.msra.mxu0 0.0
    %5152 = vmatprep.subr.mxu0 0.0
    %5153 = vmatpush1.msra.mxu0 0.0
    %5154 = vmatprep.subr.mxu0 0.0
    %5155 = vmatpush1.msra.mxu0 0.0
    %5156 = vmatprep.subr.mxu0 0.0
    %5157 = vmatpush1.msra.mxu0 0.0
    %5158 = vmatprep.subr.mxu0 0.0
    %5159 = vmatpush1.msra.mxu0 0.0
    %5160 = vmatprep.subr.mxu0 0.0
    %5161 = vmatpush1.msra.mxu0 0.0
    %5162 = vmatprep.subr.mxu0 0.0
    %5163 = vmatpush1.msra.mxu0 0.0
    %5164 = vmatprep.subr.mxu0 0.0
    %5165 = vmatpush1.msra.mxu0 0.0
    %5166 = vmatprep.subr.mxu0 0.0
    %5167 = vmatpush1.msra.mxu0 0.0
    %5168 = vmatprep.subr.mxu0 0.0
    %5169 = vmatpush1.msra.mxu0 0.0
    %5170 = vmatprep.subr.mxu0 0.0
    %5171 = vmatpush1.msra.mxu0 0.0
    %5172 = vmatprep.mubr.f32.mxu0 0.0
    %5173 = vmatmul.mubr.f32.gmra.mrb[0].mxu0 %v5106
    %v5174 = vpop.f32.mrb[0].mxu0
    %v5175 = vadd.f32 %v4567, %v5174
    %v5176 = vpop.f32.mrb[0].mxu0
    %v5177 = vadd.f32 %v4571, %v5176
    %5178 = vdwg.mxu0
    %v5179 = vadd.f32 %v5099, %v5175
    %v5180 = vxor.u32 %v5179, 2147483648
    %v5181 = vmul.f32 %v5180, 1.442695
    %v5182 = vpow.pop %v5181
    %v5183 = vadd.f32 %v5182, 1.0
    %v5184 = vrcp.pop %v5183
    %v5185 = vmul.f32 1.0, %v5184
    %v5186 = vmul.f32 %v5185, %v5177
    %v5187 = vadd.f32 %v5101, %v5186
    %v5188 = vtanh.pop %v5187
    %v5189 = vsub.f32 1.0, %v5185
    %5191 = vrot.lane.b32.xlu0 %v5188, 64
    %v5192 = vpop.permute.xlu0 %5191
    %v5194 = vmul.f32 %v5189, %v5192
    %v5195 = vmul.f32 %v5185, %v4928
    %v5196 = vadd.f32 %v5194, %v5195
    %5197 = vmatprep.subr.mxu0 %v4142
    %5198 = vmatpush1.msra.mxu0 %v4141
    %5199 = vmatprep.subr.mxu0 %v4144
    %5200 = vmatpush1.msra.mxu0 %v4143
    %5201 = vmatprep.subr.mxu0 %v4146
    %5202 = vmatpush1.msra.mxu0 %v4145
    %5203 = vmatprep.subr.mxu0 %v4148
    %5204 = vmatpush1.msra.mxu0 %v4147
    %5205 = vmatprep.subr.mxu0 %v4150
    %5206 = vmatpush1.msra.mxu0 %v4149
    %5207 = vmatprep.subr.mxu0 %v4152
    %5208 = vmatpush1.msra.mxu0 %v4151
    %5209 = vmatprep.subr.mxu0 %v4154
    %5210 = vmatpush1.msra.mxu0 %v4153
    %5211 = vmatprep.subr.mxu0 %v4156
    %5212 = vmatpush1.msra.mxu0 %v4155
    %5213 = vmatprep.subr.mxu0 0.0
    %5214 = vmatpush1.msra.mxu0 0.0
    %5215 = vmatprep.subr.mxu0 0.0
    %5216 = vmatpush1.msra.mxu0 0.0
    %5217 = vmatprep.subr.mxu0 0.0
    %5218 = vmatpush1.msra.mxu0 0.0
    %5219 = vmatprep.subr.mxu0 0.0
    %5220 = vmatpush1.msra.mxu0 0.0
    %5221 = vmatprep.subr.mxu0 0.0
    %5222 = vmatpush1.msra.mxu0 0.0
    %5223 = vmatprep.subr.mxu0 0.0
    %5224 = vmatpush1.msra.mxu0 0.0
    %5225 = vmatprep.subr.mxu0 0.0
    %5226 = vmatpush1.msra.mxu0 0.0
    %5227 = vmatprep.subr.mxu0 0.0
    %5228 = vmatpush1.msra.mxu0 0.0
    %5229 = vmatprep.subr.mxu0 0.0
    %5230 = vmatpush1.msra.mxu0 0.0
    %5231 = vmatprep.subr.mxu0 0.0
    %5232 = vmatpush1.msra.mxu0 0.0
    %5233 = vmatprep.subr.mxu0 0.0
    %5234 = vmatpush1.msra.mxu0 0.0
    %5235 = vmatprep.subr.mxu0 0.0
    %5236 = vmatpush1.msra.mxu0 0.0
    %5237 = vmatprep.subr.mxu0 0.0
    %5238 = vmatpush1.msra.mxu0 0.0
    %5239 = vmatprep.subr.mxu0 0.0
    %5240 = vmatpush1.msra.mxu0 0.0
    %5241 = vmatprep.subr.mxu0 0.0
    %5242 = vmatpush1.msra.mxu0 0.0
    %5243 = vmatprep.subr.mxu0 0.0
    %5244 = vmatpush1.msra.mxu0 0.0
    %5245 = vmatprep.subr.mxu0 0.0
    %5246 = vmatpush1.msra.mxu0 0.0
    %5247 = vmatprep.subr.mxu0 0.0
    %5248 = vmatpush1.msra.mxu0 0.0
    %5249 = vmatprep.subr.mxu0 0.0
    %5250 = vmatpush1.msra.mxu0 0.0
    %5251 = vmatprep.subr.mxu0 0.0
    %5252 = vmatpush1.msra.mxu0 0.0
    %5253 = vmatprep.subr.mxu0 0.0
    %5254 = vmatpush1.msra.mxu0 0.0
    %5255 = vmatprep.subr.mxu0 0.0
    %5256 = vmatpush1.msra.mxu0 0.0
    %5257 = vmatprep.subr.mxu0 0.0
    %5258 = vmatpush1.msra.mxu0 0.0
    %5259 = vmatprep.subr.mxu0 0.0
    %5260 = vmatpush1.msra.mxu0 0.0
    %5261 = vmatprep.mubr.f32.mxu0 0.0
    %5262 = vmatmul.mubr.f32.gmra.mrb[0].mxu0 %v5030
    %v5263 = vpop.f32.mrb[0].mxu0
    %v5264 = vadd.f32 %v4373, %v5263
    %v5265 = vpop.f32.mrb[0].mxu0
    %v5266 = vadd.f32 %v4377, %v5265
    %5267 = vdwg.mxu0
    %v5269 = vrot.slane %v5264, 4
    %v5271 = vadd.f32 %v4361, %v5269
    %v5272 = vxor.u32 %v5271, 2147483648
    %v5273 = vmul.f32 %v5272, 1.442695
    %v5274 = vpow.pop %v5273
    %v5275 = vadd.f32 %v5274, 1.0
    %v5276 = vrcp.pop %v5275
    %v5277 = vmul.f32 1.0, %v5276
    %v5279 = vrot.slane %v5266, 4
    %v5281 = vmul.f32 %v5277, %v5279
    %v5282 = vadd.f32 %v4363, %v5281
    %v5283 = vtanh.pop %v5282
    %v5284 = vsub.f32 1.0, %v5277
    %5286 = vrot.lane.b32.xlu0 %v5283, 64
    %v5287 = vpop.permute.xlu0 %5286
    %v5289 = vmul.f32 %v5284, %v5287
    %v5290 = vrot.slane %v5025, 6
    %v5292 = vmul.f32 %v5277, %v5290
    %v5293 = vadd.f32 %v5289, %v5292
    %v5295 = vrot.slane %v5293, 4
    %5296 = vrot.lane.b32.xlu0 %v5295, 64
    %v5297 = vpop.permute.xlu0 %5296
    %v5298 = vsel %vm2300, %v5297, 0
    %5300 = vmatprep.subr.mxu0 %v4160
    %5301 = vmatpush1.msra.mxu0 %v4159
    %5302 = vmatprep.subr.mxu0 %v4162
    %5303 = vmatpush1.msra.mxu0 %v4161
    %5304 = vmatprep.subr.mxu0 %v4164
    %5305 = vmatpush1.msra.mxu0 %v4163
    %5306 = vmatprep.subr.mxu0 %v4166
    %5307 = vmatpush1.msra.mxu0 %v4165
    %5308 = vmatprep.subr.mxu0 %v4168
    %5309 = vmatpush1.msra.mxu0 %v4167
    %5310 = vmatprep.subr.mxu0 %v4170
    %5311 = vmatpush1.msra.mxu0 %v4169
    %5312 = vmatprep.subr.mxu0 %v4172
    %5313 = vmatpush1.msra.mxu0 %v4171
    %5314 = vmatprep.subr.mxu0 %v4174
    %5315 = vmatpush1.msra.mxu0 %v4173
    %5316 = vmatprep.subr.mxu0 0.0
    %5317 = vmatpush1.msra.mxu0 0.0
    %5318 = vmatprep.subr.mxu0 0.0
    %5319 = vmatpush1.msra.mxu0 0.0
    %5320 = vmatprep.subr.mxu0 0.0
    %5321 = vmatpush1.msra.mxu0 0.0
    %5322 = vmatprep.subr.mxu0 0.0
    %5323 = vmatpush1.msra.mxu0 0.0
    %5324 = vmatprep.subr.mxu0 0.0
    %5325 = vmatpush1.msra.mxu0 0.0
    %5326 = vmatprep.subr.mxu0 0.0
    %5327 = vmatpush1.msra.mxu0 0.0
    %5328 = vmatprep.subr.mxu0 0.0
    %5329 = vmatpush1.msra.mxu0 0.0
    %5330 = vmatprep.subr.mxu0 0.0
    %5331 = vmatpush1.msra.mxu0 0.0
    %5332 = vmatprep.subr.mxu0 0.0
    %5333 = vmatpush1.msra.mxu0 0.0
    %5334 = vmatprep.subr.mxu0 0.0
    %5335 = vmatpush1.msra.mxu0 0.0
    %5336 = vmatprep.subr.mxu0 0.0
    %5337 = vmatpush1.msra.mxu0 0.0
    %5338 = vmatprep.subr.mxu0 0.0
    %5339 = vmatpush1.msra.mxu0 0.0
    %5340 = vmatprep.subr.mxu0 0.0
    %5341 = vmatpush1.msra.mxu0 0.0
    %5342 = vmatprep.subr.mxu0 0.0
    %5343 = vmatpush1.msra.mxu0 0.0
    %5344 = vmatprep.subr.mxu0 0.0
    %5345 = vmatpush1.msra.mxu0 0.0
    %5346 = vmatprep.subr.mxu0 0.0
    %5347 = vmatpush1.msra.mxu0 0.0
    %5348 = vmatprep.subr.mxu0 0.0
    %5349 = vmatpush1.msra.mxu0 0.0
    %5350 = vmatprep.subr.mxu0 0.0
    %5351 = vmatpush1.msra.mxu0 0.0
    %5352 = vmatprep.subr.mxu0 0.0
    %5353 = vmatpush1.msra.mxu0 0.0
    %5354 = vmatprep.subr.mxu0 0.0
    %5355 = vmatpush1.msra.mxu0 0.0
    %5356 = vmatprep.subr.mxu0 0.0
    %5357 = vmatpush1.msra.mxu0 0.0
    %5358 = vmatprep.subr.mxu0 0.0
    %5359 = vmatpush1.msra.mxu0 0.0
    %5360 = vmatprep.subr.mxu0 0.0
    %5361 = vmatpush1.msra.mxu0 0.0
    %5362 = vmatprep.subr.mxu0 0.0
    %5363 = vmatpush1.msra.mxu0 0.0
    %5364 = vmatprep.mubr.f32.mxu0 0.0
    %5365 = vmatmul.mubr.f32.gmra.mrb[0].mxu0 %v5298
    %v5366 = vpop.f32.mrb[0].mxu0
    %v5367 = vadd.f32 %v4480, %v5366
    %v5368 = vpop.f32.mrb[0].mxu0
    %v5369 = vadd.f32 %v4484, %v5368
    %5370 = vdwg.mxu0
    %5372 = vrot.lane.b32.xlu0 %v5196, 64
    %v5373 = vpop.permute.xlu0 %5372
    %v5374 = vsel %vm2300, %v5373, 0
    %5376 = vmatprep.subr.mxu0 %v4176
    %5377 = vmatpush1.msra.mxu0 %v4175
    %5378 = vmatprep.subr.mxu0 %v4178
    %5379 = vmatpush1.msra.mxu0 %v4177
    %5380 = vmatprep.subr.mxu0 %v4180
    %5381 = vmatpush1.msra.mxu0 %v4179
    %5382 = vmatprep.subr.mxu0 %v4182
    %5383 = vmatpush1.msra.mxu0 %v4181
    %5384 = vmatprep.subr.mxu0 %v4184
    %5385 = vmatpush1.msra.mxu0 %v4183
    %5386 = vmatprep.subr.mxu0 %v4186
    %5387 = vmatpush1.msra.mxu0 %v4185
    %5388 = vmatprep.subr.mxu0 %v4188
    %5389 = vmatpush1.msra.mxu0 %v4187
    %5390 = vmatprep.subr.mxu0 %v4190
    %5391 = vmatpush1.msra.mxu0 %v4189
    %5392 = vmatprep.subr.mxu0 0.0
    %5393 = vmatpush1.msra.mxu0 0.0
    %5394 = vmatprep.subr.mxu0 0.0
    %5395 = vmatpush1.msra.mxu0 0.0
    %5396 = vmatprep.subr.mxu0 0.0
    %5397 = vmatpush1.msra.mxu0 0.0
    %5398 = vmatprep.subr.mxu0 0.0
    %5399 = vmatpush1.msra.mxu0 0.0
    %5400 = vmatprep.subr.mxu0 0.0
    %5401 = vmatpush1.msra.mxu0 0.0
    %5402 = vmatprep.subr.mxu0 0.0
    %5403 = vmatpush1.msra.mxu0 0.0
    %5404 = vmatprep.subr.mxu0 0.0
    %5405 = vmatpush1.msra.mxu0 0.0
    %5406 = vmatprep.subr.mxu0 0.0
    %5407 = vmatpush1.msra.mxu0 0.0
    %5408 = vmatprep.subr.mxu0 0.0
    %5409 = vmatpush1.msra.mxu0 0.0
    %5410 = vmatprep.subr.mxu0 0.0
    %5411 = vmatpush1.msra.mxu0 0.0
    %5412 = vmatprep.subr.mxu0 0.0
    %5413 = vmatpush1.msra.mxu0 0.0
    %5414 = vmatprep.subr.mxu0 0.0
    %5415 = vmatpush1.msra.mxu0 0.0
    %5416 = vmatprep.subr.mxu0 0.0
    %5417 = vmatpush1.msra.mxu0 0.0
    %5418 = vmatprep.subr.mxu0 0.0
    %5419 = vmatpush1.msra.mxu0 0.0
    %5420 = vmatprep.subr.mxu0 0.0
    %5421 = vmatpush1.msra.mxu0 0.0
    %5422 = vmatprep.subr.mxu0 0.0
    %5423 = vmatpush1.msra.mxu0 0.0
    %5424 = vmatprep.subr.mxu0 0.0
    %5425 = vmatpush1.msra.mxu0 0.0
    %5426 = vmatprep.subr.mxu0 0.0
    %5427 = vmatpush1.msra.mxu0 0.0
    %5428 = vmatprep.subr.mxu0 0.0
    %5429 = vmatpush1.msra.mxu0 0.0
    %5430 = vmatprep.subr.mxu0 0.0
    %5431 = vmatpush1.msra.mxu0 0.0
    %5432 = vmatprep.subr.mxu0 0.0
    %5433 = vmatpush1.msra.mxu0 0.0
    %5434 = vmatprep.subr.mxu0 0.0
    %5435 = vmatpush1.msra.mxu0 0.0
    %5436 = vmatprep.subr.mxu0 0.0
    %5437 = vmatpush1.msra.mxu0 0.0
    %5438 = vmatprep.subr.mxu0 0.0
    %5439 = vmatpush1.msra.mxu0 0.0
    %5440 = vmatprep.mubr.f32.mxu0 0.0
    %5441 = vmatmul.mubr.f32.gmra.mrb[0].mxu0 %v5374
    %v5442 = vpop.f32.mrb[0].mxu0
    %v5443 = vadd.f32 %v4567, %v5442
    %v5444 = vpop.f32.mrb[0].mxu0
    %v5445 = vadd.f32 %v4571, %v5444
    %5446 = vdwg.mxu0
    %v5447 = vadd.f32 %v5367, %v5443
    %v5448 = vxor.u32 %v5447, 2147483648
    %v5449 = vmul.f32 %v5448, 1.442695
    %v5450 = vpow.pop %v5449
    %v5451 = vadd.f32 %v5450, 1.0
    %v5452 = vrcp.pop %v5451
    %v5453 = vmul.f32 1.0, %v5452
    %v5454 = vmul.f32 %v5453, %v5445
    %v5455 = vadd.f32 %v5369, %v5454
    %v5456 = vtanh.pop %v5455
    %v5457 = vsub.f32 1.0, %v5453
    %5459 = vrot.lane.b32.xlu0 %v5456, 64
    %v5460 = vpop.permute.xlu0 %5459
    %v5462 = vmul.f32 %v5457, %v5460
    %v5463 = vmul.f32 %v5453, %v5196
    %v5464 = vadd.f32 %v5462, %v5463
    %5465 = vmatprep.subr.mxu0 %v4142
    %5466 = vmatpush1.msra.mxu0 %v4141
    %5467 = vmatprep.subr.mxu0 %v4144
    %5468 = vmatpush1.msra.mxu0 %v4143
    %5469 = vmatprep.subr.mxu0 %v4146
    %5470 = vmatpush1.msra.mxu0 %v4145
    %5471 = vmatprep.subr.mxu0 %v4148
    %5472 = vmatpush1.msra.mxu0 %v4147
    %5473 = vmatprep.subr.mxu0 %v4150
    %5474 = vmatpush1.msra.mxu0 %v4149
    %5475 = vmatprep.subr.mxu0 %v4152
    %5476 = vmatpush1.msra.mxu0 %v4151
    %5477 = vmatprep.subr.mxu0 %v4154
    %5478 = vmatpush1.msra.mxu0 %v4153
    %5479 = vmatprep.subr.mxu0 %v4156
    %5480 = vmatpush1.msra.mxu0 %v4155
    %5481 = vmatprep.subr.mxu0 0.0
    %5482 = vmatpush1.msra.mxu0 0.0
    %5483 = vmatprep.subr.mxu0 0.0
    %5484 = vmatpush1.msra.mxu0 0.0
    %5485 = vmatprep.subr.mxu0 0.0
    %5486 = vmatpush1.msra.mxu0 0.0
    %5487 = vmatprep.subr.mxu0 0.0
    %5488 = vmatpush1.msra.mxu0 0.0
    %5489 = vmatprep.subr.mxu0 0.0
    %5490 = vmatpush1.msra.mxu0 0.0
    %5491 = vmatprep.subr.mxu0 0.0
    %5492 = vmatpush1.msra.mxu0 0.0
    %5493 = vmatprep.subr.mxu0 0.0
    %5494 = vmatpush1.msra.mxu0 0.0
    %5495 = vmatprep.subr.mxu0 0.0
    %5496 = vmatpush1.msra.mxu0 0.0
    %5497 = vmatprep.subr.mxu0 0.0
    %5498 = vmatpush1.msra.mxu0 0.0
    %5499 = vmatprep.subr.mxu0 0.0
    %5500 = vmatpush1.msra.mxu0 0.0
    %5501 = vmatprep.subr.mxu0 0.0
    %5502 = vmatpush1.msra.mxu0 0.0
    %5503 = vmatprep.subr.mxu0 0.0
    %5504 = vmatpush1.msra.mxu0 0.0
    %5505 = vmatprep.subr.mxu0 0.0
    %5506 = vmatpush1.msra.mxu0 0.0
    %5507 = vmatprep.subr.mxu0 0.0
    %5508 = vmatpush1.msra.mxu0 0.0
    %5509 = vmatprep.subr.mxu0 0.0
    %5510 = vmatpush1.msra.mxu0 0.0
    %5511 = vmatprep.subr.mxu0 0.0
    %5512 = vmatpush1.msra.mxu0 0.0
    %5513 = vmatprep.subr.mxu0 0.0
    %5514 = vmatpush1.msra.mxu0 0.0
    %5515 = vmatprep.subr.mxu0 0.0
    %5516 = vmatpush1.msra.mxu0 0.0
    %5517 = vmatprep.subr.mxu0 0.0
    %5518 = vmatpush1.msra.mxu0 0.0
    %5519 = vmatprep.subr.mxu0 0.0
    %5520 = vmatpush1.msra.mxu0 0.0
    %5521 = vmatprep.subr.mxu0 0.0
    %5522 = vmatpush1.msra.mxu0 0.0
    %5523 = vmatprep.subr.mxu0 0.0
    %5524 = vmatpush1.msra.mxu0 0.0
    %5525 = vmatprep.subr.mxu0 0.0
    %5526 = vmatpush1.msra.mxu0 0.0
    %5527 = vmatprep.subr.mxu0 0.0
    %5528 = vmatpush1.msra.mxu0 0.0
    %5529 = vmatprep.mubr.f32.mxu0 0.0
    %5530 = vmatmul.mubr.f32.gmra.mrb[0].mxu0 %v5298
    %v5531 = vpop.f32.mrb[0].mxu0
    %v5532 = vadd.f32 %v4373, %v5531
    %v5533 = vpop.f32.mrb[0].mxu0
    %v5534 = vadd.f32 %v4377, %v5533
    %5535 = vdwg.mxu0
    %v5537 = vrot.slane %v5532, 2
    %v5539 = vadd.f32 %v4361, %v5537
    %v5540 = vxor.u32 %v5539, 2147483648
    %v5541 = vmul.f32 %v5540, 1.442695
    %v5542 = vpow.pop %v5541
    %v5543 = vadd.f32 %v5542, 1.0
    %v5544 = vrcp.pop %v5543
    %v5545 = vmul.f32 1.0, %v5544
    %v5547 = vrot.slane %v5534, 2
    %v5549 = vmul.f32 %v5545, %v5547
    %v5550 = vadd.f32 %v4363, %v5549
    %v5551 = vtanh.pop %v5550
    %v5552 = vsub.f32 1.0, %v5545
    %5554 = vrot.lane.b32.xlu0 %v5551, 64
    %v5555 = vpop.permute.xlu0 %5554
    %v5557 = vmul.f32 %v5552, %v5555
    %v5558 = vrot.slane %v5293, 6
    %v5560 = vmul.f32 %v5545, %v5558
    %v5561 = vadd.f32 %v5557, %v5560
    %v5563 = vrot.slane %v5561, 6
    %5564 = vrot.lane.b32.xlu0 %v5563, 64
    %v5565 = vpop.permute.xlu0 %5564
    %v5566 = vsel %vm2300, %v5565, 0
    %5568 = vmatprep.subr.mxu0 %v4160
    %5569 = vmatpush1.msra.mxu0 %v4159
    %5570 = vmatprep.subr.mxu0 %v4162
    %5571 = vmatpush1.msra.mxu0 %v4161
    %5572 = vmatprep.subr.mxu0 %v4164
    %5573 = vmatpush1.msra.mxu0 %v4163
    %5574 = vmatprep.subr.mxu0 %v4166
    %5575 = vmatpush1.msra.mxu0 %v4165
    %5576 = vmatprep.subr.mxu0 %v4168
    %5577 = vmatpush1.msra.mxu0 %v4167
    %5578 = vmatprep.subr.mxu0 %v4170
    %5579 = vmatpush1.msra.mxu0 %v4169
    %5580 = vmatprep.subr.mxu0 %v4172
    %5581 = vmatpush1.msra.mxu0 %v4171
    %5582 = vmatprep.subr.mxu0 %v4174
    %5583 = vmatpush1.msra.mxu0 %v4173
    %5584 = vmatprep.subr.mxu0 0.0
    %5585 = vmatpush1.msra.mxu0 0.0
    %5586 = vmatprep.subr.mxu0 0.0
    %5587 = vmatpush1.msra.mxu0 0.0
    %5588 = vmatprep.subr.mxu0 0.0
    %5589 = vmatpush1.msra.mxu0 0.0
    %5590 = vmatprep.subr.mxu0 0.0
    %5591 = vmatpush1.msra.mxu0 0.0
    %5592 = vmatprep.subr.mxu0 0.0
    %5593 = vmatpush1.msra.mxu0 0.0
    %5594 = vmatprep.subr.mxu0 0.0
    %5595 = vmatpush1.msra.mxu0 0.0
    %5596 = vmatprep.subr.mxu0 0.0
    %5597 = vmatpush1.msra.mxu0 0.0
    %5598 = vmatprep.subr.mxu0 0.0
    %5599 = vmatpush1.msra.mxu0 0.0
    %5600 = vmatprep.subr.mxu0 0.0
    %5601 = vmatpush1.msra.mxu0 0.0
    %5602 = vmatprep.subr.mxu0 0.0
    %5603 = vmatpush1.msra.mxu0 0.0
    %5604 = vmatprep.subr.mxu0 0.0
    %5605 = vmatpush1.msra.mxu0 0.0
    %5606 = vmatprep.subr.mxu0 0.0
    %5607 = vmatpush1.msra.mxu0 0.0
    %5608 = vmatprep.subr.mxu0 0.0
    %5609 = vmatpush1.msra.mxu0 0.0
    %5610 = vmatprep.subr.mxu0 0.0
    %5611 = vmatpush1.msra.mxu0 0.0
    %5612 = vmatprep.subr.mxu0 0.0
    %5613 = vmatpush1.msra.mxu0 0.0
    %5614 = vmatprep.subr.mxu0 0.0
    %5615 = vmatpush1.msra.mxu0 0.0
    %5616 = vmatprep.subr.mxu0 0.0
    %5617 = vmatpush1.msra.mxu0 0.0
    %5618 = vmatprep.subr.mxu0 0.0
    %5619 = vmatpush1.msra.mxu0 0.0
    %5620 = vmatprep.subr.mxu0 0.0
    %5621 = vmatpush1.msra.mxu0 0.0
    %5622 = vmatprep.subr.mxu0 0.0
    %5623 = vmatpush1.msra.mxu0 0.0
    %5624 = vmatprep.subr.mxu0 0.0
    %5625 = vmatpush1.msra.mxu0 0.0
    %5626 = vmatprep.subr.mxu0 0.0
    %5627 = vmatpush1.msra.mxu0 0.0
    %5628 = vmatprep.subr.mxu0 0.0
    %5629 = vmatpush1.msra.mxu0 0.0
    %5630 = vmatprep.subr.mxu0 0.0
    %5631 = vmatpush1.msra.mxu0 0.0
    %5632 = vmatprep.mubr.f32.mxu0 0.0
    %5633 = vmatmul.mubr.f32.gmra.mrb[0].mxu0 %v5566
    %v5634 = vpop.f32.mrb[0].mxu0
    %v5635 = vadd.f32 %v4480, %v5634
    %v5636 = vpop.f32.mrb[0].mxu0
    %v5637 = vadd.f32 %v4484, %v5636
    %5638 = vdwg.mxu0
    %5640 = vrot.lane.b32.xlu0 %v5464, 64
    %v5641 = vpop.permute.xlu0 %5640
    %v5642 = vsel %vm2300, %v5641, 0
    %5644 = vmatprep.subr.mxu0 %v4176
    %5645 = vmatpush1.msra.mxu0 %v4175
    %5646 = vmatprep.subr.mxu0 %v4178
    %5647 = vmatpush1.msra.mxu0 %v4177
    %5648 = vmatprep.subr.mxu0 %v4180
    %5649 = vmatpush1.msra.mxu0 %v4179
    %5650 = vmatprep.subr.mxu0 %v4182
    %5651 = vmatpush1.msra.mxu0 %v4181
    %5652 = vmatprep.subr.mxu0 %v4184
    %5653 = vmatpush1.msra.mxu0 %v4183
    %5654 = vmatprep.subr.mxu0 %v4186
    %5655 = vmatpush1.msra.mxu0 %v4185
    %5656 = vmatprep.subr.mxu0 %v4188
    %5657 = vmatpush1.msra.mxu0 %v4187
    %5658 = vmatprep.subr.mxu0 %v4190
    %5659 = vmatpush1.msra.mxu0 %v4189
    %5660 = vmatprep.subr.mxu0 0.0
    %5661 = vmatpush1.msra.mxu0 0.0
    %5662 = vmatprep.subr.mxu0 0.0
    %5663 = vmatpush1.msra.mxu0 0.0
    %5664 = vmatprep.subr.mxu0 0.0
    %5665 = vmatpush1.msra.mxu0 0.0
    %5666 = vmatprep.subr.mxu0 0.0
    %5667 = vmatpush1.msra.mxu0 0.0
    %5668 = vmatprep.subr.mxu0 0.0
    %5669 = vmatpush1.msra.mxu0 0.0
    %5670 = vmatprep.subr.mxu0 0.0
    %5671 = vmatpush1.msra.mxu0 0.0
    %5672 = vmatprep.subr.mxu0 0.0
    %5673 = vmatpush1.msra.mxu0 0.0
    %5674 = vmatprep.subr.mxu0 0.0
    %5675 = vmatpush1.msra.mxu0 0.0
    %5676 = vmatprep.subr.mxu0 0.0
    %5677 = vmatpush1.msra.mxu0 0.0
    %5678 = vmatprep.subr.mxu0 0.0
    %5679 = vmatpush1.msra.mxu0 0.0
    %5680 = vmatprep.subr.mxu0 0.0
    %5681 = vmatpush1.msra.mxu0 0.0
    %5682 = vmatprep.subr.mxu0 0.0
    %5683 = vmatpush1.msra.mxu0 0.0
    %5684 = vmatprep.subr.mxu0 0.0
    %5685 = vmatpush1.msra.mxu0 0.0
    %5686 = vmatprep.subr.mxu0 0.0
    %5687 = vmatpush1.msra.mxu0 0.0
    %5688 = vmatprep.subr.mxu0 0.0
    %5689 = vmatpush1.msra.mxu0 0.0
    %5690 = vmatprep.subr.mxu0 0.0
    %5691 = vmatpush1.msra.mxu0 0.0
    %5692 = vmatprep.subr.mxu0 0.0
    %5693 = vmatpush1.msra.mxu0 0.0
    %5694 = vmatprep.subr.mxu0 0.0
    %5695 = vmatpush1.msra.mxu0 0.0
    %5696 = vmatprep.subr.mxu0 0.0
    %5697 = vmatpush1.msra.mxu0 0.0
    %5698 = vmatprep.subr.mxu0 0.0
    %5699 = vmatpush1.msra.mxu0 0.0
    %5700 = vmatprep.subr.mxu0 0.0
    %5701 = vmatpush1.msra.mxu0 0.0
    %5702 = vmatprep.subr.mxu0 0.0
    %5703 = vmatpush1.msra.mxu0 0.0
    %5704 = vmatprep.subr.mxu0 0.0
    %5705 = vmatpush1.msra.mxu0 0.0
    %5706 = vmatprep.subr.mxu0 0.0
    %5707 = vmatpush1.msra.mxu0 0.0
    %5708 = vmatprep.mubr.f32.mxu0 0.0
    %5709 = vmatmul.mubr.f32.gmra.mrb[0].mxu0 %v5642
    %v5710 = vpop.f32.mrb[0].mxu0
    %v5711 = vadd.f32 %v4567, %v5710
    %v5712 = vpop.f32.mrb[0].mxu0
    %v5713 = vadd.f32 %v4571, %v5712
    %5714 = vdwg.mxu0
    %v5715 = vadd.f32 %v5635, %v5711
    %v5716 = vxor.u32 %v5715, 2147483648
    %v5717 = vmul.f32 %v5716, 1.442695
    %v5718 = vpow.pop %v5717
    %v5719 = vadd.f32 %v5718, 1.0
    %v5720 = vrcp.pop %v5719
    %v5721 = vmul.f32 1.0, %v5720
    %v5722 = vmul.f32 %v5721, %v5713
    %v5723 = vadd.f32 %v5637, %v5722
    %v5724 = vtanh.pop %v5723
    %v5725 = vsub.f32 1.0, %v5721
    %5727 = vrot.lane.b32.xlu0 %v5724, 64
    %v5728 = vpop.permute.xlu0 %5727
    %v5730 = vmul.f32 %v5725, %v5728
    %v5731 = vmul.f32 %v5721, %v5464
    %v5732 = vadd.f32 %v5730, %v5731
    %v5733 = vsel %vm2253, %v4475, %v5022
    %v5734 = vsel %vm2255, %v5733, %v5290
    %v5735 = vsel %vm2257, %v5734, %v5558
    %v5736 = vrot.slane %v4928, 6
    %v5738 = vrot.slane %v5196, 4
    %v5740 = vrot.slane %v5464, 2
    %v5742 = vsel %vm2253, %v4669, %v5736
    %v5743 = vsel %vm2255, %v5742, %v5738
    %v5744 = vsel %vm2257, %v5743, %v5740
    %v5745 = vld [vmem:[#allocation17] sm:$0xff]
    %v5746 = vld [vmem:[#allocation17 + $0x8] sm:$0xff]
    %v5747 = vld [vmem:[#allocation17 + $0x10] sm:$0xff]
    %v5748 = vld [vmem:[#allocation17 + $0x18] sm:$0xff]
    %v5749 = vld [vmem:[#allocation17 + $0x20] sm:$0xff]
    %v5750 = vld [vmem:[#allocation17 + $0x28] sm:$0xff]
    %v5751 = vld [vmem:[#allocation17 + $0x30] sm:$0xff]
    %v5752 = vld [vmem:[#allocation17 + $0x38] sm:$0xff]
    %v5753 = vld [vmem:[#allocation17 + $0x40] sm:$0xff]
    %v5754 = vld [vmem:[#allocation17 + $0x48] sm:$0xff]
    %v5755 = vld [vmem:[#allocation17 + $0x50] sm:$0xff]
    %v5756 = vld [vmem:[#allocation17 + $0x58] sm:$0xff]
    %v5757 = vld [vmem:[#allocation17 + $0x60] sm:$0xff]
    %v5758 = vld [vmem:[#allocation17 + $0x68] sm:$0xff]
    %v5759 = vld [vmem:[#allocation17 + $0x70] sm:$0xff]
    %v5760 = vld [vmem:[#allocation17 + $0x78] sm:$0xff]
    %v5761 = vld [vmem:[#allocation19] sm:$0x3]
    %v5763 = vlaneseq
    %v5764 = vshrl.u32 %v5763, 7
    %v5765 = vsub.s32 0, %v5764
    %v5766 = vrot.slane %v5761, %v5765
    %v5767 = vlaneseq
    %v5768 = vshrl.u32 %v5767, 7
    %v5769 = vsub.s32 1, %v5768
    %v5770 = vrot.slane %v5761, %v5769
    %5774 = vrot.lane.b32.xlu0 %v5735, 64
    %v5775 = vpop.permute.xlu0 %5774
    %v5776 = vsel %vm2300, %v5775, 0
    %5778 = vmatprep.subr.mxu0 %v5746
    %5779 = vmatpush1.msra.mxu0 %v5745
    %5780 = vmatprep.subr.mxu0 %v5748
    %5781 = vmatpush1.msra.mxu0 %v5747
    %5782 = vmatprep.subr.mxu0 %v5750
    %5783 = vmatpush1.msra.mxu0 %v5749
    %5784 = vmatprep.subr.mxu0 %v5752
    %5785 = vmatpush1.msra.mxu0 %v5751
    %5786 = vmatprep.subr.mxu0 %v5754
    %5787 = vmatpush1.msra.mxu0 %v5753
    %5788 = vmatprep.subr.mxu0 %v5756
    %5789 = vmatpush1.msra.mxu0 %v5755
    %5790 = vmatprep.subr.mxu0 %v5758
    %5791 = vmatpush1.msra.mxu0 %v5757
    %5792 = vmatprep.subr.mxu0 %v5760
    %5793 = vmatpush1.msra.mxu0 %v5759
    %5794 = vmatprep.subr.mxu0 0.0
    %5795 = vmatpush1.msra.mxu0 0.0
    %5796 = vmatprep.subr.mxu0 0.0
    %5797 = vmatpush1.msra.mxu0 0.0
    %5798 = vmatprep.subr.mxu0 0.0
    %5799 = vmatpush1.msra.mxu0 0.0
    %5800 = vmatprep.subr.mxu0 0.0
    %5801 = vmatpush1.msra.mxu0 0.0
    %5802 = vmatprep.subr.mxu0 0.0
    %5803 = vmatpush1.msra.mxu0 0.0
    %5804 = vmatprep.subr.mxu0 0.0
    %5805 = vmatpush1.msra.mxu0 0.0
    %5806 = vmatprep.subr.mxu0 0.0
    %5807 = vmatpush1.msra.mxu0 0.0
    %5808 = vmatprep.subr.mxu0 0.0
    %5809 = vmatpush1.msra.mxu0 0.0
    %5810 = vmatprep.subr.mxu0 0.0
    %5811 = vmatpush1.msra.mxu0 0.0
    %5812 = vmatprep.subr.mxu0 0.0
    %5813 = vmatpush1.msra.mxu0 0.0
    %5814 = vmatprep.subr.mxu0 0.0
    %5815 = vmatpush1.msra.mxu0 0.0
    %5816 = vmatprep.subr.mxu0 0.0
    %5817 = vmatpush1.msra.mxu0 0.0
    %5818 = vmatprep.subr.mxu0 0.0
    %5819 = vmatpush1.msra.mxu0 0.0
    %5820 = vmatprep.subr.mxu0 0.0
    %5821 = vmatpush1.msra.mxu0 0.0
    %5822 = vmatprep.subr.mxu0 0.0
    %5823 = vmatpush1.msra.mxu0 0.0
    %5824 = vmatprep.subr.mxu0 0.0
    %5825 = vmatpush1.msra.mxu0 0.0
    %5826 = vmatprep.subr.mxu0 0.0
    %5827 = vmatpush1.msra.mxu0 0.0
    %5828 = vmatprep.subr.mxu0 0.0
    %5829 = vmatpush1.msra.mxu0 0.0
    %5830 = vmatprep.subr.mxu0 0.0
    %5831 = vmatpush1.msra.mxu0 0.0
    %5832 = vmatprep.subr.mxu0 0.0
    %5833 = vmatpush1.msra.mxu0 0.0
    %5834 = vmatprep.subr.mxu0 0.0
    %5835 = vmatpush1.msra.mxu0 0.0
    %5836 = vmatprep.subr.mxu0 0.0
    %5837 = vmatpush1.msra.mxu0 0.0
    %5838 = vmatprep.subr.mxu0 0.0
    %5839 = vmatpush1.msra.mxu0 0.0
    %5840 = vmatprep.subr.mxu0 0.0
    %5841 = vmatpush1.msra.mxu0 0.0
    %5842 = vmatprep.mubr.f32.mxu0 0.0
    %5843 = vmatmul.mubr.f32.gmra.mrb[0].mxu0 %v5776
    %v5844 = vpop.f32.mrb[0].mxu0
    %v5845 = vadd.f32 %v5766, %v5844
    %v5846 = vpop.f32.mrb[0].mxu0
    %v5847 = vadd.f32 %v5770, %v5846
    %5848 = vmatprep.mubr.f32.mxu0 0.0
    %5849 = vmatmul.mubr.f32.gmra.mrb[0].mxu0 %v5566
    %v5850 = vpop.f32.mrb[0].mxu0
    %v5851 = vadd.f32 %v5766, %v5850
    %v5852 = vpop.f32.mrb[0].mxu0
    %v5853 = vadd.f32 %v5770, %v5852
    %5854 = vdwg.mxu0
    %v5855 = vld [vmem:[%s43] sm:$0xff]
    %v5856 = vld [vmem:[%s43 + $0x8] sm:$0xff]
    %v5857 = vld [vmem:[%s43 + $0x10] sm:$0xff]
    %v5858 = vld [vmem:[%s43 + $0x18] sm:$0xff]
    %v5859 = vld [vmem:[%s43 + $0x20] sm:$0xff]
    %v5860 = vld [vmem:[%s43 + $0x28] sm:$0xff]
    %v5861 = vld [vmem:[%s43 + $0x30] sm:$0xff]
    %v5862 = vld [vmem:[%s43 + $0x38] sm:$0xff]
    %v5863 = vld [vmem:[%s43 + $0x40] sm:$0xff]
    %v5864 = vld [vmem:[%s43 + $0x48] sm:$0xff]
    %v5865 = vld [vmem:[%s43 + $0x50] sm:$0xff]
    %v5866 = vld [vmem:[%s43 + $0x58] sm:$0xff]
    %v5867 = vld [vmem:[%s43 + $0x60] sm:$0xff]
    %v5868 = vld [vmem:[%s43 + $0x68] sm:$0xff]
    %v5869 = vld [vmem:[%s43 + $0x70] sm:$0xff]
    %v5870 = vld [vmem:[%s43 + $0x78] sm:$0xff]
    %v5871 = vld [vmem:[%s43 + $0x80] sm:$0xff]
    %v5872 = vld [vmem:[%s43 + $0x88] sm:$0xff]
    %v5873 = vld [vmem:[%s43 + $0x90] sm:$0xff]
    %v5874 = vld [vmem:[%s43 + $0x98] sm:$0xff]
    %v5875 = vld [vmem:[%s43 + $0xa0] sm:$0xff]
    %v5876 = vld [vmem:[%s43 + $0xa8] sm:$0xff]
    %v5877 = vld [vmem:[%s43 + $0xb0] sm:$0xff]
    %v5878 = vld [vmem:[%s43 + $0xb8] sm:$0xff]
    %v5879 = vld [vmem:[%s43 + $0xc0] sm:$0xff]
    %v5880 = vld [vmem:[%s43 + $0xc8] sm:$0xff]
    %v5881 = vld [vmem:[%s43 + $0xd0] sm:$0xff]
    %v5882 = vld [vmem:[%s43 + $0xd8] sm:$0xff]
    %v5883 = vld [vmem:[%s43 + $0xe0] sm:$0xff]
    %v5884 = vld [vmem:[%s43 + $0xe8] sm:$0xff]
    %v5885 = vld [vmem:[%s43 + $0xf0] sm:$0xff]
    %v5886 = vld [vmem:[%s43 + $0xf8] sm:$0xff]
    %v5887 = vld [vmem:[#allocation20] sm:$0x1]
    %v5889 = vlaneseq
    %v5890 = vshrl.u32 %v5889, 7
    %v5891 = vsub.s32 0, %v5890
    %v5892 = vrot.slane %v5887, %v5891
    %5894 = vmatprep.subr.mxu0 0.0
    %5895 = vmatpush1.msra.mxu0 %v5855
    %5896 = vmatprep.subr.mxu0 0.0
    %5897 = vmatpush1.msra.mxu0 %v5856
    %5898 = vmatprep.subr.mxu0 0.0
    %5899 = vmatpush1.msra.mxu0 %v5857
    %5900 = vmatprep.subr.mxu0 0.0
    %5901 = vmatpush1.msra.mxu0 %v5858
    %5902 = vmatprep.subr.mxu0 0.0
    %5903 = vmatpush1.msra.mxu0 %v5859
    %5904 = vmatprep.subr.mxu0 0.0
    %5905 = vmatpush1.msra.mxu0 %v5860
    %5906 = vmatprep.subr.mxu0 0.0
    %5907 = vmatpush1.msra.mxu0 %v5861
    %5908 = vmatprep.subr.mxu0 0.0
    %5909 = vmatpush1.msra.mxu0 %v5862
    %5910 = vmatprep.subr.mxu0 0.0
    %5911 = vmatpush1.msra.mxu0 %v5863
    %5912 = vmatprep.subr.mxu0 0.0
    %5913 = vmatpush1.msra.mxu0 %v5864
    %5914 = vmatprep.subr.mxu0 0.0
    %5915 = vmatpush1.msra.mxu0 %v5865
    %5916 = vmatprep.subr.mxu0 0.0
    %5917 = vmatpush1.msra.mxu0 %v5866
    %5918 = vmatprep.subr.mxu0 0.0
    %5919 = vmatpush1.msra.mxu0 %v5867
    %5920 = vmatprep.subr.mxu0 0.0
    %5921 = vmatpush1.msra.mxu0 %v5868
    %5922 = vmatprep.subr.mxu0 0.0
    %5923 = vmatpush1.msra.mxu0 %v5869
    %5924 = vmatprep.subr.mxu0 0.0
    %5925 = vmatpush1.msra.mxu0 %v5870
    %5926 = vmatprep.subr.mxu0 0.0
    %5927 = vmatpush1.msra.mxu0 %v5871
    %5928 = vmatprep.subr.mxu0 0.0
    %5929 = vmatpush1.msra.mxu0 %v5872
    %5930 = vmatprep.subr.mxu0 0.0
    %5931 = vmatpush1.msra.mxu0 %v5873
    %5932 = vmatprep.subr.mxu0 0.0
    %5933 = vmatpush1.msra.mxu0 %v5874
    %5934 = vmatprep.subr.mxu0 0.0
    %5935 = vmatpush1.msra.mxu0 %v5875
    %5936 = vmatprep.subr.mxu0 0.0
    %5937 = vmatpush1.msra.mxu0 %v5876
    %5938 = vmatprep.subr.mxu0 0.0
    %5939 = vmatpush1.msra.mxu0 %v5877
    %5940 = vmatprep.subr.mxu0 0.0
    %5941 = vmatpush1.msra.mxu0 %v5878
    %5942 = vmatprep.subr.mxu0 0.0
    %5943 = vmatpush1.msra.mxu0 %v5879
    %5944 = vmatprep.subr.mxu0 0.0
    %5945 = vmatpush1.msra.mxu0 %v5880
    %5946 = vmatprep.subr.mxu0 0.0
    %5947 = vmatpush1.msra.mxu0 %v5881
    %5948 = vmatprep.subr.mxu0 0.0
    %5949 = vmatpush1.msra.mxu0 %v5882
    %5950 = vmatprep.subr.mxu0 0.0
    %5951 = vmatpush1.msra.mxu0 %v5883
    %5952 = vmatprep.subr.mxu0 0.0
    %5953 = vmatpush1.msra.mxu0 %v5884
    %5954 = vmatprep.subr.mxu0 0.0
    %5955 = vmatpush1.msra.mxu0 %v5885
    %5956 = vmatprep.subr.mxu0 0.0
    %5957 = vmatpush1.msra.mxu0 %v5886
    %5958 = vmatprep.mubr.f32.mxu0 %v5847
    %5959 = vmatmul.mubr.f32.gmra.mrb[0].mxu0 %v5845
    %v5960 = vpop.f32.mrb[0].mxu0
    %v5961 = vadd.f32 %v5892, %v5960
    %v5962 = vpop.f32.mrb[0].mxu0
    %5963 = vmatprep.mubr.f32.mxu0 %v5853
    %5964 = vmatmul.mubr.f32.gmra.mrb[0].mxu0 %v5851
    %v5965 = vpop.f32.mrb[0].mxu0
    %v5966 = vadd.f32 %v5892, %v5965
    %v5967 = vpop.f32.mrb[0].mxu0
    %5968 = vdwg.mxu0
    %v5969 = vld [vmem:[#allocation22] sm:$0xff]
    %v5970 = vld [vmem:[#allocation22 + $0x8] sm:$0xff]
    %v5971 = vld [vmem:[#allocation22 + $0x10] sm:$0xff]
    %v5972 = vld [vmem:[#allocation22 + $0x18] sm:$0xff]
    %v5973 = vld [vmem:[#allocation22 + $0x20] sm:$0xff]
    %v5974 = vld [vmem:[#allocation22 + $0x28] sm:$0xff]
    %v5975 = vld [vmem:[#allocation22 + $0x30] sm:$0xff]
    %v5976 = vld [vmem:[#allocation22 + $0x38] sm:$0xff]
    %v5977 = vld [vmem:[#allocation23] sm:$0x1]
    %v5979 = vlaneseq
    %v5980 = vshrl.u32 %v5979, 7
    %v5981 = vsub.s32 0, %v5980
    %v5982 = vrot.slane %v5977, %v5981
    %5986 = vrot.lane.b32.xlu0 %v5744, 64
    %v5987 = vpop.permute.xlu0 %5986
    %5988 = vrot.lane.b32.xlu0 %v5732, 64
    %v5989 = vpop.permute.xlu0 %5988
    %v5990 = vsel %vm2300, %v5987, 0
    %v5992 = vsel %vm2300, %v5989, 0
    %5994 = vmatprep.subr.mxu0 0.0
    %5995 = vmatpush1.msra.mxu0 %v5969
    %5996 = vmatprep.subr.mxu0 0.0
    %5997 = vmatpush1.msra.mxu0 %v5970
    %5998 = vmatprep.subr.mxu0 0.0
    %5999 = vmatpush1.msra.mxu0 %v5971
    %6000 = vmatprep.subr.mxu0 0.0
    %6001 = vmatpush1.msra.mxu0 %v5972
    %6002 = vmatprep.subr.mxu0 0.0
    %6003 = vmatpush1.msra.mxu0 %v5973
    %6004 = vmatprep.subr.mxu0 0.0
    %6005 = vmatpush1.msra.mxu0 %v5974
    %6006 = vmatprep.subr.mxu0 0.0
    %6007 = vmatpush1.msra.mxu0 %v5975
    %6008 = vmatprep.subr.mxu0 0.0
    %6009 = vmatpush1.msra.mxu0 %v5976
    %6010 = vmatprep.subr.mxu0 0.0
    %6011 = vmatpush1.msra.mxu0 0.0
    %6012 = vmatprep.subr.mxu0 0.0
    %6013 = vmatpush1.msra.mxu0 0.0
    %6014 = vmatprep.subr.mxu0 0.0
    %6015 = vmatpush1.msra.mxu0 0.0
    %6016 = vmatprep.subr.mxu0 0.0
    %6017 = vmatpush1.msra.mxu0 0.0
    %6018 = vmatprep.subr.mxu0 0.0
    %6019 = vmatpush1.msra.mxu0 0.0
    %6020 = vmatprep.subr.mxu0 0.0
    %6021 = vmatpush1.msra.mxu0 0.0
    %6022 = vmatprep.subr.mxu0 0.0
    %6023 = vmatpush1.msra.mxu0 0.0
    %6024 = vmatprep.subr.mxu0 0.0
    %6025 = vmatpush1.msra.mxu0 0.0
    %6026 = vmatprep.subr.mxu0 0.0
    %6027 = vmatpush1.msra.mxu0 0.0
    %6028 = vmatprep.subr.mxu0 0.0
    %6029 = vmatpush1.msra.mxu0 0.0
    %6030 = vmatprep.subr.mxu0 0.0
    %6031 = vmatpush1.msra.mxu0 0.0
    %6032 = vmatprep.subr.mxu0 0.0
    %6033 = vmatpush1.msra.mxu0 0.0
    %6034 = vmatprep.subr.mxu0 0.0
    %6035 = vmatpush1.msra.mxu0 0.0
    %6036 = vmatprep.subr.mxu0 0.0
    %6037 = vmatpush1.msra.mxu0 0.0
    %6038 = vmatprep.subr.mxu0 0.0
    %6039 = vmatpush1.msra.mxu0 0.0
    %6040 = vmatprep.subr.mxu0 0.0
    %6041 = vmatpush1.msra.mxu0 0.0
    %6042 = vmatprep.subr.mxu0 0.0
    %6043 = vmatpush1.msra.mxu0 0.0
    %6044 = vmatprep.subr.mxu0 0.0
    %6045 = vmatpush1.msra.mxu0 0.0
    %6046 = vmatprep.subr.mxu0 0.0
    %6047 = vmatpush1.msra.mxu0 0.0
    %6048 = vmatprep.subr.mxu0 0.0
    %6049 = vmatpush1.msra.mxu0 0.0
    %6050 = vmatprep.subr.mxu0 0.0
    %6051 = vmatpush1.msra.mxu0 0.0
    %6052 = vmatprep.subr.mxu0 0.0
    %6053 = vmatpush1.msra.mxu0 0.0
    %6054 = vmatprep.subr.mxu0 0.0
    %6055 = vmatpush1.msra.mxu0 0.0
    %6056 = vmatprep.subr.mxu0 0.0
    %6057 = vmatpush1.msra.mxu0 0.0
    %6058 = vmatprep.mubr.f32.mxu0 0.0
    %6059 = vmatmul.mubr.f32.gmra.mrb[0].mxu0 %v5990
    %v6060 = vpop.f32.mrb[0].mxu0
    %v6061 = vadd.f32 %v5982, %v6060
    %v6062 = vpop.f32.mrb[0].mxu0
    %6063 = vmatprep.mubr.f32.mxu0 0.0
    %6064 = vmatmul.mubr.f32.gmra.mrb[0].mxu0 %v5992
    %v6065 = vpop.f32.mrb[0].mxu0
    %v6066 = vadd.f32 %v5982, %v6065
    %v6067 = vpop.f32.mrb[0].mxu0
    %6068 = vdwg.mxu0
    %v6069 = vmax.f32 %v6061, 0.0
    %v6070 = vmax.f32 %v6066, 0.0
    %v6071 = vld [vmem:[%s51] sm:$0xff]
    %v6072 = vld [vmem:[%s51 + $0x8] sm:$0xff]
    %v6073 = vld [vmem:[%s51 + $0x10] sm:$0xff]
    %v6074 = vld [vmem:[%s51 + $0x18] sm:$0xff]
    %v6075 = vld [vmem:[%s51 + $0x20] sm:$0xff]
    %v6076 = vld [vmem:[%s51 + $0x28] sm:$0xff]
    %v6077 = vld [vmem:[%s51 + $0x30] sm:$0xff]
    %v6078 = vld [vmem:[%s51 + $0x38] sm:$0xff]
    %v6079 = vld [vmem:[%s51 + $0x40] sm:$0xff]
    %v6080 = vld [vmem:[%s51 + $0x48] sm:$0xff]
    %v6081 = vld [vmem:[%s51 + $0x50] sm:$0xff]
    %v6082 = vld [vmem:[%s51 + $0x58] sm:$0xff]
    %v6083 = vld [vmem:[%s51 + $0x60] sm:$0xff]
    %v6084 = vld [vmem:[%s51 + $0x68] sm:$0xff]
    %v6085 = vld [vmem:[%s51 + $0x70] sm:$0xff]
    %v6086 = vld [vmem:[%s51 + $0x78] sm:$0xff]
    %v6087 = vld [vmem:[#allocation25] sm:$0x1]
    %v6089 = vlaneseq
    %v6090 = vshrl.u32 %v6089, 7
    %v6091 = vsub.s32 0, %v6090
    %v6092 = vrot.slane %v6087, %v6091
    %6094 = vmatprep.subr.mxu0 0.0
    %6095 = vmatpush1.msra.mxu0 %v6071
    %6096 = vmatprep.subr.mxu0 0.0
    %6097 = vmatpush1.msra.mxu0 %v6072
    %6098 = vmatprep.subr.mxu0 0.0
    %6099 = vmatpush1.msra.mxu0 %v6073
    %6100 = vmatprep.subr.mxu0 0.0
    %6101 = vmatpush1.msra.mxu0 %v6074
    %6102 = vmatprep.subr.mxu0 0.0
    %6103 = vmatpush1.msra.mxu0 %v6075
    %6104 = vmatprep.subr.mxu0 0.0
    %6105 = vmatpush1.msra.mxu0 %v6076
    %6106 = vmatprep.subr.mxu0 0.0
    %6107 = vmatpush1.msra.mxu0 %v6077
    %6108 = vmatprep.subr.mxu0 0.0
    %6109 = vmatpush1.msra.mxu0 %v6078
    %6110 = vmatprep.subr.mxu0 0.0
    %6111 = vmatpush1.msra.mxu0 %v6079
    %6112 = vmatprep.subr.mxu0 0.0
    %6113 = vmatpush1.msra.mxu0 %v6080
    %6114 = vmatprep.subr.mxu0 0.0
    %6115 = vmatpush1.msra.mxu0 %v6081
    %6116 = vmatprep.subr.mxu0 0.0
    %6117 = vmatpush1.msra.mxu0 %v6082
    %6118 = vmatprep.subr.mxu0 0.0
    %6119 = vmatpush1.msra.mxu0 %v6083
    %6120 = vmatprep.subr.mxu0 0.0
    %6121 = vmatpush1.msra.mxu0 %v6084
    %6122 = vmatprep.subr.mxu0 0.0
    %6123 = vmatpush1.msra.mxu0 %v6085
    %6124 = vmatprep.subr.mxu0 0.0
    %6125 = vmatpush1.msra.mxu0 %v6086
    %6126 = vmatprep.subr.mxu0 0.0
    %6127 = vmatpush1.msra.mxu0 0.0
    %6128 = vmatprep.subr.mxu0 0.0
    %6129 = vmatpush1.msra.mxu0 0.0
    %6130 = vmatprep.subr.mxu0 0.0
    %6131 = vmatpush1.msra.mxu0 0.0
    %6132 = vmatprep.subr.mxu0 0.0
    %6133 = vmatpush1.msra.mxu0 0.0
    %6134 = vmatprep.subr.mxu0 0.0
    %6135 = vmatpush1.msra.mxu0 0.0
    %6136 = vmatprep.subr.mxu0 0.0
    %6137 = vmatpush1.msra.mxu0 0.0
    %6138 = vmatprep.subr.mxu0 0.0
    %6139 = vmatpush1.msra.mxu0 0.0
    %6140 = vmatprep.subr.mxu0 0.0
    %6141 = vmatpush1.msra.mxu0 0.0
    %6142 = vmatprep.subr.mxu0 0.0
    %6143 = vmatpush1.msra.mxu0 0.0
    %6144 = vmatprep.subr.mxu0 0.0
    %6145 = vmatpush1.msra.mxu0 0.0
    %6146 = vmatprep.subr.mxu0 0.0
    %6147 = vmatpush1.msra.mxu0 0.0
    %6148 = vmatprep.subr.mxu0 0.0
    %6149 = vmatpush1.msra.mxu0 0.0
    %6150 = vmatprep.subr.mxu0 0.0
    %6151 = vmatpush1.msra.mxu0 0.0
    %6152 = vmatprep.subr.mxu0 0.0
    %6153 = vmatpush1.msra.mxu0 0.0
    %6154 = vmatprep.subr.mxu0 0.0
    %6155 = vmatpush1.msra.mxu0 0.0
    %6156 = vmatprep.subr.mxu0 0.0
    %6157 = vmatpush1.msra.mxu0 0.0
    %6158 = vmatprep.mubr.f32.mxu0 0.0
    %6159 = vmatmul.mubr.f32.gmra.mrb[0].mxu0 %v6069
    %v6160 = vpop.f32.mrb[0].mxu0
    %v6161 = vadd.f32 %v6092, %v6160
    %v6162 = vpop.f32.mrb[0].mxu0
    %6163 = vmatprep.mubr.f32.mxu0 0.0
    %6164 = vmatmul.mubr.f32.gmra.mrb[0].mxu0 %v6070
    %v6165 = vpop.f32.mrb[0].mxu0
    %v6166 = vadd.f32 %v6092, %v6165
    %v6167 = vpop.f32.mrb[0].mxu0
    %6168 = vdwg.mxu0
    %v6169 = vld [vmem:[#allocation26] sm:$0xff]
    %v6170 = vld [vmem:[#allocation26 + $0x8] sm:$0xff]
    %v6171 = vld [vmem:[#allocation26 + $0x10] sm:$0xff]
    %v6172 = vld [vmem:[#allocation26 + $0x18] sm:$0xff]
    %v6173 = vld [vmem:[#allocation26 + $0x20] sm:$0xff]
    %v6174 = vld [vmem:[#allocation26 + $0x28] sm:$0xff]
    %v6175 = vld [vmem:[#allocation26 + $0x30] sm:$0xff]
    %v6176 = vld [vmem:[#allocation26 + $0x38] sm:$0xff]
    %v6177 = vld [vmem:[#allocation28] sm:$0x1]
    %v6179 = vlaneseq
    %v6180 = vshrl.u32 %v6179, 7
    %v6181 = vsub.s32 0, %v6180
    %v6182 = vrot.slane %v6177, %v6181
    %6184 = vmatprep.subr.mxu0 0.0
    %6185 = vmatpush1.msra.mxu0 %v6169
    %6186 = vmatprep.subr.mxu0 0.0
    %6187 = vmatpush1.msra.mxu0 %v6170
    %6188 = vmatprep.subr.mxu0 0.0
    %6189 = vmatpush1.msra.mxu0 %v6171
    %6190 = vmatprep.subr.mxu0 0.0
    %6191 = vmatpush1.msra.mxu0 %v6172
    %6192 = vmatprep.subr.mxu0 0.0
    %6193 = vmatpush1.msra.mxu0 %v6173
    %6194 = vmatprep.subr.mxu0 0.0
    %6195 = vmatpush1.msra.mxu0 %v6174
    %6196 = vmatprep.subr.mxu0 0.0
    %6197 = vmatpush1.msra.mxu0 %v6175
    %6198 = vmatprep.subr.mxu0 0.0
    %6199 = vmatpush1.msra.mxu0 %v6176
    %6200 = vmatprep.subr.mxu0 0.0
    %6201 = vmatpush1.msra.mxu0 0.0
    %6202 = vmatprep.subr.mxu0 0.0
    %6203 = vmatpush1.msra.mxu0 0.0
    %6204 = vmatprep.subr.mxu0 0.0
    %6205 = vmatpush1.msra.mxu0 0.0
    %6206 = vmatprep.subr.mxu0 0.0
    %6207 = vmatpush1.msra.mxu0 0.0
    %6208 = vmatprep.subr.mxu0 0.0
    %6209 = vmatpush1.msra.mxu0 0.0
    %6210 = vmatprep.subr.mxu0 0.0
    %6211 = vmatpush1.msra.mxu0 0.0
    %6212 = vmatprep.subr.mxu0 0.0
    %6213 = vmatpush1.msra.mxu0 0.0
    %6214 = vmatprep.subr.mxu0 0.0
    %6215 = vmatpush1.msra.mxu0 0.0
    %6216 = vmatprep.subr.mxu0 0.0
    %6217 = vmatpush1.msra.mxu0 0.0
    %6218 = vmatprep.subr.mxu0 0.0
    %6219 = vmatpush1.msra.mxu0 0.0
    %6220 = vmatprep.subr.mxu0 0.0
    %6221 = vmatpush1.msra.mxu0 0.0
    %6222 = vmatprep.subr.mxu0 0.0
    %6223 = vmatpush1.msra.mxu0 0.0
    %6224 = vmatprep.subr.mxu0 0.0
    %6225 = vmatpush1.msra.mxu0 0.0
    %6226 = vmatprep.subr.mxu0 0.0
    %6227 = vmatpush1.msra.mxu0 0.0
    %6228 = vmatprep.subr.mxu0 0.0
    %6229 = vmatpush1.msra.mxu0 0.0
    %6230 = vmatprep.subr.mxu0 0.0
    %6231 = vmatpush1.msra.mxu0 0.0
    %6232 = vmatprep.subr.mxu0 0.0
    %6233 = vmatpush1.msra.mxu0 0.0
    %6234 = vmatprep.subr.mxu0 0.0
    %6235 = vmatpush1.msra.mxu0 0.0
    %6236 = vmatprep.subr.mxu0 0.0
    %6237 = vmatpush1.msra.mxu0 0.0
    %6238 = vmatprep.subr.mxu0 0.0
    %6239 = vmatpush1.msra.mxu0 0.0
    %6240 = vmatprep.subr.mxu0 0.0
    %6241 = vmatpush1.msra.mxu0 0.0
    %6242 = vmatprep.subr.mxu0 0.0
    %6243 = vmatpush1.msra.mxu0 0.0
    %6244 = vmatprep.subr.mxu0 0.0
    %6245 = vmatpush1.msra.mxu0 0.0
    %6246 = vmatprep.subr.mxu0 0.0
    %6247 = vmatpush1.msra.mxu0 0.0
    %6248 = vmatprep.mubr.f32.mxu0 0.0
    %6249 = vmatmul.mubr.f32.gmra.mrb[0].mxu0 %v5776
    %v6250 = vpop.f32.mrb[0].mxu0
    %v6251 = vadd.f32 %v6182, %v6250
    %v6252 = vpop.f32.mrb[0].mxu0
    %6253 = vmatprep.mubr.f32.mxu0 0.0
    %6254 = vmatmul.mubr.f32.gmra.mrb[0].mxu0 %v5566
    %v6255 = vpop.f32.mrb[0].mxu0
    %v6256 = vadd.f32 %v6182, %v6255
    %v6257 = vpop.f32.mrb[0].mxu0
    %6258 = vdwg.mxu0
    %v6259 = vmax.f32 %v6251, 0.0
    %v6260 = vmax.f32 %v6256, 0.0
    %v6261 = vld [vmem:[%s59] sm:$0xff]
    %v6262 = vld [vmem:[%s59 + $0x8] sm:$0xff]
    %v6263 = vld [vmem:[%s59 + $0x10] sm:$0xff]
    %v6264 = vld [vmem:[%s59 + $0x18] sm:$0xff]
    %v6265 = vld [vmem:[%s59 + $0x20] sm:$0xff]
    %v6266 = vld [vmem:[%s59 + $0x28] sm:$0xff]
    %v6267 = vld [vmem:[%s59 + $0x30] sm:$0xff]
    %v6268 = vld [vmem:[%s59 + $0x38] sm:$0xff]
    %v6269 = vld [vmem:[%s59 + $0x40] sm:$0xff]
    %v6270 = vld [vmem:[%s59 + $0x48] sm:$0xff]
    %v6271 = vld [vmem:[%s59 + $0x50] sm:$0xff]
    %v6272 = vld [vmem:[%s59 + $0x58] sm:$0xff]
    %v6273 = vld [vmem:[%s59 + $0x60] sm:$0xff]
    %v6274 = vld [vmem:[%s59 + $0x68] sm:$0xff]
    %v6275 = vld [vmem:[%s59 + $0x70] sm:$0xff]
    %v6276 = vld [vmem:[%s59 + $0x78] sm:$0xff]
    %v6277 = vld [vmem:[#allocation2] sm:$0x1]
    %v6279 = vlaneseq
    %v6280 = vshrl.u32 %v6279, 7
    %v6281 = vsub.s32 0, %v6280
    %v6282 = vrot.slane %v6277, %v6281
    %6284 = vmatprep.subr.mxu0 0.0
    %6285 = vmatpush1.msra.mxu0 %v6261
    %6286 = vmatprep.subr.mxu0 0.0
    %6287 = vmatpush1.msra.mxu0 %v6262
    %6288 = vmatprep.subr.mxu0 0.0
    %6289 = vmatpush1.msra.mxu0 %v6263
    %6290 = vmatprep.subr.mxu0 0.0
    %6291 = vmatpush1.msra.mxu0 %v6264
    %6292 = vmatprep.subr.mxu0 0.0
    %6293 = vmatpush1.msra.mxu0 %v6265
    %6294 = vmatprep.subr.mxu0 0.0
    %6295 = vmatpush1.msra.mxu0 %v6266
    %6296 = vmatprep.subr.mxu0 0.0
    %6297 = vmatpush1.msra.mxu0 %v6267
    %6298 = vmatprep.subr.mxu0 0.0
    %6299 = vmatpush1.msra.mxu0 %v6268
    %6300 = vmatprep.subr.mxu0 0.0
    %6301 = vmatpush1.msra.mxu0 %v6269
    %6302 = vmatprep.subr.mxu0 0.0
    %6303 = vmatpush1.msra.mxu0 %v6270
    %6304 = vmatprep.subr.mxu0 0.0
    %6305 = vmatpush1.msra.mxu0 %v6271
    %6306 = vmatprep.subr.mxu0 0.0
    %6307 = vmatpush1.msra.mxu0 %v6272
    %6308 = vmatprep.subr.mxu0 0.0
    %6309 = vmatpush1.msra.mxu0 %v6273
    %6310 = vmatprep.subr.mxu0 0.0
    %6311 = vmatpush1.msra.mxu0 %v6274
    %6312 = vmatprep.subr.mxu0 0.0
    %6313 = vmatpush1.msra.mxu0 %v6275
    %6314 = vmatprep.subr.mxu0 0.0
    %6315 = vmatpush1.msra.mxu0 %v6276
    %6316 = vmatprep.subr.mxu0 0.0
    %6317 = vmatpush1.msra.mxu0 0.0
    %6318 = vmatprep.subr.mxu0 0.0
    %6319 = vmatpush1.msra.mxu0 0.0
    %6320 = vmatprep.subr.mxu0 0.0
    %6321 = vmatpush1.msra.mxu0 0.0
    %6322 = vmatprep.subr.mxu0 0.0
    %6323 = vmatpush1.msra.mxu0 0.0
    %6324 = vmatprep.subr.mxu0 0.0
    %6325 = vmatpush1.msra.mxu0 0.0
    %6326 = vmatprep.subr.mxu0 0.0
    %6327 = vmatpush1.msra.mxu0 0.0
    %6328 = vmatprep.subr.mxu0 0.0
    %6329 = vmatpush1.msra.mxu0 0.0
    %6330 = vmatprep.subr.mxu0 0.0
    %6331 = vmatpush1.msra.mxu0 0.0
    %6332 = vmatprep.subr.mxu0 0.0
    %6333 = vmatpush1.msra.mxu0 0.0
    %6334 = vmatprep.subr.mxu0 0.0
    %6335 = vmatpush1.msra.mxu0 0.0
    %6336 = vmatprep.subr.mxu0 0.0
    %6337 = vmatpush1.msra.mxu0 0.0
    %6338 = vmatprep.subr.mxu0 0.0
    %6339 = vmatpush1.msra.mxu0 0.0
    %6340 = vmatprep.subr.mxu0 0.0
    %6341 = vmatpush1.msra.mxu0 0.0
    %6342 = vmatprep.subr.mxu0 0.0
    %6343 = vmatpush1.msra.mxu0 0.0
    %6344 = vmatprep.subr.mxu0 0.0
    %6345 = vmatpush1.msra.mxu0 0.0
    %6346 = vmatprep.subr.mxu0 0.0
    %6347 = vmatpush1.msra.mxu0 0.0
    %6348 = vmatprep.mubr.f32.mxu0 0.0
    %6349 = vmatmul.mubr.f32.gmra.mrb[0].mxu0 %v6259
    %v6350 = vpop.f32.mrb[0].mxu0
    %v6351 = vadd.f32 %v6282, %v6350
    %v6352 = vpop.f32.mrb[0].mxu0
    %6353 = vmatprep.mubr.f32.mxu0 0.0
    %6354 = vmatmul.mubr.f32.gmra.mrb[0].mxu0 %v6260
    %v6355 = vpop.f32.mrb[0].mxu0
    %v6356 = vadd.f32 %v6282, %v6355
    %v6357 = vpop.f32.mrb[0].mxu0
    %6358 = vdwg.mxu0
    %6361 = vrot.lane.b32.xlu0 %v6161, 8
    %v6362 = vpop.permute.xlu0 %6361
    %6363 = vrot.lane.b32.xlu0 %v6166, 8
    %v6364 = vpop.permute.xlu0 %6363
    %vm6367 = vcmask 64512
    %v6368 = vsel %vm6367, %v5961, %v6362
    %v6369 = vsel %vm6367, %v5966, %v6364
    %6370 = vst.msk [vmem:[%s63] sm:$0xff] %vm4205, %v6368
    %vm6371 = vcmask 107520
    %6372 = vst.msk [vmem:[%s63 + $0x8] sm:$0x3] %vm6371, %v6369
    %vm6373 = vcmask 7168
    %6374 = vst.msk [vmem:[%s65] sm:$0xff] %vm6373, %v6351
    %vm6375 = vcmask 1024
    %6376 = vst.msk [vmem:[%s65 + $0x8] sm:$0x3] %vm6375, %v6356
    // Predicated region
    $region194: #{seq2seq_forward.1} parent=1 // pred_check
      _
    $region195: #{seq2seq_forward.1} parent=1 // pred_check_branch
      %6378 = sbr.rel (0) target = $region197
    $region196: #{seq2seq_forward.1} parent=1 // pred_region
      _
    $region197: #{seq2seq_forward.1} parent=1 // pred_fallthru
      _
    // Predicated region
    $region198: #{seq2seq_forward.1} parent=1 // pred_check
      _
    $region199: #{seq2seq_forward.1} parent=1 // pred_check_branch
      %6380 = sbr.rel (0) target = $region201
    $region200: #{seq2seq_forward.1} parent=1 // pred_region
      _
    $region201: #{seq2seq_forward.1} parent=1 // pred_fallthru
      _
    // Predicated region
    $region202: #{seq2seq_forward.1} parent=1 // pred_check
      _
    $region203: #{seq2seq_forward.1} parent=1 // pred_check_branch
      %6382 = sbr.rel (0) target = $region205
    $region204: #{seq2seq_forward.1} parent=1 // pred_region
      _
    $region205: #{seq2seq_forward.1} parent=1 // pred_fallthru
      _
    // Predicated region
    $region206: #{seq2seq_forward.1} parent=1 // pred_check
      _
    $region207: #{seq2seq_forward.1} parent=1 // pred_check_branch
      %6384 = sbr.rel (0) target = $region209
    $region208: #{seq2seq_forward.1} parent=1 // pred_region
      _
    $region209: #{seq2seq_forward.1} parent=1 // pred_fallthru
      _
    %6385 = vsyncpa [#allocation4], 1
    %6386 = vsyncpa [#allocation6], 1
    %6387 = vsyncpa [#allocation9], 1
    %6388 = vsyncpa [#allocation12], 1
    %6389 = vsyncpa [#allocation15], 1
    %6390 = vsyncpa [#allocation18], 1
    %6391 = vsyncpa [#allocation21], 1
    %6392 = vsyncpa [#allocation24], 1
    %6393 = vsyncpa [#allocation27], 1

</llo_original>
